<compile_context>
chip_gen: v5e
topology: v5e:2x2
jax: 0.10.0
libtpu: 0.0.40
codegen_flags: <defaults>
</compile_context>

<pallas_src>
import functools
import numpy as np

import jax
import jax.numpy as jnp
from jax.experimental import pallas as pl
from jax.experimental.pallas import tpu as pltpu


_VMEM_LIMIT = 48 * 1024 * 1024  # explicit scoped-VMEM limit (v5e default 16 MiB; v7x phys 64 MiB)


def _round_up(a, m):
    return ((a + m - 1) // m) * m


def _pick_tile(dim, cap, align):
    """Tile size <= cap that minimizes padding (full dim if it fits, else even split)."""
    if dim <= cap:
        return dim                       # full dim: allowed even if unaligned, zero padding
    nblk = -(-dim // cap)
    return _round_up(-(-dim // nblk), align)


# ----------------------------- in-kernel math helpers -----------------------------

def _erf_f32(x):
    # TODO(synk): exact erf has no guaranteed Mosaic lowering; this is the Abramowitz & Stegun
    # 7.1.26 rational approximation (|err| < 1.5e-7, i.e. f32-level accurate) built from ops with
    # guaranteed lowerings (exp / mul / add / select), preserving nn.GELU(approximate='none').
    a1, a2, a3, a4, a5 = 0.254829592, -0.284496736, 1.421413741, -1.453152027, 1.061405429
    pp = 0.3275911
    ax = jnp.abs(x)
    t = 1.0 / (1.0 + pp * ax)
    poly = ((((a5 * t + a4) * t + a3) * t + a2) * t + a1) * t
    y = 1.0 - poly * jnp.exp(-ax * ax)
    return jnp.where(x < 0, -y, y)


def _gelu_exact(x):
    return 0.5 * x * (1.0 + _erf_f32(x * 0.7071067811865476))


# ----------------------------- fused linear kernel -----------------------------

def _make_linear_kernel(has_ln, has_res, act, eps):
    def kernel(*refs):
        x_ref, w_ref, b_ref = refs[0], refs[1], refs[2]
        pos = 3
        if has_ln:
            g_ref, bb_ref = refs[pos], refs[pos + 1]
            pos += 2
        if has_res:
            r_ref = refs[pos]
            pos += 1
        o_ref, acc_ref = refs[pos], refs[pos + 1]

        @pl.when(pl.program_id(2) == 0)
        def _init():
            acc_ref[...] = jnp.zeros_like(acc_ref)

        if has_ln:
            # fused LayerNorm on the loaded x tile (tile spans full K, so stats are exact)
            xf = x_ref[...].astype(jnp.float32)
            mu = jnp.mean(xf, axis=-1, keepdims=True)
            xc = xf - mu
            var = jnp.mean(xc * xc, axis=-1, keepdims=True)
            xf = xc * jax.lax.rsqrt(var + eps) * g_ref[...] + bb_ref[...]
            xv = xf.astype(jnp.bfloat16)
        else:
            xv = x_ref[...]                       # already bf16 in HBM

        acc_ref[...] += jnp.dot(xv, w_ref[...], preferred_element_type=jnp.float32)

        @pl.when(pl.program_id(2) == pl.num_programs(2) - 1)
        def _fin():
            y = acc_ref[...] + b_ref[...]
            if act == "gelu":
                y = _gelu_exact(y)
            if has_res:
                y = y + r_ref[...].astype(jnp.float32)
            o_ref[...] = y.astype(o_ref.dtype)

    return kernel


def linear_pallas(x, w, b, *, ln=None, act=None, residual=None, out_dtype=jnp.bfloat16,
                  tm_cap=256, tn_cap=4096, tk_cap=512, eps=1e-5):
    """y = [residual +] act( LN?(x) @ w + b ).

    x: (M, K) bf16/f32 activations, w: (K, N) bf16 weights (already transposed vs torch),
    b: (N,), ln: optional (gamma, beta) fused on the input tile, residual: optional (M, N).
    Output dtype bf16 by default (activation stream is bf16; this stage is HBM-bound)."""
    M, K = x.shape
    N = w.shape[1]
    has_ln = ln is not None
    has_res = residual is not None

    tm = _pick_tile(M, tm_cap, 8)
    tn = _pick_tile(N, tn_cap, 128)
    tk = K if has_ln else _pick_tile(K, tk_cap, 128)   # LN fusion needs the full row in-tile
    Mp, Kp, Np = _round_up(M, tm), _round_up(K, tk), _round_up(N, tn)

    xp = x.astype(jnp.bfloat16)
    if Mp != M or Kp != K:
        xp = jnp.pad(xp, ((0, Mp - M), (0, Kp - K)))
    wp = w.astype(jnp.bfloat16)
    if Kp != K or Np != N:
        wp = jnp.pad(wp, ((0, Kp - K), (0, Np - N)))
    bp = b.astype(jnp.float32)
    if Np != N:
        bp = jnp.pad(bp, ((0, Np - N),))
    bp = bp.reshape(1, Np)

    in_arrays = [xp, wp, bp]
    in_specs = [
        pl.BlockSpec((tm, tk), lambda i, j, k: (i, k)),
        pl.BlockSpec((tk, tn), lambda i, j, k: (k, j)),
        pl.BlockSpec((1, tn), lambda i, j, k: (0, j)),
    ]
    if has_ln:
        g, bb = ln
        in_arrays += [g.reshape(1, K).astype(jnp.float32),
                      bb.reshape(1, K).astype(jnp.float32)]
        in_specs += [pl.BlockSpec((1, K), lambda i, j, k: (0, 0)),
                     pl.BlockSpec((1, K), lambda i, j, k: (0, 0))]
    if has_res:
        rp = residual.astype(jnp.bfloat16)
        if Mp != M or Np != N:
            rp = jnp.pad(rp, ((0, Mp - M), (0, Np - N)))
        in_arrays.append(rp)
        in_specs.append(pl.BlockSpec((tm, tn), lambda i, j, k: (i, j)))

    out = pl.pallas_call(
        _make_linear_kernel(has_ln, has_res, act, eps),
        out_shape=jax.ShapeDtypeStruct((Mp, Np), out_dtype),
        grid_spec=pltpu.PrefetchScalarGridSpec(
            num_scalar_prefetch=0,
            grid=(Mp // tm, Np // tn, Kp // tk),
            in_specs=in_specs,
            out_specs=pl.BlockSpec((tm, tn), lambda i, j, k: (i, j)),
            scratch_shapes=[pltpu.VMEM((tm, tn), jnp.float32)],
        ),
        compiler_params=pltpu.CompilerParams(
            dimension_semantics=("parallel", "parallel", "arbitrary"),
            vmem_limit_bytes=_VMEM_LIMIT),
    )(*in_arrays)

    if Mp != M or Np != N:
        out = out[:M, :N]
    return out


# ----------------------------- standalone LayerNorm (fallback only) -----------------------------

def _layernorm_kernel(x_ref, g_ref, b_ref, o_ref, *, eps):
    x = x_ref[...].astype(jnp.float32)
    mu = jnp.mean(x, axis=-1, keepdims=True)
    xc = x - mu
    var = jnp.mean(xc * xc, axis=-1, keepdims=True)
    o_ref[...] = (xc * jax.lax.rsqrt(var + eps) * g_ref[...] + b_ref[...]).astype(o_ref.dtype)


def layernorm_pallas(x, gamma, beta, eps=1e-5):
    """Only used when spatial padding prevents LN fusion into the qkv matmul."""
    M, C = x.shape
    cap = 512 if C <= 1024 else 256       # v5e-safe working set for wide-C LayerNorms
    tm = _pick_tile(M, cap, 8)
    Mp = _round_up(M, tm)
    xp = x if Mp == M else jnp.pad(x, ((0, Mp - M), (0, 0)))
    out = pl.pallas_call(
        functools.partial(_layernorm_kernel, eps=eps),
        out_shape=jax.ShapeDtypeStruct((Mp, C), x.dtype),
        grid=(Mp // tm,),
        in_specs=[pl.BlockSpec((tm, C), lambda i: (i, 0)),
                  pl.BlockSpec((1, C), lambda i: (0, 0)),
                  pl.BlockSpec((1, C), lambda i: (0, 0))],
        out_specs=pl.BlockSpec((tm, C), lambda i: (i, 0)),
        compiler_params=pltpu.CompilerParams(dimension_semantics=("parallel",),
                                             vmem_limit_bytes=_VMEM_LIMIT),
    )(xp, gamma.reshape(1, C).astype(jnp.float32), beta.reshape(1, C).astype(jnp.float32))
    return out[:M] if Mp != M else out


# ----------------------------- window attention kernel -----------------------------

def _make_attn_kernel(num_heads, head_dim, scale, has_mask, mask_rep):
    def kernel(*refs):
        if has_mask:
            qkv_ref, rb_ref, mask_ref, o_ref = refs
        else:
            qkv_ref, rb_ref, o_ref = refs
        wb, N, _ = qkv_ref.shape
        C = num_heads * head_dim

        if has_mask:
            m = mask_ref[...]
            if mask_rep >= 2:   # block covers mask_rep full images worth of windows
                m = jnp.broadcast_to(m[None], (mask_rep,) + m.shape).reshape(wb, N, N)

        heads_out = []
        for hh in range(num_heads):   # static unroll over heads
            q = qkv_ref[:, :, hh * head_dim:(hh + 1) * head_dim]
            k = qkv_ref[:, :, C + hh * head_dim:C + (hh + 1) * head_dim]
            v = qkv_ref[:, :, 2 * C + hh * head_dim:2 * C + (hh + 1) * head_dim]
            s = jnp.einsum("wqd,wkd->wqk", q, k,
                           preferred_element_type=jnp.float32) * scale
            s = s + rb_ref[hh][None]
            if has_mask:
                s = s + m
            s = s - jnp.max(s, axis=-1, keepdims=True)
            p = jnp.exp(s)
            p = p * pl.reciprocal(jnp.sum(p, axis=-1, keepdims=True), approx=True)
            heads_out.append(jnp.einsum("wqk,wkd->wqd", p.astype(jnp.bfloat16), v,
                                        preferred_element_type=jnp.float32))
        # single lane-dense, full-width store (no 32-lane masked partial stores)
        o_ref[...] = jnp.concatenate(heads_out, axis=-1).astype(o_ref.dtype)

    return kernel


def _pick_wb(BW, num_win, need_mask, cap=16):
    """Windows per grid step, chosen from BW (= B*num_win) so stage-4 (num_win=1) still batches."""
    cap = max(1, min(cap, BW // 2 if BW > 1 else 1))   # keep >=2 grid steps for megacore
    best = 1
    for d in range(1, min(BW, cap) + 1):
        if BW % d != 0:
            continue
        if need_mask and not (d % num_win == 0 or num_win % d == 0):
            continue
        best = d
    return best


def window_attention_pallas(qkv, rel_bias, mask, num_heads, head_dim, scale):
    """qkv: (BW, N, 3C) bf16 (q|k|v, each head-major); rel_bias: (h, N, N) f32;
    mask: (num_win, N, N) additive shift mask or None (skipped entirely for unshifted blocks)."""
    BW, N, C3 = qkv.shape
    C = C3 // 3
    has_mask = mask is not None
    num_win = mask.shape[0] if has_mask else 1
    wb = _pick_wb(BW, num_win, has_mask)

    in_arrays = [qkv, rel_bias]
    in_specs = [
        pl.BlockSpec((wb, N, C3), lambda i: (i, 0, 0)),
        pl.BlockSpec((num_heads, N, N), lambda i: (0, 0, 0)),
    ]
    mask_rep = 0
    if has_mask:
        in_arrays.append(mask.astype(jnp.float32))
        if wb <= num_win:
            nblk = num_win // wb
            if nblk == 1:
                mmap = lambda i: (0, 0, 0)
            else:
                mmap = lambda i: (i % nblk, 0, 0)
            in_specs.append(pl.BlockSpec((wb, N, N), mmap))
        else:
            mask_rep = wb // num_win
            in_specs.append(pl.BlockSpec((num_win, N, N), lambda i: (0, 0, 0)))

    return pl.pallas_call(
        _make_attn_kernel(num_heads, head_dim, scale, has_mask, mask_rep),
        out_shape=jax.ShapeDtypeStruct((BW, N, C), jnp.bfloat16),
        grid=(BW // wb,),
        in_specs=in_specs,
        out_specs=pl.BlockSpec((wb, N, C), lambda i: (i, 0, 0)),
        compiler_params=pltpu.CompilerParams(dimension_semantics=("parallel",),
                                             vmem_limit_bytes=_VMEM_LIMIT),
    )(*in_arrays)


# ----------------------------- Swin glue (plain JAX) -----------------------------

def _relative_position_index(ws):
    coords = np.stack(np.meshgrid(np.arange(ws), np.arange(ws), indexing="ij"))
    coords = coords.reshape(2, -1)
    rel = coords[:, :, None] - coords[:, None, :]
    rel = rel.transpose(1, 2, 0).astype(np.int64)
    rel[:, :, 0] += ws - 1
    rel[:, :, 1] += ws - 1
    rel[:, :, 0] *= 2 * ws - 1
    return rel.sum(-1)                                     # (N, N)


def _shift_attn_mask(pH, pW, ws, ss):
    img = np.zeros((pH, pW), np.float32)
    h_slices = ((0, pH - ws), (pH - ws, pH - ss[0]), (pH - ss[0], pH))
    w_slices = ((0, pW - ws), (pW - ws, pW - ss[1]), (pW - ss[1], pW))
    cnt = 0
    for hs in h_slices:
        for wsl in w_slices:
            img[hs[0]:hs[1], wsl[0]:wsl[1]] = cnt
            cnt += 1
    win = img.reshape(pH // ws, ws, pW // ws, ws).transpose(0, 2, 1, 3).reshape(-1, ws * ws)
    diff = win[:, None, :] - win[:, :, None]
    return np.where(diff != 0, -100.0, 0.0).astype(np.float32)   # (num_win, N, N)


def shifted_window_attention_block(x, p, num_heads, window, shift):
    """Returns x + proj(window_attention(LN1(x))) — norm1, qkv-LN fusion, proj-residual fusion."""
    B, H, W, C = x.shape
    ws = window
    pad_b = (ws - H % ws) % ws
    pad_r = (ws - W % ws) % ws
    fuse = (pad_b == 0 and pad_r == 0)      # Swin-B stage3/4 never pads (14x14 / 7x7, ws=7)
    x_in = x
    if fuse:
        xs = x
    else:
        # TODO(synk): with spatial padding, LN must precede the zero pad (torchvision pads the
        # normalized tensor), so fall back to a standalone LN and an unfused qkv matmul.
        xs = layernorm_pallas(x.reshape(-1, C), p["norm1_g"], p["norm1_b"]).reshape(B, H, W, C)
        xs = jnp.pad(xs, ((0, 0), (0, pad_b), (0, pad_r), (0, 0)))
    pH, pW = H + pad_b, W + pad_r

    ss = list(shift)
    if ws >= pH:
        ss[0] = 0
    if ws >= pW:
        ss[1] = 0
    shifted = ss[0] > 0 or ss[1] > 0
    if shifted:
        xs = jnp.roll(xs, shift=(-ss[0], -ss[1]), axis=(1, 2))

    nH, nW_ = pH // ws, pW // ws
    num_win = nH * nW_
    N = ws * ws
    head_dim = C // num_heads

    xw = xs.reshape(B, nH, ws, nW_, ws, C).transpose(0, 1, 3, 2, 4, 5).reshape(B * num_win, N, C)
    xw_flat = xw.reshape(-1, C)

    # LN1 fused into the qkv matmul (no standalone LN HBM round trip); bf16 output.
    qkv = linear_pallas(xw_flat, p["qkv_w"], p["qkv_b"],
                        ln=(p["norm1_g"], p["norm1_b"]) if fuse else None)
    qkv = qkv.reshape(B * num_win, N, 3 * C)

    rel_idx = _relative_position_index(ws)
    rel_bias = p["rel_table"][rel_idx.reshape(-1)].reshape(N, N, num_heads)
    rel_bias = rel_bias.transpose(2, 0, 1).astype(jnp.float32)           # (h, N, N)
    mask = jnp.asarray(_shift_attn_mask(pH, pW, ws, ss)) if shifted else None

    attn_out = window_attention_pallas(qkv, rel_bias, mask, num_heads, head_dim,
                                       scale=head_dim ** -0.5)           # (BW, N, C) bf16

    # residual (the pre-LN windowed x) folded into the proj matmul when layouts coincide
    res = xw_flat if fuse else None
    out = linear_pallas(attn_out.reshape(-1, C), p["proj_w"], p["proj_b"], residual=res)
    out = out.reshape(B, nH, nW_, ws, ws, C).transpose(0, 1, 3, 2, 4, 5).reshape(B, pH, pW, C)
    if shifted:
        out = jnp.roll(out, shift=(ss[0], ss[1]), axis=(1, 2))
    out = out[:, :H, :W, :]
    if not fuse:
        out = x_in + out
    return out


def swin_block(x, p, num_heads, window, shift):
    # eval-mode: dropout / stochastic-depth are identity.
    B, H, W, C = x.shape
    x = shifted_window_attention_block(x, p, num_heads, window, shift)   # norm1+attn+proj+residual
    xf = x.reshape(-1, C)
    # norm2 fused into fc1, exact GELU fused into fc1's finalize, residual fused into fc2.
    h = linear_pallas(xf, p["fc1_w"], p["fc1_b"],
                      ln=(p["norm2_g"], p["norm2_b"]), act="gelu")
    x = linear_pallas(h, p["fc2_w"], p["fc2_b"], residual=xf)
    return x.reshape(B, H, W, C)


def patch_merging(x, p):
    B, H, W, C = x.shape
    x = jnp.pad(x, ((0, 0), (0, H % 2), (0, W % 2), (0, 0)))
    x0 = x[:, 0::2, 0::2, :]
    x1 = x[:, 1::2, 0::2, :]
    x2 = x[:, 0::2, 1::2, :]
    x3 = x[:, 1::2, 1::2, :]
    x = jnp.concatenate([x0, x1, x2, x3], axis=-1)          # (B, H/2, W/2, 4C)
    Bm, Hm, Wm, C4 = x.shape
    # norm fused into the (bias-free) reduction linear.
    h = linear_pallas(x.reshape(-1, C4), p["red_w"], jnp.zeros((C4 // 2,), jnp.float32),
                      ln=(p["norm_g"], p["norm_b"]))
    return h.reshape(Bm, Hm, Wm, C4 // 2)


def long_term_stage(x, params, cfg):
    """features[5:] of Swin-B: stage-3 blocks -> PatchMerging -> stage-4 blocks."""
    x = x.astype(jnp.bfloat16)      # bf16 activation stream (stage is HBM-bandwidth bound)
    for i, bp in enumerate(params["stage3"]):
        shift = (0, 0) if i % 2 == 0 else (cfg["window"] // 2, cfg["window"] // 2)
        x = swin_block(x, bp, cfg["heads3"], cfg["window"], shift)
    x = patch_merging(x, params["merge"])
    for i, bp in enumerate(params["stage4"]):
        shift = (0, 0) if i % 2 == 0 else (cfg["window"] // 2, cfg["window"] // 2)
        x = swin_block(x, bp, cfg["heads4"], cfg["window"], shift)
    return x.astype(jnp.float32)


# ----------------------------- deterministic parameter init -----------------------------

def _winit(key, shape, scale=0.02, dtype=jnp.float32):
    return (scale * jax.random.normal(key, shape, jnp.float32)).astype(dtype)


def init_block_params(key, dim, num_heads, window):
    ks = jax.random.split(key, 9)
    hidden = 4 * dim
    bf = jnp.bfloat16   # matmul weights stored bf16 (MXU-native; halves weight DMA/VMEM)
    return dict(
        norm1_g=jnp.ones((dim,), jnp.float32),
        norm1_b=jnp.zeros((dim,), jnp.float32),
        qkv_w=_winit(ks[0], (dim, 3 * dim), dtype=bf),
        qkv_b=_winit(ks[1], (3 * dim,)),
        rel_table=_winit(ks[2], ((2 * window - 1) ** 2, num_heads)),
        proj_w=_winit(ks[3], (dim, dim), dtype=bf),
        proj_b=_winit(ks[4], (dim,)),
        norm2_g=jnp.ones((dim,), jnp.float32),
        norm2_b=jnp.zeros((dim,), jnp.float32),
        fc1_w=_winit(ks[5], (dim, hidden), dtype=bf),
        fc1_b=_winit(ks[6], (hidden,)),
        fc2_w=_winit(ks[7], (hidden, dim), dtype=bf),
        fc2_b=_winit(ks[8], (dim,)),
    )


def init_params(key, dim, cfg):
    n = cfg["depth3"] + 1 + cfg["depth4"]
    ks = jax.random.split(key, n)
    stage3 = [init_block_params(ks[i], dim, cfg["heads3"], cfg["window"])
              for i in range(cfg["depth3"])]
    kmerge, _ = jax.random.split(ks[cfg["depth3"]])
    merge = dict(
        norm_g=jnp.ones((4 * dim,), jnp.float32),
        norm_b=jnp.zeros((4 * dim,), jnp.float32),
        red_w=_winit(kmerge, (4 * dim, 2 * dim), dtype=jnp.bfloat16),
    )
    stage4 = [init_block_params(ks[cfg["depth3"] + 1 + i], 2 * dim, cfg["heads4"], cfg["window"])
              for i in range(cfg["depth4"])]
    return dict(stage3=stage3, merge=merge, stage4=stage4)


# ----------------------------- main -----------------------------

if __name__ == "__main__":
    # Scaled-down but structurally identical config (real Swin-B stage3/4: dims 512/1024,
    # heads 16/32, depths 18/2, window 7; here: dims 32/64, heads 4/8, depths 2/2, window 4).
    cfg = dict(window=4, heads3=4, heads4=8, depth3=2, depth4=2)

    B, H, W, C = 2, 8, 8, 32            # layout: NHWC
    key = jax.random.PRNGKey(0)
    kx, kp = jax.random.split(key)
    x = jax.random.normal(kx, (B, H, W, C), jnp.float32)
    params = init_params(kp, C, cfg)

    fwd = jax.jit(functools.partial(long_term_stage, cfg=cfg))
    out = fwd(x, params)
    out = jax.block_until_ready(out)

    assert out.shape == (B, H // 2, W // 2, 2 * C), out.shape
    assert out.dtype == jnp.float32
    assert bool(jnp.all(jnp.isfinite(out)))
    print("KERNEL_OK")
</pallas_src>

<mosaic_0001>
module attributes {stable_mosaic.version = 11 : i64} {
  func.func @kernel(%arg0: i32, %arg1: i32, %arg2: i32, %arg3: memref<128x32xbf16, #tpu.memory_space<vmem>>, %arg4: memref<32x96xbf16, #tpu.memory_space<vmem>>, %arg5: memref<1x96xf32, #tpu.memory_space<vmem>>, %arg6: memref<1x32xf32, #tpu.memory_space<vmem>>, %arg7: memref<1x32xf32, #tpu.memory_space<vmem>>, %arg8: memref<128x96xbf16, #tpu.memory_space<vmem>>, %arg9: memref<128x96xf32, #tpu.memory_space<vmem>>) attributes {dimension_semantics = [#tpu.dimension_semantics<parallel>, #tpu.dimension_semantics<parallel>, #tpu.dimension_semantics<arbitrary>], iteration_bounds = array<i64: 1, 1, 1>, scalar_prefetch = 0 : i64, scratch_operands = 1 : i64, tpu.core_type = #tpu.core_type<tc>, window_params = [{transform_indices = @transform_0, window_bounds = array<i64: 128, 32>}, {transform_indices = @transform_1, window_bounds = array<i64: 32, 96>}, {transform_indices = @transform_2, window_bounds = array<i64: 1, 96>}, {pipeline_mode = #tpu.pipeline_mode<synchronous>, transform_indices = @transform_3, window_bounds = array<i64: 1, 32>}, {pipeline_mode = #tpu.pipeline_mode<synchronous>, transform_indices = @transform_4, window_bounds = array<i64: 1, 32>}, {transform_indices = @transform_5, window_bounds = array<i64: 128, 96>}]} {
    %c0_i32 = arith.constant 0 : i32
    %0 = arith.cmpi eq, %arg2, %c0_i32 : i32
    %1 = arith.extui %0 : i1 to i32
    %c0_i32_0 = arith.constant 0 : i32
    %2 = arith.cmpi ne, %1, %c0_i32_0 : i32
    scf.if %2 {
      %cst_19 = arith.constant 0.000000e+00 : f32
      %36 = vector.broadcast %cst_19 : f32 to vector<128x96xf32>
      %c0_20 = arith.constant 0 : index
      %c0_21 = arith.constant 0 : index
      %37 = vector.load %arg9[%c0_20, %c0_21] : memref<128x96xf32, #tpu.memory_space<vmem>>, vector<128x96xf32>
      tpu.vector_store %arg9[%c0_20, %c0_21], %36 {strides = array<i32>} : memref<128x96xf32, #tpu.memory_space<vmem>>, vector<128x96xf32>,
    } else {
    }
    %c0 = arith.constant 0 : index
    %c0_1 = arith.constant 0 : index
    %3 = vector.load %arg3[%c0, %c0_1] : memref<128x32xbf16, #tpu.memory_space<vmem>>, vector<128x32xbf16>
    %4 = arith.extf %3 : vector<128x32xbf16> to vector<128x32xf32>
    %cst = arith.constant dense<0.000000e+00> : vector<128xf32>
    %5 = vector.multi_reduction <add>, %4, %cst [1] : vector<128x32xf32> to vector<128xf32>
    %6 = vector.shape_cast %5 : vector<128xf32> to vector<128x1xf32>
    %cst_2 = arith.constant 3.200000e+01 : f32
    %7 = vector.broadcast %cst_2 : f32 to vector<128x1xf32>
    %8 = arith.divf %6, %7 : vector<128x1xf32>
    %9 = vector.broadcast %8 : vector<128x1xf32> to vector<128x32xf32>
    %10 = arith.subf %4, %9 : vector<128x32xf32>
    %11 = arith.mulf %10, %10 : vector<128x32xf32>
    %cst_3 = arith.constant dense<0.000000e+00> : vector<128xf32>
    %12 = vector.multi_reduction <add>, %11, %cst_3 [1] : vector<128x32xf32> to vector<128xf32>
    %13 = vector.shape_cast %12 : vector<128xf32> to vector<128x1xf32>
    %cst_4 = arith.constant 3.200000e+01 : f32
    %14 = vector.broadcast %cst_4 : f32 to vector<128x1xf32>
    %15 = arith.divf %13, %14 : vector<128x1xf32>
    %cst_5 = arith.constant 9.99999974E-6 : f32
    %16 = vector.broadcast %cst_5 : f32 to vector<128x1xf32>
    %17 = arith.addf %15, %16 : vector<128x1xf32>
    %18 = math.rsqrt %17 : vector<128x1xf32>
    %19 = vector.broadcast %18 : vector<128x1xf32> to vector<128x32xf32>
    %20 = arith.mulf %10, %19 : vector<128x32xf32>
    %c0_6 = arith.constant 0 : index
    %c0_7 = arith.constant 0 : index
    %21 = vector.load %arg6[%c0_6, %c0_7] : memref<1x32xf32, #tpu.memory_space<vmem>>, vector<1x32xf32>
    %22 = vector.broadcast %21 : vector<1x32xf32> to vector<128x32xf32>
    %23 = arith.mulf %20, %22 : vector<128x32xf32>
    %c0_8 = arith.constant 0 : index
    %c0_9 = arith.constant 0 : index
    %24 = vector.load %arg7[%c0_8, %c0_9] : memref<1x32xf32, #tpu.memory_space<vmem>>, vector<1x32xf32>
    %25 = vector.broadcast %24 : vector<1x32xf32> to vector<128x32xf32>
    %26 = arith.addf %23, %25 : vector<128x32xf32>
    %27 = arith.truncf %26 : vector<128x32xf32> to vector<128x32xbf16>
    %c0_10 = arith.constant 0 : index
    %c0_11 = arith.constant 0 : index
    %28 = vector.load %arg9[%c0_10, %c0_11] : memref<128x96xf32, #tpu.memory_space<vmem>>, vector<128x96xf32>
    %c0_12 = arith.constant 0 : index
    %c0_13 = arith.constant 0 : index
    %29 = vector.load %arg4[%c0_12, %c0_13] : memref<32x96xbf16, #tpu.memory_space<vmem>>, vector<32x96xbf16>
    %cst_14 = arith.constant dense<0.000000e+00> : vector<128x96xf32>
    %30 = tpu.matmul %27, %29, %cst_14 {dimension_numbers = #tpu.dot_dimension_numbers<[1], [0], [0], [1], [0, 0, 1, 1], [], []>} : vector<128x32xbf16>, vector<32x96xbf16>, vector<128x96xf32> -> vector<128x96xf32>
    %31 = arith.addf %28, %30 : vector<128x96xf32>
    %c0_15 = arith.constant 0 : index
    %c0_16 = arith.constant 0 : index
    %32 = vector.load %arg9[%c0_15, %c0_16] : memref<128x96xf32, #tpu.memory_space<vmem>>, vector<128x96xf32>
    tpu.vector_store %arg9[%c0_15, %c0_16], %31 {strides = array<i32>} : memref<128x96xf32, #tpu.memory_space<vmem>>, vector<128x96xf32>,
    %c0_i32_17 = arith.constant 0 : i32
    %33 = arith.cmpi eq, %arg2, %c0_i32_17 : i32
    %34 = arith.extui %33 : i1 to i32
    %c0_i32_18 = arith.constant 0 : i32
    %35 = arith.cmpi ne, %34, %c0_i32_18 : i32
    scf.if %35 {
      %c0_19 = arith.constant 0 : index
      %c0_20 = arith.constant 0 : index
      %36 = vector.load %arg9[%c0_19, %c0_20] : memref<128x96xf32, #tpu.memory_space<vmem>>, vector<128x96xf32>
      %c0_21 = arith.constant 0 : index
      %c0_22 = arith.constant 0 : index
      %37 = vector.load %arg5[%c0_21, %c0_22] : memref<1x96xf32, #tpu.memory_space<vmem>>, vector<1x96xf32>
      %38 = vector.broadcast %37 : vector<1x96xf32> to vector<128x96xf32>
      %39 = arith.addf %36, %38 : vector<128x96xf32>
      %40 = arith.truncf %39 : vector<128x96xf32> to vector<128x96xbf16>
      %c0_23 = arith.constant 0 : index
      %c0_24 = arith.constant 0 : index
      %41 = vector.load %arg8[%c0_23, %c0_24] : memref<128x96xbf16, #tpu.memory_space<vmem>>, vector<128x96xbf16>
      tpu.vector_store %arg8[%c0_23, %c0_24], %40 {strides = array<i32>} : memref<128x96xbf16, #tpu.memory_space<vmem>>, vector<128x96xbf16>,
    } else {
    }
    return
  }
  func.func @transform_0(%arg0: i32, %arg1: i32, %arg2: i32) -> (i32, i32) {
    %c0_i32 = arith.constant 0 : i32
    return %arg0, %arg2 : i32, i32
  }
  func.func @transform_1(%arg0: i32, %arg1: i32, %arg2: i32) -> (i32, i32) {
    %c0_i32 = arith.constant 0 : i32
    return %arg2, %arg1 : i32, i32
  }
  func.func @transform_2(%arg0: i32, %arg1: i32, %arg2: i32) -> (i32, i32) {
    %c0_i32 = arith.constant 0 : i32
    %c0_i32_0 = arith.constant 0 : i32
    return %c0_i32, %arg1 : i32, i32
  }
  func.func @transform_3(%arg0: i32, %arg1: i32, %arg2: i32) -> (i32, i32) {
    %c0_i32 = arith.constant 0 : i32
    %c0_i32_0 = arith.constant 0 : i32
    %c0_i32_1 = arith.constant 0 : i32
    return %c0_i32, %c0_i32_0 : i32, i32
  }
  func.func @transform_4(%arg0: i32, %arg1: i32, %arg2: i32) -> (i32, i32) {
    %c0_i32 = arith.constant 0 : i32
    %c0_i32_0 = arith.constant 0 : i32
    %c0_i32_1 = arith.constant 0 : i32
    return %c0_i32, %c0_i32_0 : i32, i32
  }
  func.func @transform_5(%arg0: i32, %arg1: i32, %arg2: i32) -> (i32, i32) {
    %c0_i32 = arith.constant 0 : i32
    return %arg0, %arg1 : i32, i32
  }
}

module attributes {stable_mosaic.version = 11 : i64} {
  func.func @kernel(%arg0: i32, %arg1: memref<4x16x96xbf16, #tpu.memory_space<vmem>>, %arg2: memref<4x16x16xf32, #tpu.memory_space<vmem>>, %arg3: memref<4x16x32xbf16, #tpu.memory_space<vmem>>) attributes {dimension_semantics = [#tpu.dimension_semantics<parallel>], iteration_bounds = array<i64: 2>, scalar_prefetch = 0 : i64, scratch_operands = 0 : i64, tpu.core_type = #tpu.core_type<tc>, window_params = [{transform_indices = @transform_0, window_bounds = array<i64: 4, 16, 96>}, {pipeline_mode = #tpu.pipeline_mode<synchronous>, transform_indices = @transform_1, window_bounds = array<i64: 4, 16, 16>}, {transform_indices = @transform_2, window_bounds = array<i64: 4, 16, 32>}]} {
    %c0 = arith.constant 0 : index
    %c0_0 = arith.constant 0 : index
    %c0_1 = arith.constant 0 : index
    %0 = vector.load %arg1[%c0, %c0_0, %c0_1] : memref<4x16x96xbf16, #tpu.memory_space<vmem>>, vector<4x16x8xbf16>
    %c0_2 = arith.constant 0 : index
    %c0_3 = arith.constant 0 : index
    %c32 = arith.constant 32 : index
    %1 = vector.load %arg1[%c0_2, %c0_3, %c32] : memref<4x16x96xbf16, #tpu.memory_space<vmem>>, vector<4x16x8xbf16>
    %c0_4 = arith.constant 0 : index
    %c0_5 = arith.constant 0 : index
    %c64 = arith.constant 64 : index
    %2 = vector.load %arg1[%c0_4, %c0_5, %c64] : memref<4x16x96xbf16, #tpu.memory_space<vmem>>, vector<4x16x8xbf16>
    "tpu.trace_start"() <{level = 10 : i32, message = "wqd,wkd->wqk"}> : () -> ()
    %cst = arith.constant dense<0.000000e+00> : vector<4x16x16xf32>
    %3 = tpu.matmul %0, %1, %cst {dimension_numbers = #tpu.dot_dimension_numbers<[2], [2], [1], [1], [0, 0, 0, 1, 1, 1], [0], [0]>} : vector<4x16x8xbf16>, vector<4x16x8xbf16>, vector<4x16x16xf32> -> vector<4x16x16xf32>
    "tpu.trace_stop"() : () -> ()
    %cst_6 = arith.constant 0.353553385 : f32
    %4 = vector.broadcast %cst_6 : f32 to vector<4x16x16xf32>
    %5 = arith.mulf %3, %4 : vector<4x16x16xf32>
    %c0_7 = arith.constant 0 : index
    %c0_8 = arith.constant 0 : index
    %c0_9 = arith.constant 0 : index
    %6 = vector.load %arg2[%c0_7, %c0_8, %c0_9] : memref<4x16x16xf32, #tpu.memory_space<vmem>>, vector<1x16x16xf32>
    %7 = vector.shape_cast %6 : vector<1x16x16xf32> to vector<16x16xf32>
    %8 = vector.shape_cast %7 : vector<16x16xf32> to vector<1x16x16xf32>
    %9 = vector.broadcast %8 : vector<1x16x16xf32> to vector<4x16x16xf32>
    %10 = arith.addf %5, %9 : vector<4x16x16xf32>
    %cst_10 = arith.constant dense<0xFF800000> : vector<4x16xf32>
    %11 = vector.multi_reduction <maximumf>, %10, %cst_10 [2] : vector<4x16x16xf32> to vector<4x16xf32>
    %12 = vector.shape_cast %11 : vector<4x16xf32> to vector<4x16x1xf32>
    %13 = vector.broadcast %12 : vector<4x16x1xf32> to vector<4x16x16xf32>
    %14 = arith.subf %10, %13 : vector<4x16x16xf32>
    %15 = math.exp %14 : vector<4x16x16xf32>
    %cst_11 = arith.constant dense<0.000000e+00> : vector<4x16xf32>
    %16 = vector.multi_reduction <add>, %15, %cst_11 [2] : vector<4x16x16xf32> to vector<4x16xf32>
    %17 = vector.shape_cast %16 : vector<4x16xf32> to vector<4x16x1xf32>
    %18 = tpu.reciprocal %17 {approx = true} : vector<4x16x1xf32> -> vector<4x16x1xf32>
    %19 = vector.broadcast %18 : vector<4x16x1xf32> to vector<4x16x16xf32>
    %20 = arith.mulf %15, %19 : vector<4x16x16xf32>
    %21 = arith.truncf %20 : vector<4x16x16xf32> to vector<4x16x16xbf16>
    "tpu.trace_start"() <{level = 10 : i32, message = "wqk,wkd->wqd"}> : () -> ()
    %cst_12 = arith.constant dense<0.000000e+00> : vector<4x16x8xf32>
    %22 = tpu.matmul %21, %2, %cst_12 {dimension_numbers = #tpu.dot_dimension_numbers<[2], [1], [1], [2], [0, 0, 0, 1, 1, 2], [0], [0]>} : vector<4x16x16xbf16>, vector<4x16x8xbf16>, vector<4x16x8xf32> -> vector<4x16x8xf32>
    "tpu.trace_stop"() : () -> ()
    %c0_13 = arith.constant 0 : index
    %c0_14 = arith.constant 0 : index
    %c8 = arith.constant 8 : index
    %23 = vector.load %arg1[%c0_13, %c0_14, %c8] : memref<4x16x96xbf16, #tpu.memory_space<vmem>>, vector<4x16x8xbf16>
    %c0_15 = arith.constant 0 : index
    %c0_16 = arith.constant 0 : index
    %c40 = arith.constant 40 : index
    %24 = vector.load %arg1[%c0_15, %c0_16, %c40] : memref<4x16x96xbf16, #tpu.memory_space<vmem>>, vector<4x16x8xbf16>
    %c0_17 = arith.constant 0 : index
    %c0_18 = arith.constant 0 : index
    %c72 = arith.constant 72 : index
    %25 = vector.load %arg1[%c0_17, %c0_18, %c72] : memref<4x16x96xbf16, #tpu.memory_space<vmem>>, vector<4x16x8xbf16>
    "tpu.trace_start"() <{level = 10 : i32, message = "wqd,wkd->wqk"}> : () -> ()
    %cst_19 = arith.constant dense<0.000000e+00> : vector<4x16x16xf32>
    %26 = tpu.matmul %23, %24, %cst_19 {dimension_numbers = #tpu.dot_dimension_numbers<[2], [2], [1], [1], [0, 0, 0, 1, 1, 1], [0], [0]>} : vector<4x16x8xbf16>, vector<4x16x8xbf16>, vector<4x16x16xf32> -> vector<4x16x16xf32>
    "tpu.trace_stop"() : () -> ()
    %cst_20 = arith.constant 0.353553385 : f32
    %27 = vector.broadcast %cst_20 : f32 to vector<4x16x16xf32>
    %28 = arith.mulf %26, %27 : vector<4x16x16xf32>
    %c1 = arith.constant 1 : index
    %c0_21 = arith.constant 0 : index
    %c0_22 = arith.constant 0 : index
    %29 = vector.load %arg2[%c1, %c0_21, %c0_22] : memref<4x16x16xf32, #tpu.memory_space<vmem>>, vector<1x16x16xf32>
    %30 = vector.shape_cast %29 : vector<1x16x16xf32> to vector<16x16xf32>
    %31 = vector.shape_cast %30 : vector<16x16xf32> to vector<1x16x16xf32>
    %32 = vector.broadcast %31 : vector<1x16x16xf32> to vector<4x16x16xf32>
    %33 = arith.addf %28, %32 : vector<4x16x16xf32>
    %cst_23 = arith.constant dense<0xFF800000> : vector<4x16xf32>
    %34 = vector.multi_reduction <maximumf>, %33, %cst_23 [2] : vector<4x16x16xf32> to vector<4x16xf32>
    %35 = vector.shape_cast %34 : vector<4x16xf32> to vector<4x16x1xf32>
    %36 = vector.broadcast %35 : vector<4x16x1xf32> to vector<4x16x16xf32>
    %37 = arith.subf %33, %36 : vector<4x16x16xf32>
    %38 = math.exp %37 : vector<4x16x16xf32>
    %cst_24 = arith.constant dense<0.000000e+00> : vector<4x16xf32>
    %39 = vector.multi_reduction <add>, %38, %cst_24 [2] : vector<4x16x16xf32> to vector<4x16xf32>
    %40 = vector.shape_cast %39 : vector<4x16xf32> to vector<4x16x1xf32>
    %41 = tpu.reciprocal %40 {approx = true} : vector<4x16x1xf32> -> vector<4x16x1xf32>
    %42 = vector.broadcast %41 : vector<4x16x1xf32> to vector<4x16x16xf32>
    %43 = arith.mulf %38, %42 : vector<4x16x16xf32>
    %44 = arith.truncf %43 : vector<4x16x16xf32> to vector<4x16x16xbf16>
    "tpu.trace_start"() <{level = 10 : i32, message = "wqk,wkd->wqd"}> : () -> ()
    %cst_25 = arith.constant dense<0.000000e+00> : vector<4x16x8xf32>
    %45 = tpu.matmul %44, %25, %cst_25 {dimension_numbers = #tpu.dot_dimension_numbers<[2], [1], [1], [2], [0, 0, 0, 1, 1, 2], [0], [0]>} : vector<4x16x16xbf16>, vector<4x16x8xbf16>, vector<4x16x8xf32> -> vector<4x16x8xf32>
    "tpu.trace_stop"() : () -> ()
    %c0_26 = arith.constant 0 : index
    %c0_27 = arith.constant 0 : index
    %c16 = arith.constant 16 : index
    %46 = vector.load %arg1[%c0_26, %c0_27, %c16] : memref<4x16x96xbf16, #tpu.memory_space<vmem>>, vector<4x16x8xbf16>
    %c0_28 = arith.constant 0 : index
    %c0_29 = arith.constant 0 : index
    %c48 = arith.constant 48 : index
    %47 = vector.load %arg1[%c0_28, %c0_29, %c48] : memref<4x16x96xbf16, #tpu.memory_space<vmem>>, vector<4x16x8xbf16>
    %c0_30 = arith.constant 0 : index
    %c0_31 = arith.constant 0 : index
    %c80 = arith.constant 80 : index
    %48 = vector.load %arg1[%c0_30, %c0_31, %c80] : memref<4x16x96xbf16, #tpu.memory_space<vmem>>, vector<4x16x8xbf16>
    "tpu.trace_start"() <{level = 10 : i32, message = "wqd,wkd->wqk"}> : () -> ()
    %cst_32 = arith.constant dense<0.000000e+00> : vector<4x16x16xf32>
    %49 = tpu.matmul %46, %47, %cst_32 {dimension_numbers = #tpu.dot_dimension_numbers<[2], [2], [1], [1], [0, 0, 0, 1, 1, 1], [0], [0]>} : vector<4x16x8xbf16>, vector<4x16x8xbf16>, vector<4x16x16xf32> -> vector<4x16x16xf32>
    "tpu.trace_stop"() : () -> ()
    %cst_33 = arith.constant 0.353553385 : f32
    %50 = vector.broadcast %cst_33 : f32 to vector<4x16x16xf32>
    %51 = arith.mulf %49, %50 : vector<4x16x16xf32>
    %c2 = arith.constant 2 : index
    %c0_34 = arith.constant 0 : index
    %c0_35 = arith.constant 0 : index
    %52 = vector.load %arg2[%c2, %c0_34, %c0_35] : memref<4x16x16xf32, #tpu.memory_space<vmem>>, vector<1x16x16xf32>
    %53 = vector.shape_cast %52 : vector<1x16x16xf32> to vector<16x16xf32>
    %54 = vector.shape_cast %53 : vector<16x16xf32> to vector<1x16x16xf32>
    %55 = vector.broadcast %54 : vector<1x16x16xf32> to vector<4x16x16xf32>
    %56 = arith.addf %51, %55 : vector<4x16x16xf32>
    %cst_36 = arith.constant dense<0xFF800000> : vector<4x16xf32>
    %57 = vector.multi_reduction <maximumf>, %56, %cst_36 [2] : vector<4x16x16xf32> to vector<4x16xf32>
    %58 = vector.shape_cast %57 : vector<4x16xf32> to vector<4x16x1xf32>
    %59 = vector.broadcast %58 : vector<4x16x1xf32> to vector<4x16x16xf32>
    %60 = arith.subf %56, %59 : vector<4x16x16xf32>
    %61 = math.exp %60 : vector<4x16x16xf32>
    %cst_37 = arith.constant dense<0.000000e+00> : vector<4x16xf32>
    %62 = vector.multi_reduction <add>, %61, %cst_37 [2] : vector<4x16x16xf32> to vector<4x16xf32>
    %63 = vector.shape_cast %62 : vector<4x16xf32> to vector<4x16x1xf32>
    %64 = tpu.reciprocal %63 {approx = true} : vector<4x16x1xf32> -> vector<4x16x1xf32>
    %65 = vector.broadcast %64 : vector<4x16x1xf32> to vector<4x16x16xf32>
    %66 = arith.mulf %61, %65 : vector<4x16x16xf32>
    %67 = arith.truncf %66 : vector<4x16x16xf32> to vector<4x16x16xbf16>
    "tpu.trace_start"() <{level = 10 : i32, message = "wqk,wkd->wqd"}> : () -> ()
    %cst_38 = arith.constant dense<0.000000e+00> : vector<4x16x8xf32>
    %68 = tpu.matmul %67, %48, %cst_38 {dimension_numbers = #tpu.dot_dimension_numbers<[2], [1], [1], [2], [0, 0, 0, 1, 1, 2], [0], [0]>} : vector<4x16x16xbf16>, vector<4x16x8xbf16>, vector<4x16x8xf32> -> vector<4x16x8xf32>
    "tpu.trace_stop"() : () -> ()
    %c0_39 = arith.constant 0 : index
    %c0_40 = arith.constant 0 : index
    %c24 = arith.constant 24 : index
    %69 = vector.load %arg1[%c0_39, %c0_40, %c24] : memref<4x16x96xbf16, #tpu.memory_space<vmem>>, vector<4x16x8xbf16>
    %c0_41 = arith.constant 0 : index
    %c0_42 = arith.constant 0 : index
    %c56 = arith.constant 56 : index
    %70 = vector.load %arg1[%c0_41, %c0_42, %c56] : memref<4x16x96xbf16, #tpu.memory_space<vmem>>, vector<4x16x8xbf16>
    %c0_43 = arith.constant 0 : index
    %c0_44 = arith.constant 0 : index
    %c88 = arith.constant 88 : index
    %71 = vector.load %arg1[%c0_43, %c0_44, %c88] : memref<4x16x96xbf16, #tpu.memory_space<vmem>>, vector<4x16x8xbf16>
    "tpu.trace_start"() <{level = 10 : i32, message = "wqd,wkd->wqk"}> : () -> ()
    %cst_45 = arith.constant dense<0.000000e+00> : vector<4x16x16xf32>
    %72 = tpu.matmul %69, %70, %cst_45 {dimension_numbers = #tpu.dot_dimension_numbers<[2], [2], [1], [1], [0, 0, 0, 1, 1, 1], [0], [0]>} : vector<4x16x8xbf16>, vector<4x16x8xbf16>, vector<4x16x16xf32> -> vector<4x16x16xf32>
    "tpu.trace_stop"() : () -> ()
    %cst_46 = arith.constant 0.353553385 : f32
    %73 = vector.broadcast %cst_46 : f32 to vector<4x16x16xf32>
    %74 = arith.mulf %72, %73 : vector<4x16x16xf32>
    %c3 = arith.constant 3 : index
    %c0_47 = arith.constant 0 : index
    %c0_48 = arith.constant 0 : index
    %75 = vector.load %arg2[%c3, %c0_47, %c0_48] : memref<4x16x16xf32, #tpu.memory_space<vmem>>, vector<1x16x16xf32>
    %76 = vector.shape_cast %75 : vector<1x16x16xf32> to vector<16x16xf32>
    %77 = vector.shape_cast %76 : vector<16x16xf32> to vector<1x16x16xf32>
    %78 = vector.broadcast %77 : vector<1x16x16xf32> to vector<4x16x16xf32>
    %79 = arith.addf %74, %78 : vector<4x16x16xf32>
    %cst_49 = arith.constant dense<0xFF800000> : vector<4x16xf32>
    %80 = vector.multi_reduction <maximumf>, %79, %cst_49 [2] : vector<4x16x16xf32> to vector<4x16xf32>
    %81 = vector.shape_cast %80 : vector<4x16xf32> to vector<4x16x1xf32>
    %82 = vector.broadcast %81 : vector<4x16x1xf32> to vector<4x16x16xf32>
    %83 = arith.subf %79, %82 : vector<4x16x16xf32>
    %84 = math.exp %83 : vector<4x16x16xf32>
    %cst_50 = arith.constant dense<0.000000e+00> : vector<4x16xf32>
    %85 = vector.multi_reduction <add>, %84, %cst_50 [2] : vector<4x16x16xf32> to vector<4x16xf32>
    %86 = vector.shape_cast %85 : vector<4x16xf32> to vector<4x16x1xf32>
    %87 = tpu.reciprocal %86 {approx = true} : vector<4x16x1xf32> -> vector<4x16x1xf32>
    %88 = vector.broadcast %87 : vector<4x16x1xf32> to vector<4x16x16xf32>
    %89 = arith.mulf %84, %88 : vector<4x16x16xf32>
    %90 = arith.truncf %89 : vector<4x16x16xf32> to vector<4x16x16xbf16>
    "tpu.trace_start"() <{level = 10 : i32, message = "wqk,wkd->wqd"}> : () -> ()
    %cst_51 = arith.constant dense<0.000000e+00> : vector<4x16x8xf32>
    %91 = tpu.matmul %90, %71, %cst_51 {dimension_numbers = #tpu.dot_dimension_numbers<[2], [1], [1], [2], [0, 0, 0, 1, 1, 2], [0], [0]>} : vector<4x16x16xbf16>, vector<4x16x8xbf16>, vector<4x16x8xf32> -> vector<4x16x8xf32>
    "tpu.trace_stop"() : () -> ()
    %92 = tpu.concatenate %22, %45, %68, %91 in 2 : vector<4x16x8xf32>, vector<4x16x8xf32>, vector<4x16x8xf32>, vector<4x16x8xf32> -> vector<4x16x32xf32>
    %93 = arith.truncf %92 : vector<4x16x32xf32> to vector<4x16x32xbf16>
    %c0_52 = arith.constant 0 : index
    %c0_53 = arith.constant 0 : index
    %c0_54 = arith.constant 0 : index
    %94 = vector.load %arg3[%c0_52, %c0_53, %c0_54] : memref<4x16x32xbf16, #tpu.memory_space<vmem>>, vector<4x16x32xbf16>
    tpu.vector_store %arg3[%c0_52, %c0_53, %c0_54], %93 {strides = array<i32>} : memref<4x16x32xbf16, #tpu.memory_space<vmem>>, vector<4x16x32xbf16>,
    return
  }
  func.func @transform_0(%arg0: i32) -> (i32, i32, i32) {
    %c0_i32 = arith.constant 0 : i32
    %c0_i32_0 = arith.constant 0 : i32
    %c0_i32_1 = arith.constant 0 : i32
    return %arg0, %c0_i32, %c0_i32_0 : i32, i32, i32
  }
  func.func @transform_1(%arg0: i32) -> (i32, i32, i32) {
    %c0_i32 = arith.constant 0 : i32
    %c0_i32_0 = arith.constant 0 : i32
    %c0_i32_1 = arith.constant 0 : i32
    %c0_i32_2 = arith.constant 0 : i32
    return %c0_i32, %c0_i32_0, %c0_i32_1 : i32, i32, i32
  }
  func.func @transform_2(%arg0: i32) -> (i32, i32, i32) {
    %c0_i32 = arith.constant 0 : i32
    %c0_i32_0 = arith.constant 0 : i32
    %c0_i32_1 = arith.constant 0 : i32
    return %arg0, %c0_i32, %c0_i32_0 : i32, i32, i32
  }
}

module attributes {stable_mosaic.version = 11 : i64} {
  func.func @kernel(%arg0: i32, %arg1: i32, %arg2: i32, %arg3: memref<128x32xbf16, #tpu.memory_space<vmem>>, %arg4: memref<32x32xbf16, #tpu.memory_space<vmem>>, %arg5: memref<1x32xf32, #tpu.memory_space<vmem>>, %arg6: memref<128x32xbf16, #tpu.memory_space<vmem>>, %arg7: memref<128x32xbf16, #tpu.memory_space<vmem>>, %arg8: memref<128x32xf32, #tpu.memory_space<vmem>>) attributes {dimension_semantics = [#tpu.dimension_semantics<parallel>, #tpu.dimension_semantics<parallel>, #tpu.dimension_semantics<arbitrary>], iteration_bounds = array<i64: 1, 1, 1>, scalar_prefetch = 0 : i64, scratch_operands = 1 : i64, tpu.core_type = #tpu.core_type<tc>, window_params = [{transform_indices = @transform_0, window_bounds = array<i64: 128, 32>}, {transform_indices = @transform_1, window_bounds = array<i64: 32, 32>}, {transform_indices = @transform_2, window_bounds = array<i64: 1, 32>}, {transform_indices = @transform_3, window_bounds = array<i64: 128, 32>}, {transform_indices = @transform_4, window_bounds = array<i64: 128, 32>}]} {
    %c0_i32 = arith.constant 0 : i32
    %0 = arith.cmpi eq, %arg2, %c0_i32 : i32
    %1 = arith.extui %0 : i1 to i32
    %c0_i32_0 = arith.constant 0 : i32
    %2 = arith.cmpi ne, %1, %c0_i32_0 : i32
    scf.if %2 {
      %cst_10 = arith.constant 0.000000e+00 : f32
      %12 = vector.broadcast %cst_10 : f32 to vector<128x32xf32>
      %c0_11 = arith.constant 0 : index
      %c0_12 = arith.constant 0 : index
      %13 = vector.load %arg8[%c0_11, %c0_12] : memref<128x32xf32, #tpu.memory_space<vmem>>, vector<128x32xf32>
      tpu.vector_store %arg8[%c0_11, %c0_12], %12 {strides = array<i32>} : memref<128x32xf32, #tpu.memory_space<vmem>>, vector<128x32xf32>,
    } else {
    }
    %c0 = arith.constant 0 : index
    %c0_1 = arith.constant 0 : index
    %3 = vector.load %arg3[%c0, %c0_1] : memref<128x32xbf16, #tpu.memory_space<vmem>>, vector<128x32xbf16>
    %c0_2 = arith.constant 0 : index
    %c0_3 = arith.constant 0 : index
    %4 = vector.load %arg8[%c0_2, %c0_3] : memref<128x32xf32, #tpu.memory_space<vmem>>, vector<128x32xf32>
    %c0_4 = arith.constant 0 : index
    %c0_5 = arith.constant 0 : index
    %5 = vector.load %arg4[%c0_4, %c0_5] : memref<32x32xbf16, #tpu.memory_space<vmem>>, vector<32x32xbf16>
    %cst = arith.constant dense<0.000000e+00> : vector<128x32xf32>
    %6 = tpu.matmul %3, %5, %cst {dimension_numbers = #tpu.dot_dimension_numbers<[1], [0], [0], [1], [0, 0, 1, 1], [], []>} : vector<128x32xbf16>, vector<32x32xbf16>, vector<128x32xf32> -> vector<128x32xf32>
    %7 = arith.addf %4, %6 : vector<128x32xf32>
    %c0_6 = arith.constant 0 : index
    %c0_7 = arith.constant 0 : index
    %8 = vector.load %arg8[%c0_6, %c0_7] : memref<128x32xf32, #tpu.memory_space<vmem>>, vector<128x32xf32>
    tpu.vector_store %arg8[%c0_6, %c0_7], %7 {strides = array<i32>} : memref<128x32xf32, #tpu.memory_space<vmem>>, vector<128x32xf32>,
    %c0_i32_8 = arith.constant 0 : i32
    %9 = arith.cmpi eq, %arg2, %c0_i32_8 : i32
    %10 = arith.extui %9 : i1 to i32
    %c0_i32_9 = arith.constant 0 : i32
    %11 = arith.cmpi ne, %10, %c0_i32_9 : i32
    scf.if %11 {
      %c0_10 = arith.constant 0 : index
      %c0_11 = arith.constant 0 : index
      %12 = vector.load %arg8[%c0_10, %c0_11] : memref<128x32xf32, #tpu.memory_space<vmem>>, vector<128x32xf32>
      %c0_12 = arith.constant 0 : index
      %c0_13 = arith.constant 0 : index
      %13 = vector.load %arg5[%c0_12, %c0_13] : memref<1x32xf32, #tpu.memory_space<vmem>>, vector<1x32xf32>
      %14 = vector.broadcast %13 : vector<1x32xf32> to vector<128x32xf32>
      %15 = arith.addf %12, %14 : vector<128x32xf32>
      %c0_14 = arith.constant 0 : index
      %c0_15 = arith.constant 0 : index
      %16 = vector.load %arg6[%c0_14, %c0_15] : memref<128x32xbf16, #tpu.memory_space<vmem>>, vector<128x32xbf16>
      %17 = arith.extf %16 : vector<128x32xbf16> to vector<128x32xf32>
      %18 = arith.addf %15, %17 : vector<128x32xf32>
      %19 = arith.truncf %18 : vector<128x32xf32> to vector<128x32xbf16>
      %c0_16 = arith.constant 0 : index
      %c0_17 = arith.constant 0 : index
      %20 = vector.load %arg7[%c0_16, %c0_17] : memref<128x32xbf16, #tpu.memory_space<vmem>>, vector<128x32xbf16>
      tpu.vector_store %arg7[%c0_16, %c0_17], %19 {strides = array<i32>} : memref<128x32xbf16, #tpu.memory_space<vmem>>, vector<128x32xbf16>,
    } else {
    }
    return
  }
  func.func @transform_0(%arg0: i32, %arg1: i32, %arg2: i32) -> (i32, i32) {
    %c0_i32 = arith.constant 0 : i32
    return %arg0, %arg2 : i32, i32
  }
  func.func @transform_1(%arg0: i32, %arg1: i32, %arg2: i32) -> (i32, i32) {
    %c0_i32 = arith.constant 0 : i32
    return %arg2, %arg1 : i32, i32
  }
  func.func @transform_2(%arg0: i32, %arg1: i32, %arg2: i32) -> (i32, i32) {
    %c0_i32 = arith.constant 0 : i32
    %c0_i32_0 = arith.constant 0 : i32
    return %c0_i32, %arg1 : i32, i32
  }
  func.func @transform_3(%arg0: i32, %arg1: i32, %arg2: i32) -> (i32, i32) {
    %c0_i32 = arith.constant 0 : i32
    return %arg0, %arg1 : i32, i32
  }
  func.func @transform_4(%arg0: i32, %arg1: i32, %arg2: i32) -> (i32, i32) {
    %c0_i32 = arith.constant 0 : i32
    return %arg0, %arg1 : i32, i32
  }
}

module attributes {stable_mosaic.version = 11 : i64} {
  func.func @kernel(%arg0: i32, %arg1: i32, %arg2: i32, %arg3: memref<128x32xbf16, #tpu.memory_space<vmem>>, %arg4: memref<32x128xbf16, #tpu.memory_space<vmem>>, %arg5: memref<1x128xf32, #tpu.memory_space<vmem>>, %arg6: memref<1x32xf32, #tpu.memory_space<vmem>>, %arg7: memref<1x32xf32, #tpu.memory_space<vmem>>, %arg8: memref<128x128xbf16, #tpu.memory_space<vmem>>, %arg9: memref<128x128xf32, #tpu.memory_space<vmem>>) attributes {dimension_semantics = [#tpu.dimension_semantics<parallel>, #tpu.dimension_semantics<parallel>, #tpu.dimension_semantics<arbitrary>], iteration_bounds = array<i64: 1, 1, 1>, scalar_prefetch = 0 : i64, scratch_operands = 1 : i64, tpu.core_type = #tpu.core_type<tc>, window_params = [{transform_indices = @transform_0, window_bounds = array<i64: 128, 32>}, {transform_indices = @transform_1, window_bounds = array<i64: 32, 128>}, {transform_indices = @transform_2, window_bounds = array<i64: 1, 128>}, {pipeline_mode = #tpu.pipeline_mode<synchronous>, transform_indices = @transform_3, window_bounds = array<i64: 1, 32>}, {pipeline_mode = #tpu.pipeline_mode<synchronous>, transform_indices = @transform_4, window_bounds = array<i64: 1, 32>}, {transform_indices = @transform_5, window_bounds = array<i64: 128, 128>}]} {
    %c0_i32 = arith.constant 0 : i32
    %0 = arith.cmpi eq, %arg2, %c0_i32 : i32
    %1 = arith.extui %0 : i1 to i32
    %c0_i32_0 = arith.constant 0 : i32
    %2 = arith.cmpi ne, %1, %c0_i32_0 : i32
    scf.if %2 {
      %cst_19 = arith.constant 0.000000e+00 : f32
      %36 = vector.broadcast %cst_19 : f32 to vector<128x128xf32>
      %c0_20 = arith.constant 0 : index
      %c0_21 = arith.constant 0 : index
      %37 = vector.load %arg9[%c0_20, %c0_21] : memref<128x128xf32, #tpu.memory_space<vmem>>, vector<128x128xf32>
      tpu.vector_store %arg9[%c0_20, %c0_21], %36 {strides = array<i32>} : memref<128x128xf32, #tpu.memory_space<vmem>>, vector<128x128xf32>,
    } else {
    }
    %c0 = arith.constant 0 : index
    %c0_1 = arith.constant 0 : index
    %3 = vector.load %arg3[%c0, %c0_1] : memref<128x32xbf16, #tpu.memory_space<vmem>>, vector<128x32xbf16>
    %4 = arith.extf %3 : vector<128x32xbf16> to vector<128x32xf32>
    %cst = arith.constant dense<0.000000e+00> : vector<128xf32>
    %5 = vector.multi_reduction <add>, %4, %cst [1] : vector<128x32xf32> to vector<128xf32>
    %6 = vector.shape_cast %5 : vector<128xf32> to vector<128x1xf32>
    %cst_2 = arith.constant 3.200000e+01 : f32
    %7 = vector.broadcast %cst_2 : f32 to vector<128x1xf32>
    %8 = arith.divf %6, %7 : vector<128x1xf32>
    %9 = vector.broadcast %8 : vector<128x1xf32> to vector<128x32xf32>
    %10 = arith.subf %4, %9 : vector<128x32xf32>
    %11 = arith.mulf %10, %10 : vector<128x32xf32>
    %cst_3 = arith.constant dense<0.000000e+00> : vector<128xf32>
    %12 = vector.multi_reduction <add>, %11, %cst_3 [1] : vector<128x32xf32> to vector<128xf32>
    %13 = vector.shape_cast %12 : vector<128xf32> to vector<128x1xf32>
    %cst_4 = arith.constant 3.200000e+01 : f32
    %14 = vector.broadcast %cst_4 : f32 to vector<128x1xf32>
    %15 = arith.divf %13, %14 : vector<128x1xf32>
    %cst_5 = arith.constant 9.99999974E-6 : f32
    %16 = vector.broadcast %cst_5 : f32 to vector<128x1xf32>
    %17 = arith.addf %15, %16 : vector<128x1xf32>
    %18 = math.rsqrt %17 : vector<128x1xf32>
    %19 = vector.broadcast %18 : vector<128x1xf32> to vector<128x32xf32>
    %20 = arith.mulf %10, %19 : vector<128x32xf32>
    %c0_6 = arith.constant 0 : index
    %c0_7 = arith.constant 0 : index
    %21 = vector.load %arg6[%c0_6, %c0_7] : memref<1x32xf32, #tpu.memory_space<vmem>>, vector<1x32xf32>
    %22 = vector.broadcast %21 : vector<1x32xf32> to vector<128x32xf32>
    %23 = arith.mulf %20, %22 : vector<128x32xf32>
    %c0_8 = arith.constant 0 : index
    %c0_9 = arith.constant 0 : index
    %24 = vector.load %arg7[%c0_8, %c0_9] : memref<1x32xf32, #tpu.memory_space<vmem>>, vector<1x32xf32>
    %25 = vector.broadcast %24 : vector<1x32xf32> to vector<128x32xf32>
    %26 = arith.addf %23, %25 : vector<128x32xf32>
    %27 = arith.truncf %26 : vector<128x32xf32> to vector<128x32xbf16>
    %c0_10 = arith.constant 0 : index
    %c0_11 = arith.constant 0 : index
    %28 = vector.load %arg9[%c0_10, %c0_11] : memref<128x128xf32, #tpu.memory_space<vmem>>, vector<128x128xf32>
    %c0_12 = arith.constant 0 : index
    %c0_13 = arith.constant 0 : index
    %29 = vector.load %arg4[%c0_12, %c0_13] : memref<32x128xbf16, #tpu.memory_space<vmem>>, vector<32x128xbf16>
    %cst_14 = arith.constant dense<0.000000e+00> : vector<128x128xf32>
    %30 = tpu.matmul %27, %29, %cst_14 {dimension_numbers = #tpu.dot_dimension_numbers<[1], [0], [0], [1], [0, 0, 1, 1], [], []>} : vector<128x32xbf16>, vector<32x128xbf16>, vector<128x128xf32> -> vector<128x128xf32>
    %31 = arith.addf %28, %30 : vector<128x128xf32>
    %c0_15 = arith.constant 0 : index
    %c0_16 = arith.constant 0 : index
    %32 = vector.load %arg9[%c0_15, %c0_16] : memref<128x128xf32, #tpu.memory_space<vmem>>, vector<128x128xf32>
    tpu.vector_store %arg9[%c0_15, %c0_16], %31 {strides = array<i32>} : memref<128x128xf32, #tpu.memory_space<vmem>>, vector<128x128xf32>,
    %c0_i32_17 = arith.constant 0 : i32
    %33 = arith.cmpi eq, %arg2, %c0_i32_17 : i32
    %34 = arith.extui %33 : i1 to i32
    %c0_i32_18 = arith.constant 0 : i32
    %35 = arith.cmpi ne, %34, %c0_i32_18 : i32
    scf.if %35 {
      %c0_19 = arith.constant 0 : index
      %c0_20 = arith.constant 0 : index
      %36 = vector.load %arg9[%c0_19, %c0_20] : memref<128x128xf32, #tpu.memory_space<vmem>>, vector<128x128xf32>
      %c0_21 = arith.constant 0 : index
      %c0_22 = arith.constant 0 : index
      %37 = vector.load %arg5[%c0_21, %c0_22] : memref<1x128xf32, #tpu.memory_space<vmem>>, vector<1x128xf32>
      %38 = vector.broadcast %37 : vector<1x128xf32> to vector<128x128xf32>
      %39 = arith.addf %36, %38 : vector<128x128xf32>
      %cst_23 = arith.constant 5.000000e-01 : f32
      %40 = vector.broadcast %cst_23 : f32 to vector<128x128xf32>
      %41 = arith.mulf %40, %39 : vector<128x128xf32>
      %cst_24 = arith.constant 0.707106769 : f32
      %42 = vector.broadcast %cst_24 : f32 to vector<128x128xf32>
      %43 = arith.mulf %39, %42 : vector<128x128xf32>
      %44 = math.absf %43 : vector<128x128xf32>
      %cst_25 = arith.constant 0.327591091 : f32
      %45 = vector.broadcast %cst_25 : f32 to vector<128x128xf32>
      %46 = arith.mulf %45, %44 : vector<128x128xf32>
      %cst_26 = arith.constant 1.000000e+00 : f32
      %47 = vector.broadcast %cst_26 : f32 to vector<128x128xf32>
      %48 = arith.addf %47, %46 : vector<128x128xf32>
      %cst_27 = arith.constant 1.000000e+00 : f32
      %49 = vector.broadcast %cst_27 : f32 to vector<128x128xf32>
      %50 = arith.divf %49, %48 : vector<128x128xf32>
      %cst_28 = arith.constant 1.06140542 : f32
      %51 = vector.broadcast %cst_28 : f32 to vector<128x128xf32>
      %52 = arith.mulf %51, %50 : vector<128x128xf32>
      %cst_29 = arith.constant -1.45315206 : f32
      %53 = vector.broadcast %cst_29 : f32 to vector<128x128xf32>
      %54 = arith.addf %52, %53 : vector<128x128xf32>
      %55 = arith.mulf %54, %50 : vector<128x128xf32>
      %cst_30 = arith.constant 1.42141378 : f32
      %56 = vector.broadcast %cst_30 : f32 to vector<128x128xf32>
      %57 = arith.addf %55, %56 : vector<128x128xf32>
      %58 = arith.mulf %57, %50 : vector<128x128xf32>
      %cst_31 = arith.constant -0.284496725 : f32
      %59 = vector.broadcast %cst_31 : f32 to vector<128x128xf32>
      %60 = arith.addf %58, %59 : vector<128x128xf32>
      %61 = arith.mulf %60, %50 : vector<128x128xf32>
      %cst_32 = arith.constant 0.254829586 : f32
      %62 = vector.broadcast %cst_32 : f32 to vector<128x128xf32>
      %63 = arith.addf %61, %62 : vector<128x128xf32>
      %64 = arith.mulf %63, %50 : vector<128x128xf32>
      %cst_33 = arith.constant 0.000000e+00 : f32
      %65 = vector.broadcast %cst_33 : f32 to vector<128x128xf32>
      %66 = arith.subf %65, %44 : vector<128x128xf32>
      %67 = arith.mulf %66, %44 : vector<128x128xf32>
      %68 = math.exp %67 : vector<128x128xf32>
      %69 = arith.mulf %64, %68 : vector<128x128xf32>
      %cst_34 = arith.constant 1.000000e+00 : f32
      %70 = vector.broadcast %cst_34 : f32 to vector<128x128xf32>
      %71 = arith.subf %70, %69 : vector<128x128xf32>
      %cst_35 = arith.constant 0.000000e+00 : f32
      %72 = vector.broadcast %cst_35 : f32 to vector<128x128xf32>
      %73 = arith.cmpf olt, %43, %72 : vector<128x128xf32>
      %cst_36 = arith.constant 0.000000e+00 : f32
      %74 = vector.broadcast %cst_36 : f32 to vector<128x128xf32>
      %75 = arith.subf %74, %71 : vector<128x128xf32>
      %76 = arith.select %73, %75, %71 : vector<128x128xi1>, vector<128x128xf32>
      %cst_37 = arith.constant 1.000000e+00 : f32
      %77 = vector.broadcast %cst_37 : f32 to vector<128x128xf32>
      %78 = arith.addf %77, %76 : vector<128x128xf32>
      %79 = arith.mulf %41, %78 : vector<128x128xf32>
      %80 = arith.truncf %79 : vector<128x128xf32> to vector<128x128xbf16>
      %c0_38 = arith.constant 0 : index
      %c0_39 = arith.constant 0 : index
      %81 = vector.load %arg8[%c0_38, %c0_39] : memref<128x128xbf16, #tpu.memory_space<vmem>>, vector<128x128xbf16>
      tpu.vector_store %arg8[%c0_38, %c0_39], %80 {strides = array<i32>} : memref<128x128xbf16, #tpu.memory_space<vmem>>, vector<128x128xbf16>,
    } else {
    }
    return
  }
  func.func @transform_0(%arg0: i32, %arg1: i32, %arg2: i32) -> (i32, i32) {
    %c0_i32 = arith.constant 0 : i32
    return %arg0, %arg2 : i32, i32
  }
  func.func @transform_1(%arg0: i32, %arg1: i32, %arg2: i32) -> (i32, i32) {
    %c0_i32 = arith.constant 0 : i32
    return %arg2, %arg1 : i32, i32
  }
  func.func @transform_2(%arg0: i32, %arg1: i32, %arg2: i32) -> (i32, i32) {
    %c0_i32 = arith.constant 0 : i32
    %c0_i32_0 = arith.constant 0 : i32
    return %c0_i32, %arg1 : i32, i32
  }
  func.func @transform_3(%arg0: i32, %arg1: i32, %arg2: i32) -> (i32, i32) {
    %c0_i32 = arith.constant 0 : i32
    %c0_i32_0 = arith.constant 0 : i32
    %c0_i32_1 = arith.constant 0 : i32
    return %c0_i32, %c0_i32_0 : i32, i32
  }
  func.func @transform_4(%arg0: i32, %arg1: i32, %arg2: i32) -> (i32, i32) {
    %c0_i32 = arith.constant 0 : i32
    %c0_i32_0 = arith.constant 0 : i32
    %c0_i32_1 = arith.constant 0 : i32
    return %c0_i32, %c0_i32_0 : i32, i32
  }
  func.func @transform_5(%arg0: i32, %arg1: i32, %arg2: i32) -> (i32, i32) {
    %c0_i32 = arith.constant 0 : i32
    return %arg0, %arg1 : i32, i32
  }
}

module attributes {stable_mosaic.version = 11 : i64} {
  func.func @kernel(%arg0: i32, %arg1: i32, %arg2: i32, %arg3: memref<128x128xbf16, #tpu.memory_space<vmem>>, %arg4: memref<128x32xbf16, #tpu.memory_space<vmem>>, %arg5: memref<1x32xf32, #tpu.memory_space<vmem>>, %arg6: memref<128x32xbf16, #tpu.memory_space<vmem>>, %arg7: memref<128x32xbf16, #tpu.memory_space<vmem>>, %arg8: memref<128x32xf32, #tpu.memory_space<vmem>>) attributes {dimension_semantics = [#tpu.dimension_semantics<parallel>, #tpu.dimension_semantics<parallel>, #tpu.dimension_semantics<arbitrary>], iteration_bounds = array<i64: 1, 1, 1>, scalar_prefetch = 0 : i64, scratch_operands = 1 : i64, tpu.core_type = #tpu.core_type<tc>, window_params = [{transform_indices = @transform_0, window_bounds = array<i64: 128, 128>}, {transform_indices = @transform_1, window_bounds = array<i64: 128, 32>}, {transform_indices = @transform_2, window_bounds = array<i64: 1, 32>}, {transform_indices = @transform_3, window_bounds = array<i64: 128, 32>}, {transform_indices = @transform_4, window_bounds = array<i64: 128, 32>}]} {
    %c0_i32 = arith.constant 0 : i32
    %0 = arith.cmpi eq, %arg2, %c0_i32 : i32
    %1 = arith.extui %0 : i1 to i32
    %c0_i32_0 = arith.constant 0 : i32
    %2 = arith.cmpi ne, %1, %c0_i32_0 : i32
    scf.if %2 {
      %cst_10 = arith.constant 0.000000e+00 : f32
      %12 = vector.broadcast %cst_10 : f32 to vector<128x32xf32>
      %c0_11 = arith.constant 0 : index
      %c0_12 = arith.constant 0 : index
      %13 = vector.load %arg8[%c0_11, %c0_12] : memref<128x32xf32, #tpu.memory_space<vmem>>, vector<128x32xf32>
      tpu.vector_store %arg8[%c0_11, %c0_12], %12 {strides = array<i32>} : memref<128x32xf32, #tpu.memory_space<vmem>>, vector<128x32xf32>,
    } else {
    }
    %c0 = arith.constant 0 : index
    %c0_1 = arith.constant 0 : index
    %3 = vector.load %arg3[%c0, %c0_1] : memref<128x128xbf16, #tpu.memory_space<vmem>>, vector<128x128xbf16>
    %c0_2 = arith.constant 0 : index
    %c0_3 = arith.constant 0 : index
    %4 = vector.load %arg8[%c0_2, %c0_3] : memref<128x32xf32, #tpu.memory_space<vmem>>, vector<128x32xf32>
    %c0_4 = arith.constant 0 : index
    %c0_5 = arith.constant 0 : index
    %5 = vector.load %arg4[%c0_4, %c0_5] : memref<128x32xbf16, #tpu.memory_space<vmem>>, vector<128x32xbf16>
    %cst = arith.constant dense<0.000000e+00> : vector<128x32xf32>
    %6 = tpu.matmul %3, %5, %cst {dimension_numbers = #tpu.dot_dimension_numbers<[1], [0], [0], [1], [0, 0, 1, 1], [], []>} : vector<128x128xbf16>, vector<128x32xbf16>, vector<128x32xf32> -> vector<128x32xf32>
    %7 = arith.addf %4, %6 : vector<128x32xf32>
    %c0_6 = arith.constant 0 : index
    %c0_7 = arith.constant 0 : index
    %8 = vector.load %arg8[%c0_6, %c0_7] : memref<128x32xf32, #tpu.memory_space<vmem>>, vector<128x32xf32>
    tpu.vector_store %arg8[%c0_6, %c0_7], %7 {strides = array<i32>} : memref<128x32xf32, #tpu.memory_space<vmem>>, vector<128x32xf32>,
    %c0_i32_8 = arith.constant 0 : i32
    %9 = arith.cmpi eq, %arg2, %c0_i32_8 : i32
    %10 = arith.extui %9 : i1 to i32
    %c0_i32_9 = arith.constant 0 : i32
    %11 = arith.cmpi ne, %10, %c0_i32_9 : i32
    scf.if %11 {
      %c0_10 = arith.constant 0 : index
      %c0_11 = arith.constant 0 : index
      %12 = vector.load %arg8[%c0_10, %c0_11] : memref<128x32xf32, #tpu.memory_space<vmem>>, vector<128x32xf32>
      %c0_12 = arith.constant 0 : index
      %c0_13 = arith.constant 0 : index
      %13 = vector.load %arg5[%c0_12, %c0_13] : memref<1x32xf32, #tpu.memory_space<vmem>>, vector<1x32xf32>
      %14 = vector.broadcast %13 : vector<1x32xf32> to vector<128x32xf32>
      %15 = arith.addf %12, %14 : vector<128x32xf32>
      %c0_14 = arith.constant 0 : index
      %c0_15 = arith.constant 0 : index
      %16 = vector.load %arg6[%c0_14, %c0_15] : memref<128x32xbf16, #tpu.memory_space<vmem>>, vector<128x32xbf16>
      %17 = arith.extf %16 : vector<128x32xbf16> to vector<128x32xf32>
      %18 = arith.addf %15, %17 : vector<128x32xf32>
      %19 = arith.truncf %18 : vector<128x32xf32> to vector<128x32xbf16>
      %c0_16 = arith.constant 0 : index
      %c0_17 = arith.constant 0 : index
      %20 = vector.load %arg7[%c0_16, %c0_17] : memref<128x32xbf16, #tpu.memory_space<vmem>>, vector<128x32xbf16>
      tpu.vector_store %arg7[%c0_16, %c0_17], %19 {strides = array<i32>} : memref<128x32xbf16, #tpu.memory_space<vmem>>, vector<128x32xbf16>,
    } else {
    }
    return
  }
  func.func @transform_0(%arg0: i32, %arg1: i32, %arg2: i32) -> (i32, i32) {
    %c0_i32 = arith.constant 0 : i32
    return %arg0, %arg2 : i32, i32
  }
  func.func @transform_1(%arg0: i32, %arg1: i32, %arg2: i32) -> (i32, i32) {
    %c0_i32 = arith.constant 0 : i32
    return %arg2, %arg1 : i32, i32
  }
  func.func @transform_2(%arg0: i32, %arg1: i32, %arg2: i32) -> (i32, i32) {
    %c0_i32 = arith.constant 0 : i32
    %c0_i32_0 = arith.constant 0 : i32
    return %c0_i32, %arg1 : i32, i32
  }
  func.func @transform_3(%arg0: i32, %arg1: i32, %arg2: i32) -> (i32, i32) {
    %c0_i32 = arith.constant 0 : i32
    return %arg0, %arg1 : i32, i32
  }
  func.func @transform_4(%arg0: i32, %arg1: i32, %arg2: i32) -> (i32, i32) {
    %c0_i32 = arith.constant 0 : i32
    return %arg0, %arg1 : i32, i32
  }
}

module attributes {stable_mosaic.version = 11 : i64} {
  func.func @kernel(%arg0: i32, %arg1: memref<4x16x96xbf16, #tpu.memory_space<vmem>>, %arg2: memref<4x16x16xf32, #tpu.memory_space<vmem>>, %arg3: memref<4x16x16xf32, #tpu.memory_space<vmem>>, %arg4: memref<4x16x32xbf16, #tpu.memory_space<vmem>>) attributes {dimension_semantics = [#tpu.dimension_semantics<parallel>], iteration_bounds = array<i64: 2>, scalar_prefetch = 0 : i64, scratch_operands = 0 : i64, tpu.core_type = #tpu.core_type<tc>, window_params = [{transform_indices = @transform_0, window_bounds = array<i64: 4, 16, 96>}, {pipeline_mode = #tpu.pipeline_mode<synchronous>, transform_indices = @transform_1, window_bounds = array<i64: 4, 16, 16>}, {pipeline_mode = #tpu.pipeline_mode<synchronous>, transform_indices = @transform_2, window_bounds = array<i64: 4, 16, 16>}, {transform_indices = @transform_3, window_bounds = array<i64: 4, 16, 32>}]} {
    %c0 = arith.constant 0 : index
    %c0_0 = arith.constant 0 : index
    %c0_1 = arith.constant 0 : index
    %0 = vector.load %arg3[%c0, %c0_0, %c0_1] : memref<4x16x16xf32, #tpu.memory_space<vmem>>, vector<4x16x16xf32>
    %c0_2 = arith.constant 0 : index
    %c0_3 = arith.constant 0 : index
    %c0_4 = arith.constant 0 : index
    %1 = vector.load %arg1[%c0_2, %c0_3, %c0_4] : memref<4x16x96xbf16, #tpu.memory_space<vmem>>, vector<4x16x8xbf16>
    %c0_5 = arith.constant 0 : index
    %c0_6 = arith.constant 0 : index
    %c32 = arith.constant 32 : index
    %2 = vector.load %arg1[%c0_5, %c0_6, %c32] : memref<4x16x96xbf16, #tpu.memory_space<vmem>>, vector<4x16x8xbf16>
    %c0_7 = arith.constant 0 : index
    %c0_8 = arith.constant 0 : index
    %c64 = arith.constant 64 : index
    %3 = vector.load %arg1[%c0_7, %c0_8, %c64] : memref<4x16x96xbf16, #tpu.memory_space<vmem>>, vector<4x16x8xbf16>
    "tpu.trace_start"() <{level = 10 : i32, message = "wqd,wkd->wqk"}> : () -> ()
    %cst = arith.constant dense<0.000000e+00> : vector<4x16x16xf32>
    %4 = tpu.matmul %1, %2, %cst {dimension_numbers = #tpu.dot_dimension_numbers<[2], [2], [1], [1], [0, 0, 0, 1, 1, 1], [0], [0]>} : vector<4x16x8xbf16>, vector<4x16x8xbf16>, vector<4x16x16xf32> -> vector<4x16x16xf32>
    "tpu.trace_stop"() : () -> ()
    %cst_9 = arith.constant 0.353553385 : f32
    %5 = vector.broadcast %cst_9 : f32 to vector<4x16x16xf32>
    %6 = arith.mulf %4, %5 : vector<4x16x16xf32>
    %c0_10 = arith.constant 0 : index
    %c0_11 = arith.constant 0 : index
    %c0_12 = arith.constant 0 : index
    %7 = vector.load %arg2[%c0_10, %c0_11, %c0_12] : memref<4x16x16xf32, #tpu.memory_space<vmem>>, vector<1x16x16xf32>
    %8 = vector.shape_cast %7 : vector<1x16x16xf32> to vector<16x16xf32>
    %9 = vector.shape_cast %8 : vector<16x16xf32> to vector<1x16x16xf32>
    %10 = vector.broadcast %9 : vector<1x16x16xf32> to vector<4x16x16xf32>
    %11 = arith.addf %6, %10 : vector<4x16x16xf32>
    %12 = arith.addf %11, %0 : vector<4x16x16xf32>
    %cst_13 = arith.constant dense<0xFF800000> : vector<4x16xf32>
    %13 = vector.multi_reduction <maximumf>, %12, %cst_13 [2] : vector<4x16x16xf32> to vector<4x16xf32>
    %14 = vector.shape_cast %13 : vector<4x16xf32> to vector<4x16x1xf32>
    %15 = vector.broadcast %14 : vector<4x16x1xf32> to vector<4x16x16xf32>
    %16 = arith.subf %12, %15 : vector<4x16x16xf32>
    %17 = math.exp %16 : vector<4x16x16xf32>
    %cst_14 = arith.constant dense<0.000000e+00> : vector<4x16xf32>
    %18 = vector.multi_reduction <add>, %17, %cst_14 [2] : vector<4x16x16xf32> to vector<4x16xf32>
    %19 = vector.shape_cast %18 : vector<4x16xf32> to vector<4x16x1xf32>
    %20 = tpu.reciprocal %19 {approx = true} : vector<4x16x1xf32> -> vector<4x16x1xf32>
    %21 = vector.broadcast %20 : vector<4x16x1xf32> to vector<4x16x16xf32>
    %22 = arith.mulf %17, %21 : vector<4x16x16xf32>
    %23 = arith.truncf %22 : vector<4x16x16xf32> to vector<4x16x16xbf16>
    "tpu.trace_start"() <{level = 10 : i32, message = "wqk,wkd->wqd"}> : () -> ()
    %cst_15 = arith.constant dense<0.000000e+00> : vector<4x16x8xf32>
    %24 = tpu.matmul %23, %3, %cst_15 {dimension_numbers = #tpu.dot_dimension_numbers<[2], [1], [1], [2], [0, 0, 0, 1, 1, 2], [0], [0]>} : vector<4x16x16xbf16>, vector<4x16x8xbf16>, vector<4x16x8xf32> -> vector<4x16x8xf32>
    "tpu.trace_stop"() : () -> ()
    %c0_16 = arith.constant 0 : index
    %c0_17 = arith.constant 0 : index
    %c8 = arith.constant 8 : index
    %25 = vector.load %arg1[%c0_16, %c0_17, %c8] : memref<4x16x96xbf16, #tpu.memory_space<vmem>>, vector<4x16x8xbf16>
    %c0_18 = arith.constant 0 : index
    %c0_19 = arith.constant 0 : index
    %c40 = arith.constant 40 : index
    %26 = vector.load %arg1[%c0_18, %c0_19, %c40] : memref<4x16x96xbf16, #tpu.memory_space<vmem>>, vector<4x16x8xbf16>
    %c0_20 = arith.constant 0 : index
    %c0_21 = arith.constant 0 : index
    %c72 = arith.constant 72 : index
    %27 = vector.load %arg1[%c0_20, %c0_21, %c72] : memref<4x16x96xbf16, #tpu.memory_space<vmem>>, vector<4x16x8xbf16>
    "tpu.trace_start"() <{level = 10 : i32, message = "wqd,wkd->wqk"}> : () -> ()
    %cst_22 = arith.constant dense<0.000000e+00> : vector<4x16x16xf32>
    %28 = tpu.matmul %25, %26, %cst_22 {dimension_numbers = #tpu.dot_dimension_numbers<[2], [2], [1], [1], [0, 0, 0, 1, 1, 1], [0], [0]>} : vector<4x16x8xbf16>, vector<4x16x8xbf16>, vector<4x16x16xf32> -> vector<4x16x16xf32>
    "tpu.trace_stop"() : () -> ()
    %cst_23 = arith.constant 0.353553385 : f32
    %29 = vector.broadcast %cst_23 : f32 to vector<4x16x16xf32>
    %30 = arith.mulf %28, %29 : vector<4x16x16xf32>
    %c1 = arith.constant 1 : index
    %c0_24 = arith.constant 0 : index
    %c0_25 = arith.constant 0 : index
    %31 = vector.load %arg2[%c1, %c0_24, %c0_25] : memref<4x16x16xf32, #tpu.memory_space<vmem>>, vector<1x16x16xf32>
    %32 = vector.shape_cast %31 : vector<1x16x16xf32> to vector<16x16xf32>
    %33 = vector.shape_cast %32 : vector<16x16xf32> to vector<1x16x16xf32>
    %34 = vector.broadcast %33 : vector<1x16x16xf32> to vector<4x16x16xf32>
    %35 = arith.addf %30, %34 : vector<4x16x16xf32>
    %36 = arith.addf %35, %0 : vector<4x16x16xf32>
    %cst_26 = arith.constant dense<0xFF800000> : vector<4x16xf32>
    %37 = vector.multi_reduction <maximumf>, %36, %cst_26 [2] : vector<4x16x16xf32> to vector<4x16xf32>
    %38 = vector.shape_cast %37 : vector<4x16xf32> to vector<4x16x1xf32>
    %39 = vector.broadcast %38 : vector<4x16x1xf32> to vector<4x16x16xf32>
    %40 = arith.subf %36, %39 : vector<4x16x16xf32>
    %41 = math.exp %40 : vector<4x16x16xf32>
    %cst_27 = arith.constant dense<0.000000e+00> : vector<4x16xf32>
    %42 = vector.multi_reduction <add>, %41, %cst_27 [2] : vector<4x16x16xf32> to vector<4x16xf32>
    %43 = vector.shape_cast %42 : vector<4x16xf32> to vector<4x16x1xf32>
    %44 = tpu.reciprocal %43 {approx = true} : vector<4x16x1xf32> -> vector<4x16x1xf32>
    %45 = vector.broadcast %44 : vector<4x16x1xf32> to vector<4x16x16xf32>
    %46 = arith.mulf %41, %45 : vector<4x16x16xf32>
    %47 = arith.truncf %46 : vector<4x16x16xf32> to vector<4x16x16xbf16>
    "tpu.trace_start"() <{level = 10 : i32, message = "wqk,wkd->wqd"}> : () -> ()
    %cst_28 = arith.constant dense<0.000000e+00> : vector<4x16x8xf32>
    %48 = tpu.matmul %47, %27, %cst_28 {dimension_numbers = #tpu.dot_dimension_numbers<[2], [1], [1], [2], [0, 0, 0, 1, 1, 2], [0], [0]>} : vector<4x16x16xbf16>, vector<4x16x8xbf16>, vector<4x16x8xf32> -> vector<4x16x8xf32>
    "tpu.trace_stop"() : () -> ()
    %c0_29 = arith.constant 0 : index
    %c0_30 = arith.constant 0 : index
    %c16 = arith.constant 16 : index
    %49 = vector.load %arg1[%c0_29, %c0_30, %c16] : memref<4x16x96xbf16, #tpu.memory_space<vmem>>, vector<4x16x8xbf16>
    %c0_31 = arith.constant 0 : index
    %c0_32 = arith.constant 0 : index
    %c48 = arith.constant 48 : index
    %50 = vector.load %arg1[%c0_31, %c0_32, %c48] : memref<4x16x96xbf16, #tpu.memory_space<vmem>>, vector<4x16x8xbf16>
    %c0_33 = arith.constant 0 : index
    %c0_34 = arith.constant 0 : index
    %c80 = arith.constant 80 : index
    %51 = vector.load %arg1[%c0_33, %c0_34, %c80] : memref<4x16x96xbf16, #tpu.memory_space<vmem>>, vector<4x16x8xbf16>
    "tpu.trace_start"() <{level = 10 : i32, message = "wqd,wkd->wqk"}> : () -> ()
    %cst_35 = arith.constant dense<0.000000e+00> : vector<4x16x16xf32>
    %52 = tpu.matmul %49, %50, %cst_35 {dimension_numbers = #tpu.dot_dimension_numbers<[2], [2], [1], [1], [0, 0, 0, 1, 1, 1], [0], [0]>} : vector<4x16x8xbf16>, vector<4x16x8xbf16>, vector<4x16x16xf32> -> vector<4x16x16xf32>
    "tpu.trace_stop"() : () -> ()
    %cst_36 = arith.constant 0.353553385 : f32
    %53 = vector.broadcast %cst_36 : f32 to vector<4x16x16xf32>
    %54 = arith.mulf %52, %53 : vector<4x16x16xf32>
    %c2 = arith.constant 2 : index
    %c0_37 = arith.constant 0 : index
    %c0_38 = arith.constant 0 : index
    %55 = vector.load %arg2[%c2, %c0_37, %c0_38] : memref<4x16x16xf32, #tpu.memory_space<vmem>>, vector<1x16x16xf32>
    %56 = vector.shape_cast %55 : vector<1x16x16xf32> to vector<16x16xf32>
    %57 = vector.shape_cast %56 : vector<16x16xf32> to vector<1x16x16xf32>
    %58 = vector.broadcast %57 : vector<1x16x16xf32> to vector<4x16x16xf32>
    %59 = arith.addf %54, %58 : vector<4x16x16xf32>
    %60 = arith.addf %59, %0 : vector<4x16x16xf32>
    %cst_39 = arith.constant dense<0xFF800000> : vector<4x16xf32>
    %61 = vector.multi_reduction <maximumf>, %60, %cst_39 [2] : vector<4x16x16xf32> to vector<4x16xf32>
    %62 = vector.shape_cast %61 : vector<4x16xf32> to vector<4x16x1xf32>
    %63 = vector.broadcast %62 : vector<4x16x1xf32> to vector<4x16x16xf32>
    %64 = arith.subf %60, %63 : vector<4x16x16xf32>
    %65 = math.exp %64 : vector<4x16x16xf32>
    %cst_40 = arith.constant dense<0.000000e+00> : vector<4x16xf32>
    %66 = vector.multi_reduction <add>, %65, %cst_40 [2] : vector<4x16x16xf32> to vector<4x16xf32>
    %67 = vector.shape_cast %66 : vector<4x16xf32> to vector<4x16x1xf32>
    %68 = tpu.reciprocal %67 {approx = true} : vector<4x16x1xf32> -> vector<4x16x1xf32>
    %69 = vector.broadcast %68 : vector<4x16x1xf32> to vector<4x16x16xf32>
    %70 = arith.mulf %65, %69 : vector<4x16x16xf32>
    %71 = arith.truncf %70 : vector<4x16x16xf32> to vector<4x16x16xbf16>
    "tpu.trace_start"() <{level = 10 : i32, message = "wqk,wkd->wqd"}> : () -> ()
    %cst_41 = arith.constant dense<0.000000e+00> : vector<4x16x8xf32>
    %72 = tpu.matmul %71, %51, %cst_41 {dimension_numbers = #tpu.dot_dimension_numbers<[2], [1], [1], [2], [0, 0, 0, 1, 1, 2], [0], [0]>} : vector<4x16x16xbf16>, vector<4x16x8xbf16>, vector<4x16x8xf32> -> vector<4x16x8xf32>
    "tpu.trace_stop"() : () -> ()
    %c0_42 = arith.constant 0 : index
    %c0_43 = arith.constant 0 : index
    %c24 = arith.constant 24 : index
    %73 = vector.load %arg1[%c0_42, %c0_43, %c24] : memref<4x16x96xbf16, #tpu.memory_space<vmem>>, vector<4x16x8xbf16>
    %c0_44 = arith.constant 0 : index
    %c0_45 = arith.constant 0 : index
    %c56 = arith.constant 56 : index
    %74 = vector.load %arg1[%c0_44, %c0_45, %c56] : memref<4x16x96xbf16, #tpu.memory_space<vmem>>, vector<4x16x8xbf16>
    %c0_46 = arith.constant 0 : index
    %c0_47 = arith.constant 0 : index
    %c88 = arith.constant 88 : index
    %75 = vector.load %arg1[%c0_46, %c0_47, %c88] : memref<4x16x96xbf16, #tpu.memory_space<vmem>>, vector<4x16x8xbf16>
    "tpu.trace_start"() <{level = 10 : i32, message = "wqd,wkd->wqk"}> : () -> ()
    %cst_48 = arith.constant dense<0.000000e+00> : vector<4x16x16xf32>
    %76 = tpu.matmul %73, %74, %cst_48 {dimension_numbers = #tpu.dot_dimension_numbers<[2], [2], [1], [1], [0, 0, 0, 1, 1, 1], [0], [0]>} : vector<4x16x8xbf16>, vector<4x16x8xbf16>, vector<4x16x16xf32> -> vector<4x16x16xf32>
    "tpu.trace_stop"() : () -> ()
    %cst_49 = arith.constant 0.353553385 : f32
    %77 = vector.broadcast %cst_49 : f32 to vector<4x16x16xf32>
    %78 = arith.mulf %76, %77 : vector<4x16x16xf32>
    %c3 = arith.constant 3 : index
    %c0_50 = arith.constant 0 : index
    %c0_51 = arith.constant 0 : index
    %79 = vector.load %arg2[%c3, %c0_50, %c0_51] : memref<4x16x16xf32, #tpu.memory_space<vmem>>, vector<1x16x16xf32>
    %80 = vector.shape_cast %79 : vector<1x16x16xf32> to vector<16x16xf32>
    %81 = vector.shape_cast %80 : vector<16x16xf32> to vector<1x16x16xf32>
    %82 = vector.broadcast %81 : vector<1x16x16xf32> to vector<4x16x16xf32>
    %83 = arith.addf %78, %82 : vector<4x16x16xf32>
    %84 = arith.addf %83, %0 : vector<4x16x16xf32>
    %cst_52 = arith.constant dense<0xFF800000> : vector<4x16xf32>
    %85 = vector.multi_reduction <maximumf>, %84, %cst_52 [2] : vector<4x16x16xf32> to vector<4x16xf32>
    %86 = vector.shape_cast %85 : vector<4x16xf32> to vector<4x16x1xf32>
    %87 = vector.broadcast %86 : vector<4x16x1xf32> to vector<4x16x16xf32>
    %88 = arith.subf %84, %87 : vector<4x16x16xf32>
    %89 = math.exp %88 : vector<4x16x16xf32>
    %cst_53 = arith.constant dense<0.000000e+00> : vector<4x16xf32>
    %90 = vector.multi_reduction <add>, %89, %cst_53 [2] : vector<4x16x16xf32> to vector<4x16xf32>
    %91 = vector.shape_cast %90 : vector<4x16xf32> to vector<4x16x1xf32>
    %92 = tpu.reciprocal %91 {approx = true} : vector<4x16x1xf32> -> vector<4x16x1xf32>
    %93 = vector.broadcast %92 : vector<4x16x1xf32> to vector<4x16x16xf32>
    %94 = arith.mulf %89, %93 : vector<4x16x16xf32>
    %95 = arith.truncf %94 : vector<4x16x16xf32> to vector<4x16x16xbf16>
    "tpu.trace_start"() <{level = 10 : i32, message = "wqk,wkd->wqd"}> : () -> ()
    %cst_54 = arith.constant dense<0.000000e+00> : vector<4x16x8xf32>
    %96 = tpu.matmul %95, %75, %cst_54 {dimension_numbers = #tpu.dot_dimension_numbers<[2], [1], [1], [2], [0, 0, 0, 1, 1, 2], [0], [0]>} : vector<4x16x16xbf16>, vector<4x16x8xbf16>, vector<4x16x8xf32> -> vector<4x16x8xf32>
    "tpu.trace_stop"() : () -> ()
    %97 = tpu.concatenate %24, %48, %72, %96 in 2 : vector<4x16x8xf32>, vector<4x16x8xf32>, vector<4x16x8xf32>, vector<4x16x8xf32> -> vector<4x16x32xf32>
    %98 = arith.truncf %97 : vector<4x16x32xf32> to vector<4x16x32xbf16>
    %c0_55 = arith.constant 0 : index
    %c0_56 = arith.constant 0 : index
    %c0_57 = arith.constant 0 : index
    %99 = vector.load %arg4[%c0_55, %c0_56, %c0_57] : memref<4x16x32xbf16, #tpu.memory_space<vmem>>, vector<4x16x32xbf16>
    tpu.vector_store %arg4[%c0_55, %c0_56, %c0_57], %98 {strides = array<i32>} : memref<4x16x32xbf16, #tpu.memory_space<vmem>>, vector<4x16x32xbf16>,
    return
  }
  func.func @transform_0(%arg0: i32) -> (i32, i32, i32) {
    %c0_i32 = arith.constant 0 : i32
    %c0_i32_0 = arith.constant 0 : i32
    %c0_i32_1 = arith.constant 0 : i32
    return %arg0, %c0_i32, %c0_i32_0 : i32, i32, i32
  }
  func.func @transform_1(%arg0: i32) -> (i32, i32, i32) {
    %c0_i32 = arith.constant 0 : i32
    %c0_i32_0 = arith.constant 0 : i32
    %c0_i32_1 = arith.constant 0 : i32
    %c0_i32_2 = arith.constant 0 : i32
    return %c0_i32, %c0_i32_0, %c0_i32_1 : i32, i32, i32
  }
  func.func @transform_2(%arg0: i32) -> (i32, i32, i32) {
    %c0_i32 = arith.constant 0 : i32
    %c0_i32_0 = arith.constant 0 : i32
    %c0_i32_1 = arith.constant 0 : i32
    %c0_i32_2 = arith.constant 0 : i32
    return %c0_i32, %c0_i32_0, %c0_i32_1 : i32, i32, i32
  }
  func.func @transform_3(%arg0: i32) -> (i32, i32, i32) {
    %c0_i32 = arith.constant 0 : i32
    %c0_i32_0 = arith.constant 0 : i32
    %c0_i32_1 = arith.constant 0 : i32
    return %arg0, %c0_i32, %c0_i32_0 : i32, i32, i32
  }
}

module attributes {stable_mosaic.version = 11 : i64} {
  func.func @kernel(%arg0: i32, %arg1: i32, %arg2: i32, %arg3: memref<32x128xbf16, #tpu.memory_space<vmem>>, %arg4: memref<128x64xbf16, #tpu.memory_space<vmem>>, %arg5: memref<1x64xf32, #tpu.memory_space<vmem>>, %arg6: memref<1x128xf32, #tpu.memory_space<vmem>>, %arg7: memref<1x128xf32, #tpu.memory_space<vmem>>, %arg8: memref<32x64xbf16, #tpu.memory_space<vmem>>, %arg9: memref<32x64xf32, #tpu.memory_space<vmem>>) attributes {dimension_semantics = [#tpu.dimension_semantics<parallel>, #tpu.dimension_semantics<parallel>, #tpu.dimension_semantics<arbitrary>], iteration_bounds = array<i64: 1, 1, 1>, scalar_prefetch = 0 : i64, scratch_operands = 1 : i64, tpu.core_type = #tpu.core_type<tc>, window_params = [{transform_indices = @transform_0, window_bounds = array<i64: 32, 128>}, {transform_indices = @transform_1, window_bounds = array<i64: 128, 64>}, {transform_indices = @transform_2, window_bounds = array<i64: 1, 64>}, {pipeline_mode = #tpu.pipeline_mode<synchronous>, transform_indices = @transform_3, window_bounds = array<i64: 1, 128>}, {pipeline_mode = #tpu.pipeline_mode<synchronous>, transform_indices = @transform_4, window_bounds = array<i64: 1, 128>}, {transform_indices = @transform_5, window_bounds = array<i64: 32, 64>}]} {
    %c0_i32 = arith.constant 0 : i32
    %0 = arith.cmpi eq, %arg2, %c0_i32 : i32
    %1 = arith.extui %0 : i1 to i32
    %c0_i32_0 = arith.constant 0 : i32
    %2 = arith.cmpi ne, %1, %c0_i32_0 : i32
    scf.if %2 {
      %cst_19 = arith.constant 0.000000e+00 : f32
      %36 = vector.broadcast %cst_19 : f32 to vector<32x64xf32>
      %c0_20 = arith.constant 0 : index
      %c0_21 = arith.constant 0 : index
      %37 = vector.load %arg9[%c0_20, %c0_21] : memref<32x64xf32, #tpu.memory_space<vmem>>, vector<32x64xf32>
      tpu.vector_store %arg9[%c0_20, %c0_21], %36 {strides = array<i32>} : memref<32x64xf32, #tpu.memory_space<vmem>>, vector<32x64xf32>,
    } else {
    }
    %c0 = arith.constant 0 : index
    %c0_1 = arith.constant 0 : index
    %3 = vector.load %arg3[%c0, %c0_1] : memref<32x128xbf16, #tpu.memory_space<vmem>>, vector<32x128xbf16>
    %4 = arith.extf %3 : vector<32x128xbf16> to vector<32x128xf32>
    %cst = arith.constant dense<0.000000e+00> : vector<32xf32>
    %5 = vector.multi_reduction <add>, %4, %cst [1] : vector<32x128xf32> to vector<32xf32>
    %6 = vector.shape_cast %5 : vector<32xf32> to vector<32x1xf32>
    %cst_2 = arith.constant 1.280000e+02 : f32
    %7 = vector.broadcast %cst_2 : f32 to vector<32x1xf32>
    %8 = arith.divf %6, %7 : vector<32x1xf32>
    %9 = vector.broadcast %8 : vector<32x1xf32> to vector<32x128xf32>
    %10 = arith.subf %4, %9 : vector<32x128xf32>
    %11 = arith.mulf %10, %10 : vector<32x128xf32>
    %cst_3 = arith.constant dense<0.000000e+00> : vector<32xf32>
    %12 = vector.multi_reduction <add>, %11, %cst_3 [1] : vector<32x128xf32> to vector<32xf32>
    %13 = vector.shape_cast %12 : vector<32xf32> to vector<32x1xf32>
    %cst_4 = arith.constant 1.280000e+02 : f32
    %14 = vector.broadcast %cst_4 : f32 to vector<32x1xf32>
    %15 = arith.divf %13, %14 : vector<32x1xf32>
    %cst_5 = arith.constant 9.99999974E-6 : f32
    %16 = vector.broadcast %cst_5 : f32 to vector<32x1xf32>
    %17 = arith.addf %15, %16 : vector<32x1xf32>
    %18 = math.rsqrt %17 : vector<32x1xf32>
    %19 = vector.broadcast %18 : vector<32x1xf32> to vector<32x128xf32>
    %20 = arith.mulf %10, %19 : vector<32x128xf32>
    %c0_6 = arith.constant 0 : index
    %c0_7 = arith.constant 0 : index
    %21 = vector.load %arg6[%c0_6, %c0_7] : memref<1x128xf32, #tpu.memory_space<vmem>>, vector<1x128xf32>
    %22 = vector.broadcast %21 : vector<1x128xf32> to vector<32x128xf32>
    %23 = arith.mulf %20, %22 : vector<32x128xf32>
    %c0_8 = arith.constant 0 : index
    %c0_9 = arith.constant 0 : index
    %24 = vector.load %arg7[%c0_8, %c0_9] : memref<1x128xf32, #tpu.memory_space<vmem>>, vector<1x128xf32>
    %25 = vector.broadcast %24 : vector<1x128xf32> to vector<32x128xf32>
    %26 = arith.addf %23, %25 : vector<32x128xf32>
    %27 = arith.truncf %26 : vector<32x128xf32> to vector<32x128xbf16>
    %c0_10 = arith.constant 0 : index
    %c0_11 = arith.constant 0 : index
    %28 = vector.load %arg9[%c0_10, %c0_11] : memref<32x64xf32, #tpu.memory_space<vmem>>, vector<32x64xf32>
    %c0_12 = arith.constant 0 : index
    %c0_13 = arith.constant 0 : index
    %29 = vector.load %arg4[%c0_12, %c0_13] : memref<128x64xbf16, #tpu.memory_space<vmem>>, vector<128x64xbf16>
    %cst_14 = arith.constant dense<0.000000e+00> : vector<32x64xf32>
    %30 = tpu.matmul %27, %29, %cst_14 {dimension_numbers = #tpu.dot_dimension_numbers<[1], [0], [0], [1], [0, 0, 1, 1], [], []>} : vector<32x128xbf16>, vector<128x64xbf16>, vector<32x64xf32> -> vector<32x64xf32>
    %31 = arith.addf %28, %30 : vector<32x64xf32>
    %c0_15 = arith.constant 0 : index
    %c0_16 = arith.constant 0 : index
    %32 = vector.load %arg9[%c0_15, %c0_16] : memref<32x64xf32, #tpu.memory_space<vmem>>, vector<32x64xf32>
    tpu.vector_store %arg9[%c0_15, %c0_16], %31 {strides = array<i32>} : memref<32x64xf32, #tpu.memory_space<vmem>>, vector<32x64xf32>,
    %c0_i32_17 = arith.constant 0 : i32
    %33 = arith.cmpi eq, %arg2, %c0_i32_17 : i32
    %34 = arith.extui %33 : i1 to i32
    %c0_i32_18 = arith.constant 0 : i32
    %35 = arith.cmpi ne, %34, %c0_i32_18 : i32
    scf.if %35 {
      %c0_19 = arith.constant 0 : index
      %c0_20 = arith.constant 0 : index
      %36 = vector.load %arg9[%c0_19, %c0_20] : memref<32x64xf32, #tpu.memory_space<vmem>>, vector<32x64xf32>
      %c0_21 = arith.constant 0 : index
      %c0_22 = arith.constant 0 : index
      %37 = vector.load %arg5[%c0_21, %c0_22] : memref<1x64xf32, #tpu.memory_space<vmem>>, vector<1x64xf32>
      %38 = vector.broadcast %37 : vector<1x64xf32> to vector<32x64xf32>
      %39 = arith.addf %36, %38 : vector<32x64xf32>
      %40 = arith.truncf %39 : vector<32x64xf32> to vector<32x64xbf16>
      %c0_23 = arith.constant 0 : index
      %c0_24 = arith.constant 0 : index
      %41 = vector.load %arg8[%c0_23, %c0_24] : memref<32x64xbf16, #tpu.memory_space<vmem>>, vector<32x64xbf16>
      tpu.vector_store %arg8[%c0_23, %c0_24], %40 {strides = array<i32>} : memref<32x64xbf16, #tpu.memory_space<vmem>>, vector<32x64xbf16>,
    } else {
    }
    return
  }
  func.func @transform_0(%arg0: i32, %arg1: i32, %arg2: i32) -> (i32, i32) {
    %c0_i32 = arith.constant 0 : i32
    return %arg0, %arg2 : i32, i32
  }
  func.func @transform_1(%arg0: i32, %arg1: i32, %arg2: i32) -> (i32, i32) {
    %c0_i32 = arith.constant 0 : i32
    return %arg2, %arg1 : i32, i32
  }
  func.func @transform_2(%arg0: i32, %arg1: i32, %arg2: i32) -> (i32, i32) {
    %c0_i32 = arith.constant 0 : i32
    %c0_i32_0 = arith.constant 0 : i32
    return %c0_i32, %arg1 : i32, i32
  }
  func.func @transform_3(%arg0: i32, %arg1: i32, %arg2: i32) -> (i32, i32) {
    %c0_i32 = arith.constant 0 : i32
    %c0_i32_0 = arith.constant 0 : i32
    %c0_i32_1 = arith.constant 0 : i32
    return %c0_i32, %c0_i32_0 : i32, i32
  }
  func.func @transform_4(%arg0: i32, %arg1: i32, %arg2: i32) -> (i32, i32) {
    %c0_i32 = arith.constant 0 : i32
    %c0_i32_0 = arith.constant 0 : i32
    %c0_i32_1 = arith.constant 0 : i32
    return %c0_i32, %c0_i32_0 : i32, i32
  }
  func.func @transform_5(%arg0: i32, %arg1: i32, %arg2: i32) -> (i32, i32) {
    %c0_i32 = arith.constant 0 : i32
    return %arg0, %arg1 : i32, i32
  }
}

module attributes {stable_mosaic.version = 11 : i64} {
  func.func @kernel(%arg0: i32, %arg1: i32, %arg2: i32, %arg3: memref<32x64xbf16, #tpu.memory_space<vmem>>, %arg4: memref<64x192xbf16, #tpu.memory_space<vmem>>, %arg5: memref<1x192xf32, #tpu.memory_space<vmem>>, %arg6: memref<1x64xf32, #tpu.memory_space<vmem>>, %arg7: memref<1x64xf32, #tpu.memory_space<vmem>>, %arg8: memref<32x192xbf16, #tpu.memory_space<vmem>>, %arg9: memref<32x192xf32, #tpu.memory_space<vmem>>) attributes {dimension_semantics = [#tpu.dimension_semantics<parallel>, #tpu.dimension_semantics<parallel>, #tpu.dimension_semantics<arbitrary>], iteration_bounds = array<i64: 1, 1, 1>, scalar_prefetch = 0 : i64, scratch_operands = 1 : i64, tpu.core_type = #tpu.core_type<tc>, window_params = [{transform_indices = @transform_0, window_bounds = array<i64: 32, 64>}, {transform_indices = @transform_1, window_bounds = array<i64: 64, 192>}, {transform_indices = @transform_2, window_bounds = array<i64: 1, 192>}, {pipeline_mode = #tpu.pipeline_mode<synchronous>, transform_indices = @transform_3, window_bounds = array<i64: 1, 64>}, {pipeline_mode = #tpu.pipeline_mode<synchronous>, transform_indices = @transform_4, window_bounds = array<i64: 1, 64>}, {transform_indices = @transform_5, window_bounds = array<i64: 32, 192>}]} {
    %c0_i32 = arith.constant 0 : i32
    %0 = arith.cmpi eq, %arg2, %c0_i32 : i32
    %1 = arith.extui %0 : i1 to i32
    %c0_i32_0 = arith.constant 0 : i32
    %2 = arith.cmpi ne, %1, %c0_i32_0 : i32
    scf.if %2 {
      %cst_19 = arith.constant 0.000000e+00 : f32
      %36 = vector.broadcast %cst_19 : f32 to vector<32x192xf32>
      %c0_20 = arith.constant 0 : index
      %c0_21 = arith.constant 0 : index
      %37 = vector.load %arg9[%c0_20, %c0_21] : memref<32x192xf32, #tpu.memory_space<vmem>>, vector<32x192xf32>
      tpu.vector_store %arg9[%c0_20, %c0_21], %36 {strides = array<i32>} : memref<32x192xf32, #tpu.memory_space<vmem>>, vector<32x192xf32>,
    } else {
    }
    %c0 = arith.constant 0 : index
    %c0_1 = arith.constant 0 : index
    %3 = vector.load %arg3[%c0, %c0_1] : memref<32x64xbf16, #tpu.memory_space<vmem>>, vector<32x64xbf16>
    %4 = arith.extf %3 : vector<32x64xbf16> to vector<32x64xf32>
    %cst = arith.constant dense<0.000000e+00> : vector<32xf32>
    %5 = vector.multi_reduction <add>, %4, %cst [1] : vector<32x64xf32> to vector<32xf32>
    %6 = vector.shape_cast %5 : vector<32xf32> to vector<32x1xf32>
    %cst_2 = arith.constant 6.400000e+01 : f32
    %7 = vector.broadcast %cst_2 : f32 to vector<32x1xf32>
    %8 = arith.divf %6, %7 : vector<32x1xf32>
    %9 = vector.broadcast %8 : vector<32x1xf32> to vector<32x64xf32>
    %10 = arith.subf %4, %9 : vector<32x64xf32>
    %11 = arith.mulf %10, %10 : vector<32x64xf32>
    %cst_3 = arith.constant dense<0.000000e+00> : vector<32xf32>
    %12 = vector.multi_reduction <add>, %11, %cst_3 [1] : vector<32x64xf32> to vector<32xf32>
    %13 = vector.shape_cast %12 : vector<32xf32> to vector<32x1xf32>
    %cst_4 = arith.constant 6.400000e+01 : f32
    %14 = vector.broadcast %cst_4 : f32 to vector<32x1xf32>
    %15 = arith.divf %13, %14 : vector<32x1xf32>
    %cst_5 = arith.constant 9.99999974E-6 : f32
    %16 = vector.broadcast %cst_5 : f32 to vector<32x1xf32>
    %17 = arith.addf %15, %16 : vector<32x1xf32>
    %18 = math.rsqrt %17 : vector<32x1xf32>
    %19 = vector.broadcast %18 : vector<32x1xf32> to vector<32x64xf32>
    %20 = arith.mulf %10, %19 : vector<32x64xf32>
    %c0_6 = arith.constant 0 : index
    %c0_7 = arith.constant 0 : index
    %21 = vector.load %arg6[%c0_6, %c0_7] : memref<1x64xf32, #tpu.memory_space<vmem>>, vector<1x64xf32>
    %22 = vector.broadcast %21 : vector<1x64xf32> to vector<32x64xf32>
    %23 = arith.mulf %20, %22 : vector<32x64xf32>
    %c0_8 = arith.constant 0 : index
    %c0_9 = arith.constant 0 : index
    %24 = vector.load %arg7[%c0_8, %c0_9] : memref<1x64xf32, #tpu.memory_space<vmem>>, vector<1x64xf32>
    %25 = vector.broadcast %24 : vector<1x64xf32> to vector<32x64xf32>
    %26 = arith.addf %23, %25 : vector<32x64xf32>
    %27 = arith.truncf %26 : vector<32x64xf32> to vector<32x64xbf16>
    %c0_10 = arith.constant 0 : index
    %c0_11 = arith.constant 0 : index
    %28 = vector.load %arg9[%c0_10, %c0_11] : memref<32x192xf32, #tpu.memory_space<vmem>>, vector<32x192xf32>
    %c0_12 = arith.constant 0 : index
    %c0_13 = arith.constant 0 : index
    %29 = vector.load %arg4[%c0_12, %c0_13] : memref<64x192xbf16, #tpu.memory_space<vmem>>, vector<64x192xbf16>
    %cst_14 = arith.constant dense<0.000000e+00> : vector<32x192xf32>
    %30 = tpu.matmul %27, %29, %cst_14 {dimension_numbers = #tpu.dot_dimension_numbers<[1], [0], [0], [1], [0, 0, 1, 1], [], []>} : vector<32x64xbf16>, vector<64x192xbf16>, vector<32x192xf32> -> vector<32x192xf32>
    %31 = arith.addf %28, %30 : vector<32x192xf32>
    %c0_15 = arith.constant 0 : index
    %c0_16 = arith.constant 0 : index
    %32 = vector.load %arg9[%c0_15, %c0_16] : memref<32x192xf32, #tpu.memory_space<vmem>>, vector<32x192xf32>
    tpu.vector_store %arg9[%c0_15, %c0_16], %31 {strides = array<i32>} : memref<32x192xf32, #tpu.memory_space<vmem>>, vector<32x192xf32>,
    %c0_i32_17 = arith.constant 0 : i32
    %33 = arith.cmpi eq, %arg2, %c0_i32_17 : i32
    %34 = arith.extui %33 : i1 to i32
    %c0_i32_18 = arith.constant 0 : i32
    %35 = arith.cmpi ne, %34, %c0_i32_18 : i32
    scf.if %35 {
      %c0_19 = arith.constant 0 : index
      %c0_20 = arith.constant 0 : index
      %36 = vector.load %arg9[%c0_19, %c0_20] : memref<32x192xf32, #tpu.memory_space<vmem>>, vector<32x192xf32>
      %c0_21 = arith.constant 0 : index
      %c0_22 = arith.constant 0 : index
      %37 = vector.load %arg5[%c0_21, %c0_22] : memref<1x192xf32, #tpu.memory_space<vmem>>, vector<1x192xf32>
      %38 = vector.broadcast %37 : vector<1x192xf32> to vector<32x192xf32>
      %39 = arith.addf %36, %38 : vector<32x192xf32>
      %40 = arith.truncf %39 : vector<32x192xf32> to vector<32x192xbf16>
      %c0_23 = arith.constant 0 : index
      %c0_24 = arith.constant 0 : index
      %41 = vector.load %arg8[%c0_23, %c0_24] : memref<32x192xbf16, #tpu.memory_space<vmem>>, vector<32x192xbf16>
      tpu.vector_store %arg8[%c0_23, %c0_24], %40 {strides = array<i32>} : memref<32x192xbf16, #tpu.memory_space<vmem>>, vector<32x192xbf16>,
    } else {
    }
    return
  }
  func.func @transform_0(%arg0: i32, %arg1: i32, %arg2: i32) -> (i32, i32) {
    %c0_i32 = arith.constant 0 : i32
    return %arg0, %arg2 : i32, i32
  }
  func.func @transform_1(%arg0: i32, %arg1: i32, %arg2: i32) -> (i32, i32) {
    %c0_i32 = arith.constant 0 : i32
    return %arg2, %arg1 : i32, i32
  }
  func.func @transform_2(%arg0: i32, %arg1: i32, %arg2: i32) -> (i32, i32) {
    %c0_i32 = arith.constant 0 : i32
    %c0_i32_0 = arith.constant 0 : i32
    return %c0_i32, %arg1 : i32, i32
  }
  func.func @transform_3(%arg0: i32, %arg1: i32, %arg2: i32) -> (i32, i32) {
    %c0_i32 = arith.constant 0 : i32
    %c0_i32_0 = arith.constant 0 : i32
    %c0_i32_1 = arith.constant 0 : i32
    return %c0_i32, %c0_i32_0 : i32, i32
  }
  func.func @transform_4(%arg0: i32, %arg1: i32, %arg2: i32) -> (i32, i32) {
    %c0_i32 = arith.constant 0 : i32
    %c0_i32_0 = arith.constant 0 : i32
    %c0_i32_1 = arith.constant 0 : i32
    return %c0_i32, %c0_i32_0 : i32, i32
  }
  func.func @transform_5(%arg0: i32, %arg1: i32, %arg2: i32) -> (i32, i32) {
    %c0_i32 = arith.constant 0 : i32
    return %arg0, %arg1 : i32, i32
  }
}

module attributes {stable_mosaic.version = 11 : i64} {
  func.func @kernel(%arg0: i32, %arg1: memref<1x16x192xbf16, #tpu.memory_space<vmem>>, %arg2: memref<8x16x16xf32, #tpu.memory_space<vmem>>, %arg3: memref<1x16x64xbf16, #tpu.memory_space<vmem>>) attributes {dimension_semantics = [#tpu.dimension_semantics<parallel>], iteration_bounds = array<i64: 2>, scalar_prefetch = 0 : i64, scratch_operands = 0 : i64, tpu.core_type = #tpu.core_type<tc>, window_params = [{transform_indices = @transform_0, window_bounds = array<i64: 1, 16, 192>}, {pipeline_mode = #tpu.pipeline_mode<synchronous>, transform_indices = @transform_1, window_bounds = array<i64: 8, 16, 16>}, {transform_indices = @transform_2, window_bounds = array<i64: 1, 16, 64>}]} {
    %c0 = arith.constant 0 : index
    %c0_0 = arith.constant 0 : index
    %c0_1 = arith.constant 0 : index
    %0 = vector.load %arg1[%c0, %c0_0, %c0_1] : memref<1x16x192xbf16, #tpu.memory_space<vmem>>, vector<1x16x8xbf16>
    %c0_2 = arith.constant 0 : index
    %c0_3 = arith.constant 0 : index
    %c64 = arith.constant 64 : index
    %1 = vector.load %arg1[%c0_2, %c0_3, %c64] : memref<1x16x192xbf16, #tpu.memory_space<vmem>>, vector<1x16x8xbf16>
    %c0_4 = arith.constant 0 : index
    %c0_5 = arith.constant 0 : index
    %c128 = arith.constant 128 : index
    %2 = vector.load %arg1[%c0_4, %c0_5, %c128] : memref<1x16x192xbf16, #tpu.memory_space<vmem>>, vector<1x16x8xbf16>
    "tpu.trace_start"() <{level = 10 : i32, message = "wqd,wkd->wqk"}> : () -> ()
    %cst = arith.constant dense<0.000000e+00> : vector<1x16x16xf32>
    %3 = tpu.matmul %0, %1, %cst {dimension_numbers = #tpu.dot_dimension_numbers<[2], [2], [1], [1], [0, 0, 0, 1, 1, 1], [0], [0]>} : vector<1x16x8xbf16>, vector<1x16x8xbf16>, vector<1x16x16xf32> -> vector<1x16x16xf32>
    "tpu.trace_stop"() : () -> ()
    %cst_6 = arith.constant 0.353553385 : f32
    %4 = vector.broadcast %cst_6 : f32 to vector<1x16x16xf32>
    %5 = arith.mulf %3, %4 : vector<1x16x16xf32>
    %c0_7 = arith.constant 0 : index
    %c0_8 = arith.constant 0 : index
    %c0_9 = arith.constant 0 : index
    %6 = vector.load %arg2[%c0_7, %c0_8, %c0_9] : memref<8x16x16xf32, #tpu.memory_space<vmem>>, vector<1x16x16xf32>
    %7 = vector.shape_cast %6 : vector<1x16x16xf32> to vector<16x16xf32>
    %8 = vector.shape_cast %7 : vector<16x16xf32> to vector<1x16x16xf32>
    %9 = arith.addf %5, %8 : vector<1x16x16xf32>
    %cst_10 = arith.constant dense<0xFF800000> : vector<1x16xf32>
    %10 = vector.multi_reduction <maximumf>, %9, %cst_10 [2] : vector<1x16x16xf32> to vector<1x16xf32>
    %11 = vector.shape_cast %10 : vector<1x16xf32> to vector<1x16x1xf32>
    %12 = vector.broadcast %11 : vector<1x16x1xf32> to vector<1x16x16xf32>
    %13 = arith.subf %9, %12 : vector<1x16x16xf32>
    %14 = math.exp %13 : vector<1x16x16xf32>
    %cst_11 = arith.constant dense<0.000000e+00> : vector<1x16xf32>
    %15 = vector.multi_reduction <add>, %14, %cst_11 [2] : vector<1x16x16xf32> to vector<1x16xf32>
    %16 = vector.shape_cast %15 : vector<1x16xf32> to vector<1x16x1xf32>
    %17 = tpu.reciprocal %16 {approx = true} : vector<1x16x1xf32> -> vector<1x16x1xf32>
    %18 = vector.broadcast %17 : vector<1x16x1xf32> to vector<1x16x16xf32>
    %19 = arith.mulf %14, %18 : vector<1x16x16xf32>
    %20 = arith.truncf %19 : vector<1x16x16xf32> to vector<1x16x16xbf16>
    "tpu.trace_start"() <{level = 10 : i32, message = "wqk,wkd->wqd"}> : () -> ()
    %cst_12 = arith.constant dense<0.000000e+00> : vector<1x16x8xf32>
    %21 = tpu.matmul %20, %2, %cst_12 {dimension_numbers = #tpu.dot_dimension_numbers<[2], [1], [1], [2], [0, 0, 0, 1, 1, 2], [0], [0]>} : vector<1x16x16xbf16>, vector<1x16x8xbf16>, vector<1x16x8xf32> -> vector<1x16x8xf32>
    "tpu.trace_stop"() : () -> ()
    %c0_13 = arith.constant 0 : index
    %c0_14 = arith.constant 0 : index
    %c8 = arith.constant 8 : index
    %22 = vector.load %arg1[%c0_13, %c0_14, %c8] : memref<1x16x192xbf16, #tpu.memory_space<vmem>>, vector<1x16x8xbf16>
    %c0_15 = arith.constant 0 : index
    %c0_16 = arith.constant 0 : index
    %c72 = arith.constant 72 : index
    %23 = vector.load %arg1[%c0_15, %c0_16, %c72] : memref<1x16x192xbf16, #tpu.memory_space<vmem>>, vector<1x16x8xbf16>
    %c0_17 = arith.constant 0 : index
    %c0_18 = arith.constant 0 : index
    %c136 = arith.constant 136 : index
    %24 = vector.load %arg1[%c0_17, %c0_18, %c136] : memref<1x16x192xbf16, #tpu.memory_space<vmem>>, vector<1x16x8xbf16>
    "tpu.trace_start"() <{level = 10 : i32, message = "wqd,wkd->wqk"}> : () -> ()
    %cst_19 = arith.constant dense<0.000000e+00> : vector<1x16x16xf32>
    %25 = tpu.matmul %22, %23, %cst_19 {dimension_numbers = #tpu.dot_dimension_numbers<[2], [2], [1], [1], [0, 0, 0, 1, 1, 1], [0], [0]>} : vector<1x16x8xbf16>, vector<1x16x8xbf16>, vector<1x16x16xf32> -> vector<1x16x16xf32>
    "tpu.trace_stop"() : () -> ()
    %cst_20 = arith.constant 0.353553385 : f32
    %26 = vector.broadcast %cst_20 : f32 to vector<1x16x16xf32>
    %27 = arith.mulf %25, %26 : vector<1x16x16xf32>
    %c1 = arith.constant 1 : index
    %c0_21 = arith.constant 0 : index
    %c0_22 = arith.constant 0 : index
    %28 = vector.load %arg2[%c1, %c0_21, %c0_22] : memref<8x16x16xf32, #tpu.memory_space<vmem>>, vector<1x16x16xf32>
    %29 = vector.shape_cast %28 : vector<1x16x16xf32> to vector<16x16xf32>
    %30 = vector.shape_cast %29 : vector<16x16xf32> to vector<1x16x16xf32>
    %31 = arith.addf %27, %30 : vector<1x16x16xf32>
    %cst_23 = arith.constant dense<0xFF800000> : vector<1x16xf32>
    %32 = vector.multi_reduction <maximumf>, %31, %cst_23 [2] : vector<1x16x16xf32> to vector<1x16xf32>
    %33 = vector.shape_cast %32 : vector<1x16xf32> to vector<1x16x1xf32>
    %34 = vector.broadcast %33 : vector<1x16x1xf32> to vector<1x16x16xf32>
    %35 = arith.subf %31, %34 : vector<1x16x16xf32>
    %36 = math.exp %35 : vector<1x16x16xf32>
    %cst_24 = arith.constant dense<0.000000e+00> : vector<1x16xf32>
    %37 = vector.multi_reduction <add>, %36, %cst_24 [2] : vector<1x16x16xf32> to vector<1x16xf32>
    %38 = vector.shape_cast %37 : vector<1x16xf32> to vector<1x16x1xf32>
    %39 = tpu.reciprocal %38 {approx = true} : vector<1x16x1xf32> -> vector<1x16x1xf32>
    %40 = vector.broadcast %39 : vector<1x16x1xf32> to vector<1x16x16xf32>
    %41 = arith.mulf %36, %40 : vector<1x16x16xf32>
    %42 = arith.truncf %41 : vector<1x16x16xf32> to vector<1x16x16xbf16>
    "tpu.trace_start"() <{level = 10 : i32, message = "wqk,wkd->wqd"}> : () -> ()
    %cst_25 = arith.constant dense<0.000000e+00> : vector<1x16x8xf32>
    %43 = tpu.matmul %42, %24, %cst_25 {dimension_numbers = #tpu.dot_dimension_numbers<[2], [1], [1], [2], [0, 0, 0, 1, 1, 2], [0], [0]>} : vector<1x16x16xbf16>, vector<1x16x8xbf16>, vector<1x16x8xf32> -> vector<1x16x8xf32>
    "tpu.trace_stop"() : () -> ()
    %c0_26 = arith.constant 0 : index
    %c0_27 = arith.constant 0 : index
    %c16 = arith.constant 16 : index
    %44 = vector.load %arg1[%c0_26, %c0_27, %c16] : memref<1x16x192xbf16, #tpu.memory_space<vmem>>, vector<1x16x8xbf16>
    %c0_28 = arith.constant 0 : index
    %c0_29 = arith.constant 0 : index
    %c80 = arith.constant 80 : index
    %45 = vector.load %arg1[%c0_28, %c0_29, %c80] : memref<1x16x192xbf16, #tpu.memory_space<vmem>>, vector<1x16x8xbf16>
    %c0_30 = arith.constant 0 : index
    %c0_31 = arith.constant 0 : index
    %c144 = arith.constant 144 : index
    %46 = vector.load %arg1[%c0_30, %c0_31, %c144] : memref<1x16x192xbf16, #tpu.memory_space<vmem>>, vector<1x16x8xbf16>
    "tpu.trace_start"() <{level = 10 : i32, message = "wqd,wkd->wqk"}> : () -> ()
    %cst_32 = arith.constant dense<0.000000e+00> : vector<1x16x16xf32>
    %47 = tpu.matmul %44, %45, %cst_32 {dimension_numbers = #tpu.dot_dimension_numbers<[2], [2], [1], [1], [0, 0, 0, 1, 1, 1], [0], [0]>} : vector<1x16x8xbf16>, vector<1x16x8xbf16>, vector<1x16x16xf32> -> vector<1x16x16xf32>
    "tpu.trace_stop"() : () -> ()
    %cst_33 = arith.constant 0.353553385 : f32
    %48 = vector.broadcast %cst_33 : f32 to vector<1x16x16xf32>
    %49 = arith.mulf %47, %48 : vector<1x16x16xf32>
    %c2 = arith.constant 2 : index
    %c0_34 = arith.constant 0 : index
    %c0_35 = arith.constant 0 : index
    %50 = vector.load %arg2[%c2, %c0_34, %c0_35] : memref<8x16x16xf32, #tpu.memory_space<vmem>>, vector<1x16x16xf32>
    %51 = vector.shape_cast %50 : vector<1x16x16xf32> to vector<16x16xf32>
    %52 = vector.shape_cast %51 : vector<16x16xf32> to vector<1x16x16xf32>
    %53 = arith.addf %49, %52 : vector<1x16x16xf32>
    %cst_36 = arith.constant dense<0xFF800000> : vector<1x16xf32>
    %54 = vector.multi_reduction <maximumf>, %53, %cst_36 [2] : vector<1x16x16xf32> to vector<1x16xf32>
    %55 = vector.shape_cast %54 : vector<1x16xf32> to vector<1x16x1xf32>
    %56 = vector.broadcast %55 : vector<1x16x1xf32> to vector<1x16x16xf32>
    %57 = arith.subf %53, %56 : vector<1x16x16xf32>
    %58 = math.exp %57 : vector<1x16x16xf32>
    %cst_37 = arith.constant dense<0.000000e+00> : vector<1x16xf32>
    %59 = vector.multi_reduction <add>, %58, %cst_37 [2] : vector<1x16x16xf32> to vector<1x16xf32>
    %60 = vector.shape_cast %59 : vector<1x16xf32> to vector<1x16x1xf32>
    %61 = tpu.reciprocal %60 {approx = true} : vector<1x16x1xf32> -> vector<1x16x1xf32>
    %62 = vector.broadcast %61 : vector<1x16x1xf32> to vector<1x16x16xf32>
    %63 = arith.mulf %58, %62 : vector<1x16x16xf32>
    %64 = arith.truncf %63 : vector<1x16x16xf32> to vector<1x16x16xbf16>
    "tpu.trace_start"() <{level = 10 : i32, message = "wqk,wkd->wqd"}> : () -> ()
    %cst_38 = arith.constant dense<0.000000e+00> : vector<1x16x8xf32>
    %65 = tpu.matmul %64, %46, %cst_38 {dimension_numbers = #tpu.dot_dimension_numbers<[2], [1], [1], [2], [0, 0, 0, 1, 1, 2], [0], [0]>} : vector<1x16x16xbf16>, vector<1x16x8xbf16>, vector<1x16x8xf32> -> vector<1x16x8xf32>
    "tpu.trace_stop"() : () -> ()
    %c0_39 = arith.constant 0 : index
    %c0_40 = arith.constant 0 : index
    %c24 = arith.constant 24 : index
    %66 = vector.load %arg1[%c0_39, %c0_40, %c24] : memref<1x16x192xbf16, #tpu.memory_space<vmem>>, vector<1x16x8xbf16>
    %c0_41 = arith.constant 0 : index
    %c0_42 = arith.constant 0 : index
    %c88 = arith.constant 88 : index
    %67 = vector.load %arg1[%c0_41, %c0_42, %c88] : memref<1x16x192xbf16, #tpu.memory_space<vmem>>, vector<1x16x8xbf16>
    %c0_43 = arith.constant 0 : index
    %c0_44 = arith.constant 0 : index
    %c152 = arith.constant 152 : index
    %68 = vector.load %arg1[%c0_43, %c0_44, %c152] : memref<1x16x192xbf16, #tpu.memory_space<vmem>>, vector<1x16x8xbf16>
    "tpu.trace_start"() <{level = 10 : i32, message = "wqd,wkd->wqk"}> : () -> ()
    %cst_45 = arith.constant dense<0.000000e+00> : vector<1x16x16xf32>
    %69 = tpu.matmul %66, %67, %cst_45 {dimension_numbers = #tpu.dot_dimension_numbers<[2], [2], [1], [1], [0, 0, 0, 1, 1, 1], [0], [0]>} : vector<1x16x8xbf16>, vector<1x16x8xbf16>, vector<1x16x16xf32> -> vector<1x16x16xf32>
    "tpu.trace_stop"() : () -> ()
    %cst_46 = arith.constant 0.353553385 : f32
    %70 = vector.broadcast %cst_46 : f32 to vector<1x16x16xf32>
    %71 = arith.mulf %69, %70 : vector<1x16x16xf32>
    %c3 = arith.constant 3 : index
    %c0_47 = arith.constant 0 : index
    %c0_48 = arith.constant 0 : index
    %72 = vector.load %arg2[%c3, %c0_47, %c0_48] : memref<8x16x16xf32, #tpu.memory_space<vmem>>, vector<1x16x16xf32>
    %73 = vector.shape_cast %72 : vector<1x16x16xf32> to vector<16x16xf32>
    %74 = vector.shape_cast %73 : vector<16x16xf32> to vector<1x16x16xf32>
    %75 = arith.addf %71, %74 : vector<1x16x16xf32>
    %cst_49 = arith.constant dense<0xFF800000> : vector<1x16xf32>
    %76 = vector.multi_reduction <maximumf>, %75, %cst_49 [2] : vector<1x16x16xf32> to vector<1x16xf32>
    %77 = vector.shape_cast %76 : vector<1x16xf32> to vector<1x16x1xf32>
    %78 = vector.broadcast %77 : vector<1x16x1xf32> to vector<1x16x16xf32>
    %79 = arith.subf %75, %78 : vector<1x16x16xf32>
    %80 = math.exp %79 : vector<1x16x16xf32>
    %cst_50 = arith.constant dense<0.000000e+00> : vector<1x16xf32>
    %81 = vector.multi_reduction <add>, %80, %cst_50 [2] : vector<1x16x16xf32> to vector<1x16xf32>
    %82 = vector.shape_cast %81 : vector<1x16xf32> to vector<1x16x1xf32>
    %83 = tpu.reciprocal %82 {approx = true} : vector<1x16x1xf32> -> vector<1x16x1xf32>
    %84 = vector.broadcast %83 : vector<1x16x1xf32> to vector<1x16x16xf32>
    %85 = arith.mulf %80, %84 : vector<1x16x16xf32>
    %86 = arith.truncf %85 : vector<1x16x16xf32> to vector<1x16x16xbf16>
    "tpu.trace_start"() <{level = 10 : i32, message = "wqk,wkd->wqd"}> : () -> ()
    %cst_51 = arith.constant dense<0.000000e+00> : vector<1x16x8xf32>
    %87 = tpu.matmul %86, %68, %cst_51 {dimension_numbers = #tpu.dot_dimension_numbers<[2], [1], [1], [2], [0, 0, 0, 1, 1, 2], [0], [0]>} : vector<1x16x16xbf16>, vector<1x16x8xbf16>, vector<1x16x8xf32> -> vector<1x16x8xf32>
    "tpu.trace_stop"() : () -> ()
    %c0_52 = arith.constant 0 : index
    %c0_53 = arith.constant 0 : index
    %c32 = arith.constant 32 : index
    %88 = vector.load %arg1[%c0_52, %c0_53, %c32] : memref<1x16x192xbf16, #tpu.memory_space<vmem>>, vector<1x16x8xbf16>
    %c0_54 = arith.constant 0 : index
    %c0_55 = arith.constant 0 : index
    %c96 = arith.constant 96 : index
    %89 = vector.load %arg1[%c0_54, %c0_55, %c96] : memref<1x16x192xbf16, #tpu.memory_space<vmem>>, vector<1x16x8xbf16>
    %c0_56 = arith.constant 0 : index
    %c0_57 = arith.constant 0 : index
    %c160 = arith.constant 160 : index
    %90 = vector.load %arg1[%c0_56, %c0_57, %c160] : memref<1x16x192xbf16, #tpu.memory_space<vmem>>, vector<1x16x8xbf16>
    "tpu.trace_start"() <{level = 10 : i32, message = "wqd,wkd->wqk"}> : () -> ()
    %cst_58 = arith.constant dense<0.000000e+00> : vector<1x16x16xf32>
    %91 = tpu.matmul %88, %89, %cst_58 {dimension_numbers = #tpu.dot_dimension_numbers<[2], [2], [1], [1], [0, 0, 0, 1, 1, 1], [0], [0]>} : vector<1x16x8xbf16>, vector<1x16x8xbf16>, vector<1x16x16xf32> -> vector<1x16x16xf32>
    "tpu.trace_stop"() : () -> ()
    %cst_59 = arith.constant 0.353553385 : f32
    %92 = vector.broadcast %cst_59 : f32 to vector<1x16x16xf32>
    %93 = arith.mulf %91, %92 : vector<1x16x16xf32>
    %c4 = arith.constant 4 : index
    %c0_60 = arith.constant 0 : index
    %c0_61 = arith.constant 0 : index
    %94 = vector.load %arg2[%c4, %c0_60, %c0_61] : memref<8x16x16xf32, #tpu.memory_space<vmem>>, vector<1x16x16xf32>
    %95 = vector.shape_cast %94 : vector<1x16x16xf32> to vector<16x16xf32>
    %96 = vector.shape_cast %95 : vector<16x16xf32> to vector<1x16x16xf32>
    %97 = arith.addf %93, %96 : vector<1x16x16xf32>
    %cst_62 = arith.constant dense<0xFF800000> : vector<1x16xf32>
    %98 = vector.multi_reduction <maximumf>, %97, %cst_62 [2] : vector<1x16x16xf32> to vector<1x16xf32>
    %99 = vector.shape_cast %98 : vector<1x16xf32> to vector<1x16x1xf32>
    %100 = vector.broadcast %99 : vector<1x16x1xf32> to vector<1x16x16xf32>
    %101 = arith.subf %97, %100 : vector<1x16x16xf32>
    %102 = math.exp %101 : vector<1x16x16xf32>
    %cst_63 = arith.constant dense<0.000000e+00> : vector<1x16xf32>
    %103 = vector.multi_reduction <add>, %102, %cst_63 [2] : vector<1x16x16xf32> to vector<1x16xf32>
    %104 = vector.shape_cast %103 : vector<1x16xf32> to vector<1x16x1xf32>
    %105 = tpu.reciprocal %104 {approx = true} : vector<1x16x1xf32> -> vector<1x16x1xf32>
    %106 = vector.broadcast %105 : vector<1x16x1xf32> to vector<1x16x16xf32>
    %107 = arith.mulf %102, %106 : vector<1x16x16xf32>
    %108 = arith.truncf %107 : vector<1x16x16xf32> to vector<1x16x16xbf16>
    "tpu.trace_start"() <{level = 10 : i32, message = "wqk,wkd->wqd"}> : () -> ()
    %cst_64 = arith.constant dense<0.000000e+00> : vector<1x16x8xf32>
    %109 = tpu.matmul %108, %90, %cst_64 {dimension_numbers = #tpu.dot_dimension_numbers<[2], [1], [1], [2], [0, 0, 0, 1, 1, 2], [0], [0]>} : vector<1x16x16xbf16>, vector<1x16x8xbf16>, vector<1x16x8xf32> -> vector<1x16x8xf32>
    "tpu.trace_stop"() : () -> ()
    %c0_65 = arith.constant 0 : index
    %c0_66 = arith.constant 0 : index
    %c40 = arith.constant 40 : index
    %110 = vector.load %arg1[%c0_65, %c0_66, %c40] : memref<1x16x192xbf16, #tpu.memory_space<vmem>>, vector<1x16x8xbf16>
    %c0_67 = arith.constant 0 : index
    %c0_68 = arith.constant 0 : index
    %c104 = arith.constant 104 : index
    %111 = vector.load %arg1[%c0_67, %c0_68, %c104] : memref<1x16x192xbf16, #tpu.memory_space<vmem>>, vector<1x16x8xbf16>
    %c0_69 = arith.constant 0 : index
    %c0_70 = arith.constant 0 : index
    %c168 = arith.constant 168 : index
    %112 = vector.load %arg1[%c0_69, %c0_70, %c168] : memref<1x16x192xbf16, #tpu.memory_space<vmem>>, vector<1x16x8xbf16>
    "tpu.trace_start"() <{level = 10 : i32, message = "wqd,wkd->wqk"}> : () -> ()
    %cst_71 = arith.constant dense<0.000000e+00> : vector<1x16x16xf32>
    %113 = tpu.matmul %110, %111, %cst_71 {dimension_numbers = #tpu.dot_dimension_numbers<[2], [2], [1], [1], [0, 0, 0, 1, 1, 1], [0], [0]>} : vector<1x16x8xbf16>, vector<1x16x8xbf16>, vector<1x16x16xf32> -> vector<1x16x16xf32>
    "tpu.trace_stop"() : () -> ()
    %cst_72 = arith.constant 0.353553385 : f32
    %114 = vector.broadcast %cst_72 : f32 to vector<1x16x16xf32>
    %115 = arith.mulf %113, %114 : vector<1x16x16xf32>
    %c5 = arith.constant 5 : index
    %c0_73 = arith.constant 0 : index
    %c0_74 = arith.constant 0 : index
    %116 = vector.load %arg2[%c5, %c0_73, %c0_74] : memref<8x16x16xf32, #tpu.memory_space<vmem>>, vector<1x16x16xf32>
    %117 = vector.shape_cast %116 : vector<1x16x16xf32> to vector<16x16xf32>
    %118 = vector.shape_cast %117 : vector<16x16xf32> to vector<1x16x16xf32>
    %119 = arith.addf %115, %118 : vector<1x16x16xf32>
    %cst_75 = arith.constant dense<0xFF800000> : vector<1x16xf32>
    %120 = vector.multi_reduction <maximumf>, %119, %cst_75 [2] : vector<1x16x16xf32> to vector<1x16xf32>
    %121 = vector.shape_cast %120 : vector<1x16xf32> to vector<1x16x1xf32>
    %122 = vector.broadcast %121 : vector<1x16x1xf32> to vector<1x16x16xf32>
    %123 = arith.subf %119, %122 : vector<1x16x16xf32>
    %124 = math.exp %123 : vector<1x16x16xf32>
    %cst_76 = arith.constant dense<0.000000e+00> : vector<1x16xf32>
    %125 = vector.multi_reduction <add>, %124, %cst_76 [2] : vector<1x16x16xf32> to vector<1x16xf32>
    %126 = vector.shape_cast %125 : vector<1x16xf32> to vector<1x16x1xf32>
    %127 = tpu.reciprocal %126 {approx = true} : vector<1x16x1xf32> -> vector<1x16x1xf32>
    %128 = vector.broadcast %127 : vector<1x16x1xf32> to vector<1x16x16xf32>
    %129 = arith.mulf %124, %128 : vector<1x16x16xf32>
    %130 = arith.truncf %129 : vector<1x16x16xf32> to vector<1x16x16xbf16>
    "tpu.trace_start"() <{level = 10 : i32, message = "wqk,wkd->wqd"}> : () -> ()
    %cst_77 = arith.constant dense<0.000000e+00> : vector<1x16x8xf32>
    %131 = tpu.matmul %130, %112, %cst_77 {dimension_numbers = #tpu.dot_dimension_numbers<[2], [1], [1], [2], [0, 0, 0, 1, 1, 2], [0], [0]>} : vector<1x16x16xbf16>, vector<1x16x8xbf16>, vector<1x16x8xf32> -> vector<1x16x8xf32>
    "tpu.trace_stop"() : () -> ()
    %c0_78 = arith.constant 0 : index
    %c0_79 = arith.constant 0 : index
    %c48 = arith.constant 48 : index
    %132 = vector.load %arg1[%c0_78, %c0_79, %c48] : memref<1x16x192xbf16, #tpu.memory_space<vmem>>, vector<1x16x8xbf16>
    %c0_80 = arith.constant 0 : index
    %c0_81 = arith.constant 0 : index
    %c112 = arith.constant 112 : index
    %133 = vector.load %arg1[%c0_80, %c0_81, %c112] : memref<1x16x192xbf16, #tpu.memory_space<vmem>>, vector<1x16x8xbf16>
    %c0_82 = arith.constant 0 : index
    %c0_83 = arith.constant 0 : index
    %c176 = arith.constant 176 : index
    %134 = vector.load %arg1[%c0_82, %c0_83, %c176] : memref<1x16x192xbf16, #tpu.memory_space<vmem>>, vector<1x16x8xbf16>
    "tpu.trace_start"() <{level = 10 : i32, message = "wqd,wkd->wqk"}> : () -> ()
    %cst_84 = arith.constant dense<0.000000e+00> : vector<1x16x16xf32>
    %135 = tpu.matmul %132, %133, %cst_84 {dimension_numbers = #tpu.dot_dimension_numbers<[2], [2], [1], [1], [0, 0, 0, 1, 1, 1], [0], [0]>} : vector<1x16x8xbf16>, vector<1x16x8xbf16>, vector<1x16x16xf32> -> vector<1x16x16xf32>
    "tpu.trace_stop"() : () -> ()
    %cst_85 = arith.constant 0.353553385 : f32
    %136 = vector.broadcast %cst_85 : f32 to vector<1x16x16xf32>
    %137 = arith.mulf %135, %136 : vector<1x16x16xf32>
    %c6 = arith.constant 6 : index
    %c0_86 = arith.constant 0 : index
    %c0_87 = arith.constant 0 : index
    %138 = vector.load %arg2[%c6, %c0_86, %c0_87] : memref<8x16x16xf32, #tpu.memory_space<vmem>>, vector<1x16x16xf32>
    %139 = vector.shape_cast %138 : vector<1x16x16xf32> to vector<16x16xf32>
    %140 = vector.shape_cast %139 : vector<16x16xf32> to vector<1x16x16xf32>
    %141 = arith.addf %137, %140 : vector<1x16x16xf32>
    %cst_88 = arith.constant dense<0xFF800000> : vector<1x16xf32>
    %142 = vector.multi_reduction <maximumf>, %141, %cst_88 [2] : vector<1x16x16xf32> to vector<1x16xf32>
    %143 = vector.shape_cast %142 : vector<1x16xf32> to vector<1x16x1xf32>
    %144 = vector.broadcast %143 : vector<1x16x1xf32> to vector<1x16x16xf32>
    %145 = arith.subf %141, %144 : vector<1x16x16xf32>
    %146 = math.exp %145 : vector<1x16x16xf32>
    %cst_89 = arith.constant dense<0.000000e+00> : vector<1x16xf32>
    %147 = vector.multi_reduction <add>, %146, %cst_89 [2] : vector<1x16x16xf32> to vector<1x16xf32>
    %148 = vector.shape_cast %147 : vector<1x16xf32> to vector<1x16x1xf32>
    %149 = tpu.reciprocal %148 {approx = true} : vector<1x16x1xf32> -> vector<1x16x1xf32>
    %150 = vector.broadcast %149 : vector<1x16x1xf32> to vector<1x16x16xf32>
    %151 = arith.mulf %146, %150 : vector<1x16x16xf32>
    %152 = arith.truncf %151 : vector<1x16x16xf32> to vector<1x16x16xbf16>
    "tpu.trace_start"() <{level = 10 : i32, message = "wqk,wkd->wqd"}> : () -> ()
    %cst_90 = arith.constant dense<0.000000e+00> : vector<1x16x8xf32>
    %153 = tpu.matmul %152, %134, %cst_90 {dimension_numbers = #tpu.dot_dimension_numbers<[2], [1], [1], [2], [0, 0, 0, 1, 1, 2], [0], [0]>} : vector<1x16x16xbf16>, vector<1x16x8xbf16>, vector<1x16x8xf32> -> vector<1x16x8xf32>
    "tpu.trace_stop"() : () -> ()
    %c0_91 = arith.constant 0 : index
    %c0_92 = arith.constant 0 : index
    %c56 = arith.constant 56 : index
    %154 = vector.load %arg1[%c0_91, %c0_92, %c56] : memref<1x16x192xbf16, #tpu.memory_space<vmem>>, vector<1x16x8xbf16>
    %c0_93 = arith.constant 0 : index
    %c0_94 = arith.constant 0 : index
    %c120 = arith.constant 120 : index
    %155 = vector.load %arg1[%c0_93, %c0_94, %c120] : memref<1x16x192xbf16, #tpu.memory_space<vmem>>, vector<1x16x8xbf16>
    %c0_95 = arith.constant 0 : index
    %c0_96 = arith.constant 0 : index
    %c184 = arith.constant 184 : index
    %156 = vector.load %arg1[%c0_95, %c0_96, %c184] : memref<1x16x192xbf16, #tpu.memory_space<vmem>>, vector<1x16x8xbf16>
    "tpu.trace_start"() <{level = 10 : i32, message = "wqd,wkd->wqk"}> : () -> ()
    %cst_97 = arith.constant dense<0.000000e+00> : vector<1x16x16xf32>
    %157 = tpu.matmul %154, %155, %cst_97 {dimension_numbers = #tpu.dot_dimension_numbers<[2], [2], [1], [1], [0, 0, 0, 1, 1, 1], [0], [0]>} : vector<1x16x8xbf16>, vector<1x16x8xbf16>, vector<1x16x16xf32> -> vector<1x16x16xf32>
    "tpu.trace_stop"() : () -> ()
    %cst_98 = arith.constant 0.353553385 : f32
    %158 = vector.broadcast %cst_98 : f32 to vector<1x16x16xf32>
    %159 = arith.mulf %157, %158 : vector<1x16x16xf32>
    %c7 = arith.constant 7 : index
    %c0_99 = arith.constant 0 : index
    %c0_100 = arith.constant 0 : index
    %160 = vector.load %arg2[%c7, %c0_99, %c0_100] : memref<8x16x16xf32, #tpu.memory_space<vmem>>, vector<1x16x16xf32>
    %161 = vector.shape_cast %160 : vector<1x16x16xf32> to vector<16x16xf32>
    %162 = vector.shape_cast %161 : vector<16x16xf32> to vector<1x16x16xf32>
    %163 = arith.addf %159, %162 : vector<1x16x16xf32>
    %cst_101 = arith.constant dense<0xFF800000> : vector<1x16xf32>
    %164 = vector.multi_reduction <maximumf>, %163, %cst_101 [2] : vector<1x16x16xf32> to vector<1x16xf32>
    %165 = vector.shape_cast %164 : vector<1x16xf32> to vector<1x16x1xf32>
    %166 = vector.broadcast %165 : vector<1x16x1xf32> to vector<1x16x16xf32>
    %167 = arith.subf %163, %166 : vector<1x16x16xf32>
    %168 = math.exp %167 : vector<1x16x16xf32>
    %cst_102 = arith.constant dense<0.000000e+00> : vector<1x16xf32>
    %169 = vector.multi_reduction <add>, %168, %cst_102 [2] : vector<1x16x16xf32> to vector<1x16xf32>
    %170 = vector.shape_cast %169 : vector<1x16xf32> to vector<1x16x1xf32>
    %171 = tpu.reciprocal %170 {approx = true} : vector<1x16x1xf32> -> vector<1x16x1xf32>
    %172 = vector.broadcast %171 : vector<1x16x1xf32> to vector<1x16x16xf32>
    %173 = arith.mulf %168, %172 : vector<1x16x16xf32>
    %174 = arith.truncf %173 : vector<1x16x16xf32> to vector<1x16x16xbf16>
    "tpu.trace_start"() <{level = 10 : i32, message = "wqk,wkd->wqd"}> : () -> ()
    %cst_103 = arith.constant dense<0.000000e+00> : vector<1x16x8xf32>
    %175 = tpu.matmul %174, %156, %cst_103 {dimension_numbers = #tpu.dot_dimension_numbers<[2], [1], [1], [2], [0, 0, 0, 1, 1, 2], [0], [0]>} : vector<1x16x16xbf16>, vector<1x16x8xbf16>, vector<1x16x8xf32> -> vector<1x16x8xf32>
    "tpu.trace_stop"() : () -> ()
    %176 = tpu.concatenate %21, %43, %65, %87, %109, %131, %153, %175 in 2 : vector<1x16x8xf32>, vector<1x16x8xf32>, vector<1x16x8xf32>, vector<1x16x8xf32>, vector<1x16x8xf32>, vector<1x16x8xf32>, vector<1x16x8xf32>, vector<1x16x8xf32> -> vector<1x16x64xf32>
    %177 = arith.truncf %176 : vector<1x16x64xf32> to vector<1x16x64xbf16>
    %c0_104 = arith.constant 0 : index
    %c0_105 = arith.constant 0 : index
    %c0_106 = arith.constant 0 : index
    %178 = vector.load %arg3[%c0_104, %c0_105, %c0_106] : memref<1x16x64xbf16, #tpu.memory_space<vmem>>, vector<1x16x64xbf16>
    tpu.vector_store %arg3[%c0_104, %c0_105, %c0_106], %177 {strides = array<i32>} : memref<1x16x64xbf16, #tpu.memory_space<vmem>>, vector<1x16x64xbf16>,
    return
  }
  func.func @transform_0(%arg0: i32) -> (i32, i32, i32) {
    %c0_i32 = arith.constant 0 : i32
    %c0_i32_0 = arith.constant 0 : i32
    %c0_i32_1 = arith.constant 0 : i32
    return %arg0, %c0_i32, %c0_i32_0 : i32, i32, i32
  }
  func.func @transform_1(%arg0: i32) -> (i32, i32, i32) {
    %c0_i32 = arith.constant 0 : i32
    %c0_i32_0 = arith.constant 0 : i32
    %c0_i32_1 = arith.constant 0 : i32
    %c0_i32_2 = arith.constant 0 : i32
    return %c0_i32, %c0_i32_0, %c0_i32_1 : i32, i32, i32
  }
  func.func @transform_2(%arg0: i32) -> (i32, i32, i32) {
    %c0_i32 = arith.constant 0 : i32
    %c0_i32_0 = arith.constant 0 : i32
    %c0_i32_1 = arith.constant 0 : i32
    return %arg0, %c0_i32, %c0_i32_0 : i32, i32, i32
  }
}

module attributes {stable_mosaic.version = 11 : i64} {
  func.func @kernel(%arg0: i32, %arg1: i32, %arg2: i32, %arg3: memref<32x64xbf16, #tpu.memory_space<vmem>>, %arg4: memref<64x256xbf16, #tpu.memory_space<vmem>>, %arg5: memref<1x256xf32, #tpu.memory_space<vmem>>, %arg6: memref<1x64xf32, #tpu.memory_space<vmem>>, %arg7: memref<1x64xf32, #tpu.memory_space<vmem>>, %arg8: memref<32x256xbf16, #tpu.memory_space<vmem>>, %arg9: memref<32x256xf32, #tpu.memory_space<vmem>>) attributes {dimension_semantics = [#tpu.dimension_semantics<parallel>, #tpu.dimension_semantics<parallel>, #tpu.dimension_semantics<arbitrary>], iteration_bounds = array<i64: 1, 1, 1>, scalar_prefetch = 0 : i64, scratch_operands = 1 : i64, tpu.core_type = #tpu.core_type<tc>, window_params = [{transform_indices = @transform_0, window_bounds = array<i64: 32, 64>}, {transform_indices = @transform_1, window_bounds = array<i64: 64, 256>}, {transform_indices = @transform_2, window_bounds = array<i64: 1, 256>}, {pipeline_mode = #tpu.pipeline_mode<synchronous>, transform_indices = @transform_3, window_bounds = array<i64: 1, 64>}, {pipeline_mode = #tpu.pipeline_mode<synchronous>, transform_indices = @transform_4, window_bounds = array<i64: 1, 64>}, {transform_indices = @transform_5, window_bounds = array<i64: 32, 256>}]} {
    %c0_i32 = arith.constant 0 : i32
    %0 = arith.cmpi eq, %arg2, %c0_i32 : i32
    %1 = arith.extui %0 : i1 to i32
    %c0_i32_0 = arith.constant 0 : i32
    %2 = arith.cmpi ne, %1, %c0_i32_0 : i32
    scf.if %2 {
      %cst_19 = arith.constant 0.000000e+00 : f32
      %36 = vector.broadcast %cst_19 : f32 to vector<32x256xf32>
      %c0_20 = arith.constant 0 : index
      %c0_21 = arith.constant 0 : index
      %37 = vector.load %arg9[%c0_20, %c0_21] : memref<32x256xf32, #tpu.memory_space<vmem>>, vector<32x256xf32>
      tpu.vector_store %arg9[%c0_20, %c0_21], %36 {strides = array<i32>} : memref<32x256xf32, #tpu.memory_space<vmem>>, vector<32x256xf32>,
    } else {
    }
    %c0 = arith.constant 0 : index
    %c0_1 = arith.constant 0 : index
    %3 = vector.load %arg3[%c0, %c0_1] : memref<32x64xbf16, #tpu.memory_space<vmem>>, vector<32x64xbf16>
    %4 = arith.extf %3 : vector<32x64xbf16> to vector<32x64xf32>
    %cst = arith.constant dense<0.000000e+00> : vector<32xf32>
    %5 = vector.multi_reduction <add>, %4, %cst [1] : vector<32x64xf32> to vector<32xf32>
    %6 = vector.shape_cast %5 : vector<32xf32> to vector<32x1xf32>
    %cst_2 = arith.constant 6.400000e+01 : f32
    %7 = vector.broadcast %cst_2 : f32 to vector<32x1xf32>
    %8 = arith.divf %6, %7 : vector<32x1xf32>
    %9 = vector.broadcast %8 : vector<32x1xf32> to vector<32x64xf32>
    %10 = arith.subf %4, %9 : vector<32x64xf32>
    %11 = arith.mulf %10, %10 : vector<32x64xf32>
    %cst_3 = arith.constant dense<0.000000e+00> : vector<32xf32>
    %12 = vector.multi_reduction <add>, %11, %cst_3 [1] : vector<32x64xf32> to vector<32xf32>
    %13 = vector.shape_cast %12 : vector<32xf32> to vector<32x1xf32>
    %cst_4 = arith.constant 6.400000e+01 : f32
    %14 = vector.broadcast %cst_4 : f32 to vector<32x1xf32>
    %15 = arith.divf %13, %14 : vector<32x1xf32>
    %cst_5 = arith.constant 9.99999974E-6 : f32
    %16 = vector.broadcast %cst_5 : f32 to vector<32x1xf32>
    %17 = arith.addf %15, %16 : vector<32x1xf32>
    %18 = math.rsqrt %17 : vector<32x1xf32>
    %19 = vector.broadcast %18 : vector<32x1xf32> to vector<32x64xf32>
    %20 = arith.mulf %10, %19 : vector<32x64xf32>
    %c0_6 = arith.constant 0 : index
    %c0_7 = arith.constant 0 : index
    %21 = vector.load %arg6[%c0_6, %c0_7] : memref<1x64xf32, #tpu.memory_space<vmem>>, vector<1x64xf32>
    %22 = vector.broadcast %21 : vector<1x64xf32> to vector<32x64xf32>
    %23 = arith.mulf %20, %22 : vector<32x64xf32>
    %c0_8 = arith.constant 0 : index
    %c0_9 = arith.constant 0 : index
    %24 = vector.load %arg7[%c0_8, %c0_9] : memref<1x64xf32, #tpu.memory_space<vmem>>, vector<1x64xf32>
    %25 = vector.broadcast %24 : vector<1x64xf32> to vector<32x64xf32>
    %26 = arith.addf %23, %25 : vector<32x64xf32>
    %27 = arith.truncf %26 : vector<32x64xf32> to vector<32x64xbf16>
    %c0_10 = arith.constant 0 : index
    %c0_11 = arith.constant 0 : index
    %28 = vector.load %arg9[%c0_10, %c0_11] : memref<32x256xf32, #tpu.memory_space<vmem>>, vector<32x256xf32>
    %c0_12 = arith.constant 0 : index
    %c0_13 = arith.constant 0 : index
    %29 = vector.load %arg4[%c0_12, %c0_13] : memref<64x256xbf16, #tpu.memory_space<vmem>>, vector<64x256xbf16>
    %cst_14 = arith.constant dense<0.000000e+00> : vector<32x256xf32>
    %30 = tpu.matmul %27, %29, %cst_14 {dimension_numbers = #tpu.dot_dimension_numbers<[1], [0], [0], [1], [0, 0, 1, 1], [], []>} : vector<32x64xbf16>, vector<64x256xbf16>, vector<32x256xf32> -> vector<32x256xf32>
    %31 = arith.addf %28, %30 : vector<32x256xf32>
    %c0_15 = arith.constant 0 : index
    %c0_16 = arith.constant 0 : index
    %32 = vector.load %arg9[%c0_15, %c0_16] : memref<32x256xf32, #tpu.memory_space<vmem>>, vector<32x256xf32>
    tpu.vector_store %arg9[%c0_15, %c0_16], %31 {strides = array<i32>} : memref<32x256xf32, #tpu.memory_space<vmem>>, vector<32x256xf32>,
    %c0_i32_17 = arith.constant 0 : i32
    %33 = arith.cmpi eq, %arg2, %c0_i32_17 : i32
    %34 = arith.extui %33 : i1 to i32
    %c0_i32_18 = arith.constant 0 : i32
    %35 = arith.cmpi ne, %34, %c0_i32_18 : i32
    scf.if %35 {
      %c0_19 = arith.constant 0 : index
      %c0_20 = arith.constant 0 : index
      %36 = vector.load %arg9[%c0_19, %c0_20] : memref<32x256xf32, #tpu.memory_space<vmem>>, vector<32x256xf32>
      %c0_21 = arith.constant 0 : index
      %c0_22 = arith.constant 0 : index
      %37 = vector.load %arg5[%c0_21, %c0_22] : memref<1x256xf32, #tpu.memory_space<vmem>>, vector<1x256xf32>
      %38 = vector.broadcast %37 : vector<1x256xf32> to vector<32x256xf32>
      %39 = arith.addf %36, %38 : vector<32x256xf32>
      %cst_23 = arith.constant 5.000000e-01 : f32
      %40 = vector.broadcast %cst_23 : f32 to vector<32x256xf32>
      %41 = arith.mulf %40, %39 : vector<32x256xf32>
      %cst_24 = arith.constant 0.707106769 : f32
      %42 = vector.broadcast %cst_24 : f32 to vector<32x256xf32>
      %43 = arith.mulf %39, %42 : vector<32x256xf32>
      %44 = math.absf %43 : vector<32x256xf32>
      %cst_25 = arith.constant 0.327591091 : f32
      %45 = vector.broadcast %cst_25 : f32 to vector<32x256xf32>
      %46 = arith.mulf %45, %44 : vector<32x256xf32>
      %cst_26 = arith.constant 1.000000e+00 : f32
      %47 = vector.broadcast %cst_26 : f32 to vector<32x256xf32>
      %48 = arith.addf %47, %46 : vector<32x256xf32>
      %cst_27 = arith.constant 1.000000e+00 : f32
      %49 = vector.broadcast %cst_27 : f32 to vector<32x256xf32>
      %50 = arith.divf %49, %48 : vector<32x256xf32>
      %cst_28 = arith.constant 1.06140542 : f32
      %51 = vector.broadcast %cst_28 : f32 to vector<32x256xf32>
      %52 = arith.mulf %51, %50 : vector<32x256xf32>
      %cst_29 = arith.constant -1.45315206 : f32
      %53 = vector.broadcast %cst_29 : f32 to vector<32x256xf32>
      %54 = arith.addf %52, %53 : vector<32x256xf32>
      %55 = arith.mulf %54, %50 : vector<32x256xf32>
      %cst_30 = arith.constant 1.42141378 : f32
      %56 = vector.broadcast %cst_30 : f32 to vector<32x256xf32>
      %57 = arith.addf %55, %56 : vector<32x256xf32>
      %58 = arith.mulf %57, %50 : vector<32x256xf32>
      %cst_31 = arith.constant -0.284496725 : f32
      %59 = vector.broadcast %cst_31 : f32 to vector<32x256xf32>
      %60 = arith.addf %58, %59 : vector<32x256xf32>
      %61 = arith.mulf %60, %50 : vector<32x256xf32>
      %cst_32 = arith.constant 0.254829586 : f32
      %62 = vector.broadcast %cst_32 : f32 to vector<32x256xf32>
      %63 = arith.addf %61, %62 : vector<32x256xf32>
      %64 = arith.mulf %63, %50 : vector<32x256xf32>
      %cst_33 = arith.constant 0.000000e+00 : f32
      %65 = vector.broadcast %cst_33 : f32 to vector<32x256xf32>
      %66 = arith.subf %65, %44 : vector<32x256xf32>
      %67 = arith.mulf %66, %44 : vector<32x256xf32>
      %68 = math.exp %67 : vector<32x256xf32>
      %69 = arith.mulf %64, %68 : vector<32x256xf32>
      %cst_34 = arith.constant 1.000000e+00 : f32
      %70 = vector.broadcast %cst_34 : f32 to vector<32x256xf32>
      %71 = arith.subf %70, %69 : vector<32x256xf32>
      %cst_35 = arith.constant 0.000000e+00 : f32
      %72 = vector.broadcast %cst_35 : f32 to vector<32x256xf32>
      %73 = arith.cmpf olt, %43, %72 : vector<32x256xf32>
      %cst_36 = arith.constant 0.000000e+00 : f32
      %74 = vector.broadcast %cst_36 : f32 to vector<32x256xf32>
      %75 = arith.subf %74, %71 : vector<32x256xf32>
      %76 = arith.select %73, %75, %71 : vector<32x256xi1>, vector<32x256xf32>
      %cst_37 = arith.constant 1.000000e+00 : f32
      %77 = vector.broadcast %cst_37 : f32 to vector<32x256xf32>
      %78 = arith.addf %77, %76 : vector<32x256xf32>
      %79 = arith.mulf %41, %78 : vector<32x256xf32>
      %80 = arith.truncf %79 : vector<32x256xf32> to vector<32x256xbf16>
      %c0_38 = arith.constant 0 : index
      %c0_39 = arith.constant 0 : index
      %81 = vector.load %arg8[%c0_38, %c0_39] : memref<32x256xbf16, #tpu.memory_space<vmem>>, vector<32x256xbf16>
      tpu.vector_store %arg8[%c0_38, %c0_39], %80 {strides = array<i32>} : memref<32x256xbf16, #tpu.memory_space<vmem>>, vector<32x256xbf16>,
    } else {
    }
    return
  }
  func.func @transform_0(%arg0: i32, %arg1: i32, %arg2: i32) -> (i32, i32) {
    %c0_i32 = arith.constant 0 : i32
    return %arg0, %arg2 : i32, i32
  }
  func.func @transform_1(%arg0: i32, %arg1: i32, %arg2: i32) -> (i32, i32) {
    %c0_i32 = arith.constant 0 : i32
    return %arg2, %arg1 : i32, i32
  }
  func.func @transform_2(%arg0: i32, %arg1: i32, %arg2: i32) -> (i32, i32) {
    %c0_i32 = arith.constant 0 : i32
    %c0_i32_0 = arith.constant 0 : i32
    return %c0_i32, %arg1 : i32, i32
  }
  func.func @transform_3(%arg0: i32, %arg1: i32, %arg2: i32) -> (i32, i32) {
    %c0_i32 = arith.constant 0 : i32
    %c0_i32_0 = arith.constant 0 : i32
    %c0_i32_1 = arith.constant 0 : i32
    return %c0_i32, %c0_i32_0 : i32, i32
  }
  func.func @transform_4(%arg0: i32, %arg1: i32, %arg2: i32) -> (i32, i32) {
    %c0_i32 = arith.constant 0 : i32
    %c0_i32_0 = arith.constant 0 : i32
    %c0_i32_1 = arith.constant 0 : i32
    return %c0_i32, %c0_i32_0 : i32, i32
  }
  func.func @transform_5(%arg0: i32, %arg1: i32, %arg2: i32) -> (i32, i32) {
    %c0_i32 = arith.constant 0 : i32
    return %arg0, %arg1 : i32, i32
  }
}

module attributes {stable_mosaic.version = 11 : i64} {
  func.func @kernel(%arg0: i32, %arg1: i32, %arg2: i32, %arg3: memref<32x64xbf16, #tpu.memory_space<vmem>>, %arg4: memref<64x64xbf16, #tpu.memory_space<vmem>>, %arg5: memref<1x64xf32, #tpu.memory_space<vmem>>, %arg6: memref<32x64xbf16, #tpu.memory_space<vmem>>, %arg7: memref<32x64xbf16, #tpu.memory_space<vmem>>, %arg8: memref<32x64xf32, #tpu.memory_space<vmem>>) attributes {dimension_semantics = [#tpu.dimension_semantics<parallel>, #tpu.dimension_semantics<parallel>, #tpu.dimension_semantics<arbitrary>], iteration_bounds = array<i64: 1, 1, 1>, scalar_prefetch = 0 : i64, scratch_operands = 1 : i64, tpu.core_type = #tpu.core_type<tc>, window_params = [{transform_indices = @transform_0, window_bounds = array<i64: 32, 64>}, {transform_indices = @transform_1, window_bounds = array<i64: 64, 64>}, {transform_indices = @transform_2, window_bounds = array<i64: 1, 64>}, {transform_indices = @transform_3, window_bounds = array<i64: 32, 64>}, {transform_indices = @transform_4, window_bounds = array<i64: 32, 64>}]} {
    %c0_i32 = arith.constant 0 : i32
    %0 = arith.cmpi eq, %arg2, %c0_i32 : i32
    %1 = arith.extui %0 : i1 to i32
    %c0_i32_0 = arith.constant 0 : i32
    %2 = arith.cmpi ne, %1, %c0_i32_0 : i32
    scf.if %2 {
      %cst_10 = arith.constant 0.000000e+00 : f32
      %12 = vector.broadcast %cst_10 : f32 to vector<32x64xf32>
      %c0_11 = arith.constant 0 : index
      %c0_12 = arith.constant 0 : index
      %13 = vector.load %arg8[%c0_11, %c0_12] : memref<32x64xf32, #tpu.memory_space<vmem>>, vector<32x64xf32>
      tpu.vector_store %arg8[%c0_11, %c0_12], %12 {strides = array<i32>} : memref<32x64xf32, #tpu.memory_space<vmem>>, vector<32x64xf32>,
    } else {
    }
    %c0 = arith.constant 0 : index
    %c0_1 = arith.constant 0 : index
    %3 = vector.load %arg3[%c0, %c0_1] : memref<32x64xbf16, #tpu.memory_space<vmem>>, vector<32x64xbf16>
    %c0_2 = arith.constant 0 : index
    %c0_3 = arith.constant 0 : index
    %4 = vector.load %arg8[%c0_2, %c0_3] : memref<32x64xf32, #tpu.memory_space<vmem>>, vector<32x64xf32>
    %c0_4 = arith.constant 0 : index
    %c0_5 = arith.constant 0 : index
    %5 = vector.load %arg4[%c0_4, %c0_5] : memref<64x64xbf16, #tpu.memory_space<vmem>>, vector<64x64xbf16>
    %cst = arith.constant dense<0.000000e+00> : vector<32x64xf32>
    %6 = tpu.matmul %3, %5, %cst {dimension_numbers = #tpu.dot_dimension_numbers<[1], [0], [0], [1], [0, 0, 1, 1], [], []>} : vector<32x64xbf16>, vector<64x64xbf16>, vector<32x64xf32> -> vector<32x64xf32>
    %7 = arith.addf %4, %6 : vector<32x64xf32>
    %c0_6 = arith.constant 0 : index
    %c0_7 = arith.constant 0 : index
    %8 = vector.load %arg8[%c0_6, %c0_7] : memref<32x64xf32, #tpu.memory_space<vmem>>, vector<32x64xf32>
    tpu.vector_store %arg8[%c0_6, %c0_7], %7 {strides = array<i32>} : memref<32x64xf32, #tpu.memory_space<vmem>>, vector<32x64xf32>,
    %c0_i32_8 = arith.constant 0 : i32
    %9 = arith.cmpi eq, %arg2, %c0_i32_8 : i32
    %10 = arith.extui %9 : i1 to i32
    %c0_i32_9 = arith.constant 0 : i32
    %11 = arith.cmpi ne, %10, %c0_i32_9 : i32
    scf.if %11 {
      %c0_10 = arith.constant 0 : index
      %c0_11 = arith.constant 0 : index
      %12 = vector.load %arg8[%c0_10, %c0_11] : memref<32x64xf32, #tpu.memory_space<vmem>>, vector<32x64xf32>
      %c0_12 = arith.constant 0 : index
      %c0_13 = arith.constant 0 : index
      %13 = vector.load %arg5[%c0_12, %c0_13] : memref<1x64xf32, #tpu.memory_space<vmem>>, vector<1x64xf32>
      %14 = vector.broadcast %13 : vector<1x64xf32> to vector<32x64xf32>
      %15 = arith.addf %12, %14 : vector<32x64xf32>
      %c0_14 = arith.constant 0 : index
      %c0_15 = arith.constant 0 : index
      %16 = vector.load %arg6[%c0_14, %c0_15] : memref<32x64xbf16, #tpu.memory_space<vmem>>, vector<32x64xbf16>
      %17 = arith.extf %16 : vector<32x64xbf16> to vector<32x64xf32>
      %18 = arith.addf %15, %17 : vector<32x64xf32>
      %19 = arith.truncf %18 : vector<32x64xf32> to vector<32x64xbf16>
      %c0_16 = arith.constant 0 : index
      %c0_17 = arith.constant 0 : index
      %20 = vector.load %arg7[%c0_16, %c0_17] : memref<32x64xbf16, #tpu.memory_space<vmem>>, vector<32x64xbf16>
      tpu.vector_store %arg7[%c0_16, %c0_17], %19 {strides = array<i32>} : memref<32x64xbf16, #tpu.memory_space<vmem>>, vector<32x64xbf16>,
    } else {
    }
    return
  }
  func.func @transform_0(%arg0: i32, %arg1: i32, %arg2: i32) -> (i32, i32) {
    %c0_i32 = arith.constant 0 : i32
    return %arg0, %arg2 : i32, i32
  }
  func.func @transform_1(%arg0: i32, %arg1: i32, %arg2: i32) -> (i32, i32) {
    %c0_i32 = arith.constant 0 : i32
    return %arg2, %arg1 : i32, i32
  }
  func.func @transform_2(%arg0: i32, %arg1: i32, %arg2: i32) -> (i32, i32) {
    %c0_i32 = arith.constant 0 : i32
    %c0_i32_0 = arith.constant 0 : i32
    return %c0_i32, %arg1 : i32, i32
  }
  func.func @transform_3(%arg0: i32, %arg1: i32, %arg2: i32) -> (i32, i32) {
    %c0_i32 = arith.constant 0 : i32
    return %arg0, %arg1 : i32, i32
  }
  func.func @transform_4(%arg0: i32, %arg1: i32, %arg2: i32) -> (i32, i32) {
    %c0_i32 = arith.constant 0 : i32
    return %arg0, %arg1 : i32, i32
  }
}

module attributes {stable_mosaic.version = 11 : i64} {
  func.func @kernel(%arg0: i32, %arg1: i32, %arg2: i32, %arg3: memref<32x256xbf16, #tpu.memory_space<vmem>>, %arg4: memref<256x64xbf16, #tpu.memory_space<vmem>>, %arg5: memref<1x64xf32, #tpu.memory_space<vmem>>, %arg6: memref<32x64xbf16, #tpu.memory_space<vmem>>, %arg7: memref<32x64xbf16, #tpu.memory_space<vmem>>, %arg8: memref<32x64xf32, #tpu.memory_space<vmem>>) attributes {dimension_semantics = [#tpu.dimension_semantics<parallel>, #tpu.dimension_semantics<parallel>, #tpu.dimension_semantics<arbitrary>], iteration_bounds = array<i64: 1, 1, 1>, scalar_prefetch = 0 : i64, scratch_operands = 1 : i64, tpu.core_type = #tpu.core_type<tc>, window_params = [{transform_indices = @transform_0, window_bounds = array<i64: 32, 256>}, {transform_indices = @transform_1, window_bounds = array<i64: 256, 64>}, {transform_indices = @transform_2, window_bounds = array<i64: 1, 64>}, {transform_indices = @transform_3, window_bounds = array<i64: 32, 64>}, {transform_indices = @transform_4, window_bounds = array<i64: 32, 64>}]} {
    %c0_i32 = arith.constant 0 : i32
    %0 = arith.cmpi eq, %arg2, %c0_i32 : i32
    %1 = arith.extui %0 : i1 to i32
    %c0_i32_0 = arith.constant 0 : i32
    %2 = arith.cmpi ne, %1, %c0_i32_0 : i32
    scf.if %2 {
      %cst_10 = arith.constant 0.000000e+00 : f32
      %12 = vector.broadcast %cst_10 : f32 to vector<32x64xf32>
      %c0_11 = arith.constant 0 : index
      %c0_12 = arith.constant 0 : index
      %13 = vector.load %arg8[%c0_11, %c0_12] : memref<32x64xf32, #tpu.memory_space<vmem>>, vector<32x64xf32>
      tpu.vector_store %arg8[%c0_11, %c0_12], %12 {strides = array<i32>} : memref<32x64xf32, #tpu.memory_space<vmem>>, vector<32x64xf32>,
    } else {
    }
    %c0 = arith.constant 0 : index
    %c0_1 = arith.constant 0 : index
    %3 = vector.load %arg3[%c0, %c0_1] : memref<32x256xbf16, #tpu.memory_space<vmem>>, vector<32x256xbf16>
    %c0_2 = arith.constant 0 : index
    %c0_3 = arith.constant 0 : index
    %4 = vector.load %arg8[%c0_2, %c0_3] : memref<32x64xf32, #tpu.memory_space<vmem>>, vector<32x64xf32>
    %c0_4 = arith.constant 0 : index
    %c0_5 = arith.constant 0 : index
    %5 = vector.load %arg4[%c0_4, %c0_5] : memref<256x64xbf16, #tpu.memory_space<vmem>>, vector<256x64xbf16>
    %cst = arith.constant dense<0.000000e+00> : vector<32x64xf32>
    %6 = tpu.matmul %3, %5, %cst {dimension_numbers = #tpu.dot_dimension_numbers<[1], [0], [0], [1], [0, 0, 1, 1], [], []>} : vector<32x256xbf16>, vector<256x64xbf16>, vector<32x64xf32> -> vector<32x64xf32>
    %7 = arith.addf %4, %6 : vector<32x64xf32>
    %c0_6 = arith.constant 0 : index
    %c0_7 = arith.constant 0 : index
    %8 = vector.load %arg8[%c0_6, %c0_7] : memref<32x64xf32, #tpu.memory_space<vmem>>, vector<32x64xf32>
    tpu.vector_store %arg8[%c0_6, %c0_7], %7 {strides = array<i32>} : memref<32x64xf32, #tpu.memory_space<vmem>>, vector<32x64xf32>,
    %c0_i32_8 = arith.constant 0 : i32
    %9 = arith.cmpi eq, %arg2, %c0_i32_8 : i32
    %10 = arith.extui %9 : i1 to i32
    %c0_i32_9 = arith.constant 0 : i32
    %11 = arith.cmpi ne, %10, %c0_i32_9 : i32
    scf.if %11 {
      %c0_10 = arith.constant 0 : index
      %c0_11 = arith.constant 0 : index
      %12 = vector.load %arg8[%c0_10, %c0_11] : memref<32x64xf32, #tpu.memory_space<vmem>>, vector<32x64xf32>
      %c0_12 = arith.constant 0 : index
      %c0_13 = arith.constant 0 : index
      %13 = vector.load %arg5[%c0_12, %c0_13] : memref<1x64xf32, #tpu.memory_space<vmem>>, vector<1x64xf32>
      %14 = vector.broadcast %13 : vector<1x64xf32> to vector<32x64xf32>
      %15 = arith.addf %12, %14 : vector<32x64xf32>
      %c0_14 = arith.constant 0 : index
      %c0_15 = arith.constant 0 : index
      %16 = vector.load %arg6[%c0_14, %c0_15] : memref<32x64xbf16, #tpu.memory_space<vmem>>, vector<32x64xbf16>
      %17 = arith.extf %16 : vector<32x64xbf16> to vector<32x64xf32>
      %18 = arith.addf %15, %17 : vector<32x64xf32>
      %19 = arith.truncf %18 : vector<32x64xf32> to vector<32x64xbf16>
      %c0_16 = arith.constant 0 : index
      %c0_17 = arith.constant 0 : index
      %20 = vector.load %arg7[%c0_16, %c0_17] : memref<32x64xbf16, #tpu.memory_space<vmem>>, vector<32x64xbf16>
      tpu.vector_store %arg7[%c0_16, %c0_17], %19 {strides = array<i32>} : memref<32x64xbf16, #tpu.memory_space<vmem>>, vector<32x64xbf16>,
    } else {
    }
    return
  }
  func.func @transform_0(%arg0: i32, %arg1: i32, %arg2: i32) -> (i32, i32) {
    %c0_i32 = arith.constant 0 : i32
    return %arg0, %arg2 : i32, i32
  }
  func.func @transform_1(%arg0: i32, %arg1: i32, %arg2: i32) -> (i32, i32) {
    %c0_i32 = arith.constant 0 : i32
    return %arg2, %arg1 : i32, i32
  }
  func.func @transform_2(%arg0: i32, %arg1: i32, %arg2: i32) -> (i32, i32) {
    %c0_i32 = arith.constant 0 : i32
    %c0_i32_0 = arith.constant 0 : i32
    return %c0_i32, %arg1 : i32, i32
  }
  func.func @transform_3(%arg0: i32, %arg1: i32, %arg2: i32) -> (i32, i32) {
    %c0_i32 = arith.constant 0 : i32
    return %arg0, %arg1 : i32, i32
  }
  func.func @transform_4(%arg0: i32, %arg1: i32, %arg2: i32) -> (i32, i32) {
    %c0_i32 = arith.constant 0 : i32
    return %arg0, %arg1 : i32, i32
  }
}

</mosaic_0001>

<llo_original>
// kernel: long_term_stage.23
$region0: #{long_term_stage.23}
  #allocation0 [shape = 'u32[]', space=smem, size = 0x4, offset = 0x4, fixed_abs, tag = 'smem constant byte address 0x4 - core index']
  #allocation1 [shape = 'u32[72,128]{1,0:T(1,128)}', space=vmem, size = 0x9000, scoped, tag = 'internal scratch']
  #allocation2 [shape = 'f32[128,32]{1,0:T(8,128)}', space=vmem, size = 0x10000, scoped, tag = 'scratch operand']
  %s0 = inlined_call_operand.vmem [shape: bf16[128,32], index: 0, kind: input, shape index: {}]
  %s1 = inlined_call_operand.vmem [shape: bf16[32,32], index: 1, kind: input, shape index: {}]
  %s2 = inlined_call_operand.vmem [shape: f32[1,32], index: 2, kind: input, shape index: {}]
  %s3 = inlined_call_operand.vmem [shape: bf16[128,32], index: 3, kind: input, shape index: {}]
  %s4 = inlined_call_operand.vmem [shape: bf16[128,32], index: 4, kind: output, shape index: {}]
  %s5 = sld [smem:[#allocation0]]
  $region34: #{long_term_stage.23} parent=0
    _
  %s7 = ssub.s32 1, %s5
  %s8 = scalar_select 0, %s7, %s5
  // Predicated region
  $region2: #{long_term_stage.23} parent=0 // pred_check
    _
  $region3: #{long_term_stage.23} parent=0 // pred_check_branch
    %10 = sbr.rel (0) target = $region5
  $region4: #{long_term_stage.23} parent=0 // pred_region
    _
  $region5: #{long_term_stage.23} parent=0 // pred_fallthru
    _
  // Predicated region
  $region6: #{long_term_stage.23} parent=0 // pred_check
    _
  $region7: #{long_term_stage.23} parent=0 // pred_check_branch
    %12 = sbr.rel (0) target = $region9
  $region8: #{long_term_stage.23} parent=0 // pred_region
    _
  $region9: #{long_term_stage.23} parent=0 // pred_fallthru
    _
  // Predicated region
  $region10: #{long_term_stage.23} parent=0 // pred_check
    _
  $region11: #{long_term_stage.23} parent=0 // pred_check_branch
    %14 = sbr.rel (0) target = $region13
  $region12: #{long_term_stage.23} parent=0 // pred_region
    _
  $region13: #{long_term_stage.23} parent=0 // pred_fallthru
    _
  // Predicated region
  $region14: #{long_term_stage.23} parent=0 // pred_check
    _
  $region15: #{long_term_stage.23} parent=0 // pred_check_branch
    %16 = sbr.rel (0) target = $region17
  $region16: #{long_term_stage.23} parent=0 // pred_region
    _
  $region17: #{long_term_stage.23} parent=0 // pred_fallthru
    _
  %p18 = scmp.eq.s32.totalorder 0, 0
  // Predicated region
  $region18: #{long_term_stage.23} parent=0 // pred_check
    %p19 = pneg %p18
  $region19: #{long_term_stage.23} parent=0 // pred_check_branch
    %21 = sbr.rel (%p19) target = $region21
  $region20: #{long_term_stage.23} parent=0 // pred_region
    %vm22 = vcmask 261120
    %23 = vst.msk [vmem:[#allocation2] sm:$0xff] %vm22, 0.0
    %24 = vst.msk [vmem:[#allocation2 + $0x8] sm:$0xff] %vm22, 0.0
    %25 = vst.msk [vmem:[#allocation2 + $0x10] sm:$0xff] %vm22, 0.0
    %26 = vst.msk [vmem:[#allocation2 + $0x18] sm:$0xff] %vm22, 0.0
    %27 = vst.msk [vmem:[#allocation2 + $0x20] sm:$0xff] %vm22, 0.0
    %28 = vst.msk [vmem:[#allocation2 + $0x28] sm:$0xff] %vm22, 0.0
    %29 = vst.msk [vmem:[#allocation2 + $0x30] sm:$0xff] %vm22, 0.0
    %30 = vst.msk [vmem:[#allocation2 + $0x38] sm:$0xff] %vm22, 0.0
    %31 = vst.msk [vmem:[#allocation2 + $0x40] sm:$0xff] %vm22, 0.0
    %32 = vst.msk [vmem:[#allocation2 + $0x48] sm:$0xff] %vm22, 0.0
    %33 = vst.msk [vmem:[#allocation2 + $0x50] sm:$0xff] %vm22, 0.0
    %34 = vst.msk [vmem:[#allocation2 + $0x58] sm:$0xff] %vm22, 0.0
    %35 = vst.msk [vmem:[#allocation2 + $0x60] sm:$0xff] %vm22, 0.0
    %36 = vst.msk [vmem:[#allocation2 + $0x68] sm:$0xff] %vm22, 0.0
    %37 = vst.msk [vmem:[#allocation2 + $0x70] sm:$0xff] %vm22, 0.0
    %38 = vst.msk [vmem:[#allocation2 + $0x78] sm:$0xff] %vm22, 0.0
  $region21: #{long_term_stage.23} parent=0 // pred_fallthru
    _
  %v39 = vld [vmem:[%s0] sm:$0xf]
  %v40 = vld [vmem:[%s0 + $0x4] sm:$0xf]
  %v41 = vld [vmem:[%s0 + $0x8] sm:$0xf]
  %v42 = vld [vmem:[%s0 + $0xc] sm:$0xf]
  %v43 = vld [vmem:[%s0 + $0x10] sm:$0xf]
  %v44 = vld [vmem:[%s0 + $0x14] sm:$0xf]
  %v45 = vld [vmem:[%s0 + $0x18] sm:$0xf]
  %v46 = vld [vmem:[%s0 + $0x1c] sm:$0xf]
  %v47 = vld [vmem:[%s0 + $0x20] sm:$0xf]
  %v48 = vld [vmem:[%s0 + $0x24] sm:$0xf]
  %v49 = vld [vmem:[%s0 + $0x28] sm:$0xf]
  %v50 = vld [vmem:[%s0 + $0x2c] sm:$0xf]
  %v51 = vld [vmem:[%s0 + $0x30] sm:$0xf]
  %v52 = vld [vmem:[%s0 + $0x34] sm:$0xf]
  %v53 = vld [vmem:[%s0 + $0x38] sm:$0xf]
  %v54 = vld [vmem:[%s0 + $0x3c] sm:$0xf]
  %v55 = vld [vmem:[#allocation2] sm:$0xff]
  %v56 = vld [vmem:[#allocation2 + $0x8] sm:$0xff]
  %v57 = vld [vmem:[#allocation2 + $0x10] sm:$0xff]
  %v58 = vld [vmem:[#allocation2 + $0x18] sm:$0xff]
  %v59 = vld [vmem:[#allocation2 + $0x20] sm:$0xff]
  %v60 = vld [vmem:[#allocation2 + $0x28] sm:$0xff]
  %v61 = vld [vmem:[#allocation2 + $0x30] sm:$0xff]
  %v62 = vld [vmem:[#allocation2 + $0x38] sm:$0xff]
  %v63 = vld [vmem:[#allocation2 + $0x40] sm:$0xff]
  %v64 = vld [vmem:[#allocation2 + $0x48] sm:$0xff]
  %v65 = vld [vmem:[#allocation2 + $0x50] sm:$0xff]
  %v66 = vld [vmem:[#allocation2 + $0x58] sm:$0xff]
  %v67 = vld [vmem:[#allocation2 + $0x60] sm:$0xff]
  %v68 = vld [vmem:[#allocation2 + $0x68] sm:$0xff]
  %v69 = vld [vmem:[#allocation2 + $0x70] sm:$0xff]
  %v70 = vld [vmem:[#allocation2 + $0x78] sm:$0xff]
  %v71 = vld [vmem:[%s1] sm:$0xf]
  %v72 = vld [vmem:[%s1 + $0x4] sm:$0xf]
  %v73 = vld [vmem:[%s1 + $0x8] sm:$0xf]
  %v74 = vld [vmem:[%s1 + $0xc] sm:$0xf]
  %v91 = vunpack.c.l.b16 %v39
  %v92 = vunpack.c.l.b16 %v40
  %v93 = vunpack.c.l.b16 %v41
  %v94 = vunpack.c.l.b16 %v42
  %v95 = vunpack.c.l.b16 %v43
  %v96 = vunpack.c.l.b16 %v44
  %v97 = vunpack.c.l.b16 %v45
  %v98 = vunpack.c.l.b16 %v46
  %v99 = vunpack.c.l.b16 %v47
  %v100 = vunpack.c.l.b16 %v48
  %v101 = vunpack.c.l.b16 %v49
  %v102 = vunpack.c.l.b16 %v50
  %v103 = vunpack.c.l.b16 %v51
  %v104 = vunpack.c.l.b16 %v52
  %v105 = vunpack.c.l.b16 %v53
  %v106 = vunpack.c.l.b16 %v54
  %v107 = vpack.c.b16 %v92, %v91
  %v108 = vpack.c.b16 %v94, %v93
  %v109 = vpack.c.b16 %v96, %v95
  %v110 = vpack.c.b16 %v98, %v97
  %v111 = vpack.c.b16 %v100, %v99
  %v112 = vpack.c.b16 %v102, %v101
  %v113 = vpack.c.b16 %v104, %v103
  %v114 = vpack.c.b16 %v106, %v105
  %v119 = vunpack.c.l.b16 %v71
  %v120 = vunpack.c.l.b16 %v72
  %v121 = vunpack.c.l.b16 %v73
  %v122 = vunpack.c.l.b16 %v74
  %v123 = vpack.c.b16 %v120, %v119
  %v124 = vpack.c.b16 %v122, %v121
  %vm127 = vcmask 261120
  %v129 = vsel %vm127, %v107, 0
  %v132 = vsel %vm127, %v108, 0
  %v135 = vsel %vm127, %v109, 0
  %v138 = vsel %vm127, %v110, 0
  %v141 = vsel %vm127, %v111, 0
  %v144 = vsel %vm127, %v112, 0
  %v147 = vsel %vm127, %v113, 0
  %v150 = vsel %vm127, %v114, 0
  %152 = vmatpush.bf16.msra.mxu0 0
  %153 = vmatpush.bf16.msra.mxu0 0
  %154 = vmatpush.bf16.msra.mxu0 0
  %155 = vmatpush.bf16.msra.mxu0 0
  %156 = vmatpush.bf16.msra.mxu0 0
  %157 = vmatpush.bf16.msra.mxu0 0
  %158 = vmatpush.bf16.msra.mxu0 %v124
  %159 = vmatpush.bf16.msra.mxu0 %v123
  %160 = vmatmul.bf16.gmra.mxu0 %v129
  %v161 = vpop.f32.mrf.mxu0
  %v162 = vadd.f32 0.0, %v161
  %v163 = vpop.f32.mrf.mxu0
  %v164 = vadd.f32 0.0, %v163
  %165 = vmatmul.bf16.gmra.mxu0 %v132
  %v166 = vpop.f32.mrf.mxu0
  %v167 = vadd.f32 0.0, %v166
  %v168 = vpop.f32.mrf.mxu0
  %v169 = vadd.f32 0.0, %v168
  %170 = vmatmul.bf16.gmra.mxu0 %v135
  %v171 = vpop.f32.mrf.mxu0
  %v172 = vadd.f32 0.0, %v171
  %v173 = vpop.f32.mrf.mxu0
  %v174 = vadd.f32 0.0, %v173
  %175 = vmatmul.bf16.gmra.mxu0 %v138
  %v176 = vpop.f32.mrf.mxu0
  %v177 = vadd.f32 0.0, %v176
  %v178 = vpop.f32.mrf.mxu0
  %v179 = vadd.f32 0.0, %v178
  %180 = vmatmul.bf16.gmra.mxu0 %v141
  %v181 = vpop.f32.mrf.mxu0
  %v182 = vadd.f32 0.0, %v181
  %v183 = vpop.f32.mrf.mxu0
  %v184 = vadd.f32 0.0, %v183
  %185 = vmatmul.bf16.gmra.mxu0 %v144
  %v186 = vpop.f32.mrf.mxu0
  %v187 = vadd.f32 0.0, %v186
  %v188 = vpop.f32.mrf.mxu0
  %v189 = vadd.f32 0.0, %v188
  %190 = vmatmul.bf16.gmra.mxu0 %v147
  %v191 = vpop.f32.mrf.mxu0
  %v192 = vadd.f32 0.0, %v191
  %v193 = vpop.f32.mrf.mxu0
  %v194 = vadd.f32 0.0, %v193
  %195 = vmatmul.bf16.gmra.mxu0 %v150
  %v196 = vpop.f32.mrf.mxu0
  %v197 = vadd.f32 0.0, %v196
  %v198 = vpop.f32.mrf.mxu0
  %v199 = vadd.f32 0.0, %v198
  %200 = vdwg.mxu0
  %v201 = vadd.f32 %v55, %v162
  %v202 = vadd.f32 %v56, %v164
  %v203 = vadd.f32 %v57, %v167
  %v204 = vadd.f32 %v58, %v169
  %v205 = vadd.f32 %v59, %v172
  %v206 = vadd.f32 %v60, %v174
  %v207 = vadd.f32 %v61, %v177
  %v208 = vadd.f32 %v62, %v179
  %v209 = vadd.f32 %v63, %v182
  %v210 = vadd.f32 %v64, %v184
  %v211 = vadd.f32 %v65, %v187
  %v212 = vadd.f32 %v66, %v189
  %v213 = vadd.f32 %v67, %v192
  %v214 = vadd.f32 %v68, %v194
  %v215 = vadd.f32 %v69, %v197
  %v216 = vadd.f32 %v70, %v199
  %217 = vst.msk [vmem:[#allocation2] sm:$0xff] %vm127, %v201
  %218 = vst.msk [vmem:[#allocation2 + $0x8] sm:$0xff] %vm127, %v202
  %219 = vst.msk [vmem:[#allocation2 + $0x10] sm:$0xff] %vm127, %v203
  %220 = vst.msk [vmem:[#allocation2 + $0x18] sm:$0xff] %vm127, %v204
  %221 = vst.msk [vmem:[#allocation2 + $0x20] sm:$0xff] %vm127, %v205
  %222 = vst.msk [vmem:[#allocation2 + $0x28] sm:$0xff] %vm127, %v206
  %223 = vst.msk [vmem:[#allocation2 + $0x30] sm:$0xff] %vm127, %v207
  %224 = vst.msk [vmem:[#allocation2 + $0x38] sm:$0xff] %vm127, %v208
  %225 = vst.msk [vmem:[#allocation2 + $0x40] sm:$0xff] %vm127, %v209
  %226 = vst.msk [vmem:[#allocation2 + $0x48] sm:$0xff] %vm127, %v210
  %227 = vst.msk [vmem:[#allocation2 + $0x50] sm:$0xff] %vm127, %v211
  %228 = vst.msk [vmem:[#allocation2 + $0x58] sm:$0xff] %vm127, %v212
  %229 = vst.msk [vmem:[#allocation2 + $0x60] sm:$0xff] %vm127, %v213
  %230 = vst.msk [vmem:[#allocation2 + $0x68] sm:$0xff] %vm127, %v214
  %231 = vst.msk [vmem:[#allocation2 + $0x70] sm:$0xff] %vm127, %v215
  %232 = vst.msk [vmem:[#allocation2 + $0x78] sm:$0xff] %vm127, %v216
  // Predicated region
  $region22: #{long_term_stage.23} parent=0 // pred_check
    %p233 = pneg %p18
  $region23: #{long_term_stage.23} parent=0 // pred_check_branch
    %235 = sbr.rel (%p233) target = $region25
  $region24: #{long_term_stage.23} parent=0 // pred_region
    %v236 = vld [vmem:[#allocation2] sm:$0xff]
    %v237 = vld [vmem:[#allocation2 + $0x8] sm:$0xff]
    %v238 = vld [vmem:[#allocation2 + $0x10] sm:$0xff]
    %v239 = vld [vmem:[#allocation2 + $0x18] sm:$0xff]
    %v240 = vld [vmem:[#allocation2 + $0x20] sm:$0xff]
    %v241 = vld [vmem:[#allocation2 + $0x28] sm:$0xff]
    %v242 = vld [vmem:[#allocation2 + $0x30] sm:$0xff]
    %v243 = vld [vmem:[#allocation2 + $0x38] sm:$0xff]
    %v244 = vld [vmem:[#allocation2 + $0x40] sm:$0xff]
    %v245 = vld [vmem:[#allocation2 + $0x48] sm:$0xff]
    %v246 = vld [vmem:[#allocation2 + $0x50] sm:$0xff]
    %v247 = vld [vmem:[#allocation2 + $0x58] sm:$0xff]
    %v248 = vld [vmem:[#allocation2 + $0x60] sm:$0xff]
    %v249 = vld [vmem:[#allocation2 + $0x68] sm:$0xff]
    %v250 = vld [vmem:[#allocation2 + $0x70] sm:$0xff]
    %v251 = vld [vmem:[#allocation2 + $0x78] sm:$0xff]
    %v252 = vld [vmem:[%s2] sm:$0x1]
    %v254 = vperm.slane %v252, 0
    %v256 = vadd.f32 %v236, %v254
    %v257 = vadd.f32 %v237, %v254
    %v258 = vadd.f32 %v238, %v254
    %v259 = vadd.f32 %v239, %v254
    %v260 = vadd.f32 %v240, %v254
    %v261 = vadd.f32 %v241, %v254
    %v262 = vadd.f32 %v242, %v254
    %v263 = vadd.f32 %v243, %v254
    %v264 = vadd.f32 %v244, %v254
    %v265 = vadd.f32 %v245, %v254
    %v266 = vadd.f32 %v246, %v254
    %v267 = vadd.f32 %v247, %v254
    %v268 = vadd.f32 %v248, %v254
    %v269 = vadd.f32 %v249, %v254
    %v270 = vadd.f32 %v250, %v254
    %v271 = vadd.f32 %v251, %v254
    %v272 = vld [vmem:[%s3] sm:$0xf]
    %v273 = vld [vmem:[%s3 + $0x4] sm:$0xf]
    %v274 = vld [vmem:[%s3 + $0x8] sm:$0xf]
    %v275 = vld [vmem:[%s3 + $0xc] sm:$0xf]
    %v276 = vld [vmem:[%s3 + $0x10] sm:$0xf]
    %v277 = vld [vmem:[%s3 + $0x14] sm:$0xf]
    %v278 = vld [vmem:[%s3 + $0x18] sm:$0xf]
    %v279 = vld [vmem:[%s3 + $0x1c] sm:$0xf]
    %v280 = vld [vmem:[%s3 + $0x20] sm:$0xf]
    %v281 = vld [vmem:[%s3 + $0x24] sm:$0xf]
    %v282 = vld [vmem:[%s3 + $0x28] sm:$0xf]
    %v283 = vld [vmem:[%s3 + $0x2c] sm:$0xf]
    %v284 = vld [vmem:[%s3 + $0x30] sm:$0xf]
    %v285 = vld [vmem:[%s3 + $0x34] sm:$0xf]
    %v286 = vld [vmem:[%s3 + $0x38] sm:$0xf]
    %v287 = vld [vmem:[%s3 + $0x3c] sm:$0xf]
    %v288 = vunpack.c.l.bf16 %v272
    %v289 = vunpack.c.l.bf16 %v273
    %v290 = vunpack.c.l.bf16 %v274
    %v291 = vunpack.c.l.bf16 %v275
    %v292 = vunpack.c.l.bf16 %v276
    %v293 = vunpack.c.l.bf16 %v277
    %v294 = vunpack.c.l.bf16 %v278
    %v295 = vunpack.c.l.bf16 %v279
    %v296 = vunpack.c.l.bf16 %v280
    %v297 = vunpack.c.l.bf16 %v281
    %v298 = vunpack.c.l.bf16 %v282
    %v299 = vunpack.c.l.bf16 %v283
    %v300 = vunpack.c.l.bf16 %v284
    %v301 = vunpack.c.l.bf16 %v285
    %v302 = vunpack.c.l.bf16 %v286
    %v303 = vunpack.c.l.bf16 %v287
    %v304 = vadd.f32 %v256, %v288
    %v305 = vadd.f32 %v257, %v289
    %v306 = vadd.f32 %v258, %v290
    %v307 = vadd.f32 %v259, %v291
    %v308 = vadd.f32 %v260, %v292
    %v309 = vadd.f32 %v261, %v293
    %v310 = vadd.f32 %v262, %v294
    %v311 = vadd.f32 %v263, %v295
    %v312 = vadd.f32 %v264, %v296
    %v313 = vadd.f32 %v265, %v297
    %v314 = vadd.f32 %v266, %v298
    %v315 = vadd.f32 %v267, %v299
    %v316 = vadd.f32 %v268, %v300
    %v317 = vadd.f32 %v269, %v301
    %v318 = vadd.f32 %v270, %v302
    %v319 = vadd.f32 %v271, %v303
    %v320 = vpack.c.bf16 %v304, %v304
    %v321 = vpack.c.bf16 %v305, %v305
    %v322 = vpack.c.bf16 %v306, %v306
    %v323 = vpack.c.bf16 %v307, %v307
    %v324 = vpack.c.bf16 %v308, %v308
    %v325 = vpack.c.bf16 %v309, %v309
    %v326 = vpack.c.bf16 %v310, %v310
    %v327 = vpack.c.bf16 %v311, %v311
    %v328 = vpack.c.bf16 %v312, %v312
    %v329 = vpack.c.bf16 %v313, %v313
    %v330 = vpack.c.bf16 %v314, %v314
    %v331 = vpack.c.bf16 %v315, %v315
    %v332 = vpack.c.bf16 %v316, %v316
    %v333 = vpack.c.bf16 %v317, %v317
    %v334 = vpack.c.bf16 %v318, %v318
    %v335 = vpack.c.bf16 %v319, %v319
    %vm336 = vcmask 257024
    %337 = vst.msk [vmem:[%s4] sm:$0xf] %vm336, %v320
    %338 = vst.msk [vmem:[%s4 + $0x4] sm:$0xf] %vm336, %v321
    %339 = vst.msk [vmem:[%s4 + $0x8] sm:$0xf] %vm336, %v322
    %340 = vst.msk [vmem:[%s4 + $0xc] sm:$0xf] %vm336, %v323
    %341 = vst.msk [vmem:[%s4 + $0x10] sm:$0xf] %vm336, %v324
    %342 = vst.msk [vmem:[%s4 + $0x14] sm:$0xf] %vm336, %v325
    %343 = vst.msk [vmem:[%s4 + $0x18] sm:$0xf] %vm336, %v326
    %344 = vst.msk [vmem:[%s4 + $0x1c] sm:$0xf] %vm336, %v327
    %345 = vst.msk [vmem:[%s4 + $0x20] sm:$0xf] %vm336, %v328
    %346 = vst.msk [vmem:[%s4 + $0x24] sm:$0xf] %vm336, %v329
    %347 = vst.msk [vmem:[%s4 + $0x28] sm:$0xf] %vm336, %v330
    %348 = vst.msk [vmem:[%s4 + $0x2c] sm:$0xf] %vm336, %v331
    %349 = vst.msk [vmem:[%s4 + $0x30] sm:$0xf] %vm336, %v332
    %350 = vst.msk [vmem:[%s4 + $0x34] sm:$0xf] %vm336, %v333
    %351 = vst.msk [vmem:[%s4 + $0x38] sm:$0xf] %vm336, %v334
    %352 = vst.msk [vmem:[%s4 + $0x3c] sm:$0xf] %vm336, %v335
  $region25: #{long_term_stage.23} parent=0 // pred_fallthru
    _
  // Predicated region
  $region26: #{long_term_stage.23} parent=0 // pred_check
    _
  $region27: #{long_term_stage.23} parent=0 // pred_check_branch
    %354 = sbr.rel (0) target = $region29
  $region28: #{long_term_stage.23} parent=0 // pred_region
    _
  $region29: #{long_term_stage.23} parent=0 // pred_fallthru
    _
  // Predicated region
  $region30: #{long_term_stage.23} parent=0 // pred_check
    _
  $region31: #{long_term_stage.23} parent=0 // pred_check_branch
    %356 = sbr.rel (0) target = $region33
  $region32: #{long_term_stage.23} parent=0 // pred_region
    _
  $region33: #{long_term_stage.23} parent=0 // pred_fallthru
    _

// kernel: long_term_stage.21
$region0: #{long_term_stage.21}
  #allocation0 [shape = 'u32[]', space=smem, size = 0x4, offset = 0x4, fixed_abs, tag = 'smem constant byte address 0x4 - core index']
  #allocation1 [shape = 'u32[72,128]{1,0:T(1,128)}', space=vmem, size = 0x9000, scoped, tag = 'internal scratch']
  #allocation2 [shape = 'f32[128,96]{1,0:T(8,128)}', space=vmem, size = 0x10000, scoped, tag = 'scratch operand']
  %s0 = inlined_call_operand.vmem [shape: bf16[128,32], index: 0, kind: input, shape index: {}]
  %s1 = inlined_call_operand.vmem [shape: bf16[32,96], index: 1, kind: input, shape index: {}]
  %s2 = inlined_call_operand.vmem [shape: f32[1,96], index: 2, kind: input, shape index: {}]
  %s3 = inlined_call_operand.vmem [shape: f32[1,32], index: 3, kind: input, shape index: {}]
  %s4 = inlined_call_operand.vmem [shape: f32[1,32], index: 4, kind: input, shape index: {}]
  %s5 = inlined_call_operand.vmem [shape: bf16[128,96], index: 5, kind: output, shape index: {}]
  %s6 = sld [smem:[#allocation0]]
  $region38: #{long_term_stage.21} parent=0
    _
  %s8 = ssub.s32 1, %s6
  %s9 = scalar_select 0, %s8, %s6
  // Predicated region
  $region2: #{long_term_stage.21} parent=0 // pred_check
    _
  $region3: #{long_term_stage.21} parent=0 // pred_check_branch
    %11 = sbr.rel (0) target = $region5
  $region4: #{long_term_stage.21} parent=0 // pred_region
    _
  $region5: #{long_term_stage.21} parent=0 // pred_fallthru
    _
  // Predicated region
  $region6: #{long_term_stage.21} parent=0 // pred_check
    _
  $region7: #{long_term_stage.21} parent=0 // pred_check_branch
    %13 = sbr.rel (0) target = $region9
  $region8: #{long_term_stage.21} parent=0 // pred_region
    _
  $region9: #{long_term_stage.21} parent=0 // pred_fallthru
    _
  // Predicated region
  $region10: #{long_term_stage.21} parent=0 // pred_check
    _
  $region11: #{long_term_stage.21} parent=0 // pred_check_branch
    %15 = sbr.rel (0) target = $region13
  $region12: #{long_term_stage.21} parent=0 // pred_region
    _
  $region13: #{long_term_stage.21} parent=0 // pred_fallthru
    _
  // Predicated region
  $region14: #{long_term_stage.21} parent=0 // pred_check
    _
  $region15: #{long_term_stage.21} parent=0 // pred_check_branch
    %17 = sbr.rel (0) target = $region17
  $region16: #{long_term_stage.21} parent=0 // pred_region
    _
  $region17: #{long_term_stage.21} parent=0 // pred_fallthru
    _
  // Predicated region
  $region18: #{long_term_stage.21} parent=0 // pred_check
    _
  $region19: #{long_term_stage.21} parent=0 // pred_check_branch
    %19 = sbr.rel (0) target = $region21
  $region20: #{long_term_stage.21} parent=0 // pred_region
    _
  $region21: #{long_term_stage.21} parent=0 // pred_fallthru
    _
  %p21 = scmp.eq.s32.totalorder 0, 0
  // Predicated region
  $region22: #{long_term_stage.21} parent=0 // pred_check
    %p22 = pneg %p21
  $region23: #{long_term_stage.21} parent=0 // pred_check_branch
    %24 = sbr.rel (%p22) target = $region25
  $region24: #{long_term_stage.21} parent=0 // pred_region
    %vm25 = vcmask 785408
    %26 = vst.msk [vmem:[#allocation2] sm:$0xff] %vm25, 0.0
    %27 = vst.msk [vmem:[#allocation2 + $0x8] sm:$0xff] %vm25, 0.0
    %28 = vst.msk [vmem:[#allocation2 + $0x10] sm:$0xff] %vm25, 0.0
    %29 = vst.msk [vmem:[#allocation2 + $0x18] sm:$0xff] %vm25, 0.0
    %30 = vst.msk [vmem:[#allocation2 + $0x20] sm:$0xff] %vm25, 0.0
    %31 = vst.msk [vmem:[#allocation2 + $0x28] sm:$0xff] %vm25, 0.0
    %32 = vst.msk [vmem:[#allocation2 + $0x30] sm:$0xff] %vm25, 0.0
    %33 = vst.msk [vmem:[#allocation2 + $0x38] sm:$0xff] %vm25, 0.0
    %34 = vst.msk [vmem:[#allocation2 + $0x40] sm:$0xff] %vm25, 0.0
    %35 = vst.msk [vmem:[#allocation2 + $0x48] sm:$0xff] %vm25, 0.0
    %36 = vst.msk [vmem:[#allocation2 + $0x50] sm:$0xff] %vm25, 0.0
    %37 = vst.msk [vmem:[#allocation2 + $0x58] sm:$0xff] %vm25, 0.0
    %38 = vst.msk [vmem:[#allocation2 + $0x60] sm:$0xff] %vm25, 0.0
    %39 = vst.msk [vmem:[#allocation2 + $0x68] sm:$0xff] %vm25, 0.0
    %40 = vst.msk [vmem:[#allocation2 + $0x70] sm:$0xff] %vm25, 0.0
    %41 = vst.msk [vmem:[#allocation2 + $0x78] sm:$0xff] %vm25, 0.0
  $region25: #{long_term_stage.21} parent=0 // pred_fallthru
    _
  %v42 = vld [vmem:[%s0] sm:$0xf]
  %v43 = vld [vmem:[%s0 + $0x4] sm:$0xf]
  %v44 = vld [vmem:[%s0 + $0x8] sm:$0xf]
  %v45 = vld [vmem:[%s0 + $0xc] sm:$0xf]
  %v46 = vld [vmem:[%s0 + $0x10] sm:$0xf]
  %v47 = vld [vmem:[%s0 + $0x14] sm:$0xf]
  %v48 = vld [vmem:[%s0 + $0x18] sm:$0xf]
  %v49 = vld [vmem:[%s0 + $0x1c] sm:$0xf]
  %v50 = vld [vmem:[%s0 + $0x20] sm:$0xf]
  %v51 = vld [vmem:[%s0 + $0x24] sm:$0xf]
  %v52 = vld [vmem:[%s0 + $0x28] sm:$0xf]
  %v53 = vld [vmem:[%s0 + $0x2c] sm:$0xf]
  %v54 = vld [vmem:[%s0 + $0x30] sm:$0xf]
  %v55 = vld [vmem:[%s0 + $0x34] sm:$0xf]
  %v56 = vld [vmem:[%s0 + $0x38] sm:$0xf]
  %v57 = vld [vmem:[%s0 + $0x3c] sm:$0xf]
  %v58 = vunpack.c.l.bf16 %v42
  %v59 = vunpack.c.l.bf16 %v43
  %v60 = vunpack.c.l.bf16 %v44
  %v61 = vunpack.c.l.bf16 %v45
  %v62 = vunpack.c.l.bf16 %v46
  %v63 = vunpack.c.l.bf16 %v47
  %v64 = vunpack.c.l.bf16 %v48
  %v65 = vunpack.c.l.bf16 %v49
  %v66 = vunpack.c.l.bf16 %v50
  %v67 = vunpack.c.l.bf16 %v51
  %v68 = vunpack.c.l.bf16 %v52
  %v69 = vunpack.c.l.bf16 %v53
  %v70 = vunpack.c.l.bf16 %v54
  %v71 = vunpack.c.l.bf16 %v55
  %v72 = vunpack.c.l.bf16 %v56
  %v73 = vunpack.c.l.bf16 %v57
  %vm74 = vcmask 261120
  %v75 = vsel %vm74, %v58, 0.0
  %76 = vadd.xlane.f32.xlu0 %v75
  %v77 = vpop.xlane.xlu0 %76
  %v78 = vsel %vm74, %v59, 0.0
  %79 = vadd.xlane.f32.xlu0 %v78
  %v80 = vpop.xlane.xlu0 %79
  %v81 = vsel %vm74, %v60, 0.0
  %82 = vadd.xlane.f32.xlu0 %v81
  %v83 = vpop.xlane.xlu0 %82
  %v84 = vsel %vm74, %v61, 0.0
  %85 = vadd.xlane.f32.xlu0 %v84
  %v86 = vpop.xlane.xlu0 %85
  %v87 = vsel %vm74, %v62, 0.0
  %88 = vadd.xlane.f32.xlu0 %v87
  %v89 = vpop.xlane.xlu0 %88
  %v90 = vsel %vm74, %v63, 0.0
  %91 = vadd.xlane.f32.xlu0 %v90
  %v92 = vpop.xlane.xlu0 %91
  %v93 = vsel %vm74, %v64, 0.0
  %94 = vadd.xlane.f32.xlu0 %v93
  %v95 = vpop.xlane.xlu0 %94
  %v96 = vsel %vm74, %v65, 0.0
  %97 = vadd.xlane.f32.xlu0 %v96
  %v98 = vpop.xlane.xlu0 %97
  %v99 = vsel %vm74, %v66, 0.0
  %100 = vadd.xlane.f32.xlu0 %v99
  %v101 = vpop.xlane.xlu0 %100
  %v102 = vsel %vm74, %v67, 0.0
  %103 = vadd.xlane.f32.xlu0 %v102
  %v104 = vpop.xlane.xlu0 %103
  %v105 = vsel %vm74, %v68, 0.0
  %106 = vadd.xlane.f32.xlu0 %v105
  %v107 = vpop.xlane.xlu0 %106
  %v108 = vsel %vm74, %v69, 0.0
  %109 = vadd.xlane.f32.xlu0 %v108
  %v110 = vpop.xlane.xlu0 %109
  %v111 = vsel %vm74, %v70, 0.0
  %112 = vadd.xlane.f32.xlu0 %v111
  %v113 = vpop.xlane.xlu0 %112
  %v114 = vsel %vm74, %v71, 0.0
  %115 = vadd.xlane.f32.xlu0 %v114
  %v116 = vpop.xlane.xlu0 %115
  %v117 = vsel %vm74, %v72, 0.0
  %118 = vadd.xlane.f32.xlu0 %v117
  %v119 = vpop.xlane.xlu0 %118
  %v120 = vsel %vm74, %v73, 0.0
  %121 = vadd.xlane.f32.xlu0 %v120
  %v122 = vpop.xlane.xlu0 %121
  %v123 = vrcp.pop 32.0
  %v124 = vmul.f32 32.0, %v123
  %v125 = vsub.f32 1.0, %v124
  %v126 = vmul.f32 %v123, %v125
  %v127 = vadd.f32 %v123, %v126
  %vm128 = vweird.f32 %v123
  %v129 = vsel %vm128, %v123, %v127
  %v130 = vmul.f32 %v77, %v129
  %v131 = vmul.f32 %v80, %v129
  %v132 = vmul.f32 %v83, %v129
  %v133 = vmul.f32 %v86, %v129
  %v134 = vmul.f32 %v89, %v129
  %v135 = vmul.f32 %v92, %v129
  %v136 = vmul.f32 %v95, %v129
  %v137 = vmul.f32 %v98, %v129
  %v138 = vmul.f32 %v101, %v129
  %v139 = vmul.f32 %v104, %v129
  %v140 = vmul.f32 %v107, %v129
  %v141 = vmul.f32 %v110, %v129
  %v142 = vmul.f32 %v113, %v129
  %v143 = vmul.f32 %v116, %v129
  %v144 = vmul.f32 %v119, %v129
  %v145 = vmul.f32 %v122, %v129
  %v146 = vsub.f32 %v58, %v130
  %v147 = vsub.f32 %v59, %v131
  %v148 = vsub.f32 %v60, %v132
  %v149 = vsub.f32 %v61, %v133
  %v150 = vsub.f32 %v62, %v134
  %v151 = vsub.f32 %v63, %v135
  %v152 = vsub.f32 %v64, %v136
  %v153 = vsub.f32 %v65, %v137
  %v154 = vsub.f32 %v66, %v138
  %v155 = vsub.f32 %v67, %v139
  %v156 = vsub.f32 %v68, %v140
  %v157 = vsub.f32 %v69, %v141
  %v158 = vsub.f32 %v70, %v142
  %v159 = vsub.f32 %v71, %v143
  %v160 = vsub.f32 %v72, %v144
  %v161 = vsub.f32 %v73, %v145
  %v162 = vmul.f32 %v146, %v146
  %v163 = vmul.f32 %v147, %v147
  %v164 = vmul.f32 %v148, %v148
  %v165 = vmul.f32 %v149, %v149
  %v166 = vmul.f32 %v150, %v150
  %v167 = vmul.f32 %v151, %v151
  %v168 = vmul.f32 %v152, %v152
  %v169 = vmul.f32 %v153, %v153
  %v170 = vmul.f32 %v154, %v154
  %v171 = vmul.f32 %v155, %v155
  %v172 = vmul.f32 %v156, %v156
  %v173 = vmul.f32 %v157, %v157
  %v174 = vmul.f32 %v158, %v158
  %v175 = vmul.f32 %v159, %v159
  %v176 = vmul.f32 %v160, %v160
  %v177 = vmul.f32 %v161, %v161
  %v178 = vsel %vm74, %v162, 0.0
  %179 = vadd.xlane.f32.xlu0 %v178
  %v180 = vpop.xlane.xlu0 %179
  %v181 = vsel %vm74, %v163, 0.0
  %182 = vadd.xlane.f32.xlu0 %v181
  %v183 = vpop.xlane.xlu0 %182
  %v184 = vsel %vm74, %v164, 0.0
  %185 = vadd.xlane.f32.xlu0 %v184
  %v186 = vpop.xlane.xlu0 %185
  %v187 = vsel %vm74, %v165, 0.0
  %188 = vadd.xlane.f32.xlu0 %v187
  %v189 = vpop.xlane.xlu0 %188
  %v190 = vsel %vm74, %v166, 0.0
  %191 = vadd.xlane.f32.xlu0 %v190
  %v192 = vpop.xlane.xlu0 %191
  %v193 = vsel %vm74, %v167, 0.0
  %194 = vadd.xlane.f32.xlu0 %v193
  %v195 = vpop.xlane.xlu0 %194
  %v196 = vsel %vm74, %v168, 0.0
  %197 = vadd.xlane.f32.xlu0 %v196
  %v198 = vpop.xlane.xlu0 %197
  %v199 = vsel %vm74, %v169, 0.0
  %200 = vadd.xlane.f32.xlu0 %v199
  %v201 = vpop.xlane.xlu0 %200
  %v202 = vsel %vm74, %v170, 0.0
  %203 = vadd.xlane.f32.xlu0 %v202
  %v204 = vpop.xlane.xlu0 %203
  %v205 = vsel %vm74, %v171, 0.0
  %206 = vadd.xlane.f32.xlu0 %v205
  %v207 = vpop.xlane.xlu0 %206
  %v208 = vsel %vm74, %v172, 0.0
  %209 = vadd.xlane.f32.xlu0 %v208
  %v210 = vpop.xlane.xlu0 %209
  %v211 = vsel %vm74, %v173, 0.0
  %212 = vadd.xlane.f32.xlu0 %v211
  %v213 = vpop.xlane.xlu0 %212
  %v214 = vsel %vm74, %v174, 0.0
  %215 = vadd.xlane.f32.xlu0 %v214
  %v216 = vpop.xlane.xlu0 %215
  %v217 = vsel %vm74, %v175, 0.0
  %218 = vadd.xlane.f32.xlu0 %v217
  %v219 = vpop.xlane.xlu0 %218
  %v220 = vsel %vm74, %v176, 0.0
  %221 = vadd.xlane.f32.xlu0 %v220
  %v222 = vpop.xlane.xlu0 %221
  %v223 = vsel %vm74, %v177, 0.0
  %224 = vadd.xlane.f32.xlu0 %v223
  %v225 = vpop.xlane.xlu0 %224
  %v226 = vmul.f32 %v180, %v129
  %v227 = vmul.f32 %v183, %v129
  %v228 = vmul.f32 %v186, %v129
  %v229 = vmul.f32 %v189, %v129
  %v230 = vmul.f32 %v192, %v129
  %v231 = vmul.f32 %v195, %v129
  %v232 = vmul.f32 %v198, %v129
  %v233 = vmul.f32 %v201, %v129
  %v234 = vmul.f32 %v204, %v129
  %v235 = vmul.f32 %v207, %v129
  %v236 = vmul.f32 %v210, %v129
  %v237 = vmul.f32 %v213, %v129
  %v238 = vmul.f32 %v216, %v129
  %v239 = vmul.f32 %v219, %v129
  %v240 = vmul.f32 %v222, %v129
  %v241 = vmul.f32 %v225, %v129
  %v242 = vadd.f32 %v226, 1e-05
  %v243 = vadd.f32 %v227, 1e-05
  %v244 = vadd.f32 %v228, 1e-05
  %v245 = vadd.f32 %v229, 1e-05
  %v246 = vadd.f32 %v230, 1e-05
  %v247 = vadd.f32 %v231, 1e-05
  %v248 = vadd.f32 %v232, 1e-05
  %v249 = vadd.f32 %v233, 1e-05
  %v250 = vadd.f32 %v234, 1e-05
  %v251 = vadd.f32 %v235, 1e-05
  %v252 = vadd.f32 %v236, 1e-05
  %v253 = vadd.f32 %v237, 1e-05
  %v254 = vadd.f32 %v238, 1e-05
  %v255 = vadd.f32 %v239, 1e-05
  %v256 = vadd.f32 %v240, 1e-05
  %v257 = vadd.f32 %v241, 1e-05
  %v258 = vrsqrt.pop %v242
  %v259 = vmul.f32 %v258, %v242
  %v260 = vmul.f32 %v259, %v258
  %v261 = vmul.f32 0.5, %v260
  %v262 = vsub.f32 1.5, %v261
  %v263 = vmul.f32 %v258, %v262
  %vm264 = vweird.f32 %v242
  %vm265 = vweird.f32 %v258
  %vm266 = vmor %vm264, %vm265
  %v267 = vsel %vm266, %v258, %v263
  %v268 = vrsqrt.pop %v243
  %v269 = vmul.f32 %v268, %v243
  %v270 = vmul.f32 %v269, %v268
  %v271 = vmul.f32 0.5, %v270
  %v272 = vsub.f32 1.5, %v271
  %v273 = vmul.f32 %v268, %v272
  %vm274 = vweird.f32 %v243
  %vm275 = vweird.f32 %v268
  %vm276 = vmor %vm274, %vm275
  %v277 = vsel %vm276, %v268, %v273
  %v278 = vrsqrt.pop %v244
  %v279 = vmul.f32 %v278, %v244
  %v280 = vmul.f32 %v279, %v278
  %v281 = vmul.f32 0.5, %v280
  %v282 = vsub.f32 1.5, %v281
  %v283 = vmul.f32 %v278, %v282
  %vm284 = vweird.f32 %v244
  %vm285 = vweird.f32 %v278
  %vm286 = vmor %vm284, %vm285
  %v287 = vsel %vm286, %v278, %v283
  %v288 = vrsqrt.pop %v245
  %v289 = vmul.f32 %v288, %v245
  %v290 = vmul.f32 %v289, %v288
  %v291 = vmul.f32 0.5, %v290
  %v292 = vsub.f32 1.5, %v291
  %v293 = vmul.f32 %v288, %v292
  %vm294 = vweird.f32 %v245
  %vm295 = vweird.f32 %v288
  %vm296 = vmor %vm294, %vm295
  %v297 = vsel %vm296, %v288, %v293
  %v298 = vrsqrt.pop %v246
  %v299 = vmul.f32 %v298, %v246
  %v300 = vmul.f32 %v299, %v298
  %v301 = vmul.f32 0.5, %v300
  %v302 = vsub.f32 1.5, %v301
  %v303 = vmul.f32 %v298, %v302
  %vm304 = vweird.f32 %v246
  %vm305 = vweird.f32 %v298
  %vm306 = vmor %vm304, %vm305
  %v307 = vsel %vm306, %v298, %v303
  %v308 = vrsqrt.pop %v247
  %v309 = vmul.f32 %v308, %v247
  %v310 = vmul.f32 %v309, %v308
  %v311 = vmul.f32 0.5, %v310
  %v312 = vsub.f32 1.5, %v311
  %v313 = vmul.f32 %v308, %v312
  %vm314 = vweird.f32 %v247
  %vm315 = vweird.f32 %v308
  %vm316 = vmor %vm314, %vm315
  %v317 = vsel %vm316, %v308, %v313
  %v318 = vrsqrt.pop %v248
  %v319 = vmul.f32 %v318, %v248
  %v320 = vmul.f32 %v319, %v318
  %v321 = vmul.f32 0.5, %v320
  %v322 = vsub.f32 1.5, %v321
  %v323 = vmul.f32 %v318, %v322
  %vm324 = vweird.f32 %v248
  %vm325 = vweird.f32 %v318
  %vm326 = vmor %vm324, %vm325
  %v327 = vsel %vm326, %v318, %v323
  %v328 = vrsqrt.pop %v249
  %v329 = vmul.f32 %v328, %v249
  %v330 = vmul.f32 %v329, %v328
  %v331 = vmul.f32 0.5, %v330
  %v332 = vsub.f32 1.5, %v331
  %v333 = vmul.f32 %v328, %v332
  %vm334 = vweird.f32 %v249
  %vm335 = vweird.f32 %v328
  %vm336 = vmor %vm334, %vm335
  %v337 = vsel %vm336, %v328, %v333
  %v338 = vrsqrt.pop %v250
  %v339 = vmul.f32 %v338, %v250
  %v340 = vmul.f32 %v339, %v338
  %v341 = vmul.f32 0.5, %v340
  %v342 = vsub.f32 1.5, %v341
  %v343 = vmul.f32 %v338, %v342
  %vm344 = vweird.f32 %v250
  %vm345 = vweird.f32 %v338
  %vm346 = vmor %vm344, %vm345
  %v347 = vsel %vm346, %v338, %v343
  %v348 = vrsqrt.pop %v251
  %v349 = vmul.f32 %v348, %v251
  %v350 = vmul.f32 %v349, %v348
  %v351 = vmul.f32 0.5, %v350
  %v352 = vsub.f32 1.5, %v351
  %v353 = vmul.f32 %v348, %v352
  %vm354 = vweird.f32 %v251
  %vm355 = vweird.f32 %v348
  %vm356 = vmor %vm354, %vm355
  %v357 = vsel %vm356, %v348, %v353
  %v358 = vrsqrt.pop %v252
  %v359 = vmul.f32 %v358, %v252
  %v360 = vmul.f32 %v359, %v358
  %v361 = vmul.f32 0.5, %v360
  %v362 = vsub.f32 1.5, %v361
  %v363 = vmul.f32 %v358, %v362
  %vm364 = vweird.f32 %v252
  %vm365 = vweird.f32 %v358
  %vm366 = vmor %vm364, %vm365
  %v367 = vsel %vm366, %v358, %v363
  %v368 = vrsqrt.pop %v253
  %v369 = vmul.f32 %v368, %v253
  %v370 = vmul.f32 %v369, %v368
  %v371 = vmul.f32 0.5, %v370
  %v372 = vsub.f32 1.5, %v371
  %v373 = vmul.f32 %v368, %v372
  %vm374 = vweird.f32 %v253
  %vm375 = vweird.f32 %v368
  %vm376 = vmor %vm374, %vm375
  %v377 = vsel %vm376, %v368, %v373
  %v378 = vrsqrt.pop %v254
  %v379 = vmul.f32 %v378, %v254
  %v380 = vmul.f32 %v379, %v378
  %v381 = vmul.f32 0.5, %v380
  %v382 = vsub.f32 1.5, %v381
  %v383 = vmul.f32 %v378, %v382
  %vm384 = vweird.f32 %v254
  %vm385 = vweird.f32 %v378
  %vm386 = vmor %vm384, %vm385
  %v387 = vsel %vm386, %v378, %v383
  %v388 = vrsqrt.pop %v255
  %v389 = vmul.f32 %v388, %v255
  %v390 = vmul.f32 %v389, %v388
  %v391 = vmul.f32 0.5, %v390
  %v392 = vsub.f32 1.5, %v391
  %v393 = vmul.f32 %v388, %v392
  %vm394 = vweird.f32 %v255
  %vm395 = vweird.f32 %v388
  %vm396 = vmor %vm394, %vm395
  %v397 = vsel %vm396, %v388, %v393
  %v398 = vrsqrt.pop %v256
  %v399 = vmul.f32 %v398, %v256
  %v400 = vmul.f32 %v399, %v398
  %v401 = vmul.f32 0.5, %v400
  %v402 = vsub.f32 1.5, %v401
  %v403 = vmul.f32 %v398, %v402
  %vm404 = vweird.f32 %v256
  %vm405 = vweird.f32 %v398
  %vm406 = vmor %vm404, %vm405
  %v407 = vsel %vm406, %v398, %v403
  %v408 = vrsqrt.pop %v257
  %v409 = vmul.f32 %v408, %v257
  %v410 = vmul.f32 %v409, %v408
  %v411 = vmul.f32 0.5, %v410
  %v412 = vsub.f32 1.5, %v411
  %v413 = vmul.f32 %v408, %v412
  %vm414 = vweird.f32 %v257
  %vm415 = vweird.f32 %v408
  %vm416 = vmor %vm414, %vm415
  %v417 = vsel %vm416, %v408, %v413
  %v418 = vmul.f32 %v146, %v267
  %v419 = vmul.f32 %v147, %v277
  %v420 = vmul.f32 %v148, %v287
  %v421 = vmul.f32 %v149, %v297
  %v422 = vmul.f32 %v150, %v307
  %v423 = vmul.f32 %v151, %v317
  %v424 = vmul.f32 %v152, %v327
  %v425 = vmul.f32 %v153, %v337
  %v426 = vmul.f32 %v154, %v347
  %v427 = vmul.f32 %v155, %v357
  %v428 = vmul.f32 %v156, %v367
  %v429 = vmul.f32 %v157, %v377
  %v430 = vmul.f32 %v158, %v387
  %v431 = vmul.f32 %v159, %v397
  %v432 = vmul.f32 %v160, %v407
  %v433 = vmul.f32 %v161, %v417
  %v434 = vld [vmem:[%s3] sm:$0x1]
  %v436 = vperm.slane %v434, 0
  %v438 = vmul.f32 %v418, %v436
  %v439 = vmul.f32 %v419, %v436
  %v440 = vmul.f32 %v420, %v436
  %v441 = vmul.f32 %v421, %v436
  %v442 = vmul.f32 %v422, %v436
  %v443 = vmul.f32 %v423, %v436
  %v444 = vmul.f32 %v424, %v436
  %v445 = vmul.f32 %v425, %v436
  %v446 = vmul.f32 %v426, %v436
  %v447 = vmul.f32 %v427, %v436
  %v448 = vmul.f32 %v428, %v436
  %v449 = vmul.f32 %v429, %v436
  %v450 = vmul.f32 %v430, %v436
  %v451 = vmul.f32 %v431, %v436
  %v452 = vmul.f32 %v432, %v436
  %v453 = vmul.f32 %v433, %v436
  %v454 = vld [vmem:[%s4] sm:$0x1]
  %v456 = vperm.slane %v454, 0
  %v458 = vadd.f32 %v438, %v456
  %v459 = vadd.f32 %v439, %v456
  %v460 = vadd.f32 %v440, %v456
  %v461 = vadd.f32 %v441, %v456
  %v462 = vadd.f32 %v442, %v456
  %v463 = vadd.f32 %v443, %v456
  %v464 = vadd.f32 %v444, %v456
  %v465 = vadd.f32 %v445, %v456
  %v466 = vadd.f32 %v446, %v456
  %v467 = vadd.f32 %v447, %v456
  %v468 = vadd.f32 %v448, %v456
  %v469 = vadd.f32 %v449, %v456
  %v470 = vadd.f32 %v450, %v456
  %v471 = vadd.f32 %v451, %v456
  %v472 = vadd.f32 %v452, %v456
  %v473 = vadd.f32 %v453, %v456
  %v474 = vpack.c.bf16 %v459, %v458
  %v475 = vpack.c.bf16 %v461, %v460
  %v476 = vpack.c.bf16 %v463, %v462
  %v477 = vpack.c.bf16 %v465, %v464
  %v478 = vpack.c.bf16 %v467, %v466
  %v479 = vpack.c.bf16 %v469, %v468
  %v480 = vpack.c.bf16 %v471, %v470
  %v481 = vpack.c.bf16 %v473, %v472
  %v482 = vld [vmem:[#allocation2] sm:$0xff]
  %v483 = vld [vmem:[#allocation2 + $0x8] sm:$0xff]
  %v484 = vld [vmem:[#allocation2 + $0x10] sm:$0xff]
  %v485 = vld [vmem:[#allocation2 + $0x18] sm:$0xff]
  %v486 = vld [vmem:[#allocation2 + $0x20] sm:$0xff]
  %v487 = vld [vmem:[#allocation2 + $0x28] sm:$0xff]
  %v488 = vld [vmem:[#allocation2 + $0x30] sm:$0xff]
  %v489 = vld [vmem:[#allocation2 + $0x38] sm:$0xff]
  %v490 = vld [vmem:[#allocation2 + $0x40] sm:$0xff]
  %v491 = vld [vmem:[#allocation2 + $0x48] sm:$0xff]
  %v492 = vld [vmem:[#allocation2 + $0x50] sm:$0xff]
  %v493 = vld [vmem:[#allocation2 + $0x58] sm:$0xff]
  %v494 = vld [vmem:[#allocation2 + $0x60] sm:$0xff]
  %v495 = vld [vmem:[#allocation2 + $0x68] sm:$0xff]
  %v496 = vld [vmem:[#allocation2 + $0x70] sm:$0xff]
  %v497 = vld [vmem:[#allocation2 + $0x78] sm:$0xff]
  %v498 = vld [vmem:[%s1] sm:$0xf]
  %v499 = vld [vmem:[%s1 + $0x4] sm:$0xf]
  %v500 = vld [vmem:[%s1 + $0x8] sm:$0xf]
  %v501 = vld [vmem:[%s1 + $0xc] sm:$0xf]
  %v506 = vunpack.c.l.b16 %v498
  %v507 = vunpack.c.l.b16 %v499
  %v508 = vunpack.c.l.b16 %v500
  %v509 = vunpack.c.l.b16 %v501
  %v510 = vpack.c.b16 %v507, %v506
  %v511 = vpack.c.b16 %v509, %v508
  %v515 = vsel %vm74, %v474, 0
  %v518 = vsel %vm74, %v475, 0
  %v521 = vsel %vm74, %v476, 0
  %v524 = vsel %vm74, %v477, 0
  %v527 = vsel %vm74, %v478, 0
  %v530 = vsel %vm74, %v479, 0
  %v533 = vsel %vm74, %v480, 0
  %v536 = vsel %vm74, %v481, 0
  %538 = vmatpush.bf16.msra.mxu0 0
  %539 = vmatpush.bf16.msra.mxu0 0
  %540 = vmatpush.bf16.msra.mxu0 0
  %541 = vmatpush.bf16.msra.mxu0 0
  %542 = vmatpush.bf16.msra.mxu0 0
  %543 = vmatpush.bf16.msra.mxu0 0
  %544 = vmatpush.bf16.msra.mxu0 %v511
  %545 = vmatpush.bf16.msra.mxu0 %v510
  %546 = vmatmul.bf16.gmra.mxu0 %v515
  %v547 = vpop.f32.mrf.mxu0
  %v548 = vadd.f32 0.0, %v547
  %v549 = vpop.f32.mrf.mxu0
  %v550 = vadd.f32 0.0, %v549
  %551 = vmatmul.bf16.gmra.mxu0 %v518
  %v552 = vpop.f32.mrf.mxu0
  %v553 = vadd.f32 0.0, %v552
  %v554 = vpop.f32.mrf.mxu0
  %v555 = vadd.f32 0.0, %v554
  %556 = vmatmul.bf16.gmra.mxu0 %v521
  %v557 = vpop.f32.mrf.mxu0
  %v558 = vadd.f32 0.0, %v557
  %v559 = vpop.f32.mrf.mxu0
  %v560 = vadd.f32 0.0, %v559
  %561 = vmatmul.bf16.gmra.mxu0 %v524
  %v562 = vpop.f32.mrf.mxu0
  %v563 = vadd.f32 0.0, %v562
  %v564 = vpop.f32.mrf.mxu0
  %v565 = vadd.f32 0.0, %v564
  %566 = vmatmul.bf16.gmra.mxu0 %v527
  %v567 = vpop.f32.mrf.mxu0
  %v568 = vadd.f32 0.0, %v567
  %v569 = vpop.f32.mrf.mxu0
  %v570 = vadd.f32 0.0, %v569
  %571 = vmatmul.bf16.gmra.mxu0 %v530
  %v572 = vpop.f32.mrf.mxu0
  %v573 = vadd.f32 0.0, %v572
  %v574 = vpop.f32.mrf.mxu0
  %v575 = vadd.f32 0.0, %v574
  %576 = vmatmul.bf16.gmra.mxu0 %v533
  %v577 = vpop.f32.mrf.mxu0
  %v578 = vadd.f32 0.0, %v577
  %v579 = vpop.f32.mrf.mxu0
  %v580 = vadd.f32 0.0, %v579
  %581 = vmatmul.bf16.gmra.mxu0 %v536
  %v582 = vpop.f32.mrf.mxu0
  %v583 = vadd.f32 0.0, %v582
  %v584 = vpop.f32.mrf.mxu0
  %v585 = vadd.f32 0.0, %v584
  %586 = vdwg.mxu0
  %v587 = vadd.f32 %v482, %v548
  %v588 = vadd.f32 %v483, %v550
  %v589 = vadd.f32 %v484, %v553
  %v590 = vadd.f32 %v485, %v555
  %v591 = vadd.f32 %v486, %v558
  %v592 = vadd.f32 %v487, %v560
  %v593 = vadd.f32 %v488, %v563
  %v594 = vadd.f32 %v489, %v565
  %v595 = vadd.f32 %v490, %v568
  %v596 = vadd.f32 %v491, %v570
  %v597 = vadd.f32 %v492, %v573
  %v598 = vadd.f32 %v493, %v575
  %v599 = vadd.f32 %v494, %v578
  %v600 = vadd.f32 %v495, %v580
  %v601 = vadd.f32 %v496, %v583
  %v602 = vadd.f32 %v497, %v585
  %vm603 = vcmask 785408
  %604 = vst.msk [vmem:[#allocation2] sm:$0xff] %vm603, %v587
  %605 = vst.msk [vmem:[#allocation2 + $0x8] sm:$0xff] %vm603, %v588
  %606 = vst.msk [vmem:[#allocation2 + $0x10] sm:$0xff] %vm603, %v589
  %607 = vst.msk [vmem:[#allocation2 + $0x18] sm:$0xff] %vm603, %v590
  %608 = vst.msk [vmem:[#allocation2 + $0x20] sm:$0xff] %vm603, %v591
  %609 = vst.msk [vmem:[#allocation2 + $0x28] sm:$0xff] %vm603, %v592
  %610 = vst.msk [vmem:[#allocation2 + $0x30] sm:$0xff] %vm603, %v593
  %611 = vst.msk [vmem:[#allocation2 + $0x38] sm:$0xff] %vm603, %v594
  %612 = vst.msk [vmem:[#allocation2 + $0x40] sm:$0xff] %vm603, %v595
  %613 = vst.msk [vmem:[#allocation2 + $0x48] sm:$0xff] %vm603, %v596
  %614 = vst.msk [vmem:[#allocation2 + $0x50] sm:$0xff] %vm603, %v597
  %615 = vst.msk [vmem:[#allocation2 + $0x58] sm:$0xff] %vm603, %v598
  %616 = vst.msk [vmem:[#allocation2 + $0x60] sm:$0xff] %vm603, %v599
  %617 = vst.msk [vmem:[#allocation2 + $0x68] sm:$0xff] %vm603, %v600
  %618 = vst.msk [vmem:[#allocation2 + $0x70] sm:$0xff] %vm603, %v601
  %619 = vst.msk [vmem:[#allocation2 + $0x78] sm:$0xff] %vm603, %v602
  // Predicated region
  $region26: #{long_term_stage.21} parent=0 // pred_check
    %p620 = pneg %p21
  $region27: #{long_term_stage.21} parent=0 // pred_check_branch
    %622 = sbr.rel (%p620) target = $region29
  $region28: #{long_term_stage.21} parent=0 // pred_region
    %v623 = vld [vmem:[#allocation2] sm:$0xff]
    %v624 = vld [vmem:[#allocation2 + $0x8] sm:$0xff]
    %v625 = vld [vmem:[#allocation2 + $0x10] sm:$0xff]
    %v626 = vld [vmem:[#allocation2 + $0x18] sm:$0xff]
    %v627 = vld [vmem:[#allocation2 + $0x20] sm:$0xff]
    %v628 = vld [vmem:[#allocation2 + $0x28] sm:$0xff]
    %v629 = vld [vmem:[#allocation2 + $0x30] sm:$0xff]
    %v630 = vld [vmem:[#allocation2 + $0x38] sm:$0xff]
    %v631 = vld [vmem:[#allocation2 + $0x40] sm:$0xff]
    %v632 = vld [vmem:[#allocation2 + $0x48] sm:$0xff]
    %v633 = vld [vmem:[#allocation2 + $0x50] sm:$0xff]
    %v634 = vld [vmem:[#allocation2 + $0x58] sm:$0xff]
    %v635 = vld [vmem:[#allocation2 + $0x60] sm:$0xff]
    %v636 = vld [vmem:[#allocation2 + $0x68] sm:$0xff]
    %v637 = vld [vmem:[#allocation2 + $0x70] sm:$0xff]
    %v638 = vld [vmem:[#allocation2 + $0x78] sm:$0xff]
    %v639 = vld [vmem:[%s2] sm:$0x1]
    %v641 = vperm.slane %v639, 0
    %v643 = vadd.f32 %v623, %v641
    %v644 = vadd.f32 %v624, %v641
    %v645 = vadd.f32 %v625, %v641
    %v646 = vadd.f32 %v626, %v641
    %v647 = vadd.f32 %v627, %v641
    %v648 = vadd.f32 %v628, %v641
    %v649 = vadd.f32 %v629, %v641
    %v650 = vadd.f32 %v630, %v641
    %v651 = vadd.f32 %v631, %v641
    %v652 = vadd.f32 %v632, %v641
    %v653 = vadd.f32 %v633, %v641
    %v654 = vadd.f32 %v634, %v641
    %v655 = vadd.f32 %v635, %v641
    %v656 = vadd.f32 %v636, %v641
    %v657 = vadd.f32 %v637, %v641
    %v658 = vadd.f32 %v638, %v641
    %v659 = vpack.c.bf16 %v643, %v643
    %v660 = vpack.c.bf16 %v644, %v644
    %v661 = vpack.c.bf16 %v645, %v645
    %v662 = vpack.c.bf16 %v646, %v646
    %v663 = vpack.c.bf16 %v647, %v647
    %v664 = vpack.c.bf16 %v648, %v648
    %v665 = vpack.c.bf16 %v649, %v649
    %v666 = vpack.c.bf16 %v650, %v650
    %v667 = vpack.c.bf16 %v651, %v651
    %v668 = vpack.c.bf16 %v652, %v652
    %v669 = vpack.c.bf16 %v653, %v653
    %v670 = vpack.c.bf16 %v654, %v654
    %v671 = vpack.c.bf16 %v655, %v655
    %v672 = vpack.c.bf16 %v656, %v656
    %v673 = vpack.c.bf16 %v657, %v657
    %v674 = vpack.c.bf16 %v658, %v658
    %vm675 = vcmask 781312
    %676 = vst.msk [vmem:[%s5] sm:$0xf] %vm675, %v659
    %677 = vst.msk [vmem:[%s5 + $0x4] sm:$0xf] %vm675, %v660
    %678 = vst.msk [vmem:[%s5 + $0x8] sm:$0xf] %vm675, %v661
    %679 = vst.msk [vmem:[%s5 + $0xc] sm:$0xf] %vm675, %v662
    %680 = vst.msk [vmem:[%s5 + $0x10] sm:$0xf] %vm675, %v663
    %681 = vst.msk [vmem:[%s5 + $0x14] sm:$0xf] %vm675, %v664
    %682 = vst.msk [vmem:[%s5 + $0x18] sm:$0xf] %vm675, %v665
    %683 = vst.msk [vmem:[%s5 + $0x1c] sm:$0xf] %vm675, %v666
    %684 = vst.msk [vmem:[%s5 + $0x20] sm:$0xf] %vm675, %v667
    %685 = vst.msk [vmem:[%s5 + $0x24] sm:$0xf] %vm675, %v668
    %686 = vst.msk [vmem:[%s5 + $0x28] sm:$0xf] %vm675, %v669
    %687 = vst.msk [vmem:[%s5 + $0x2c] sm:$0xf] %vm675, %v670
    %688 = vst.msk [vmem:[%s5 + $0x30] sm:$0xf] %vm675, %v671
    %689 = vst.msk [vmem:[%s5 + $0x34] sm:$0xf] %vm675, %v672
    %690 = vst.msk [vmem:[%s5 + $0x38] sm:$0xf] %vm675, %v673
    %691 = vst.msk [vmem:[%s5 + $0x3c] sm:$0xf] %vm675, %v674
  $region29: #{long_term_stage.21} parent=0 // pred_fallthru
    _
  // Predicated region
  $region30: #{long_term_stage.21} parent=0 // pred_check
    _
  $region31: #{long_term_stage.21} parent=0 // pred_check_branch
    %693 = sbr.rel (0) target = $region33
  $region32: #{long_term_stage.21} parent=0 // pred_region
    _
  $region33: #{long_term_stage.21} parent=0 // pred_fallthru
    _
  // Predicated region
  $region34: #{long_term_stage.21} parent=0 // pred_check
    _
  $region35: #{long_term_stage.21} parent=0 // pred_check_branch
    %695 = sbr.rel (0) target = $region37
  $region36: #{long_term_stage.21} parent=0 // pred_region
    _
  $region37: #{long_term_stage.21} parent=0 // pred_fallthru
    _

// kernel: long_term_stage.22
$region0: #{long_term_stage.22}
  #allocation0 [shape = 'u32[]', space=smem, size = 0x4, offset = 0x4, fixed_abs, tag = 'smem constant byte address 0x4 - core index']
  #allocation1 [shape = 'u32[72,128]{1,0:T(1,128)}', space=vmem, size = 0x9000, scoped, tag = 'internal scratch']
  %s0 = inlined_call_operand.vmem [shape: bf16[8,16,96], index: 0, kind: input, shape index: {}]
  %s1 = inlined_call_operand.vmem [shape: f32[4,16,16], index: 1, kind: input, shape index: {}]
  %s2 = inlined_call_operand.vmem [shape: bf16[8,16,32], index: 2, kind: output, shape index: {}]
  %s3 = sld [smem:[#allocation0]]
  $region41: #{long_term_stage.22} parent=0
    _
  %s5 = ssub.s32 1, %s3
  %s6 = scalar_select 0, %s5, %s3
  loop: start=0, step=1, limit=4
  $region2: #{long_term_stage.22} parent=0 // loop_pre_header
    _
  $region3: #{long_term_stage.22} parent=0 // loop_header
    %s8 = sphi 0, %s12
    %p9 = scmp.ge.s32.totalorder %s8, 4
    %s18 = sphi 0, %s20
    %s21 = sphi 0, %s18
    %s22 = sphi 0, %s21
    %s38 = sphi 0, %s22
    %s42 = sphi 0, %s42
    %s44 = sphi 0, %s42
    %s45 = sphi 0, %s44
    %s59 = sphi 0, %s45
    %s65 = sphi 0, %s67
    %s68 = sphi 0, %s65
    %s69 = sphi 0, %s68
    %s85 = sphi 0, %s69
  $region4: #{long_term_stage.22} parent=0 // loop_header_branch
    %11 = sbr.rel (%p9) target = $region8
  $region5: #{long_term_stage.22} parent=0 // loop_body
    %s13 = ssub.s32 %s8, 1
    %s14 = ssub.s32 %s8, 2
    %s15 = sadd.s32 %s8, 1
    %s16 = ssub.s32 %s8, %s15
    %p17 = scmp.eq.s32.totalorder %s16, 0
    %s19 = sadd.s32 %s18, 1
    %s20 = scalar_select %p17, %s18, %s19
    %p23 = pneg %p17
    %p24 = scmp.eq.s32.totalorder %s8, 1
    %p25 = por %p23, %p24
    %p26 = scmp.ne.s32.totalorder %s18, %s21
    %p27 = scmp.eq.s32.totalorder %s8, 0
    %p28 = por %p26, %p27
    %p29 = scmp.ne.s32.totalorder %s18, %s21
    %p30 = scmp.eq.s32.totalorder %s13, 1
    %p31 = por %p29, %p30
    %p32 = scmp.ne.s32.totalorder %s21, %s22
    %p33 = scmp.eq.s32.totalorder %s13, 0
    %p34 = por %p32, %p33
    %p35 = scmp.ne.s32.totalorder %s21, %s22
    %p36 = scmp.eq.s32.totalorder %s14, 1
    %p37 = por %p35, %p36
    %p39 = scmp.ne.s32.totalorder %s22, %s38
    %p40 = scmp.eq.s32.totalorder %s14, 0
    %p41 = por %p39, %p40
    %s43 = sadd.s32 %s42, 1
    %p46 = scmp.eq.s32.totalorder %s8, 1
    %p47 = scmp.ne.s32.totalorder %s42, %s44
    %p48 = scmp.eq.s32.totalorder %s8, 0
    %p49 = por %p47, %p48
    %p50 = scmp.ne.s32.totalorder %s42, %s44
    %p51 = scmp.eq.s32.totalorder %s13, 1
    %p52 = por %p50, %p51
    %p53 = scmp.ne.s32.totalorder %s44, %s45
    %p54 = scmp.eq.s32.totalorder %s13, 0
    %p55 = por %p53, %p54
    %p56 = scmp.ne.s32.totalorder %s44, %s45
    %p57 = scmp.eq.s32.totalorder %s14, 1
    %p58 = por %p56, %p57
    %p60 = scmp.ne.s32.totalorder %s45, %s59
    %p61 = scmp.eq.s32.totalorder %s14, 0
    %p62 = por %p60, %p61
    %s63 = ssub.s32 %s8, %s15
    %p64 = scmp.eq.s32.totalorder %s63, 0
    %s66 = sadd.s32 %s65, 1
    %s67 = scalar_select %p64, %s65, %s66
    %p70 = pneg %p64
    %p71 = scmp.eq.s32.totalorder %s8, 1
    %p72 = por %p70, %p71
    %p73 = scmp.ne.s32.totalorder %s65, %s68
    %p74 = scmp.eq.s32.totalorder %s8, 0
    %p75 = por %p73, %p74
    %p76 = scmp.ne.s32.totalorder %s65, %s68
    %p77 = scmp.eq.s32.totalorder %s13, 1
    %p78 = por %p76, %p77
    %p79 = scmp.ne.s32.totalorder %s68, %s69
    %p80 = scmp.eq.s32.totalorder %s13, 0
    %p81 = por %p79, %p80
    %p82 = scmp.ne.s32.totalorder %s68, %s69
    %p83 = scmp.eq.s32.totalorder %s14, 1
    %p84 = por %p82, %p83
    %p86 = scmp.ne.s32.totalorder %s69, %s85
    %p87 = scmp.eq.s32.totalorder %s14, 0
    %p88 = por %p86, %p87
    %p89 = scmp.le.s32.totalorder 1, %s8
    %p90 = scmp.lt.s32.totalorder %s8, 3
    %p91 = pnand %p89, %p90
    %p92 = pneg %p91
    // Predicated region
    $region9: #{long_term_stage.22} parent=5 // pred_check
      _
    $region10: #{long_term_stage.22} parent=5 // pred_check_branch
      %94 = sbr.rel (%p91) target = $region12
    $region11: #{long_term_stage.22} parent=5 // pred_region
      %s95 = ssub.s32 %s8, 1
      // Predicated region
      $region13: #{long_term_stage.22} parent=11 // pred_check
        %p96 = pneg %p55
      $region14: #{long_term_stage.22} parent=11 // pred_check_branch
        %98 = sbr.rel (%p96) target = $region16
      $region15: #{long_term_stage.22} parent=11 // pred_region
        _
      $region16: #{long_term_stage.22} parent=11 // pred_fallthru
        _
    $region12: #{long_term_stage.22} parent=5 // pred_fallthru
      _
    %p99 = scmp.lt.s32.totalorder %s8, 2
    // Predicated region
    $region17: #{long_term_stage.22} parent=5 // pred_check
      %p100 = pneg %p99
    $region18: #{long_term_stage.22} parent=5 // pred_check_branch
      %102 = sbr.rel (%p100) target = $region20
    $region19: #{long_term_stage.22} parent=5 // pred_region
      // Predicated region
      $region21: #{long_term_stage.22} parent=19 // pred_check
        %p103 = pneg %p28
      $region22: #{long_term_stage.22} parent=19 // pred_check_branch
        %105 = sbr.rel (%p103) target = $region24
      $region23: #{long_term_stage.22} parent=19 // pred_region
        %s106 = smul.u32 4, %s8
        %p107 = scmp.lt.s32.totalorder %s106, 7
        %s108 = scalar_select %p107, %s106, 7
        %s109 = smul.addr %s108, 2
        %s110 = smul.addr %s109, 4
        %s111 = scalar_lea.vmem %s0, %s110
        %s112 = smul.u32 4, %s8
      $region24: #{long_term_stage.22} parent=19 // pred_fallthru
        _
    $region20: #{long_term_stage.22} parent=5 // pred_fallthru
      _
    %p113 = scmp.le.s32.totalorder 1, %s8
    %p114 = scmp.lt.s32.totalorder %s8, 3
    %p115 = pnand %p113, %p114
    %p116 = pneg %p115
    // Predicated region
    $region25: #{long_term_stage.22} parent=5 // pred_check
      _
    $region26: #{long_term_stage.22} parent=5 // pred_check_branch
      %118 = sbr.rel (%p115) target = $region28
    $region27: #{long_term_stage.22} parent=5 // pred_region
      %s119 = ssub.s32 %s8, 1
      %s120 = smul.u32 4, %s13
      %p121 = scmp.lt.s32.totalorder %s120, 7
      %s122 = scalar_select %p121, %s120, 7
      %s123 = smul.addr %s122, 2
      %s124 = smul.addr %s123, 4
      %s125 = scalar_lea.vmem %s0, %s124
      %p126 = pneg %p34
      %p127 = pneg %p31
      %p128 = pneg %p55
      %p129 = pneg %p52
      %p130 = pneg %p81
      %p131 = pneg %p78
      %s132 = smul.u32 4, %s13
      %p133 = scmp.lt.s32.totalorder %s132, 7
      %s134 = scalar_select %p133, %s132, 7
      %s135 = smul.addr %s134, 2
      %s136 = smul.addr %s135, 4
      %s137 = scalar_lea.vmem %s2, %s136
      %s138 = smul.u32 4, %s13
      %p139 = scmp.lt.s32.totalorder %s138, 7
      %s140 = scalar_select %p139, %s138, 7
      %s141 = smul.addr %s140, 2
      %s142 = smul.addr %s141, 4
      %s143 = scalar_lea.vmem %s0, %s142
      %s144 = smul.u32 4, %s13
      %s145 = smul.u32 4, %s13
      %p146 = scmp.lt.s32.totalorder %s145, 7
      %s147 = scalar_select %p146, %s145, 7
      %s148 = smul.addr %s147, 2
      %s149 = smul.addr %s148, 4
      %s150 = scalar_lea.vmem %s2, %s149
      %s151 = smul.u32 4, %s13
      %v153 = vld [vmem:[%s143] sm:$0xf]
      %v154 = vld [vmem:[%s143 + $0x4] sm:$0xf]
      %v155 = vld [vmem:[%s143 + $0x8] sm:$0xf]
      %v156 = vld [vmem:[%s143 + $0xc] sm:$0xf]
      %v157 = vld [vmem:[%s143 + $0x10] sm:$0xf]
      %v158 = vld [vmem:[%s143 + $0x14] sm:$0xf]
      %v159 = vld [vmem:[%s143 + $0x18] sm:$0xf]
      %v160 = vld [vmem:[%s143 + $0x1c] sm:$0xf]
      %v163 = vunpack.c.l.b16 %v153
      %v164 = vunpack.c.l.b16 %v154
      %v165 = vpack.c.b16 %v164, %v163
      %166 = vrot.lane.b32.xlu0 %v165, 96
      %v167 = vpop.permute.xlu0 %166
      %vm168 = vcmask 64512
      %v170 = vsel %vm168, %v165, 0
      %v173 = vsel %vm168, %v167, 0
      %175 = vmatpush.bf16.xpose.msra.mxu0 0
      %176 = vmatpush.bf16.xpose.msra.mxu0 0
      %177 = vmatpush.bf16.xpose.msra.mxu0 0
      %178 = vmatpush.bf16.xpose.msra.mxu0 0
      %179 = vmatpush.bf16.xpose.msra.mxu0 0
      %180 = vmatpush.bf16.xpose.msra.mxu0 0
      %181 = vmatpush.bf16.xpose.msra.mxu0 0
      %182 = vmatpush.bf16.xpose.msra.mxu0 %v173
      %183 = vmatmul.bf16.gmra.mxu0 %v170
      %v184 = vpop.f32.mrf.mxu0
      %v185 = vadd.f32 0.0, %v184
      %v186 = vpop.f32.mrf.mxu0
      %v187 = vadd.f32 0.0, %v186
      %188 = vdwg.mxu0
      %v191 = vunpack.c.l.b16 %v155
      %v192 = vunpack.c.l.b16 %v156
      %v193 = vpack.c.b16 %v192, %v191
      %194 = vrot.lane.b32.xlu0 %v193, 96
      %v195 = vpop.permute.xlu0 %194
      %v197 = vsel %vm168, %v193, 0
      %v200 = vsel %vm168, %v195, 0
      %202 = vmatpush.bf16.xpose.msra.mxu0 0
      %203 = vmatpush.bf16.xpose.msra.mxu0 0
      %204 = vmatpush.bf16.xpose.msra.mxu0 0
      %205 = vmatpush.bf16.xpose.msra.mxu0 0
      %206 = vmatpush.bf16.xpose.msra.mxu0 0
      %207 = vmatpush.bf16.xpose.msra.mxu0 0
      %208 = vmatpush.bf16.xpose.msra.mxu0 0
      %209 = vmatpush.bf16.xpose.msra.mxu0 %v200
      %210 = vmatmul.bf16.gmra.mxu0 %v197
      %v211 = vpop.f32.mrf.mxu0
      %v212 = vadd.f32 0.0, %v211
      %v213 = vpop.f32.mrf.mxu0
      %v214 = vadd.f32 0.0, %v213
      %215 = vdwg.mxu0
      %v218 = vunpack.c.l.b16 %v157
      %v219 = vunpack.c.l.b16 %v158
      %v220 = vpack.c.b16 %v219, %v218
      %221 = vrot.lane.b32.xlu0 %v220, 96
      %v222 = vpop.permute.xlu0 %221
      %v224 = vsel %vm168, %v220, 0
      %v227 = vsel %vm168, %v222, 0
      %229 = vmatpush.bf16.xpose.msra.mxu0 0
      %230 = vmatpush.bf16.xpose.msra.mxu0 0
      %231 = vmatpush.bf16.xpose.msra.mxu0 0
      %232 = vmatpush.bf16.xpose.msra.mxu0 0
      %233 = vmatpush.bf16.xpose.msra.mxu0 0
      %234 = vmatpush.bf16.xpose.msra.mxu0 0
      %235 = vmatpush.bf16.xpose.msra.mxu0 0
      %236 = vmatpush.bf16.xpose.msra.mxu0 %v227
      %237 = vmatmul.bf16.gmra.mxu0 %v224
      %v238 = vpop.f32.mrf.mxu0
      %v239 = vadd.f32 0.0, %v238
      %v240 = vpop.f32.mrf.mxu0
      %v241 = vadd.f32 0.0, %v240
      %242 = vdwg.mxu0
      %v245 = vunpack.c.l.b16 %v159
      %v246 = vunpack.c.l.b16 %v160
      %v247 = vpack.c.b16 %v246, %v245
      %248 = vrot.lane.b32.xlu0 %v247, 96
      %v249 = vpop.permute.xlu0 %248
      %v251 = vsel %vm168, %v247, 0
      %v254 = vsel %vm168, %v249, 0
      %256 = vmatpush.bf16.xpose.msra.mxu0 0
      %257 = vmatpush.bf16.xpose.msra.mxu0 0
      %258 = vmatpush.bf16.xpose.msra.mxu0 0
      %259 = vmatpush.bf16.xpose.msra.mxu0 0
      %260 = vmatpush.bf16.xpose.msra.mxu0 0
      %261 = vmatpush.bf16.xpose.msra.mxu0 0
      %262 = vmatpush.bf16.xpose.msra.mxu0 0
      %263 = vmatpush.bf16.xpose.msra.mxu0 %v254
      %264 = vmatmul.bf16.gmra.mxu0 %v251
      %v265 = vpop.f32.mrf.mxu0
      %v266 = vadd.f32 0.0, %v265
      %v267 = vpop.f32.mrf.mxu0
      %v268 = vadd.f32 0.0, %v267
      %269 = vdwg.mxu0
      %v270 = vmul.f32 %v185, 0.35355338
      %v271 = vmul.f32 %v187, 0.35355338
      %v272 = vmul.f32 %v212, 0.35355338
      %v273 = vmul.f32 %v214, 0.35355338
      %v274 = vmul.f32 %v239, 0.35355338
      %v275 = vmul.f32 %v241, 0.35355338
      %v276 = vmul.f32 %v266, 0.35355338
      %v277 = vmul.f32 %v268, 0.35355338
      %v278 = vld [vmem:[%s1] sm:$0xff]
      %v279 = vld [vmem:[%s1 + $0x8] sm:$0xff]
      %v280 = vadd.f32 %v270, %v278
      %v281 = vadd.f32 %v271, %v279
      %v282 = vadd.f32 %v272, %v278
      %v283 = vadd.f32 %v273, %v279
      %v284 = vadd.f32 %v274, %v278
      %v285 = vadd.f32 %v275, %v279
      %v286 = vadd.f32 %v276, %v278
      %v287 = vadd.f32 %v277, %v279
      %vm288 = vcmask 130048
      %v289 = vsel %vm288, %v280, -inf
      %290 = vmax.xlane.f32.xlu0 %v289
      %v291 = vpop.xlane.xlu0 %290
      %v292 = vsel %vm288, %v281, -inf
      %293 = vmax.xlane.f32.xlu0 %v292
      %v294 = vpop.xlane.xlu0 %293
      %v295 = vsel %vm288, %v282, -inf
      %296 = vmax.xlane.f32.xlu0 %v295
      %v297 = vpop.xlane.xlu0 %296
      %v298 = vsel %vm288, %v283, -inf
      %299 = vmax.xlane.f32.xlu0 %v298
      %v300 = vpop.xlane.xlu0 %299
      %v301 = vsel %vm288, %v284, -inf
      %302 = vmax.xlane.f32.xlu0 %v301
      %v303 = vpop.xlane.xlu0 %302
      %v304 = vsel %vm288, %v285, -inf
      %305 = vmax.xlane.f32.xlu0 %v304
      %v306 = vpop.xlane.xlu0 %305
      %v307 = vsel %vm288, %v286, -inf
      %308 = vmax.xlane.f32.xlu0 %v307
      %v309 = vpop.xlane.xlu0 %308
      %v310 = vsel %vm288, %v287, -inf
      %311 = vmax.xlane.f32.xlu0 %v310
      %v312 = vpop.xlane.xlu0 %311
      %v313 = vsub.f32 %v280, %v291
      %v314 = vsub.f32 %v281, %v294
      %v315 = vsub.f32 %v282, %v297
      %v316 = vsub.f32 %v283, %v300
      %v317 = vsub.f32 %v284, %v303
      %v318 = vsub.f32 %v285, %v306
      %v319 = vsub.f32 %v286, %v309
      %v320 = vsub.f32 %v287, %v312
      %v321 = vmul.f32 %v313, 1.442695
      %v322 = vpow.pop %v321
      %v323 = vmul.f32 %v314, 1.442695
      %v324 = vpow.pop %v323
      %v325 = vmul.f32 %v315, 1.442695
      %v326 = vpow.pop %v325
      %v327 = vmul.f32 %v316, 1.442695
      %v328 = vpow.pop %v327
      %v329 = vmul.f32 %v317, 1.442695
      %v330 = vpow.pop %v329
      %v331 = vmul.f32 %v318, 1.442695
      %v332 = vpow.pop %v331
      %v333 = vmul.f32 %v319, 1.442695
      %v334 = vpow.pop %v333
      %v335 = vmul.f32 %v320, 1.442695
      %v336 = vpow.pop %v335
      %v337 = vsel %vm288, %v322, 0.0
      %338 = vadd.xlane.f32.xlu0 %v337
      %v339 = vpop.xlane.xlu0 %338
      %v340 = vsel %vm288, %v324, 0.0
      %341 = vadd.xlane.f32.xlu0 %v340
      %v342 = vpop.xlane.xlu0 %341
      %v343 = vsel %vm288, %v326, 0.0
      %344 = vadd.xlane.f32.xlu0 %v343
      %v345 = vpop.xlane.xlu0 %344
      %v346 = vsel %vm288, %v328, 0.0
      %347 = vadd.xlane.f32.xlu0 %v346
      %v348 = vpop.xlane.xlu0 %347
      %v349 = vsel %vm288, %v330, 0.0
      %350 = vadd.xlane.f32.xlu0 %v349
      %v351 = vpop.xlane.xlu0 %350
      %v352 = vsel %vm288, %v332, 0.0
      %353 = vadd.xlane.f32.xlu0 %v352
      %v354 = vpop.xlane.xlu0 %353
      %v355 = vsel %vm288, %v334, 0.0
      %356 = vadd.xlane.f32.xlu0 %v355
      %v357 = vpop.xlane.xlu0 %356
      %v358 = vsel %vm288, %v336, 0.0
      %359 = vadd.xlane.f32.xlu0 %v358
      %v360 = vpop.xlane.xlu0 %359
      %v361 = vrcp.pop %v339
      %v362 = vrcp.pop %v342
      %v363 = vrcp.pop %v345
      %v364 = vrcp.pop %v348
      %v365 = vrcp.pop %v351
      %v366 = vrcp.pop %v354
      %v367 = vrcp.pop %v357
      %v368 = vrcp.pop %v360
      %v369 = vmul.f32 %v322, %v361
      %v370 = vmul.f32 %v324, %v362
      %v371 = vmul.f32 %v326, %v363
      %v372 = vmul.f32 %v328, %v364
      %v373 = vmul.f32 %v330, %v365
      %v374 = vmul.f32 %v332, %v366
      %v375 = vmul.f32 %v334, %v367
      %v376 = vmul.f32 %v336, %v368
      %v377 = vpack.c.bf16 %v369, %v369
      %v378 = vpack.c.bf16 %v370, %v370
      %v379 = vpack.c.bf16 %v371, %v371
      %v380 = vpack.c.bf16 %v372, %v372
      %v381 = vpack.c.bf16 %v373, %v373
      %v382 = vpack.c.bf16 %v374, %v374
      %v383 = vpack.c.bf16 %v375, %v375
      %v384 = vpack.c.bf16 %v376, %v376
      %v387 = vunpack.c.l.b16 %v377
      %v388 = vunpack.c.l.b16 %v378
      %v389 = vpack.c.b16 %v388, %v387
      %390 = vrot.lane.b32.xlu0 %v165, 64
      %v391 = vpop.permute.xlu0 %390
      %v394 = vsel %vm288, %v389, 0
      %396 = vmatpush.bf16.msra.mxu0 0
      %397 = vmatpush.bf16.msra.mxu0 0
      %398 = vmatpush.bf16.msra.mxu0 0
      %399 = vmatpush.bf16.msra.mxu0 0
      %400 = vmatpush.bf16.msra.mxu0 0
      %401 = vmatpush.bf16.msra.mxu0 0
      %402 = vmatpush.bf16.msra.mxu0 0
      %403 = vmatpush.bf16.msra.mxu0 %v391
      %404 = vmatmul.bf16.gmra.mxu0 %v394
      %v405 = vpop.f32.mrf.mxu0
      %v406 = vadd.f32 0.0, %v405
      %v407 = vpop.f32.mrf.mxu0
      %v408 = vadd.f32 0.0, %v407
      %409 = vdwg.mxu0
      %v412 = vunpack.c.l.b16 %v379
      %v413 = vunpack.c.l.b16 %v380
      %v414 = vpack.c.b16 %v413, %v412
      %415 = vrot.lane.b32.xlu0 %v193, 64
      %v416 = vpop.permute.xlu0 %415
      %v419 = vsel %vm288, %v414, 0
      %421 = vmatpush.bf16.msra.mxu0 0
      %422 = vmatpush.bf16.msra.mxu0 0
      %423 = vmatpush.bf16.msra.mxu0 0
      %424 = vmatpush.bf16.msra.mxu0 0
      %425 = vmatpush.bf16.msra.mxu0 0
      %426 = vmatpush.bf16.msra.mxu0 0
      %427 = vmatpush.bf16.msra.mxu0 0
      %428 = vmatpush.bf16.msra.mxu0 %v416
      %429 = vmatmul.bf16.gmra.mxu0 %v419
      %v430 = vpop.f32.mrf.mxu0
      %v431 = vadd.f32 0.0, %v430
      %v432 = vpop.f32.mrf.mxu0
      %v433 = vadd.f32 0.0, %v432
      %434 = vdwg.mxu0
      %v437 = vunpack.c.l.b16 %v381
      %v438 = vunpack.c.l.b16 %v382
      %v439 = vpack.c.b16 %v438, %v437
      %440 = vrot.lane.b32.xlu0 %v220, 64
      %v441 = vpop.permute.xlu0 %440
      %v444 = vsel %vm288, %v439, 0
      %446 = vmatpush.bf16.msra.mxu0 0
      %447 = vmatpush.bf16.msra.mxu0 0
      %448 = vmatpush.bf16.msra.mxu0 0
      %449 = vmatpush.bf16.msra.mxu0 0
      %450 = vmatpush.bf16.msra.mxu0 0
      %451 = vmatpush.bf16.msra.mxu0 0
      %452 = vmatpush.bf16.msra.mxu0 0
      %453 = vmatpush.bf16.msra.mxu0 %v441
      %454 = vmatmul.bf16.gmra.mxu0 %v444
      %v455 = vpop.f32.mrf.mxu0
      %v456 = vadd.f32 0.0, %v455
      %v457 = vpop.f32.mrf.mxu0
      %v458 = vadd.f32 0.0, %v457
      %459 = vdwg.mxu0
      %v462 = vunpack.c.l.b16 %v383
      %v463 = vunpack.c.l.b16 %v384
      %v464 = vpack.c.b16 %v463, %v462
      %465 = vrot.lane.b32.xlu0 %v247, 64
      %v466 = vpop.permute.xlu0 %465
      %v469 = vsel %vm288, %v464, 0
      %471 = vmatpush.bf16.msra.mxu0 0
      %472 = vmatpush.bf16.msra.mxu0 0
      %473 = vmatpush.bf16.msra.mxu0 0
      %474 = vmatpush.bf16.msra.mxu0 0
      %475 = vmatpush.bf16.msra.mxu0 0
      %476 = vmatpush.bf16.msra.mxu0 0
      %477 = vmatpush.bf16.msra.mxu0 0
      %478 = vmatpush.bf16.msra.mxu0 %v466
      %479 = vmatmul.bf16.gmra.mxu0 %v469
      %v480 = vpop.f32.mrf.mxu0
      %v481 = vadd.f32 0.0, %v480
      %v482 = vpop.f32.mrf.mxu0
      %v483 = vadd.f32 0.0, %v482
      %484 = vdwg.mxu0
      %v485 = vld [vmem:[%s143] sm:$0xf]
      %v486 = vld [vmem:[%s143 + $0x4] sm:$0xf]
      %v487 = vld [vmem:[%s143 + $0x8] sm:$0xf]
      %v488 = vld [vmem:[%s143 + $0xc] sm:$0xf]
      %v489 = vld [vmem:[%s143 + $0x10] sm:$0xf]
      %v490 = vld [vmem:[%s143 + $0x14] sm:$0xf]
      %v491 = vld [vmem:[%s143 + $0x18] sm:$0xf]
      %v492 = vld [vmem:[%s143 + $0x1c] sm:$0xf]
      %v495 = vunpack.c.l.b16 %v485
      %v496 = vunpack.c.l.b16 %v486
      %v497 = vpack.c.b16 %v496, %v495
      %498 = vrot.lane.b32.xlu0 %v497, 120
      %v499 = vpop.permute.xlu0 %498
      %500 = vrot.lane.b32.xlu0 %v497, 88
      %v501 = vpop.permute.xlu0 %500
      %v503 = vsel %vm168, %v499, 0
      %v506 = vsel %vm168, %v501, 0
      %508 = vmatpush.bf16.xpose.msra.mxu0 0
      %509 = vmatpush.bf16.xpose.msra.mxu0 0
      %510 = vmatpush.bf16.xpose.msra.mxu0 0
      %511 = vmatpush.bf16.xpose.msra.mxu0 0
      %512 = vmatpush.bf16.xpose.msra.mxu0 0
      %513 = vmatpush.bf16.xpose.msra.mxu0 0
      %514 = vmatpush.bf16.xpose.msra.mxu0 0
      %515 = vmatpush.bf16.xpose.msra.mxu0 %v506
      %516 = vmatmul.bf16.gmra.mxu0 %v503
      %v517 = vpop.f32.mrf.mxu0
      %v518 = vadd.f32 0.0, %v517
      %v519 = vpop.f32.mrf.mxu0
      %v520 = vadd.f32 0.0, %v519
      %521 = vdwg.mxu0
      %v524 = vunpack.c.l.b16 %v487
      %v525 = vunpack.c.l.b16 %v488
      %v526 = vpack.c.b16 %v525, %v524
      %527 = vrot.lane.b32.xlu0 %v526, 120
      %v528 = vpop.permute.xlu0 %527
      %529 = vrot.lane.b32.xlu0 %v526, 88
      %v530 = vpop.permute.xlu0 %529
      %v532 = vsel %vm168, %v528, 0
      %v535 = vsel %vm168, %v530, 0
      %537 = vmatpush.bf16.xpose.msra.mxu0 0
      %538 = vmatpush.bf16.xpose.msra.mxu0 0
      %539 = vmatpush.bf16.xpose.msra.mxu0 0
      %540 = vmatpush.bf16.xpose.msra.mxu0 0
      %541 = vmatpush.bf16.xpose.msra.mxu0 0
      %542 = vmatpush.bf16.xpose.msra.mxu0 0
      %543 = vmatpush.bf16.xpose.msra.mxu0 0
      %544 = vmatpush.bf16.xpose.msra.mxu0 %v535
      %545 = vmatmul.bf16.gmra.mxu0 %v532
      %v546 = vpop.f32.mrf.mxu0
      %v547 = vadd.f32 0.0, %v546
      %v548 = vpop.f32.mrf.mxu0
      %v549 = vadd.f32 0.0, %v548
      %550 = vdwg.mxu0
      %v553 = vunpack.c.l.b16 %v489
      %v554 = vunpack.c.l.b16 %v490
      %v555 = vpack.c.b16 %v554, %v553
      %556 = vrot.lane.b32.xlu0 %v555, 120
      %v557 = vpop.permute.xlu0 %556
      %558 = vrot.lane.b32.xlu0 %v555, 88
      %v559 = vpop.permute.xlu0 %558
      %v561 = vsel %vm168, %v557, 0
      %v564 = vsel %vm168, %v559, 0
      %566 = vmatpush.bf16.xpose.msra.mxu0 0
      %567 = vmatpush.bf16.xpose.msra.mxu0 0
      %568 = vmatpush.bf16.xpose.msra.mxu0 0
      %569 = vmatpush.bf16.xpose.msra.mxu0 0
      %570 = vmatpush.bf16.xpose.msra.mxu0 0
      %571 = vmatpush.bf16.xpose.msra.mxu0 0
      %572 = vmatpush.bf16.xpose.msra.mxu0 0
      %573 = vmatpush.bf16.xpose.msra.mxu0 %v564
      %574 = vmatmul.bf16.gmra.mxu0 %v561
      %v575 = vpop.f32.mrf.mxu0
      %v576 = vadd.f32 0.0, %v575
      %v577 = vpop.f32.mrf.mxu0
      %v578 = vadd.f32 0.0, %v577
      %579 = vdwg.mxu0
      %v582 = vunpack.c.l.b16 %v491
      %v583 = vunpack.c.l.b16 %v492
      %v584 = vpack.c.b16 %v583, %v582
      %585 = vrot.lane.b32.xlu0 %v584, 120
      %v586 = vpop.permute.xlu0 %585
      %587 = vrot.lane.b32.xlu0 %v584, 88
      %v588 = vpop.permute.xlu0 %587
      %v590 = vsel %vm168, %v586, 0
      %v593 = vsel %vm168, %v588, 0
      %595 = vmatpush.bf16.xpose.msra.mxu0 0
      %596 = vmatpush.bf16.xpose.msra.mxu0 0
      %597 = vmatpush.bf16.xpose.msra.mxu0 0
      %598 = vmatpush.bf16.xpose.msra.mxu0 0
      %599 = vmatpush.bf16.xpose.msra.mxu0 0
      %600 = vmatpush.bf16.xpose.msra.mxu0 0
      %601 = vmatpush.bf16.xpose.msra.mxu0 0
      %602 = vmatpush.bf16.xpose.msra.mxu0 %v593
      %603 = vmatmul.bf16.gmra.mxu0 %v590
      %v604 = vpop.f32.mrf.mxu0
      %v605 = vadd.f32 0.0, %v604
      %v606 = vpop.f32.mrf.mxu0
      %v607 = vadd.f32 0.0, %v606
      %608 = vdwg.mxu0
      %v609 = vmul.f32 %v518, 0.35355338
      %v610 = vmul.f32 %v520, 0.35355338
      %v611 = vmul.f32 %v547, 0.35355338
      %v612 = vmul.f32 %v549, 0.35355338
      %v613 = vmul.f32 %v576, 0.35355338
      %v614 = vmul.f32 %v578, 0.35355338
      %v615 = vmul.f32 %v605, 0.35355338
      %v616 = vmul.f32 %v607, 0.35355338
      %s617 = scalar_lea.vmem %s1, 16
      %v618 = vld [vmem:[%s617] sm:$0xff]
      %v619 = vld [vmem:[%s617 + $0x8] sm:$0xff]
      %v620 = vadd.f32 %v609, %v618
      %v621 = vadd.f32 %v610, %v619
      %v622 = vadd.f32 %v611, %v618
      %v623 = vadd.f32 %v612, %v619
      %v624 = vadd.f32 %v613, %v618
      %v625 = vadd.f32 %v614, %v619
      %v626 = vadd.f32 %v615, %v618
      %v627 = vadd.f32 %v616, %v619
      %v628 = vsel %vm288, %v620, -inf
      %629 = vmax.xlane.f32.xlu0 %v628
      %v630 = vpop.xlane.xlu0 %629
      %v631 = vsel %vm288, %v621, -inf
      %632 = vmax.xlane.f32.xlu0 %v631
      %v633 = vpop.xlane.xlu0 %632
      %v634 = vsel %vm288, %v622, -inf
      %635 = vmax.xlane.f32.xlu0 %v634
      %v636 = vpop.xlane.xlu0 %635
      %v637 = vsel %vm288, %v623, -inf
      %638 = vmax.xlane.f32.xlu0 %v637
      %v639 = vpop.xlane.xlu0 %638
      %v640 = vsel %vm288, %v624, -inf
      %641 = vmax.xlane.f32.xlu0 %v640
      %v642 = vpop.xlane.xlu0 %641
      %v643 = vsel %vm288, %v625, -inf
      %644 = vmax.xlane.f32.xlu0 %v643
      %v645 = vpop.xlane.xlu0 %644
      %v646 = vsel %vm288, %v626, -inf
      %647 = vmax.xlane.f32.xlu0 %v646
      %v648 = vpop.xlane.xlu0 %647
      %v649 = vsel %vm288, %v627, -inf
      %650 = vmax.xlane.f32.xlu0 %v649
      %v651 = vpop.xlane.xlu0 %650
      %v652 = vsub.f32 %v620, %v630
      %v653 = vsub.f32 %v621, %v633
      %v654 = vsub.f32 %v622, %v636
      %v655 = vsub.f32 %v623, %v639
      %v656 = vsub.f32 %v624, %v642
      %v657 = vsub.f32 %v625, %v645
      %v658 = vsub.f32 %v626, %v648
      %v659 = vsub.f32 %v627, %v651
      %v660 = vmul.f32 %v652, 1.442695
      %v661 = vpow.pop %v660
      %v662 = vmul.f32 %v653, 1.442695
      %v663 = vpow.pop %v662
      %v664 = vmul.f32 %v654, 1.442695
      %v665 = vpow.pop %v664
      %v666 = vmul.f32 %v655, 1.442695
      %v667 = vpow.pop %v666
      %v668 = vmul.f32 %v656, 1.442695
      %v669 = vpow.pop %v668
      %v670 = vmul.f32 %v657, 1.442695
      %v671 = vpow.pop %v670
      %v672 = vmul.f32 %v658, 1.442695
      %v673 = vpow.pop %v672
      %v674 = vmul.f32 %v659, 1.442695
      %v675 = vpow.pop %v674
      %v676 = vsel %vm288, %v661, 0.0
      %677 = vadd.xlane.f32.xlu0 %v676
      %v678 = vpop.xlane.xlu0 %677
      %v679 = vsel %vm288, %v663, 0.0
      %680 = vadd.xlane.f32.xlu0 %v679
      %v681 = vpop.xlane.xlu0 %680
      %v682 = vsel %vm288, %v665, 0.0
      %683 = vadd.xlane.f32.xlu0 %v682
      %v684 = vpop.xlane.xlu0 %683
      %v685 = vsel %vm288, %v667, 0.0
      %686 = vadd.xlane.f32.xlu0 %v685
      %v687 = vpop.xlane.xlu0 %686
      %v688 = vsel %vm288, %v669, 0.0
      %689 = vadd.xlane.f32.xlu0 %v688
      %v690 = vpop.xlane.xlu0 %689
      %v691 = vsel %vm288, %v671, 0.0
      %692 = vadd.xlane.f32.xlu0 %v691
      %v693 = vpop.xlane.xlu0 %692
      %v694 = vsel %vm288, %v673, 0.0
      %695 = vadd.xlane.f32.xlu0 %v694
      %v696 = vpop.xlane.xlu0 %695
      %v697 = vsel %vm288, %v675, 0.0
      %698 = vadd.xlane.f32.xlu0 %v697
      %v699 = vpop.xlane.xlu0 %698
      %v700 = vrcp.pop %v678
      %v701 = vrcp.pop %v681
      %v702 = vrcp.pop %v684
      %v703 = vrcp.pop %v687
      %v704 = vrcp.pop %v690
      %v705 = vrcp.pop %v693
      %v706 = vrcp.pop %v696
      %v707 = vrcp.pop %v699
      %v708 = vmul.f32 %v661, %v700
      %v709 = vmul.f32 %v663, %v701
      %v710 = vmul.f32 %v665, %v702
      %v711 = vmul.f32 %v667, %v703
      %v712 = vmul.f32 %v669, %v704
      %v713 = vmul.f32 %v671, %v705
      %v714 = vmul.f32 %v673, %v706
      %v715 = vmul.f32 %v675, %v707
      %v716 = vpack.c.bf16 %v708, %v708
      %v717 = vpack.c.bf16 %v709, %v709
      %v718 = vpack.c.bf16 %v710, %v710
      %v719 = vpack.c.bf16 %v711, %v711
      %v720 = vpack.c.bf16 %v712, %v712
      %v721 = vpack.c.bf16 %v713, %v713
      %v722 = vpack.c.bf16 %v714, %v714
      %v723 = vpack.c.bf16 %v715, %v715
      %v726 = vunpack.c.l.b16 %v716
      %v727 = vunpack.c.l.b16 %v717
      %v728 = vpack.c.b16 %v727, %v726
      %729 = vrot.lane.b32.xlu0 %v497, 56
      %v730 = vpop.permute.xlu0 %729
      %v733 = vsel %vm288, %v728, 0
      %735 = vmatpush.bf16.msra.mxu0 0
      %736 = vmatpush.bf16.msra.mxu0 0
      %737 = vmatpush.bf16.msra.mxu0 0
      %738 = vmatpush.bf16.msra.mxu0 0
      %739 = vmatpush.bf16.msra.mxu0 0
      %740 = vmatpush.bf16.msra.mxu0 0
      %741 = vmatpush.bf16.msra.mxu0 0
      %742 = vmatpush.bf16.msra.mxu0 %v730
      %743 = vmatmul.bf16.gmra.mxu0 %v733
      %v744 = vpop.f32.mrf.mxu0
      %v745 = vadd.f32 0.0, %v744
      %v746 = vpop.f32.mrf.mxu0
      %v747 = vadd.f32 0.0, %v746
      %748 = vdwg.mxu0
      %v751 = vunpack.c.l.b16 %v718
      %v752 = vunpack.c.l.b16 %v719
      %v753 = vpack.c.b16 %v752, %v751
      %754 = vrot.lane.b32.xlu0 %v526, 56
      %v755 = vpop.permute.xlu0 %754
      %v758 = vsel %vm288, %v753, 0
      %760 = vmatpush.bf16.msra.mxu0 0
      %761 = vmatpush.bf16.msra.mxu0 0
      %762 = vmatpush.bf16.msra.mxu0 0
      %763 = vmatpush.bf16.msra.mxu0 0
      %764 = vmatpush.bf16.msra.mxu0 0
      %765 = vmatpush.bf16.msra.mxu0 0
      %766 = vmatpush.bf16.msra.mxu0 0
      %767 = vmatpush.bf16.msra.mxu0 %v755
      %768 = vmatmul.bf16.gmra.mxu0 %v758
      %v769 = vpop.f32.mrf.mxu0
      %v770 = vadd.f32 0.0, %v769
      %v771 = vpop.f32.mrf.mxu0
      %v772 = vadd.f32 0.0, %v771
      %773 = vdwg.mxu0
      %v776 = vunpack.c.l.b16 %v720
      %v777 = vunpack.c.l.b16 %v721
      %v778 = vpack.c.b16 %v777, %v776
      %779 = vrot.lane.b32.xlu0 %v555, 56
      %v780 = vpop.permute.xlu0 %779
      %v783 = vsel %vm288, %v778, 0
      %785 = vmatpush.bf16.msra.mxu0 0
      %786 = vmatpush.bf16.msra.mxu0 0
      %787 = vmatpush.bf16.msra.mxu0 0
      %788 = vmatpush.bf16.msra.mxu0 0
      %789 = vmatpush.bf16.msra.mxu0 0
      %790 = vmatpush.bf16.msra.mxu0 0
      %791 = vmatpush.bf16.msra.mxu0 0
      %792 = vmatpush.bf16.msra.mxu0 %v780
      %793 = vmatmul.bf16.gmra.mxu0 %v783
      %v794 = vpop.f32.mrf.mxu0
      %v795 = vadd.f32 0.0, %v794
      %v796 = vpop.f32.mrf.mxu0
      %v797 = vadd.f32 0.0, %v796
      %798 = vdwg.mxu0
      %v801 = vunpack.c.l.b16 %v722
      %v802 = vunpack.c.l.b16 %v723
      %v803 = vpack.c.b16 %v802, %v801
      %804 = vrot.lane.b32.xlu0 %v584, 56
      %v805 = vpop.permute.xlu0 %804
      %v808 = vsel %vm288, %v803, 0
      %810 = vmatpush.bf16.msra.mxu0 0
      %811 = vmatpush.bf16.msra.mxu0 0
      %812 = vmatpush.bf16.msra.mxu0 0
      %813 = vmatpush.bf16.msra.mxu0 0
      %814 = vmatpush.bf16.msra.mxu0 0
      %815 = vmatpush.bf16.msra.mxu0 0
      %816 = vmatpush.bf16.msra.mxu0 0
      %817 = vmatpush.bf16.msra.mxu0 %v805
      %818 = vmatmul.bf16.gmra.mxu0 %v808
      %v819 = vpop.f32.mrf.mxu0
      %v820 = vadd.f32 0.0, %v819
      %v821 = vpop.f32.mrf.mxu0
      %v822 = vadd.f32 0.0, %v821
      %823 = vdwg.mxu0
      %v824 = vld [vmem:[%s143] sm:$0xf]
      %v825 = vld [vmem:[%s143 + $0x4] sm:$0xf]
      %v826 = vld [vmem:[%s143 + $0x8] sm:$0xf]
      %v827 = vld [vmem:[%s143 + $0xc] sm:$0xf]
      %v828 = vld [vmem:[%s143 + $0x10] sm:$0xf]
      %v829 = vld [vmem:[%s143 + $0x14] sm:$0xf]
      %v830 = vld [vmem:[%s143 + $0x18] sm:$0xf]
      %v831 = vld [vmem:[%s143 + $0x1c] sm:$0xf]
      %v834 = vunpack.c.l.b16 %v824
      %v835 = vunpack.c.l.b16 %v825
      %v836 = vpack.c.b16 %v835, %v834
      %837 = vrot.lane.b32.xlu0 %v836, 112
      %v838 = vpop.permute.xlu0 %837
      %839 = vrot.lane.b32.xlu0 %v836, 80
      %v840 = vpop.permute.xlu0 %839
      %v842 = vsel %vm168, %v838, 0
      %v845 = vsel %vm168, %v840, 0
      %847 = vmatpush.bf16.xpose.msra.mxu0 0
      %848 = vmatpush.bf16.xpose.msra.mxu0 0
      %849 = vmatpush.bf16.xpose.msra.mxu0 0
      %850 = vmatpush.bf16.xpose.msra.mxu0 0
      %851 = vmatpush.bf16.xpose.msra.mxu0 0
      %852 = vmatpush.bf16.xpose.msra.mxu0 0
      %853 = vmatpush.bf16.xpose.msra.mxu0 0
      %854 = vmatpush.bf16.xpose.msra.mxu0 %v845
      %855 = vmatmul.bf16.gmra.mxu0 %v842
      %v856 = vpop.f32.mrf.mxu0
      %v857 = vadd.f32 0.0, %v856
      %v858 = vpop.f32.mrf.mxu0
      %v859 = vadd.f32 0.0, %v858
      %860 = vdwg.mxu0
      %v863 = vunpack.c.l.b16 %v826
      %v864 = vunpack.c.l.b16 %v827
      %v865 = vpack.c.b16 %v864, %v863
      %866 = vrot.lane.b32.xlu0 %v865, 112
      %v867 = vpop.permute.xlu0 %866
      %868 = vrot.lane.b32.xlu0 %v865, 80
      %v869 = vpop.permute.xlu0 %868
      %v871 = vsel %vm168, %v867, 0
      %v874 = vsel %vm168, %v869, 0
      %876 = vmatpush.bf16.xpose.msra.mxu0 0
      %877 = vmatpush.bf16.xpose.msra.mxu0 0
      %878 = vmatpush.bf16.xpose.msra.mxu0 0
      %879 = vmatpush.bf16.xpose.msra.mxu0 0
      %880 = vmatpush.bf16.xpose.msra.mxu0 0
      %881 = vmatpush.bf16.xpose.msra.mxu0 0
      %882 = vmatpush.bf16.xpose.msra.mxu0 0
      %883 = vmatpush.bf16.xpose.msra.mxu0 %v874
      %884 = vmatmul.bf16.gmra.mxu0 %v871
      %v885 = vpop.f32.mrf.mxu0
      %v886 = vadd.f32 0.0, %v885
      %v887 = vpop.f32.mrf.mxu0
      %v888 = vadd.f32 0.0, %v887
      %889 = vdwg.mxu0
      %v892 = vunpack.c.l.b16 %v828
      %v893 = vunpack.c.l.b16 %v829
      %v894 = vpack.c.b16 %v893, %v892
      %895 = vrot.lane.b32.xlu0 %v894, 112
      %v896 = vpop.permute.xlu0 %895
      %897 = vrot.lane.b32.xlu0 %v894, 80
      %v898 = vpop.permute.xlu0 %897
      %v900 = vsel %vm168, %v896, 0
      %v903 = vsel %vm168, %v898, 0
      %905 = vmatpush.bf16.xpose.msra.mxu0 0
      %906 = vmatpush.bf16.xpose.msra.mxu0 0
      %907 = vmatpush.bf16.xpose.msra.mxu0 0
      %908 = vmatpush.bf16.xpose.msra.mxu0 0
      %909 = vmatpush.bf16.xpose.msra.mxu0 0
      %910 = vmatpush.bf16.xpose.msra.mxu0 0
      %911 = vmatpush.bf16.xpose.msra.mxu0 0
      %912 = vmatpush.bf16.xpose.msra.mxu0 %v903
      %913 = vmatmul.bf16.gmra.mxu0 %v900
      %v914 = vpop.f32.mrf.mxu0
      %v915 = vadd.f32 0.0, %v914
      %v916 = vpop.f32.mrf.mxu0
      %v917 = vadd.f32 0.0, %v916
      %918 = vdwg.mxu0
      %v921 = vunpack.c.l.b16 %v830
      %v922 = vunpack.c.l.b16 %v831
      %v923 = vpack.c.b16 %v922, %v921
      %924 = vrot.lane.b32.xlu0 %v923, 112
      %v925 = vpop.permute.xlu0 %924
      %926 = vrot.lane.b32.xlu0 %v923, 80
      %v927 = vpop.permute.xlu0 %926
      %v929 = vsel %vm168, %v925, 0
      %v932 = vsel %vm168, %v927, 0
      %934 = vmatpush.bf16.xpose.msra.mxu0 0
      %935 = vmatpush.bf16.xpose.msra.mxu0 0
      %936 = vmatpush.bf16.xpose.msra.mxu0 0
      %937 = vmatpush.bf16.xpose.msra.mxu0 0
      %938 = vmatpush.bf16.xpose.msra.mxu0 0
      %939 = vmatpush.bf16.xpose.msra.mxu0 0
      %940 = vmatpush.bf16.xpose.msra.mxu0 0
      %941 = vmatpush.bf16.xpose.msra.mxu0 %v932
      %942 = vmatmul.bf16.gmra.mxu0 %v929
      %v943 = vpop.f32.mrf.mxu0
      %v944 = vadd.f32 0.0, %v943
      %v945 = vpop.f32.mrf.mxu0
      %v946 = vadd.f32 0.0, %v945
      %947 = vdwg.mxu0
      %v948 = vmul.f32 %v857, 0.35355338
      %v949 = vmul.f32 %v859, 0.35355338
      %v950 = vmul.f32 %v886, 0.35355338
      %v951 = vmul.f32 %v888, 0.35355338
      %v952 = vmul.f32 %v915, 0.35355338
      %v953 = vmul.f32 %v917, 0.35355338
      %v954 = vmul.f32 %v944, 0.35355338
      %v955 = vmul.f32 %v946, 0.35355338
      %s956 = scalar_lea.vmem %s1, 32
      %v957 = vld [vmem:[%s956] sm:$0xff]
      %v958 = vld [vmem:[%s956 + $0x8] sm:$0xff]
      %v959 = vadd.f32 %v948, %v957
      %v960 = vadd.f32 %v949, %v958
      %v961 = vadd.f32 %v950, %v957
      %v962 = vadd.f32 %v951, %v958
      %v963 = vadd.f32 %v952, %v957
      %v964 = vadd.f32 %v953, %v958
      %v965 = vadd.f32 %v954, %v957
      %v966 = vadd.f32 %v955, %v958
      %v967 = vsel %vm288, %v959, -inf
      %968 = vmax.xlane.f32.xlu0 %v967
      %v969 = vpop.xlane.xlu0 %968
      %v970 = vsel %vm288, %v960, -inf
      %971 = vmax.xlane.f32.xlu0 %v970
      %v972 = vpop.xlane.xlu0 %971
      %v973 = vsel %vm288, %v961, -inf
      %974 = vmax.xlane.f32.xlu0 %v973
      %v975 = vpop.xlane.xlu0 %974
      %v976 = vsel %vm288, %v962, -inf
      %977 = vmax.xlane.f32.xlu0 %v976
      %v978 = vpop.xlane.xlu0 %977
      %v979 = vsel %vm288, %v963, -inf
      %980 = vmax.xlane.f32.xlu0 %v979
      %v981 = vpop.xlane.xlu0 %980
      %v982 = vsel %vm288, %v964, -inf
      %983 = vmax.xlane.f32.xlu0 %v982
      %v984 = vpop.xlane.xlu0 %983
      %v985 = vsel %vm288, %v965, -inf
      %986 = vmax.xlane.f32.xlu0 %v985
      %v987 = vpop.xlane.xlu0 %986
      %v988 = vsel %vm288, %v966, -inf
      %989 = vmax.xlane.f32.xlu0 %v988
      %v990 = vpop.xlane.xlu0 %989
      %v991 = vsub.f32 %v959, %v969
      %v992 = vsub.f32 %v960, %v972
      %v993 = vsub.f32 %v961, %v975
      %v994 = vsub.f32 %v962, %v978
      %v995 = vsub.f32 %v963, %v981
      %v996 = vsub.f32 %v964, %v984
      %v997 = vsub.f32 %v965, %v987
      %v998 = vsub.f32 %v966, %v990
      %v999 = vmul.f32 %v991, 1.442695
      %v1000 = vpow.pop %v999
      %v1001 = vmul.f32 %v992, 1.442695
      %v1002 = vpow.pop %v1001
      %v1003 = vmul.f32 %v993, 1.442695
      %v1004 = vpow.pop %v1003
      %v1005 = vmul.f32 %v994, 1.442695
      %v1006 = vpow.pop %v1005
      %v1007 = vmul.f32 %v995, 1.442695
      %v1008 = vpow.pop %v1007
      %v1009 = vmul.f32 %v996, 1.442695
      %v1010 = vpow.pop %v1009
      %v1011 = vmul.f32 %v997, 1.442695
      %v1012 = vpow.pop %v1011
      %v1013 = vmul.f32 %v998, 1.442695
      %v1014 = vpow.pop %v1013
      %v1015 = vsel %vm288, %v1000, 0.0
      %1016 = vadd.xlane.f32.xlu0 %v1015
      %v1017 = vpop.xlane.xlu0 %1016
      %v1018 = vsel %vm288, %v1002, 0.0
      %1019 = vadd.xlane.f32.xlu0 %v1018
      %v1020 = vpop.xlane.xlu0 %1019
      %v1021 = vsel %vm288, %v1004, 0.0
      %1022 = vadd.xlane.f32.xlu0 %v1021
      %v1023 = vpop.xlane.xlu0 %1022
      %v1024 = vsel %vm288, %v1006, 0.0
      %1025 = vadd.xlane.f32.xlu0 %v1024
      %v1026 = vpop.xlane.xlu0 %1025
      %v1027 = vsel %vm288, %v1008, 0.0
      %1028 = vadd.xlane.f32.xlu0 %v1027
      %v1029 = vpop.xlane.xlu0 %1028
      %v1030 = vsel %vm288, %v1010, 0.0
      %1031 = vadd.xlane.f32.xlu0 %v1030
      %v1032 = vpop.xlane.xlu0 %1031
      %v1033 = vsel %vm288, %v1012, 0.0
      %1034 = vadd.xlane.f32.xlu0 %v1033
      %v1035 = vpop.xlane.xlu0 %1034
      %v1036 = vsel %vm288, %v1014, 0.0
      %1037 = vadd.xlane.f32.xlu0 %v1036
      %v1038 = vpop.xlane.xlu0 %1037
      %v1039 = vrcp.pop %v1017
      %v1040 = vrcp.pop %v1020
      %v1041 = vrcp.pop %v1023
      %v1042 = vrcp.pop %v1026
      %v1043 = vrcp.pop %v1029
      %v1044 = vrcp.pop %v1032
      %v1045 = vrcp.pop %v1035
      %v1046 = vrcp.pop %v1038
      %v1047 = vmul.f32 %v1000, %v1039
      %v1048 = vmul.f32 %v1002, %v1040
      %v1049 = vmul.f32 %v1004, %v1041
      %v1050 = vmul.f32 %v1006, %v1042
      %v1051 = vmul.f32 %v1008, %v1043
      %v1052 = vmul.f32 %v1010, %v1044
      %v1053 = vmul.f32 %v1012, %v1045
      %v1054 = vmul.f32 %v1014, %v1046
      %v1055 = vpack.c.bf16 %v1047, %v1047
      %v1056 = vpack.c.bf16 %v1048, %v1048
      %v1057 = vpack.c.bf16 %v1049, %v1049
      %v1058 = vpack.c.bf16 %v1050, %v1050
      %v1059 = vpack.c.bf16 %v1051, %v1051
      %v1060 = vpack.c.bf16 %v1052, %v1052
      %v1061 = vpack.c.bf16 %v1053, %v1053
      %v1062 = vpack.c.bf16 %v1054, %v1054
      %v1065 = vunpack.c.l.b16 %v1055
      %v1066 = vunpack.c.l.b16 %v1056
      %v1067 = vpack.c.b16 %v1066, %v1065
      %1068 = vrot.lane.b32.xlu0 %v836, 48
      %v1069 = vpop.permute.xlu0 %1068
      %v1072 = vsel %vm288, %v1067, 0
      %1074 = vmatpush.bf16.msra.mxu0 0
      %1075 = vmatpush.bf16.msra.mxu0 0
      %1076 = vmatpush.bf16.msra.mxu0 0
      %1077 = vmatpush.bf16.msra.mxu0 0
      %1078 = vmatpush.bf16.msra.mxu0 0
      %1079 = vmatpush.bf16.msra.mxu0 0
      %1080 = vmatpush.bf16.msra.mxu0 0
      %1081 = vmatpush.bf16.msra.mxu0 %v1069
      %1082 = vmatmul.bf16.gmra.mxu0 %v1072
      %v1083 = vpop.f32.mrf.mxu0
      %v1084 = vadd.f32 0.0, %v1083
      %v1085 = vpop.f32.mrf.mxu0
      %v1086 = vadd.f32 0.0, %v1085
      %1087 = vdwg.mxu0
      %v1090 = vunpack.c.l.b16 %v1057
      %v1091 = vunpack.c.l.b16 %v1058
      %v1092 = vpack.c.b16 %v1091, %v1090
      %1093 = vrot.lane.b32.xlu0 %v865, 48
      %v1094 = vpop.permute.xlu0 %1093
      %v1097 = vsel %vm288, %v1092, 0
      %1099 = vmatpush.bf16.msra.mxu0 0
      %1100 = vmatpush.bf16.msra.mxu0 0
      %1101 = vmatpush.bf16.msra.mxu0 0
      %1102 = vmatpush.bf16.msra.mxu0 0
      %1103 = vmatpush.bf16.msra.mxu0 0
      %1104 = vmatpush.bf16.msra.mxu0 0
      %1105 = vmatpush.bf16.msra.mxu0 0
      %1106 = vmatpush.bf16.msra.mxu0 %v1094
      %1107 = vmatmul.bf16.gmra.mxu0 %v1097
      %v1108 = vpop.f32.mrf.mxu0
      %v1109 = vadd.f32 0.0, %v1108
      %v1110 = vpop.f32.mrf.mxu0
      %v1111 = vadd.f32 0.0, %v1110
      %1112 = vdwg.mxu0
      %v1115 = vunpack.c.l.b16 %v1059
      %v1116 = vunpack.c.l.b16 %v1060
      %v1117 = vpack.c.b16 %v1116, %v1115
      %1118 = vrot.lane.b32.xlu0 %v894, 48
      %v1119 = vpop.permute.xlu0 %1118
      %v1122 = vsel %vm288, %v1117, 0
      %1124 = vmatpush.bf16.msra.mxu0 0
      %1125 = vmatpush.bf16.msra.mxu0 0
      %1126 = vmatpush.bf16.msra.mxu0 0
      %1127 = vmatpush.bf16.msra.mxu0 0
      %1128 = vmatpush.bf16.msra.mxu0 0
      %1129 = vmatpush.bf16.msra.mxu0 0
      %1130 = vmatpush.bf16.msra.mxu0 0
      %1131 = vmatpush.bf16.msra.mxu0 %v1119
      %1132 = vmatmul.bf16.gmra.mxu0 %v1122
      %v1133 = vpop.f32.mrf.mxu0
      %v1134 = vadd.f32 0.0, %v1133
      %v1135 = vpop.f32.mrf.mxu0
      %v1136 = vadd.f32 0.0, %v1135
      %1137 = vdwg.mxu0
      %v1140 = vunpack.c.l.b16 %v1061
      %v1141 = vunpack.c.l.b16 %v1062
      %v1142 = vpack.c.b16 %v1141, %v1140
      %1143 = vrot.lane.b32.xlu0 %v923, 48
      %v1144 = vpop.permute.xlu0 %1143
      %v1147 = vsel %vm288, %v1142, 0
      %1149 = vmatpush.bf16.msra.mxu0 0
      %1150 = vmatpush.bf16.msra.mxu0 0
      %1151 = vmatpush.bf16.msra.mxu0 0
      %1152 = vmatpush.bf16.msra.mxu0 0
      %1153 = vmatpush.bf16.msra.mxu0 0
      %1154 = vmatpush.bf16.msra.mxu0 0
      %1155 = vmatpush.bf16.msra.mxu0 0
      %1156 = vmatpush.bf16.msra.mxu0 %v1144
      %1157 = vmatmul.bf16.gmra.mxu0 %v1147
      %v1158 = vpop.f32.mrf.mxu0
      %v1159 = vadd.f32 0.0, %v1158
      %v1160 = vpop.f32.mrf.mxu0
      %v1161 = vadd.f32 0.0, %v1160
      %1162 = vdwg.mxu0
      %v1163 = vld [vmem:[%s143] sm:$0xf]
      %v1164 = vld [vmem:[%s143 + $0x4] sm:$0xf]
      %v1165 = vld [vmem:[%s143 + $0x8] sm:$0xf]
      %v1166 = vld [vmem:[%s143 + $0xc] sm:$0xf]
      %v1167 = vld [vmem:[%s143 + $0x10] sm:$0xf]
      %v1168 = vld [vmem:[%s143 + $0x14] sm:$0xf]
      %v1169 = vld [vmem:[%s143 + $0x18] sm:$0xf]
      %v1170 = vld [vmem:[%s143 + $0x1c] sm:$0xf]
      %v1173 = vunpack.c.l.b16 %v1163
      %v1174 = vunpack.c.l.b16 %v1164
      %v1175 = vpack.c.b16 %v1174, %v1173
      %1176 = vrot.lane.b32.xlu0 %v1175, 104
      %v1177 = vpop.permute.xlu0 %1176
      %1178 = vrot.lane.b32.xlu0 %v1175, 72
      %v1179 = vpop.permute.xlu0 %1178
      %v1181 = vsel %vm168, %v1177, 0
      %v1184 = vsel %vm168, %v1179, 0
      %1186 = vmatpush.bf16.xpose.msra.mxu0 0
      %1187 = vmatpush.bf16.xpose.msra.mxu0 0
      %1188 = vmatpush.bf16.xpose.msra.mxu0 0
      %1189 = vmatpush.bf16.xpose.msra.mxu0 0
      %1190 = vmatpush.bf16.xpose.msra.mxu0 0
      %1191 = vmatpush.bf16.xpose.msra.mxu0 0
      %1192 = vmatpush.bf16.xpose.msra.mxu0 0
      %1193 = vmatpush.bf16.xpose.msra.mxu0 %v1184
      %1194 = vmatmul.bf16.gmra.mxu0 %v1181
      %v1195 = vpop.f32.mrf.mxu0
      %v1196 = vadd.f32 0.0, %v1195
      %v1197 = vpop.f32.mrf.mxu0
      %v1198 = vadd.f32 0.0, %v1197
      %1199 = vdwg.mxu0
      %v1202 = vunpack.c.l.b16 %v1165
      %v1203 = vunpack.c.l.b16 %v1166
      %v1204 = vpack.c.b16 %v1203, %v1202
      %1205 = vrot.lane.b32.xlu0 %v1204, 104
      %v1206 = vpop.permute.xlu0 %1205
      %1207 = vrot.lane.b32.xlu0 %v1204, 72
      %v1208 = vpop.permute.xlu0 %1207
      %v1210 = vsel %vm168, %v1206, 0
      %v1213 = vsel %vm168, %v1208, 0
      %1215 = vmatpush.bf16.xpose.msra.mxu0 0
      %1216 = vmatpush.bf16.xpose.msra.mxu0 0
      %1217 = vmatpush.bf16.xpose.msra.mxu0 0
      %1218 = vmatpush.bf16.xpose.msra.mxu0 0
      %1219 = vmatpush.bf16.xpose.msra.mxu0 0
      %1220 = vmatpush.bf16.xpose.msra.mxu0 0
      %1221 = vmatpush.bf16.xpose.msra.mxu0 0
      %1222 = vmatpush.bf16.xpose.msra.mxu0 %v1213
      %1223 = vmatmul.bf16.gmra.mxu0 %v1210
      %v1224 = vpop.f32.mrf.mxu0
      %v1225 = vadd.f32 0.0, %v1224
      %v1226 = vpop.f32.mrf.mxu0
      %v1227 = vadd.f32 0.0, %v1226
      %1228 = vdwg.mxu0
      %v1231 = vunpack.c.l.b16 %v1167
      %v1232 = vunpack.c.l.b16 %v1168
      %v1233 = vpack.c.b16 %v1232, %v1231
      %1234 = vrot.lane.b32.xlu0 %v1233, 104
      %v1235 = vpop.permute.xlu0 %1234
      %1236 = vrot.lane.b32.xlu0 %v1233, 72
      %v1237 = vpop.permute.xlu0 %1236
      %v1239 = vsel %vm168, %v1235, 0
      %v1242 = vsel %vm168, %v1237, 0
      %1244 = vmatpush.bf16.xpose.msra.mxu0 0
      %1245 = vmatpush.bf16.xpose.msra.mxu0 0
      %1246 = vmatpush.bf16.xpose.msra.mxu0 0
      %1247 = vmatpush.bf16.xpose.msra.mxu0 0
      %1248 = vmatpush.bf16.xpose.msra.mxu0 0
      %1249 = vmatpush.bf16.xpose.msra.mxu0 0
      %1250 = vmatpush.bf16.xpose.msra.mxu0 0
      %1251 = vmatpush.bf16.xpose.msra.mxu0 %v1242
      %1252 = vmatmul.bf16.gmra.mxu0 %v1239
      %v1253 = vpop.f32.mrf.mxu0
      %v1254 = vadd.f32 0.0, %v1253
      %v1255 = vpop.f32.mrf.mxu0
      %v1256 = vadd.f32 0.0, %v1255
      %1257 = vdwg.mxu0
      %v1260 = vunpack.c.l.b16 %v1169
      %v1261 = vunpack.c.l.b16 %v1170
      %v1262 = vpack.c.b16 %v1261, %v1260
      %1263 = vrot.lane.b32.xlu0 %v1262, 104
      %v1264 = vpop.permute.xlu0 %1263
      %1265 = vrot.lane.b32.xlu0 %v1262, 72
      %v1266 = vpop.permute.xlu0 %1265
      %v1268 = vsel %vm168, %v1264, 0
      %v1271 = vsel %vm168, %v1266, 0
      %1273 = vmatpush.bf16.xpose.msra.mxu0 0
      %1274 = vmatpush.bf16.xpose.msra.mxu0 0
      %1275 = vmatpush.bf16.xpose.msra.mxu0 0
      %1276 = vmatpush.bf16.xpose.msra.mxu0 0
      %1277 = vmatpush.bf16.xpose.msra.mxu0 0
      %1278 = vmatpush.bf16.xpose.msra.mxu0 0
      %1279 = vmatpush.bf16.xpose.msra.mxu0 0
      %1280 = vmatpush.bf16.xpose.msra.mxu0 %v1271
      %1281 = vmatmul.bf16.gmra.mxu0 %v1268
      %v1282 = vpop.f32.mrf.mxu0
      %v1283 = vadd.f32 0.0, %v1282
      %v1284 = vpop.f32.mrf.mxu0
      %v1285 = vadd.f32 0.0, %v1284
      %1286 = vdwg.mxu0
      %v1287 = vmul.f32 %v1196, 0.35355338
      %v1288 = vmul.f32 %v1198, 0.35355338
      %v1289 = vmul.f32 %v1225, 0.35355338
      %v1290 = vmul.f32 %v1227, 0.35355338
      %v1291 = vmul.f32 %v1254, 0.35355338
      %v1292 = vmul.f32 %v1256, 0.35355338
      %v1293 = vmul.f32 %v1283, 0.35355338
      %v1294 = vmul.f32 %v1285, 0.35355338
      %s1295 = scalar_lea.vmem %s1, 48
      %v1296 = vld [vmem:[%s1295] sm:$0xff]
      %v1297 = vld [vmem:[%s1295 + $0x8] sm:$0xff]
      %v1298 = vadd.f32 %v1287, %v1296
      %v1299 = vadd.f32 %v1288, %v1297
      %v1300 = vadd.f32 %v1289, %v1296
      %v1301 = vadd.f32 %v1290, %v1297
      %v1302 = vadd.f32 %v1291, %v1296
      %v1303 = vadd.f32 %v1292, %v1297
      %v1304 = vadd.f32 %v1293, %v1296
      %v1305 = vadd.f32 %v1294, %v1297
      %v1306 = vsel %vm288, %v1298, -inf
      %1307 = vmax.xlane.f32.xlu0 %v1306
      %v1308 = vpop.xlane.xlu0 %1307
      %v1309 = vsel %vm288, %v1299, -inf
      %1310 = vmax.xlane.f32.xlu0 %v1309
      %v1311 = vpop.xlane.xlu0 %1310
      %v1312 = vsel %vm288, %v1300, -inf
      %1313 = vmax.xlane.f32.xlu0 %v1312
      %v1314 = vpop.xlane.xlu0 %1313
      %v1315 = vsel %vm288, %v1301, -inf
      %1316 = vmax.xlane.f32.xlu0 %v1315
      %v1317 = vpop.xlane.xlu0 %1316
      %v1318 = vsel %vm288, %v1302, -inf
      %1319 = vmax.xlane.f32.xlu0 %v1318
      %v1320 = vpop.xlane.xlu0 %1319
      %v1321 = vsel %vm288, %v1303, -inf
      %1322 = vmax.xlane.f32.xlu0 %v1321
      %v1323 = vpop.xlane.xlu0 %1322
      %v1324 = vsel %vm288, %v1304, -inf
      %1325 = vmax.xlane.f32.xlu0 %v1324
      %v1326 = vpop.xlane.xlu0 %1325
      %v1327 = vsel %vm288, %v1305, -inf
      %1328 = vmax.xlane.f32.xlu0 %v1327
      %v1329 = vpop.xlane.xlu0 %1328
      %v1330 = vsub.f32 %v1298, %v1308
      %v1331 = vsub.f32 %v1299, %v1311
      %v1332 = vsub.f32 %v1300, %v1314
      %v1333 = vsub.f32 %v1301, %v1317
      %v1334 = vsub.f32 %v1302, %v1320
      %v1335 = vsub.f32 %v1303, %v1323
      %v1336 = vsub.f32 %v1304, %v1326
      %v1337 = vsub.f32 %v1305, %v1329
      %v1338 = vmul.f32 %v1330, 1.442695
      %v1339 = vpow.pop %v1338
      %v1340 = vmul.f32 %v1331, 1.442695
      %v1341 = vpow.pop %v1340
      %v1342 = vmul.f32 %v1332, 1.442695
      %v1343 = vpow.pop %v1342
      %v1344 = vmul.f32 %v1333, 1.442695
      %v1345 = vpow.pop %v1344
      %v1346 = vmul.f32 %v1334, 1.442695
      %v1347 = vpow.pop %v1346
      %v1348 = vmul.f32 %v1335, 1.442695
      %v1349 = vpow.pop %v1348
      %v1350 = vmul.f32 %v1336, 1.442695
      %v1351 = vpow.pop %v1350
      %v1352 = vmul.f32 %v1337, 1.442695
      %v1353 = vpow.pop %v1352
      %v1354 = vsel %vm288, %v1339, 0.0
      %1355 = vadd.xlane.f32.xlu0 %v1354
      %v1356 = vpop.xlane.xlu0 %1355
      %v1357 = vsel %vm288, %v1341, 0.0
      %1358 = vadd.xlane.f32.xlu0 %v1357
      %v1359 = vpop.xlane.xlu0 %1358
      %v1360 = vsel %vm288, %v1343, 0.0
      %1361 = vadd.xlane.f32.xlu0 %v1360
      %v1362 = vpop.xlane.xlu0 %1361
      %v1363 = vsel %vm288, %v1345, 0.0
      %1364 = vadd.xlane.f32.xlu0 %v1363
      %v1365 = vpop.xlane.xlu0 %1364
      %v1366 = vsel %vm288, %v1347, 0.0
      %1367 = vadd.xlane.f32.xlu0 %v1366
      %v1368 = vpop.xlane.xlu0 %1367
      %v1369 = vsel %vm288, %v1349, 0.0
      %1370 = vadd.xlane.f32.xlu0 %v1369
      %v1371 = vpop.xlane.xlu0 %1370
      %v1372 = vsel %vm288, %v1351, 0.0
      %1373 = vadd.xlane.f32.xlu0 %v1372
      %v1374 = vpop.xlane.xlu0 %1373
      %v1375 = vsel %vm288, %v1353, 0.0
      %1376 = vadd.xlane.f32.xlu0 %v1375
      %v1377 = vpop.xlane.xlu0 %1376
      %v1378 = vrcp.pop %v1356
      %v1379 = vrcp.pop %v1359
      %v1380 = vrcp.pop %v1362
      %v1381 = vrcp.pop %v1365
      %v1382 = vrcp.pop %v1368
      %v1383 = vrcp.pop %v1371
      %v1384 = vrcp.pop %v1374
      %v1385 = vrcp.pop %v1377
      %v1386 = vmul.f32 %v1339, %v1378
      %v1387 = vmul.f32 %v1341, %v1379
      %v1388 = vmul.f32 %v1343, %v1380
      %v1389 = vmul.f32 %v1345, %v1381
      %v1390 = vmul.f32 %v1347, %v1382
      %v1391 = vmul.f32 %v1349, %v1383
      %v1392 = vmul.f32 %v1351, %v1384
      %v1393 = vmul.f32 %v1353, %v1385
      %v1394 = vpack.c.bf16 %v1386, %v1386
      %v1395 = vpack.c.bf16 %v1387, %v1387
      %v1396 = vpack.c.bf16 %v1388, %v1388
      %v1397 = vpack.c.bf16 %v1389, %v1389
      %v1398 = vpack.c.bf16 %v1390, %v1390
      %v1399 = vpack.c.bf16 %v1391, %v1391
      %v1400 = vpack.c.bf16 %v1392, %v1392
      %v1401 = vpack.c.bf16 %v1393, %v1393
      %v1404 = vunpack.c.l.b16 %v1394
      %v1405 = vunpack.c.l.b16 %v1395
      %v1406 = vpack.c.b16 %v1405, %v1404
      %1407 = vrot.lane.b32.xlu0 %v1175, 40
      %v1408 = vpop.permute.xlu0 %1407
      %v1411 = vsel %vm288, %v1406, 0
      %1413 = vmatpush.bf16.msra.mxu0 0
      %1414 = vmatpush.bf16.msra.mxu0 0
      %1415 = vmatpush.bf16.msra.mxu0 0
      %1416 = vmatpush.bf16.msra.mxu0 0
      %1417 = vmatpush.bf16.msra.mxu0 0
      %1418 = vmatpush.bf16.msra.mxu0 0
      %1419 = vmatpush.bf16.msra.mxu0 0
      %1420 = vmatpush.bf16.msra.mxu0 %v1408
      %1421 = vmatmul.bf16.gmra.mxu0 %v1411
      %v1422 = vpop.f32.mrf.mxu0
      %v1423 = vadd.f32 0.0, %v1422
      %v1424 = vpop.f32.mrf.mxu0
      %v1425 = vadd.f32 0.0, %v1424
      %1426 = vdwg.mxu0
      %v1429 = vunpack.c.l.b16 %v1396
      %v1430 = vunpack.c.l.b16 %v1397
      %v1431 = vpack.c.b16 %v1430, %v1429
      %1432 = vrot.lane.b32.xlu0 %v1204, 40
      %v1433 = vpop.permute.xlu0 %1432
      %v1436 = vsel %vm288, %v1431, 0
      %1438 = vmatpush.bf16.msra.mxu0 0
      %1439 = vmatpush.bf16.msra.mxu0 0
      %1440 = vmatpush.bf16.msra.mxu0 0
      %1441 = vmatpush.bf16.msra.mxu0 0
      %1442 = vmatpush.bf16.msra.mxu0 0
      %1443 = vmatpush.bf16.msra.mxu0 0
      %1444 = vmatpush.bf16.msra.mxu0 0
      %1445 = vmatpush.bf16.msra.mxu0 %v1433
      %1446 = vmatmul.bf16.gmra.mxu0 %v1436
      %v1447 = vpop.f32.mrf.mxu0
      %v1448 = vadd.f32 0.0, %v1447
      %v1449 = vpop.f32.mrf.mxu0
      %v1450 = vadd.f32 0.0, %v1449
      %1451 = vdwg.mxu0
      %v1454 = vunpack.c.l.b16 %v1398
      %v1455 = vunpack.c.l.b16 %v1399
      %v1456 = vpack.c.b16 %v1455, %v1454
      %1457 = vrot.lane.b32.xlu0 %v1233, 40
      %v1458 = vpop.permute.xlu0 %1457
      %v1461 = vsel %vm288, %v1456, 0
      %1463 = vmatpush.bf16.msra.mxu0 0
      %1464 = vmatpush.bf16.msra.mxu0 0
      %1465 = vmatpush.bf16.msra.mxu0 0
      %1466 = vmatpush.bf16.msra.mxu0 0
      %1467 = vmatpush.bf16.msra.mxu0 0
      %1468 = vmatpush.bf16.msra.mxu0 0
      %1469 = vmatpush.bf16.msra.mxu0 0
      %1470 = vmatpush.bf16.msra.mxu0 %v1458
      %1471 = vmatmul.bf16.gmra.mxu0 %v1461
      %v1472 = vpop.f32.mrf.mxu0
      %v1473 = vadd.f32 0.0, %v1472
      %v1474 = vpop.f32.mrf.mxu0
      %v1475 = vadd.f32 0.0, %v1474
      %1476 = vdwg.mxu0
      %v1479 = vunpack.c.l.b16 %v1400
      %v1480 = vunpack.c.l.b16 %v1401
      %v1481 = vpack.c.b16 %v1480, %v1479
      %1482 = vrot.lane.b32.xlu0 %v1262, 40
      %v1483 = vpop.permute.xlu0 %1482
      %v1486 = vsel %vm288, %v1481, 0
      %1488 = vmatpush.bf16.msra.mxu0 0
      %1489 = vmatpush.bf16.msra.mxu0 0
      %1490 = vmatpush.bf16.msra.mxu0 0
      %1491 = vmatpush.bf16.msra.mxu0 0
      %1492 = vmatpush.bf16.msra.mxu0 0
      %1493 = vmatpush.bf16.msra.mxu0 0
      %1494 = vmatpush.bf16.msra.mxu0 0
      %1495 = vmatpush.bf16.msra.mxu0 %v1483
      %1496 = vmatmul.bf16.gmra.mxu0 %v1486
      %v1497 = vpop.f32.mrf.mxu0
      %v1498 = vadd.f32 0.0, %v1497
      %v1499 = vpop.f32.mrf.mxu0
      %v1500 = vadd.f32 0.0, %v1499
      %1501 = vdwg.mxu0
      %1510 = vrot.lane.b32.xlu0 %v745, 8
      %v1511 = vpop.permute.xlu0 %1510
      %1512 = vrot.lane.b32.xlu0 %v747, 8
      %v1513 = vpop.permute.xlu0 %1512
      %1514 = vrot.lane.b32.xlu0 %v770, 8
      %v1515 = vpop.permute.xlu0 %1514
      %1516 = vrot.lane.b32.xlu0 %v772, 8
      %v1517 = vpop.permute.xlu0 %1516
      %1518 = vrot.lane.b32.xlu0 %v795, 8
      %v1519 = vpop.permute.xlu0 %1518
      %1520 = vrot.lane.b32.xlu0 %v797, 8
      %v1521 = vpop.permute.xlu0 %1520
      %1522 = vrot.lane.b32.xlu0 %v820, 8
      %v1523 = vpop.permute.xlu0 %1522
      %1524 = vrot.lane.b32.xlu0 %v822, 8
      %v1525 = vpop.permute.xlu0 %1524
      %1542 = vrot.lane.b32.xlu0 %v1084, 16
      %v1543 = vpop.permute.xlu0 %1542
      %1544 = vrot.lane.b32.xlu0 %v1086, 16
      %v1545 = vpop.permute.xlu0 %1544
      %1546 = vrot.lane.b32.xlu0 %v1109, 16
      %v1547 = vpop.permute.xlu0 %1546
      %1548 = vrot.lane.b32.xlu0 %v1111, 16
      %v1549 = vpop.permute.xlu0 %1548
      %1550 = vrot.lane.b32.xlu0 %v1134, 16
      %v1551 = vpop.permute.xlu0 %1550
      %1552 = vrot.lane.b32.xlu0 %v1136, 16
      %v1553 = vpop.permute.xlu0 %1552
      %1554 = vrot.lane.b32.xlu0 %v1159, 16
      %v1555 = vpop.permute.xlu0 %1554
      %1556 = vrot.lane.b32.xlu0 %v1161, 16
      %v1557 = vpop.permute.xlu0 %1556
      %1574 = vrot.lane.b32.xlu0 %v1423, 24
      %v1575 = vpop.permute.xlu0 %1574
      %1576 = vrot.lane.b32.xlu0 %v1425, 24
      %v1577 = vpop.permute.xlu0 %1576
      %1578 = vrot.lane.b32.xlu0 %v1448, 24
      %v1579 = vpop.permute.xlu0 %1578
      %1580 = vrot.lane.b32.xlu0 %v1450, 24
      %v1581 = vpop.permute.xlu0 %1580
      %1582 = vrot.lane.b32.xlu0 %v1473, 24
      %v1583 = vpop.permute.xlu0 %1582
      %1584 = vrot.lane.b32.xlu0 %v1475, 24
      %v1585 = vpop.permute.xlu0 %1584
      %1586 = vrot.lane.b32.xlu0 %v1498, 24
      %v1587 = vpop.permute.xlu0 %1586
      %1588 = vrot.lane.b32.xlu0 %v1500, 24
      %v1589 = vpop.permute.xlu0 %1588
      %v1598 = vsel %vm168, %v406, %v1511
      %v1599 = vsel %vm168, %v408, %v1513
      %v1600 = vsel %vm168, %v431, %v1515
      %v1601 = vsel %vm168, %v433, %v1517
      %v1602 = vsel %vm168, %v456, %v1519
      %v1603 = vsel %vm168, %v458, %v1521
      %v1604 = vsel %vm168, %v481, %v1523
      %v1605 = vsel %vm168, %v483, %v1525
      %v1606 = vsel %vm288, %v1598, %v1543
      %v1607 = vsel %vm288, %v1599, %v1545
      %v1608 = vsel %vm288, %v1600, %v1547
      %v1609 = vsel %vm288, %v1601, %v1549
      %v1610 = vsel %vm288, %v1602, %v1551
      %v1611 = vsel %vm288, %v1603, %v1553
      %v1612 = vsel %vm288, %v1604, %v1555
      %v1613 = vsel %vm288, %v1605, %v1557
      %vm1614 = vcmask 195584
      %v1615 = vsel %vm1614, %v1606, %v1575
      %v1616 = vsel %vm1614, %v1607, %v1577
      %v1617 = vsel %vm1614, %v1608, %v1579
      %v1618 = vsel %vm1614, %v1609, %v1581
      %v1619 = vsel %vm1614, %v1610, %v1583
      %v1620 = vsel %vm1614, %v1611, %v1585
      %v1621 = vsel %vm1614, %v1612, %v1587
      %v1622 = vsel %vm1614, %v1613, %v1589
      %v1623 = vpack.c.bf16 %v1615, %v1615
      %v1624 = vpack.c.bf16 %v1616, %v1616
      %v1625 = vpack.c.bf16 %v1617, %v1617
      %v1626 = vpack.c.bf16 %v1618, %v1618
      %v1627 = vpack.c.bf16 %v1619, %v1619
      %v1628 = vpack.c.bf16 %v1620, %v1620
      %v1629 = vpack.c.bf16 %v1621, %v1621
      %v1630 = vpack.c.bf16 %v1622, %v1622
      %vm1631 = vcmask 257024
      %1632 = vst.msk [vmem:[%s150] sm:$0xf] %vm1631, %v1623
      %1633 = vst.msk [vmem:[%s150 + $0x4] sm:$0xf] %vm1631, %v1624
      %1634 = vst.msk [vmem:[%s150 + $0x8] sm:$0xf] %vm1631, %v1625
      %1635 = vst.msk [vmem:[%s150 + $0xc] sm:$0xf] %vm1631, %v1626
      %1636 = vst.msk [vmem:[%s150 + $0x10] sm:$0xf] %vm1631, %v1627
      %1637 = vst.msk [vmem:[%s150 + $0x14] sm:$0xf] %vm1631, %v1628
      %1638 = vst.msk [vmem:[%s150 + $0x18] sm:$0xf] %vm1631, %v1629
      %1639 = vst.msk [vmem:[%s150 + $0x1c] sm:$0xf] %vm1631, %v1630
      %s1640 = smul.u32 4, %s13
      %p1641 = scmp.lt.s32.totalorder %s1640, 7
      %s1642 = scalar_select %p1641, %s1640, 7
      %s1643 = smul.addr %s1642, 2
      %s1644 = smul.addr %s1643, 4
      %s1645 = scalar_lea.vmem %s2, %s1644
      // Predicated region
      $region29: #{long_term_stage.22} parent=27 // pred_check
        %p1646 = pneg %p78
      $region30: #{long_term_stage.22} parent=27 // pred_check_branch
        %1648 = sbr.rel (%p1646) target = $region32
      $region31: #{long_term_stage.22} parent=27 // pred_region
        %s1649 = smul.u32 4, %s13
      $region32: #{long_term_stage.22} parent=27 // pred_fallthru
        _
    $region28: #{long_term_stage.22} parent=5 // pred_fallthru
      _
    %p1650 = scmp.le.s32.totalorder 2, %s8
    // Predicated region
    $region33: #{long_term_stage.22} parent=5 // pred_check
      %p1651 = pneg %p1650
    $region34: #{long_term_stage.22} parent=5 // pred_check_branch
      %1653 = sbr.rel (%p1651) target = $region36
    $region35: #{long_term_stage.22} parent=5 // pred_region
      %s1654 = ssub.s32 %s8, 2
      // Predicated region
      $region37: #{long_term_stage.22} parent=35 // pred_check
        %p1655 = pneg %p84
      $region38: #{long_term_stage.22} parent=35 // pred_check_branch
        %1657 = sbr.rel (%p1655) target = $region40
      $region39: #{long_term_stage.22} parent=35 // pred_region
        %s1658 = smul.u32 4, %s14
        %p1659 = scmp.lt.s32.totalorder %s1658, 7
        %s1660 = scalar_select %p1659, %s1658, 7
        %s1661 = smul.addr %s1660, 2
        %s1662 = smul.addr %s1661, 4
        %s1663 = scalar_lea.vmem %s2, %s1662
      $region40: #{long_term_stage.22} parent=35 // pred_fallthru
        _
    $region36: #{long_term_stage.22} parent=5 // pred_fallthru
      _
  $region6: #{long_term_stage.22} parent=0 // loop_footer
    %s12 = sadd.s32 1, %s8
  $region7: #{long_term_stage.22} parent=0 // loop_footer_branch
    %7 = sbr.rel target = $region3
  $region8: #{long_term_stage.22} parent=0 // loop_exit
    _

// kernel: long_term_stage.24
$region0: #{long_term_stage.24}
  #allocation0 [shape = 'u32[]', space=smem, size = 0x4, offset = 0x4, fixed_abs, tag = 'smem constant byte address 0x4 - core index']
  #allocation1 [shape = 'u32[72,128]{1,0:T(1,128)}', space=vmem, size = 0x9000, scoped, tag = 'internal scratch']
  #allocation2 [shape = 'f32[128,128]{1,0:T(8,128)}', space=vmem, size = 0x10000, scoped, tag = 'scratch operand']
  %s0 = inlined_call_operand.vmem [shape: bf16[128,32], index: 0, kind: input, shape index: {}]
  %s1 = inlined_call_operand.vmem [shape: bf16[32,128], index: 1, kind: input, shape index: {}]
  %s2 = inlined_call_operand.vmem [shape: f32[1,128], index: 2, kind: input, shape index: {}]
  %s3 = inlined_call_operand.vmem [shape: f32[1,32], index: 3, kind: input, shape index: {}]
  %s4 = inlined_call_operand.vmem [shape: f32[1,32], index: 4, kind: input, shape index: {}]
  %s5 = inlined_call_operand.vmem [shape: bf16[128,128], index: 5, kind: output, shape index: {}]
  %s6 = sld [smem:[#allocation0]]
  $region38: #{long_term_stage.24} parent=0
    _
  %s8 = ssub.s32 1, %s6
  %s9 = scalar_select 0, %s8, %s6
  // Predicated region
  $region2: #{long_term_stage.24} parent=0 // pred_check
    _
  $region3: #{long_term_stage.24} parent=0 // pred_check_branch
    %11 = sbr.rel (0) target = $region5
  $region4: #{long_term_stage.24} parent=0 // pred_region
    _
  $region5: #{long_term_stage.24} parent=0 // pred_fallthru
    _
  // Predicated region
  $region6: #{long_term_stage.24} parent=0 // pred_check
    _
  $region7: #{long_term_stage.24} parent=0 // pred_check_branch
    %13 = sbr.rel (0) target = $region9
  $region8: #{long_term_stage.24} parent=0 // pred_region
    _
  $region9: #{long_term_stage.24} parent=0 // pred_fallthru
    _
  // Predicated region
  $region10: #{long_term_stage.24} parent=0 // pred_check
    _
  $region11: #{long_term_stage.24} parent=0 // pred_check_branch
    %15 = sbr.rel (0) target = $region13
  $region12: #{long_term_stage.24} parent=0 // pred_region
    _
  $region13: #{long_term_stage.24} parent=0 // pred_fallthru
    _
  // Predicated region
  $region14: #{long_term_stage.24} parent=0 // pred_check
    _
  $region15: #{long_term_stage.24} parent=0 // pred_check_branch
    %17 = sbr.rel (0) target = $region17
  $region16: #{long_term_stage.24} parent=0 // pred_region
    _
  $region17: #{long_term_stage.24} parent=0 // pred_fallthru
    _
  // Predicated region
  $region18: #{long_term_stage.24} parent=0 // pred_check
    _
  $region19: #{long_term_stage.24} parent=0 // pred_check_branch
    %19 = sbr.rel (0) target = $region21
  $region20: #{long_term_stage.24} parent=0 // pred_region
    _
  $region21: #{long_term_stage.24} parent=0 // pred_fallthru
    _
  %p21 = scmp.eq.s32.totalorder 0, 0
  // Predicated region
  $region22: #{long_term_stage.24} parent=0 // pred_check
    %p22 = pneg %p21
  $region23: #{long_term_stage.24} parent=0 // pred_check_branch
    %24 = sbr.rel (%p22) target = $region25
  $region24: #{long_term_stage.24} parent=0 // pred_region
    %25 = vst [vmem:[#allocation2] sm:$0xff] 0.0
    %26 = vst [vmem:[#allocation2 + $0x8] sm:$0xff] 0.0
    %27 = vst [vmem:[#allocation2 + $0x10] sm:$0xff] 0.0
    %28 = vst [vmem:[#allocation2 + $0x18] sm:$0xff] 0.0
    %29 = vst [vmem:[#allocation2 + $0x20] sm:$0xff] 0.0
    %30 = vst [vmem:[#allocation2 + $0x28] sm:$0xff] 0.0
    %31 = vst [vmem:[#allocation2 + $0x30] sm:$0xff] 0.0
    %32 = vst [vmem:[#allocation2 + $0x38] sm:$0xff] 0.0
    %33 = vst [vmem:[#allocation2 + $0x40] sm:$0xff] 0.0
    %34 = vst [vmem:[#allocation2 + $0x48] sm:$0xff] 0.0
    %35 = vst [vmem:[#allocation2 + $0x50] sm:$0xff] 0.0
    %36 = vst [vmem:[#allocation2 + $0x58] sm:$0xff] 0.0
    %37 = vst [vmem:[#allocation2 + $0x60] sm:$0xff] 0.0
    %38 = vst [vmem:[#allocation2 + $0x68] sm:$0xff] 0.0
    %39 = vst [vmem:[#allocation2 + $0x70] sm:$0xff] 0.0
    %40 = vst [vmem:[#allocation2 + $0x78] sm:$0xff] 0.0
  $region25: #{long_term_stage.24} parent=0 // pred_fallthru
    _
  %v41 = vld [vmem:[%s0] sm:$0xf]
  %v42 = vld [vmem:[%s0 + $0x4] sm:$0xf]
  %v43 = vld [vmem:[%s0 + $0x8] sm:$0xf]
  %v44 = vld [vmem:[%s0 + $0xc] sm:$0xf]
  %v45 = vld [vmem:[%s0 + $0x10] sm:$0xf]
  %v46 = vld [vmem:[%s0 + $0x14] sm:$0xf]
  %v47 = vld [vmem:[%s0 + $0x18] sm:$0xf]
  %v48 = vld [vmem:[%s0 + $0x1c] sm:$0xf]
  %v49 = vld [vmem:[%s0 + $0x20] sm:$0xf]
  %v50 = vld [vmem:[%s0 + $0x24] sm:$0xf]
  %v51 = vld [vmem:[%s0 + $0x28] sm:$0xf]
  %v52 = vld [vmem:[%s0 + $0x2c] sm:$0xf]
  %v53 = vld [vmem:[%s0 + $0x30] sm:$0xf]
  %v54 = vld [vmem:[%s0 + $0x34] sm:$0xf]
  %v55 = vld [vmem:[%s0 + $0x38] sm:$0xf]
  %v56 = vld [vmem:[%s0 + $0x3c] sm:$0xf]
  %v57 = vunpack.c.l.bf16 %v41
  %v58 = vunpack.c.l.bf16 %v42
  %v59 = vunpack.c.l.bf16 %v43
  %v60 = vunpack.c.l.bf16 %v44
  %v61 = vunpack.c.l.bf16 %v45
  %v62 = vunpack.c.l.bf16 %v46
  %v63 = vunpack.c.l.bf16 %v47
  %v64 = vunpack.c.l.bf16 %v48
  %v65 = vunpack.c.l.bf16 %v49
  %v66 = vunpack.c.l.bf16 %v50
  %v67 = vunpack.c.l.bf16 %v51
  %v68 = vunpack.c.l.bf16 %v52
  %v69 = vunpack.c.l.bf16 %v53
  %v70 = vunpack.c.l.bf16 %v54
  %v71 = vunpack.c.l.bf16 %v55
  %v72 = vunpack.c.l.bf16 %v56
  %vm73 = vcmask 261120
  %v74 = vsel %vm73, %v57, 0.0
  %75 = vadd.xlane.f32.xlu0 %v74
  %v76 = vpop.xlane.xlu0 %75
  %v77 = vsel %vm73, %v58, 0.0
  %78 = vadd.xlane.f32.xlu0 %v77
  %v79 = vpop.xlane.xlu0 %78
  %v80 = vsel %vm73, %v59, 0.0
  %81 = vadd.xlane.f32.xlu0 %v80
  %v82 = vpop.xlane.xlu0 %81
  %v83 = vsel %vm73, %v60, 0.0
  %84 = vadd.xlane.f32.xlu0 %v83
  %v85 = vpop.xlane.xlu0 %84
  %v86 = vsel %vm73, %v61, 0.0
  %87 = vadd.xlane.f32.xlu0 %v86
  %v88 = vpop.xlane.xlu0 %87
  %v89 = vsel %vm73, %v62, 0.0
  %90 = vadd.xlane.f32.xlu0 %v89
  %v91 = vpop.xlane.xlu0 %90
  %v92 = vsel %vm73, %v63, 0.0
  %93 = vadd.xlane.f32.xlu0 %v92
  %v94 = vpop.xlane.xlu0 %93
  %v95 = vsel %vm73, %v64, 0.0
  %96 = vadd.xlane.f32.xlu0 %v95
  %v97 = vpop.xlane.xlu0 %96
  %v98 = vsel %vm73, %v65, 0.0
  %99 = vadd.xlane.f32.xlu0 %v98
  %v100 = vpop.xlane.xlu0 %99
  %v101 = vsel %vm73, %v66, 0.0
  %102 = vadd.xlane.f32.xlu0 %v101
  %v103 = vpop.xlane.xlu0 %102
  %v104 = vsel %vm73, %v67, 0.0
  %105 = vadd.xlane.f32.xlu0 %v104
  %v106 = vpop.xlane.xlu0 %105
  %v107 = vsel %vm73, %v68, 0.0
  %108 = vadd.xlane.f32.xlu0 %v107
  %v109 = vpop.xlane.xlu0 %108
  %v110 = vsel %vm73, %v69, 0.0
  %111 = vadd.xlane.f32.xlu0 %v110
  %v112 = vpop.xlane.xlu0 %111
  %v113 = vsel %vm73, %v70, 0.0
  %114 = vadd.xlane.f32.xlu0 %v113
  %v115 = vpop.xlane.xlu0 %114
  %v116 = vsel %vm73, %v71, 0.0
  %117 = vadd.xlane.f32.xlu0 %v116
  %v118 = vpop.xlane.xlu0 %117
  %v119 = vsel %vm73, %v72, 0.0
  %120 = vadd.xlane.f32.xlu0 %v119
  %v121 = vpop.xlane.xlu0 %120
  %v122 = vrcp.pop 32.0
  %v123 = vmul.f32 32.0, %v122
  %v124 = vsub.f32 1.0, %v123
  %v125 = vmul.f32 %v122, %v124
  %v126 = vadd.f32 %v122, %v125
  %vm127 = vweird.f32 %v122
  %v128 = vsel %vm127, %v122, %v126
  %v129 = vmul.f32 %v76, %v128
  %v130 = vmul.f32 %v79, %v128
  %v131 = vmul.f32 %v82, %v128
  %v132 = vmul.f32 %v85, %v128
  %v133 = vmul.f32 %v88, %v128
  %v134 = vmul.f32 %v91, %v128
  %v135 = vmul.f32 %v94, %v128
  %v136 = vmul.f32 %v97, %v128
  %v137 = vmul.f32 %v100, %v128
  %v138 = vmul.f32 %v103, %v128
  %v139 = vmul.f32 %v106, %v128
  %v140 = vmul.f32 %v109, %v128
  %v141 = vmul.f32 %v112, %v128
  %v142 = vmul.f32 %v115, %v128
  %v143 = vmul.f32 %v118, %v128
  %v144 = vmul.f32 %v121, %v128
  %v145 = vsub.f32 %v57, %v129
  %v146 = vsub.f32 %v58, %v130
  %v147 = vsub.f32 %v59, %v131
  %v148 = vsub.f32 %v60, %v132
  %v149 = vsub.f32 %v61, %v133
  %v150 = vsub.f32 %v62, %v134
  %v151 = vsub.f32 %v63, %v135
  %v152 = vsub.f32 %v64, %v136
  %v153 = vsub.f32 %v65, %v137
  %v154 = vsub.f32 %v66, %v138
  %v155 = vsub.f32 %v67, %v139
  %v156 = vsub.f32 %v68, %v140
  %v157 = vsub.f32 %v69, %v141
  %v158 = vsub.f32 %v70, %v142
  %v159 = vsub.f32 %v71, %v143
  %v160 = vsub.f32 %v72, %v144
  %v161 = vmul.f32 %v145, %v145
  %v162 = vmul.f32 %v146, %v146
  %v163 = vmul.f32 %v147, %v147
  %v164 = vmul.f32 %v148, %v148
  %v165 = vmul.f32 %v149, %v149
  %v166 = vmul.f32 %v150, %v150
  %v167 = vmul.f32 %v151, %v151
  %v168 = vmul.f32 %v152, %v152
  %v169 = vmul.f32 %v153, %v153
  %v170 = vmul.f32 %v154, %v154
  %v171 = vmul.f32 %v155, %v155
  %v172 = vmul.f32 %v156, %v156
  %v173 = vmul.f32 %v157, %v157
  %v174 = vmul.f32 %v158, %v158
  %v175 = vmul.f32 %v159, %v159
  %v176 = vmul.f32 %v160, %v160
  %v177 = vsel %vm73, %v161, 0.0
  %178 = vadd.xlane.f32.xlu0 %v177
  %v179 = vpop.xlane.xlu0 %178
  %v180 = vsel %vm73, %v162, 0.0
  %181 = vadd.xlane.f32.xlu0 %v180
  %v182 = vpop.xlane.xlu0 %181
  %v183 = vsel %vm73, %v163, 0.0
  %184 = vadd.xlane.f32.xlu0 %v183
  %v185 = vpop.xlane.xlu0 %184
  %v186 = vsel %vm73, %v164, 0.0
  %187 = vadd.xlane.f32.xlu0 %v186
  %v188 = vpop.xlane.xlu0 %187
  %v189 = vsel %vm73, %v165, 0.0
  %190 = vadd.xlane.f32.xlu0 %v189
  %v191 = vpop.xlane.xlu0 %190
  %v192 = vsel %vm73, %v166, 0.0
  %193 = vadd.xlane.f32.xlu0 %v192
  %v194 = vpop.xlane.xlu0 %193
  %v195 = vsel %vm73, %v167, 0.0
  %196 = vadd.xlane.f32.xlu0 %v195
  %v197 = vpop.xlane.xlu0 %196
  %v198 = vsel %vm73, %v168, 0.0
  %199 = vadd.xlane.f32.xlu0 %v198
  %v200 = vpop.xlane.xlu0 %199
  %v201 = vsel %vm73, %v169, 0.0
  %202 = vadd.xlane.f32.xlu0 %v201
  %v203 = vpop.xlane.xlu0 %202
  %v204 = vsel %vm73, %v170, 0.0
  %205 = vadd.xlane.f32.xlu0 %v204
  %v206 = vpop.xlane.xlu0 %205
  %v207 = vsel %vm73, %v171, 0.0
  %208 = vadd.xlane.f32.xlu0 %v207
  %v209 = vpop.xlane.xlu0 %208
  %v210 = vsel %vm73, %v172, 0.0
  %211 = vadd.xlane.f32.xlu0 %v210
  %v212 = vpop.xlane.xlu0 %211
  %v213 = vsel %vm73, %v173, 0.0
  %214 = vadd.xlane.f32.xlu0 %v213
  %v215 = vpop.xlane.xlu0 %214
  %v216 = vsel %vm73, %v174, 0.0
  %217 = vadd.xlane.f32.xlu0 %v216
  %v218 = vpop.xlane.xlu0 %217
  %v219 = vsel %vm73, %v175, 0.0
  %220 = vadd.xlane.f32.xlu0 %v219
  %v221 = vpop.xlane.xlu0 %220
  %v222 = vsel %vm73, %v176, 0.0
  %223 = vadd.xlane.f32.xlu0 %v222
  %v224 = vpop.xlane.xlu0 %223
  %v225 = vmul.f32 %v179, %v128
  %v226 = vmul.f32 %v182, %v128
  %v227 = vmul.f32 %v185, %v128
  %v228 = vmul.f32 %v188, %v128
  %v229 = vmul.f32 %v191, %v128
  %v230 = vmul.f32 %v194, %v128
  %v231 = vmul.f32 %v197, %v128
  %v232 = vmul.f32 %v200, %v128
  %v233 = vmul.f32 %v203, %v128
  %v234 = vmul.f32 %v206, %v128
  %v235 = vmul.f32 %v209, %v128
  %v236 = vmul.f32 %v212, %v128
  %v237 = vmul.f32 %v215, %v128
  %v238 = vmul.f32 %v218, %v128
  %v239 = vmul.f32 %v221, %v128
  %v240 = vmul.f32 %v224, %v128
  %v241 = vadd.f32 %v225, 1e-05
  %v242 = vadd.f32 %v226, 1e-05
  %v243 = vadd.f32 %v227, 1e-05
  %v244 = vadd.f32 %v228, 1e-05
  %v245 = vadd.f32 %v229, 1e-05
  %v246 = vadd.f32 %v230, 1e-05
  %v247 = vadd.f32 %v231, 1e-05
  %v248 = vadd.f32 %v232, 1e-05
  %v249 = vadd.f32 %v233, 1e-05
  %v250 = vadd.f32 %v234, 1e-05
  %v251 = vadd.f32 %v235, 1e-05
  %v252 = vadd.f32 %v236, 1e-05
  %v253 = vadd.f32 %v237, 1e-05
  %v254 = vadd.f32 %v238, 1e-05
  %v255 = vadd.f32 %v239, 1e-05
  %v256 = vadd.f32 %v240, 1e-05
  %v257 = vrsqrt.pop %v241
  %v258 = vmul.f32 %v257, %v241
  %v259 = vmul.f32 %v258, %v257
  %v260 = vmul.f32 0.5, %v259
  %v261 = vsub.f32 1.5, %v260
  %v262 = vmul.f32 %v257, %v261
  %vm263 = vweird.f32 %v241
  %vm264 = vweird.f32 %v257
  %vm265 = vmor %vm263, %vm264
  %v266 = vsel %vm265, %v257, %v262
  %v267 = vrsqrt.pop %v242
  %v268 = vmul.f32 %v267, %v242
  %v269 = vmul.f32 %v268, %v267
  %v270 = vmul.f32 0.5, %v269
  %v271 = vsub.f32 1.5, %v270
  %v272 = vmul.f32 %v267, %v271
  %vm273 = vweird.f32 %v242
  %vm274 = vweird.f32 %v267
  %vm275 = vmor %vm273, %vm274
  %v276 = vsel %vm275, %v267, %v272
  %v277 = vrsqrt.pop %v243
  %v278 = vmul.f32 %v277, %v243
  %v279 = vmul.f32 %v278, %v277
  %v280 = vmul.f32 0.5, %v279
  %v281 = vsub.f32 1.5, %v280
  %v282 = vmul.f32 %v277, %v281
  %vm283 = vweird.f32 %v243
  %vm284 = vweird.f32 %v277
  %vm285 = vmor %vm283, %vm284
  %v286 = vsel %vm285, %v277, %v282
  %v287 = vrsqrt.pop %v244
  %v288 = vmul.f32 %v287, %v244
  %v289 = vmul.f32 %v288, %v287
  %v290 = vmul.f32 0.5, %v289
  %v291 = vsub.f32 1.5, %v290
  %v292 = vmul.f32 %v287, %v291
  %vm293 = vweird.f32 %v244
  %vm294 = vweird.f32 %v287
  %vm295 = vmor %vm293, %vm294
  %v296 = vsel %vm295, %v287, %v292
  %v297 = vrsqrt.pop %v245
  %v298 = vmul.f32 %v297, %v245
  %v299 = vmul.f32 %v298, %v297
  %v300 = vmul.f32 0.5, %v299
  %v301 = vsub.f32 1.5, %v300
  %v302 = vmul.f32 %v297, %v301
  %vm303 = vweird.f32 %v245
  %vm304 = vweird.f32 %v297
  %vm305 = vmor %vm303, %vm304
  %v306 = vsel %vm305, %v297, %v302
  %v307 = vrsqrt.pop %v246
  %v308 = vmul.f32 %v307, %v246
  %v309 = vmul.f32 %v308, %v307
  %v310 = vmul.f32 0.5, %v309
  %v311 = vsub.f32 1.5, %v310
  %v312 = vmul.f32 %v307, %v311
  %vm313 = vweird.f32 %v246
  %vm314 = vweird.f32 %v307
  %vm315 = vmor %vm313, %vm314
  %v316 = vsel %vm315, %v307, %v312
  %v317 = vrsqrt.pop %v247
  %v318 = vmul.f32 %v317, %v247
  %v319 = vmul.f32 %v318, %v317
  %v320 = vmul.f32 0.5, %v319
  %v321 = vsub.f32 1.5, %v320
  %v322 = vmul.f32 %v317, %v321
  %vm323 = vweird.f32 %v247
  %vm324 = vweird.f32 %v317
  %vm325 = vmor %vm323, %vm324
  %v326 = vsel %vm325, %v317, %v322
  %v327 = vrsqrt.pop %v248
  %v328 = vmul.f32 %v327, %v248
  %v329 = vmul.f32 %v328, %v327
  %v330 = vmul.f32 0.5, %v329
  %v331 = vsub.f32 1.5, %v330
  %v332 = vmul.f32 %v327, %v331
  %vm333 = vweird.f32 %v248
  %vm334 = vweird.f32 %v327
  %vm335 = vmor %vm333, %vm334
  %v336 = vsel %vm335, %v327, %v332
  %v337 = vrsqrt.pop %v249
  %v338 = vmul.f32 %v337, %v249
  %v339 = vmul.f32 %v338, %v337
  %v340 = vmul.f32 0.5, %v339
  %v341 = vsub.f32 1.5, %v340
  %v342 = vmul.f32 %v337, %v341
  %vm343 = vweird.f32 %v249
  %vm344 = vweird.f32 %v337
  %vm345 = vmor %vm343, %vm344
  %v346 = vsel %vm345, %v337, %v342
  %v347 = vrsqrt.pop %v250
  %v348 = vmul.f32 %v347, %v250
  %v349 = vmul.f32 %v348, %v347
  %v350 = vmul.f32 0.5, %v349
  %v351 = vsub.f32 1.5, %v350
  %v352 = vmul.f32 %v347, %v351
  %vm353 = vweird.f32 %v250
  %vm354 = vweird.f32 %v347
  %vm355 = vmor %vm353, %vm354
  %v356 = vsel %vm355, %v347, %v352
  %v357 = vrsqrt.pop %v251
  %v358 = vmul.f32 %v357, %v251
  %v359 = vmul.f32 %v358, %v357
  %v360 = vmul.f32 0.5, %v359
  %v361 = vsub.f32 1.5, %v360
  %v362 = vmul.f32 %v357, %v361
  %vm363 = vweird.f32 %v251
  %vm364 = vweird.f32 %v357
  %vm365 = vmor %vm363, %vm364
  %v366 = vsel %vm365, %v357, %v362
  %v367 = vrsqrt.pop %v252
  %v368 = vmul.f32 %v367, %v252
  %v369 = vmul.f32 %v368, %v367
  %v370 = vmul.f32 0.5, %v369
  %v371 = vsub.f32 1.5, %v370
  %v372 = vmul.f32 %v367, %v371
  %vm373 = vweird.f32 %v252
  %vm374 = vweird.f32 %v367
  %vm375 = vmor %vm373, %vm374
  %v376 = vsel %vm375, %v367, %v372
  %v377 = vrsqrt.pop %v253
  %v378 = vmul.f32 %v377, %v253
  %v379 = vmul.f32 %v378, %v377
  %v380 = vmul.f32 0.5, %v379
  %v381 = vsub.f32 1.5, %v380
  %v382 = vmul.f32 %v377, %v381
  %vm383 = vweird.f32 %v253
  %vm384 = vweird.f32 %v377
  %vm385 = vmor %vm383, %vm384
  %v386 = vsel %vm385, %v377, %v382
  %v387 = vrsqrt.pop %v254
  %v388 = vmul.f32 %v387, %v254
  %v389 = vmul.f32 %v388, %v387
  %v390 = vmul.f32 0.5, %v389
  %v391 = vsub.f32 1.5, %v390
  %v392 = vmul.f32 %v387, %v391
  %vm393 = vweird.f32 %v254
  %vm394 = vweird.f32 %v387
  %vm395 = vmor %vm393, %vm394
  %v396 = vsel %vm395, %v387, %v392
  %v397 = vrsqrt.pop %v255
  %v398 = vmul.f32 %v397, %v255
  %v399 = vmul.f32 %v398, %v397
  %v400 = vmul.f32 0.5, %v399
  %v401 = vsub.f32 1.5, %v400
  %v402 = vmul.f32 %v397, %v401
  %vm403 = vweird.f32 %v255
  %vm404 = vweird.f32 %v397
  %vm405 = vmor %vm403, %vm404
  %v406 = vsel %vm405, %v397, %v402
  %v407 = vrsqrt.pop %v256
  %v408 = vmul.f32 %v407, %v256
  %v409 = vmul.f32 %v408, %v407
  %v410 = vmul.f32 0.5, %v409
  %v411 = vsub.f32 1.5, %v410
  %v412 = vmul.f32 %v407, %v411
  %vm413 = vweird.f32 %v256
  %vm414 = vweird.f32 %v407
  %vm415 = vmor %vm413, %vm414
  %v416 = vsel %vm415, %v407, %v412
  %v417 = vmul.f32 %v145, %v266
  %v418 = vmul.f32 %v146, %v276
  %v419 = vmul.f32 %v147, %v286
  %v420 = vmul.f32 %v148, %v296
  %v421 = vmul.f32 %v149, %v306
  %v422 = vmul.f32 %v150, %v316
  %v423 = vmul.f32 %v151, %v326
  %v424 = vmul.f32 %v152, %v336
  %v425 = vmul.f32 %v153, %v346
  %v426 = vmul.f32 %v154, %v356
  %v427 = vmul.f32 %v155, %v366
  %v428 = vmul.f32 %v156, %v376
  %v429 = vmul.f32 %v157, %v386
  %v430 = vmul.f32 %v158, %v396
  %v431 = vmul.f32 %v159, %v406
  %v432 = vmul.f32 %v160, %v416
  %v433 = vld [vmem:[%s3] sm:$0x1]
  %v435 = vperm.slane %v433, 0
  %v437 = vmul.f32 %v417, %v435
  %v438 = vmul.f32 %v418, %v435
  %v439 = vmul.f32 %v419, %v435
  %v440 = vmul.f32 %v420, %v435
  %v441 = vmul.f32 %v421, %v435
  %v442 = vmul.f32 %v422, %v435
  %v443 = vmul.f32 %v423, %v435
  %v444 = vmul.f32 %v424, %v435
  %v445 = vmul.f32 %v425, %v435
  %v446 = vmul.f32 %v426, %v435
  %v447 = vmul.f32 %v427, %v435
  %v448 = vmul.f32 %v428, %v435
  %v449 = vmul.f32 %v429, %v435
  %v450 = vmul.f32 %v430, %v435
  %v451 = vmul.f32 %v431, %v435
  %v452 = vmul.f32 %v432, %v435
  %v453 = vld [vmem:[%s4] sm:$0x1]
  %v455 = vperm.slane %v453, 0
  %v457 = vadd.f32 %v437, %v455
  %v458 = vadd.f32 %v438, %v455
  %v459 = vadd.f32 %v439, %v455
  %v460 = vadd.f32 %v440, %v455
  %v461 = vadd.f32 %v441, %v455
  %v462 = vadd.f32 %v442, %v455
  %v463 = vadd.f32 %v443, %v455
  %v464 = vadd.f32 %v444, %v455
  %v465 = vadd.f32 %v445, %v455
  %v466 = vadd.f32 %v446, %v455
  %v467 = vadd.f32 %v447, %v455
  %v468 = vadd.f32 %v448, %v455
  %v469 = vadd.f32 %v449, %v455
  %v470 = vadd.f32 %v450, %v455
  %v471 = vadd.f32 %v451, %v455
  %v472 = vadd.f32 %v452, %v455
  %v473 = vpack.c.bf16 %v458, %v457
  %v474 = vpack.c.bf16 %v460, %v459
  %v475 = vpack.c.bf16 %v462, %v461
  %v476 = vpack.c.bf16 %v464, %v463
  %v477 = vpack.c.bf16 %v466, %v465
  %v478 = vpack.c.bf16 %v468, %v467
  %v479 = vpack.c.bf16 %v470, %v469
  %v480 = vpack.c.bf16 %v472, %v471
  %v481 = vld [vmem:[#allocation2] sm:$0xff]
  %v482 = vld [vmem:[#allocation2 + $0x8] sm:$0xff]
  %v483 = vld [vmem:[#allocation2 + $0x10] sm:$0xff]
  %v484 = vld [vmem:[#allocation2 + $0x18] sm:$0xff]
  %v485 = vld [vmem:[#allocation2 + $0x20] sm:$0xff]
  %v486 = vld [vmem:[#allocation2 + $0x28] sm:$0xff]
  %v487 = vld [vmem:[#allocation2 + $0x30] sm:$0xff]
  %v488 = vld [vmem:[#allocation2 + $0x38] sm:$0xff]
  %v489 = vld [vmem:[#allocation2 + $0x40] sm:$0xff]
  %v490 = vld [vmem:[#allocation2 + $0x48] sm:$0xff]
  %v491 = vld [vmem:[#allocation2 + $0x50] sm:$0xff]
  %v492 = vld [vmem:[#allocation2 + $0x58] sm:$0xff]
  %v493 = vld [vmem:[#allocation2 + $0x60] sm:$0xff]
  %v494 = vld [vmem:[#allocation2 + $0x68] sm:$0xff]
  %v495 = vld [vmem:[#allocation2 + $0x70] sm:$0xff]
  %v496 = vld [vmem:[#allocation2 + $0x78] sm:$0xff]
  %v497 = vld [vmem:[%s1] sm:$0xf]
  %v498 = vld [vmem:[%s1 + $0x4] sm:$0xf]
  %v499 = vld [vmem:[%s1 + $0x8] sm:$0xf]
  %v500 = vld [vmem:[%s1 + $0xc] sm:$0xf]
  %v505 = vunpack.c.l.b16 %v497
  %v506 = vunpack.c.l.b16 %v498
  %v507 = vunpack.c.l.b16 %v499
  %v508 = vunpack.c.l.b16 %v500
  %v509 = vpack.c.b16 %v506, %v505
  %v510 = vpack.c.b16 %v508, %v507
  %v514 = vsel %vm73, %v473, 0
  %v517 = vsel %vm73, %v474, 0
  %v520 = vsel %vm73, %v475, 0
  %v523 = vsel %vm73, %v476, 0
  %v526 = vsel %vm73, %v477, 0
  %v529 = vsel %vm73, %v478, 0
  %v532 = vsel %vm73, %v479, 0
  %v535 = vsel %vm73, %v480, 0
  %537 = vmatpush.bf16.msra.mxu0 0
  %538 = vmatpush.bf16.msra.mxu0 0
  %539 = vmatpush.bf16.msra.mxu0 0
  %540 = vmatpush.bf16.msra.mxu0 0
  %541 = vmatpush.bf16.msra.mxu0 0
  %542 = vmatpush.bf16.msra.mxu0 0
  %543 = vmatpush.bf16.msra.mxu0 %v510
  %544 = vmatpush.bf16.msra.mxu0 %v509
  %545 = vmatmul.bf16.gmra.mxu0 %v514
  %v546 = vpop.f32.mrf.mxu0
  %v547 = vadd.f32 0.0, %v546
  %v548 = vpop.f32.mrf.mxu0
  %v549 = vadd.f32 0.0, %v548
  %550 = vmatmul.bf16.gmra.mxu0 %v517
  %v551 = vpop.f32.mrf.mxu0
  %v552 = vadd.f32 0.0, %v551
  %v553 = vpop.f32.mrf.mxu0
  %v554 = vadd.f32 0.0, %v553
  %555 = vmatmul.bf16.gmra.mxu0 %v520
  %v556 = vpop.f32.mrf.mxu0
  %v557 = vadd.f32 0.0, %v556
  %v558 = vpop.f32.mrf.mxu0
  %v559 = vadd.f32 0.0, %v558
  %560 = vmatmul.bf16.gmra.mxu0 %v523
  %v561 = vpop.f32.mrf.mxu0
  %v562 = vadd.f32 0.0, %v561
  %v563 = vpop.f32.mrf.mxu0
  %v564 = vadd.f32 0.0, %v563
  %565 = vmatmul.bf16.gmra.mxu0 %v526
  %v566 = vpop.f32.mrf.mxu0
  %v567 = vadd.f32 0.0, %v566
  %v568 = vpop.f32.mrf.mxu0
  %v569 = vadd.f32 0.0, %v568
  %570 = vmatmul.bf16.gmra.mxu0 %v529
  %v571 = vpop.f32.mrf.mxu0
  %v572 = vadd.f32 0.0, %v571
  %v573 = vpop.f32.mrf.mxu0
  %v574 = vadd.f32 0.0, %v573
  %575 = vmatmul.bf16.gmra.mxu0 %v532
  %v576 = vpop.f32.mrf.mxu0
  %v577 = vadd.f32 0.0, %v576
  %v578 = vpop.f32.mrf.mxu0
  %v579 = vadd.f32 0.0, %v578
  %580 = vmatmul.bf16.gmra.mxu0 %v535
  %v581 = vpop.f32.mrf.mxu0
  %v582 = vadd.f32 0.0, %v581
  %v583 = vpop.f32.mrf.mxu0
  %v584 = vadd.f32 0.0, %v583
  %585 = vdwg.mxu0
  %v586 = vadd.f32 %v481, %v547
  %v587 = vadd.f32 %v482, %v549
  %v588 = vadd.f32 %v483, %v552
  %v589 = vadd.f32 %v484, %v554
  %v590 = vadd.f32 %v485, %v557
  %v591 = vadd.f32 %v486, %v559
  %v592 = vadd.f32 %v487, %v562
  %v593 = vadd.f32 %v488, %v564
  %v594 = vadd.f32 %v489, %v567
  %v595 = vadd.f32 %v490, %v569
  %v596 = vadd.f32 %v491, %v572
  %v597 = vadd.f32 %v492, %v574
  %v598 = vadd.f32 %v493, %v577
  %v599 = vadd.f32 %v494, %v579
  %v600 = vadd.f32 %v495, %v582
  %v601 = vadd.f32 %v496, %v584
  %602 = vst [vmem:[#allocation2] sm:$0xff] %v586
  %603 = vst [vmem:[#allocation2 + $0x8] sm:$0xff] %v587
  %604 = vst [vmem:[#allocation2 + $0x10] sm:$0xff] %v588
  %605 = vst [vmem:[#allocation2 + $0x18] sm:$0xff] %v589
  %606 = vst [vmem:[#allocation2 + $0x20] sm:$0xff] %v590
  %607 = vst [vmem:[#allocation2 + $0x28] sm:$0xff] %v591
  %608 = vst [vmem:[#allocation2 + $0x30] sm:$0xff] %v592
  %609 = vst [vmem:[#allocation2 + $0x38] sm:$0xff] %v593
  %610 = vst [vmem:[#allocation2 + $0x40] sm:$0xff] %v594
  %611 = vst [vmem:[#allocation2 + $0x48] sm:$0xff] %v595
  %612 = vst [vmem:[#allocation2 + $0x50] sm:$0xff] %v596
  %613 = vst [vmem:[#allocation2 + $0x58] sm:$0xff] %v597
  %614 = vst [vmem:[#allocation2 + $0x60] sm:$0xff] %v598
  %615 = vst [vmem:[#allocation2 + $0x68] sm:$0xff] %v599
  %616 = vst [vmem:[#allocation2 + $0x70] sm:$0xff] %v600
  %617 = vst [vmem:[#allocation2 + $0x78] sm:$0xff] %v601
  // Predicated region
  $region26: #{long_term_stage.24} parent=0 // pred_check
    %p618 = pneg %p21
  $region27: #{long_term_stage.24} parent=0 // pred_check_branch
    %620 = sbr.rel (%p618) target = $region29
  $region28: #{long_term_stage.24} parent=0 // pred_region
    %v621 = vld [vmem:[#allocation2] sm:$0xff]
    %v622 = vld [vmem:[#allocation2 + $0x8] sm:$0xff]
    %v623 = vld [vmem:[#allocation2 + $0x10] sm:$0xff]
    %v624 = vld [vmem:[#allocation2 + $0x18] sm:$0xff]
    %v625 = vld [vmem:[#allocation2 + $0x20] sm:$0xff]
    %v626 = vld [vmem:[#allocation2 + $0x28] sm:$0xff]
    %v627 = vld [vmem:[#allocation2 + $0x30] sm:$0xff]
    %v628 = vld [vmem:[#allocation2 + $0x38] sm:$0xff]
    %v629 = vld [vmem:[#allocation2 + $0x40] sm:$0xff]
    %v630 = vld [vmem:[#allocation2 + $0x48] sm:$0xff]
    %v631 = vld [vmem:[#allocation2 + $0x50] sm:$0xff]
    %v632 = vld [vmem:[#allocation2 + $0x58] sm:$0xff]
    %v633 = vld [vmem:[#allocation2 + $0x60] sm:$0xff]
    %v634 = vld [vmem:[#allocation2 + $0x68] sm:$0xff]
    %v635 = vld [vmem:[#allocation2 + $0x70] sm:$0xff]
    %v636 = vld [vmem:[#allocation2 + $0x78] sm:$0xff]
    %v637 = vld [vmem:[%s2] sm:$0x1]
    %v639 = vperm.slane %v637, 0
    %v641 = vadd.f32 %v621, %v639
    %v642 = vadd.f32 %v622, %v639
    %v643 = vadd.f32 %v623, %v639
    %v644 = vadd.f32 %v624, %v639
    %v645 = vadd.f32 %v625, %v639
    %v646 = vadd.f32 %v626, %v639
    %v647 = vadd.f32 %v627, %v639
    %v648 = vadd.f32 %v628, %v639
    %v649 = vadd.f32 %v629, %v639
    %v650 = vadd.f32 %v630, %v639
    %v651 = vadd.f32 %v631, %v639
    %v652 = vadd.f32 %v632, %v639
    %v653 = vadd.f32 %v633, %v639
    %v654 = vadd.f32 %v634, %v639
    %v655 = vadd.f32 %v635, %v639
    %v656 = vadd.f32 %v636, %v639
    %v657 = vmul.f32 %v641, 0.5
    %v658 = vmul.f32 %v642, 0.5
    %v659 = vmul.f32 %v643, 0.5
    %v660 = vmul.f32 %v644, 0.5
    %v661 = vmul.f32 %v645, 0.5
    %v662 = vmul.f32 %v646, 0.5
    %v663 = vmul.f32 %v647, 0.5
    %v664 = vmul.f32 %v648, 0.5
    %v665 = vmul.f32 %v649, 0.5
    %v666 = vmul.f32 %v650, 0.5
    %v667 = vmul.f32 %v651, 0.5
    %v668 = vmul.f32 %v652, 0.5
    %v669 = vmul.f32 %v653, 0.5
    %v670 = vmul.f32 %v654, 0.5
    %v671 = vmul.f32 %v655, 0.5
    %v672 = vmul.f32 %v656, 0.5
    %v673 = vmul.f32 %v641, 0.70710677
    %v674 = vmul.f32 %v642, 0.70710677
    %v675 = vmul.f32 %v643, 0.70710677
    %v676 = vmul.f32 %v644, 0.70710677
    %v677 = vmul.f32 %v645, 0.70710677
    %v678 = vmul.f32 %v646, 0.70710677
    %v679 = vmul.f32 %v647, 0.70710677
    %v680 = vmul.f32 %v648, 0.70710677
    %v681 = vmul.f32 %v649, 0.70710677
    %v682 = vmul.f32 %v650, 0.70710677
    %v683 = vmul.f32 %v651, 0.70710677
    %v684 = vmul.f32 %v652, 0.70710677
    %v685 = vmul.f32 %v653, 0.70710677
    %v686 = vmul.f32 %v654, 0.70710677
    %v687 = vmul.f32 %v655, 0.70710677
    %v688 = vmul.f32 %v656, 0.70710677
    %v689 = vand.u32 2147483647, %v673
    %v690 = vand.u32 2147483647, %v674
    %v691 = vand.u32 2147483647, %v675
    %v692 = vand.u32 2147483647, %v676
    %v693 = vand.u32 2147483647, %v677
    %v694 = vand.u32 2147483647, %v678
    %v695 = vand.u32 2147483647, %v679
    %v696 = vand.u32 2147483647, %v680
    %v697 = vand.u32 2147483647, %v681
    %v698 = vand.u32 2147483647, %v682
    %v699 = vand.u32 2147483647, %v683
    %v700 = vand.u32 2147483647, %v684
    %v701 = vand.u32 2147483647, %v685
    %v702 = vand.u32 2147483647, %v686
    %v703 = vand.u32 2147483647, %v687
    %v704 = vand.u32 2147483647, %v688
    %v705 = vmul.f32 %v689, 0.3275911
    %v706 = vmul.f32 %v690, 0.3275911
    %v707 = vmul.f32 %v691, 0.3275911
    %v708 = vmul.f32 %v692, 0.3275911
    %v709 = vmul.f32 %v693, 0.3275911
    %v710 = vmul.f32 %v694, 0.3275911
    %v711 = vmul.f32 %v695, 0.3275911
    %v712 = vmul.f32 %v696, 0.3275911
    %v713 = vmul.f32 %v697, 0.3275911
    %v714 = vmul.f32 %v698, 0.3275911
    %v715 = vmul.f32 %v699, 0.3275911
    %v716 = vmul.f32 %v700, 0.3275911
    %v717 = vmul.f32 %v701, 0.3275911
    %v718 = vmul.f32 %v702, 0.3275911
    %v719 = vmul.f32 %v703, 0.3275911
    %v720 = vmul.f32 %v704, 0.3275911
    %v721 = vadd.f32 %v705, 1.0
    %v722 = vadd.f32 %v706, 1.0
    %v723 = vadd.f32 %v707, 1.0
    %v724 = vadd.f32 %v708, 1.0
    %v725 = vadd.f32 %v709, 1.0
    %v726 = vadd.f32 %v710, 1.0
    %v727 = vadd.f32 %v711, 1.0
    %v728 = vadd.f32 %v712, 1.0
    %v729 = vadd.f32 %v713, 1.0
    %v730 = vadd.f32 %v714, 1.0
    %v731 = vadd.f32 %v715, 1.0
    %v732 = vadd.f32 %v716, 1.0
    %v733 = vadd.f32 %v717, 1.0
    %v734 = vadd.f32 %v718, 1.0
    %v735 = vadd.f32 %v719, 1.0
    %v736 = vadd.f32 %v720, 1.0
    %v737 = vrcp.pop %v721
    %v738 = vmul.f32 %v721, %v737
    %v739 = vsub.f32 1.0, %v738
    %v740 = vmul.f32 %v737, %v739
    %v741 = vadd.f32 %v737, %v740
    %vm742 = vweird.f32 %v721
    %vm743 = vweird.f32 %v737
    %vm744 = vmor %vm742, %vm743
    %v745 = vsel %vm744, %v737, %v741
    %v746 = vand.u32 2147483647, %v721
    %vm747 = vcmp.eq.f32.partialorder %v746, 8.507059e+37
    %v748 = vand.u32 %v721, 2147483648
    %v749 = vor.u32 1.1754944e-38, %v748
    %v750 = vsel %vm747, %v749, %v745
    %v751 = vmul.f32 1.0, %v750
    %v752 = vrcp.pop %v722
    %v753 = vmul.f32 %v722, %v752
    %v754 = vsub.f32 1.0, %v753
    %v755 = vmul.f32 %v752, %v754
    %v756 = vadd.f32 %v752, %v755
    %vm757 = vweird.f32 %v722
    %vm758 = vweird.f32 %v752
    %vm759 = vmor %vm757, %vm758
    %v760 = vsel %vm759, %v752, %v756
    %v761 = vand.u32 2147483647, %v722
    %vm762 = vcmp.eq.f32.partialorder %v761, 8.507059e+37
    %v763 = vand.u32 %v722, 2147483648
    %v764 = vor.u32 1.1754944e-38, %v763
    %v765 = vsel %vm762, %v764, %v760
    %v766 = vmul.f32 1.0, %v765
    %v767 = vrcp.pop %v723
    %v768 = vmul.f32 %v723, %v767
    %v769 = vsub.f32 1.0, %v768
    %v770 = vmul.f32 %v767, %v769
    %v771 = vadd.f32 %v767, %v770
    %vm772 = vweird.f32 %v723
    %vm773 = vweird.f32 %v767
    %vm774 = vmor %vm772, %vm773
    %v775 = vsel %vm774, %v767, %v771
    %v776 = vand.u32 2147483647, %v723
    %vm777 = vcmp.eq.f32.partialorder %v776, 8.507059e+37
    %v778 = vand.u32 %v723, 2147483648
    %v779 = vor.u32 1.1754944e-38, %v778
    %v780 = vsel %vm777, %v779, %v775
    %v781 = vmul.f32 1.0, %v780
    %v782 = vrcp.pop %v724
    %v783 = vmul.f32 %v724, %v782
    %v784 = vsub.f32 1.0, %v783
    %v785 = vmul.f32 %v782, %v784
    %v786 = vadd.f32 %v782, %v785
    %vm787 = vweird.f32 %v724
    %vm788 = vweird.f32 %v782
    %vm789 = vmor %vm787, %vm788
    %v790 = vsel %vm789, %v782, %v786
    %v791 = vand.u32 2147483647, %v724
    %vm792 = vcmp.eq.f32.partialorder %v791, 8.507059e+37
    %v793 = vand.u32 %v724, 2147483648
    %v794 = vor.u32 1.1754944e-38, %v793
    %v795 = vsel %vm792, %v794, %v790
    %v796 = vmul.f32 1.0, %v795
    %v797 = vrcp.pop %v725
    %v798 = vmul.f32 %v725, %v797
    %v799 = vsub.f32 1.0, %v798
    %v800 = vmul.f32 %v797, %v799
    %v801 = vadd.f32 %v797, %v800
    %vm802 = vweird.f32 %v725
    %vm803 = vweird.f32 %v797
    %vm804 = vmor %vm802, %vm803
    %v805 = vsel %vm804, %v797, %v801
    %v806 = vand.u32 2147483647, %v725
    %vm807 = vcmp.eq.f32.partialorder %v806, 8.507059e+37
    %v808 = vand.u32 %v725, 2147483648
    %v809 = vor.u32 1.1754944e-38, %v808
    %v810 = vsel %vm807, %v809, %v805
    %v811 = vmul.f32 1.0, %v810
    %v812 = vrcp.pop %v726
    %v813 = vmul.f32 %v726, %v812
    %v814 = vsub.f32 1.0, %v813
    %v815 = vmul.f32 %v812, %v814
    %v816 = vadd.f32 %v812, %v815
    %vm817 = vweird.f32 %v726
    %vm818 = vweird.f32 %v812
    %vm819 = vmor %vm817, %vm818
    %v820 = vsel %vm819, %v812, %v816
    %v821 = vand.u32 2147483647, %v726
    %vm822 = vcmp.eq.f32.partialorder %v821, 8.507059e+37
    %v823 = vand.u32 %v726, 2147483648
    %v824 = vor.u32 1.1754944e-38, %v823
    %v825 = vsel %vm822, %v824, %v820
    %v826 = vmul.f32 1.0, %v825
    %v827 = vrcp.pop %v727
    %v828 = vmul.f32 %v727, %v827
    %v829 = vsub.f32 1.0, %v828
    %v830 = vmul.f32 %v827, %v829
    %v831 = vadd.f32 %v827, %v830
    %vm832 = vweird.f32 %v727
    %vm833 = vweird.f32 %v827
    %vm834 = vmor %vm832, %vm833
    %v835 = vsel %vm834, %v827, %v831
    %v836 = vand.u32 2147483647, %v727
    %vm837 = vcmp.eq.f32.partialorder %v836, 8.507059e+37
    %v838 = vand.u32 %v727, 2147483648
    %v839 = vor.u32 1.1754944e-38, %v838
    %v840 = vsel %vm837, %v839, %v835
    %v841 = vmul.f32 1.0, %v840
    %v842 = vrcp.pop %v728
    %v843 = vmul.f32 %v728, %v842
    %v844 = vsub.f32 1.0, %v843
    %v845 = vmul.f32 %v842, %v844
    %v846 = vadd.f32 %v842, %v845
    %vm847 = vweird.f32 %v728
    %vm848 = vweird.f32 %v842
    %vm849 = vmor %vm847, %vm848
    %v850 = vsel %vm849, %v842, %v846
    %v851 = vand.u32 2147483647, %v728
    %vm852 = vcmp.eq.f32.partialorder %v851, 8.507059e+37
    %v853 = vand.u32 %v728, 2147483648
    %v854 = vor.u32 1.1754944e-38, %v853
    %v855 = vsel %vm852, %v854, %v850
    %v856 = vmul.f32 1.0, %v855
    %v857 = vrcp.pop %v729
    %v858 = vmul.f32 %v729, %v857
    %v859 = vsub.f32 1.0, %v858
    %v860 = vmul.f32 %v857, %v859
    %v861 = vadd.f32 %v857, %v860
    %vm862 = vweird.f32 %v729
    %vm863 = vweird.f32 %v857
    %vm864 = vmor %vm862, %vm863
    %v865 = vsel %vm864, %v857, %v861
    %v866 = vand.u32 2147483647, %v729
    %vm867 = vcmp.eq.f32.partialorder %v866, 8.507059e+37
    %v868 = vand.u32 %v729, 2147483648
    %v869 = vor.u32 1.1754944e-38, %v868
    %v870 = vsel %vm867, %v869, %v865
    %v871 = vmul.f32 1.0, %v870
    %v872 = vrcp.pop %v730
    %v873 = vmul.f32 %v730, %v872
    %v874 = vsub.f32 1.0, %v873
    %v875 = vmul.f32 %v872, %v874
    %v876 = vadd.f32 %v872, %v875
    %vm877 = vweird.f32 %v730
    %vm878 = vweird.f32 %v872
    %vm879 = vmor %vm877, %vm878
    %v880 = vsel %vm879, %v872, %v876
    %v881 = vand.u32 2147483647, %v730
    %vm882 = vcmp.eq.f32.partialorder %v881, 8.507059e+37
    %v883 = vand.u32 %v730, 2147483648
    %v884 = vor.u32 1.1754944e-38, %v883
    %v885 = vsel %vm882, %v884, %v880
    %v886 = vmul.f32 1.0, %v885
    %v887 = vrcp.pop %v731
    %v888 = vmul.f32 %v731, %v887
    %v889 = vsub.f32 1.0, %v888
    %v890 = vmul.f32 %v887, %v889
    %v891 = vadd.f32 %v887, %v890
    %vm892 = vweird.f32 %v731
    %vm893 = vweird.f32 %v887
    %vm894 = vmor %vm892, %vm893
    %v895 = vsel %vm894, %v887, %v891
    %v896 = vand.u32 2147483647, %v731
    %vm897 = vcmp.eq.f32.partialorder %v896, 8.507059e+37
    %v898 = vand.u32 %v731, 2147483648
    %v899 = vor.u32 1.1754944e-38, %v898
    %v900 = vsel %vm897, %v899, %v895
    %v901 = vmul.f32 1.0, %v900
    %v902 = vrcp.pop %v732
    %v903 = vmul.f32 %v732, %v902
    %v904 = vsub.f32 1.0, %v903
    %v905 = vmul.f32 %v902, %v904
    %v906 = vadd.f32 %v902, %v905
    %vm907 = vweird.f32 %v732
    %vm908 = vweird.f32 %v902
    %vm909 = vmor %vm907, %vm908
    %v910 = vsel %vm909, %v902, %v906
    %v911 = vand.u32 2147483647, %v732
    %vm912 = vcmp.eq.f32.partialorder %v911, 8.507059e+37
    %v913 = vand.u32 %v732, 2147483648
    %v914 = vor.u32 1.1754944e-38, %v913
    %v915 = vsel %vm912, %v914, %v910
    %v916 = vmul.f32 1.0, %v915
    %v917 = vrcp.pop %v733
    %v918 = vmul.f32 %v733, %v917
    %v919 = vsub.f32 1.0, %v918
    %v920 = vmul.f32 %v917, %v919
    %v921 = vadd.f32 %v917, %v920
    %vm922 = vweird.f32 %v733
    %vm923 = vweird.f32 %v917
    %vm924 = vmor %vm922, %vm923
    %v925 = vsel %vm924, %v917, %v921
    %v926 = vand.u32 2147483647, %v733
    %vm927 = vcmp.eq.f32.partialorder %v926, 8.507059e+37
    %v928 = vand.u32 %v733, 2147483648
    %v929 = vor.u32 1.1754944e-38, %v928
    %v930 = vsel %vm927, %v929, %v925
    %v931 = vmul.f32 1.0, %v930
    %v932 = vrcp.pop %v734
    %v933 = vmul.f32 %v734, %v932
    %v934 = vsub.f32 1.0, %v933
    %v935 = vmul.f32 %v932, %v934
    %v936 = vadd.f32 %v932, %v935
    %vm937 = vweird.f32 %v734
    %vm938 = vweird.f32 %v932
    %vm939 = vmor %vm937, %vm938
    %v940 = vsel %vm939, %v932, %v936
    %v941 = vand.u32 2147483647, %v734
    %vm942 = vcmp.eq.f32.partialorder %v941, 8.507059e+37
    %v943 = vand.u32 %v734, 2147483648
    %v944 = vor.u32 1.1754944e-38, %v943
    %v945 = vsel %vm942, %v944, %v940
    %v946 = vmul.f32 1.0, %v945
    %v947 = vrcp.pop %v735
    %v948 = vmul.f32 %v735, %v947
    %v949 = vsub.f32 1.0, %v948
    %v950 = vmul.f32 %v947, %v949
    %v951 = vadd.f32 %v947, %v950
    %vm952 = vweird.f32 %v735
    %vm953 = vweird.f32 %v947
    %vm954 = vmor %vm952, %vm953
    %v955 = vsel %vm954, %v947, %v951
    %v956 = vand.u32 2147483647, %v735
    %vm957 = vcmp.eq.f32.partialorder %v956, 8.507059e+37
    %v958 = vand.u32 %v735, 2147483648
    %v959 = vor.u32 1.1754944e-38, %v958
    %v960 = vsel %vm957, %v959, %v955
    %v961 = vmul.f32 1.0, %v960
    %v962 = vrcp.pop %v736
    %v963 = vmul.f32 %v736, %v962
    %v964 = vsub.f32 1.0, %v963
    %v965 = vmul.f32 %v962, %v964
    %v966 = vadd.f32 %v962, %v965
    %vm967 = vweird.f32 %v736
    %vm968 = vweird.f32 %v962
    %vm969 = vmor %vm967, %vm968
    %v970 = vsel %vm969, %v962, %v966
    %v971 = vand.u32 2147483647, %v736
    %vm972 = vcmp.eq.f32.partialorder %v971, 8.507059e+37
    %v973 = vand.u32 %v736, 2147483648
    %v974 = vor.u32 1.1754944e-38, %v973
    %v975 = vsel %vm972, %v974, %v970
    %v976 = vmul.f32 1.0, %v975
    %v977 = vmul.f32 %v751, 1.0614054
    %v978 = vmul.f32 %v766, 1.0614054
    %v979 = vmul.f32 %v781, 1.0614054
    %v980 = vmul.f32 %v796, 1.0614054
    %v981 = vmul.f32 %v811, 1.0614054
    %v982 = vmul.f32 %v826, 1.0614054
    %v983 = vmul.f32 %v841, 1.0614054
    %v984 = vmul.f32 %v856, 1.0614054
    %v985 = vmul.f32 %v871, 1.0614054
    %v986 = vmul.f32 %v886, 1.0614054
    %v987 = vmul.f32 %v901, 1.0614054
    %v988 = vmul.f32 %v916, 1.0614054
    %v989 = vmul.f32 %v931, 1.0614054
    %v990 = vmul.f32 %v946, 1.0614054
    %v991 = vmul.f32 %v961, 1.0614054
    %v992 = vmul.f32 %v976, 1.0614054
    %v993 = vadd.f32 %v977, -1.4531521
    %v994 = vadd.f32 %v978, -1.4531521
    %v995 = vadd.f32 %v979, -1.4531521
    %v996 = vadd.f32 %v980, -1.4531521
    %v997 = vadd.f32 %v981, -1.4531521
    %v998 = vadd.f32 %v982, -1.4531521
    %v999 = vadd.f32 %v983, -1.4531521
    %v1000 = vadd.f32 %v984, -1.4531521
    %v1001 = vadd.f32 %v985, -1.4531521
    %v1002 = vadd.f32 %v986, -1.4531521
    %v1003 = vadd.f32 %v987, -1.4531521
    %v1004 = vadd.f32 %v988, -1.4531521
    %v1005 = vadd.f32 %v989, -1.4531521
    %v1006 = vadd.f32 %v990, -1.4531521
    %v1007 = vadd.f32 %v991, -1.4531521
    %v1008 = vadd.f32 %v992, -1.4531521
    %v1009 = vmul.f32 %v993, %v751
    %v1010 = vmul.f32 %v994, %v766
    %v1011 = vmul.f32 %v995, %v781
    %v1012 = vmul.f32 %v996, %v796
    %v1013 = vmul.f32 %v997, %v811
    %v1014 = vmul.f32 %v998, %v826
    %v1015 = vmul.f32 %v999, %v841
    %v1016 = vmul.f32 %v1000, %v856
    %v1017 = vmul.f32 %v1001, %v871
    %v1018 = vmul.f32 %v1002, %v886
    %v1019 = vmul.f32 %v1003, %v901
    %v1020 = vmul.f32 %v1004, %v916
    %v1021 = vmul.f32 %v1005, %v931
    %v1022 = vmul.f32 %v1006, %v946
    %v1023 = vmul.f32 %v1007, %v961
    %v1024 = vmul.f32 %v1008, %v976
    %v1025 = vadd.f32 %v1009, 1.4214138
    %v1026 = vadd.f32 %v1010, 1.4214138
    %v1027 = vadd.f32 %v1011, 1.4214138
    %v1028 = vadd.f32 %v1012, 1.4214138
    %v1029 = vadd.f32 %v1013, 1.4214138
    %v1030 = vadd.f32 %v1014, 1.4214138
    %v1031 = vadd.f32 %v1015, 1.4214138
    %v1032 = vadd.f32 %v1016, 1.4214138
    %v1033 = vadd.f32 %v1017, 1.4214138
    %v1034 = vadd.f32 %v1018, 1.4214138
    %v1035 = vadd.f32 %v1019, 1.4214138
    %v1036 = vadd.f32 %v1020, 1.4214138
    %v1037 = vadd.f32 %v1021, 1.4214138
    %v1038 = vadd.f32 %v1022, 1.4214138
    %v1039 = vadd.f32 %v1023, 1.4214138
    %v1040 = vadd.f32 %v1024, 1.4214138
    %v1041 = vmul.f32 %v1025, %v751
    %v1042 = vmul.f32 %v1026, %v766
    %v1043 = vmul.f32 %v1027, %v781
    %v1044 = vmul.f32 %v1028, %v796
    %v1045 = vmul.f32 %v1029, %v811
    %v1046 = vmul.f32 %v1030, %v826
    %v1047 = vmul.f32 %v1031, %v841
    %v1048 = vmul.f32 %v1032, %v856
    %v1049 = vmul.f32 %v1033, %v871
    %v1050 = vmul.f32 %v1034, %v886
    %v1051 = vmul.f32 %v1035, %v901
    %v1052 = vmul.f32 %v1036, %v916
    %v1053 = vmul.f32 %v1037, %v931
    %v1054 = vmul.f32 %v1038, %v946
    %v1055 = vmul.f32 %v1039, %v961
    %v1056 = vmul.f32 %v1040, %v976
    %v1057 = vadd.f32 %v1041, -0.28449672
    %v1058 = vadd.f32 %v1042, -0.28449672
    %v1059 = vadd.f32 %v1043, -0.28449672
    %v1060 = vadd.f32 %v1044, -0.28449672
    %v1061 = vadd.f32 %v1045, -0.28449672
    %v1062 = vadd.f32 %v1046, -0.28449672
    %v1063 = vadd.f32 %v1047, -0.28449672
    %v1064 = vadd.f32 %v1048, -0.28449672
    %v1065 = vadd.f32 %v1049, -0.28449672
    %v1066 = vadd.f32 %v1050, -0.28449672
    %v1067 = vadd.f32 %v1051, -0.28449672
    %v1068 = vadd.f32 %v1052, -0.28449672
    %v1069 = vadd.f32 %v1053, -0.28449672
    %v1070 = vadd.f32 %v1054, -0.28449672
    %v1071 = vadd.f32 %v1055, -0.28449672
    %v1072 = vadd.f32 %v1056, -0.28449672
    %v1073 = vmul.f32 %v1057, %v751
    %v1074 = vmul.f32 %v1058, %v766
    %v1075 = vmul.f32 %v1059, %v781
    %v1076 = vmul.f32 %v1060, %v796
    %v1077 = vmul.f32 %v1061, %v811
    %v1078 = vmul.f32 %v1062, %v826
    %v1079 = vmul.f32 %v1063, %v841
    %v1080 = vmul.f32 %v1064, %v856
    %v1081 = vmul.f32 %v1065, %v871
    %v1082 = vmul.f32 %v1066, %v886
    %v1083 = vmul.f32 %v1067, %v901
    %v1084 = vmul.f32 %v1068, %v916
    %v1085 = vmul.f32 %v1069, %v931
    %v1086 = vmul.f32 %v1070, %v946
    %v1087 = vmul.f32 %v1071, %v961
    %v1088 = vmul.f32 %v1072, %v976
    %v1089 = vadd.f32 %v1073, 0.2548296
    %v1090 = vadd.f32 %v1074, 0.2548296
    %v1091 = vadd.f32 %v1075, 0.2548296
    %v1092 = vadd.f32 %v1076, 0.2548296
    %v1093 = vadd.f32 %v1077, 0.2548296
    %v1094 = vadd.f32 %v1078, 0.2548296
    %v1095 = vadd.f32 %v1079, 0.2548296
    %v1096 = vadd.f32 %v1080, 0.2548296
    %v1097 = vadd.f32 %v1081, 0.2548296
    %v1098 = vadd.f32 %v1082, 0.2548296
    %v1099 = vadd.f32 %v1083, 0.2548296
    %v1100 = vadd.f32 %v1084, 0.2548296
    %v1101 = vadd.f32 %v1085, 0.2548296
    %v1102 = vadd.f32 %v1086, 0.2548296
    %v1103 = vadd.f32 %v1087, 0.2548296
    %v1104 = vadd.f32 %v1088, 0.2548296
    %v1105 = vmul.f32 %v1089, %v751
    %v1106 = vmul.f32 %v1090, %v766
    %v1107 = vmul.f32 %v1091, %v781
    %v1108 = vmul.f32 %v1092, %v796
    %v1109 = vmul.f32 %v1093, %v811
    %v1110 = vmul.f32 %v1094, %v826
    %v1111 = vmul.f32 %v1095, %v841
    %v1112 = vmul.f32 %v1096, %v856
    %v1113 = vmul.f32 %v1097, %v871
    %v1114 = vmul.f32 %v1098, %v886
    %v1115 = vmul.f32 %v1099, %v901
    %v1116 = vmul.f32 %v1100, %v916
    %v1117 = vmul.f32 %v1101, %v931
    %v1118 = vmul.f32 %v1102, %v946
    %v1119 = vmul.f32 %v1103, %v961
    %v1120 = vmul.f32 %v1104, %v976
    %v1121 = vsub.f32 0.0, %v689
    %v1122 = vsub.f32 0.0, %v690
    %v1123 = vsub.f32 0.0, %v691
    %v1124 = vsub.f32 0.0, %v692
    %v1125 = vsub.f32 0.0, %v693
    %v1126 = vsub.f32 0.0, %v694
    %v1127 = vsub.f32 0.0, %v695
    %v1128 = vsub.f32 0.0, %v696
    %v1129 = vsub.f32 0.0, %v697
    %v1130 = vsub.f32 0.0, %v698
    %v1131 = vsub.f32 0.0, %v699
    %v1132 = vsub.f32 0.0, %v700
    %v1133 = vsub.f32 0.0, %v701
    %v1134 = vsub.f32 0.0, %v702
    %v1135 = vsub.f32 0.0, %v703
    %v1136 = vsub.f32 0.0, %v704
    %v1137 = vmul.f32 %v1121, %v689
    %v1138 = vmul.f32 %v1122, %v690
    %v1139 = vmul.f32 %v1123, %v691
    %v1140 = vmul.f32 %v1124, %v692
    %v1141 = vmul.f32 %v1125, %v693
    %v1142 = vmul.f32 %v1126, %v694
    %v1143 = vmul.f32 %v1127, %v695
    %v1144 = vmul.f32 %v1128, %v696
    %v1145 = vmul.f32 %v1129, %v697
    %v1146 = vmul.f32 %v1130, %v698
    %v1147 = vmul.f32 %v1131, %v699
    %v1148 = vmul.f32 %v1132, %v700
    %v1149 = vmul.f32 %v1133, %v701
    %v1150 = vmul.f32 %v1134, %v702
    %v1151 = vmul.f32 %v1135, %v703
    %v1152 = vmul.f32 %v1136, %v704
    %v1153 = vmul.f32 %v1137, 1.442695
    %v1154 = vpow.pop %v1153
    %v1155 = vmul.f32 %v1138, 1.442695
    %v1156 = vpow.pop %v1155
    %v1157 = vmul.f32 %v1139, 1.442695
    %v1158 = vpow.pop %v1157
    %v1159 = vmul.f32 %v1140, 1.442695
    %v1160 = vpow.pop %v1159
    %v1161 = vmul.f32 %v1141, 1.442695
    %v1162 = vpow.pop %v1161
    %v1163 = vmul.f32 %v1142, 1.442695
    %v1164 = vpow.pop %v1163
    %v1165 = vmul.f32 %v1143, 1.442695
    %v1166 = vpow.pop %v1165
    %v1167 = vmul.f32 %v1144, 1.442695
    %v1168 = vpow.pop %v1167
    %v1169 = vmul.f32 %v1145, 1.442695
    %v1170 = vpow.pop %v1169
    %v1171 = vmul.f32 %v1146, 1.442695
    %v1172 = vpow.pop %v1171
    %v1173 = vmul.f32 %v1147, 1.442695
    %v1174 = vpow.pop %v1173
    %v1175 = vmul.f32 %v1148, 1.442695
    %v1176 = vpow.pop %v1175
    %v1177 = vmul.f32 %v1149, 1.442695
    %v1178 = vpow.pop %v1177
    %v1179 = vmul.f32 %v1150, 1.442695
    %v1180 = vpow.pop %v1179
    %v1181 = vmul.f32 %v1151, 1.442695
    %v1182 = vpow.pop %v1181
    %v1183 = vmul.f32 %v1152, 1.442695
    %v1184 = vpow.pop %v1183
    %v1185 = vmul.f32 %v1105, %v1154
    %v1186 = vmul.f32 %v1106, %v1156
    %v1187 = vmul.f32 %v1107, %v1158
    %v1188 = vmul.f32 %v1108, %v1160
    %v1189 = vmul.f32 %v1109, %v1162
    %v1190 = vmul.f32 %v1110, %v1164
    %v1191 = vmul.f32 %v1111, %v1166
    %v1192 = vmul.f32 %v1112, %v1168
    %v1193 = vmul.f32 %v1113, %v1170
    %v1194 = vmul.f32 %v1114, %v1172
    %v1195 = vmul.f32 %v1115, %v1174
    %v1196 = vmul.f32 %v1116, %v1176
    %v1197 = vmul.f32 %v1117, %v1178
    %v1198 = vmul.f32 %v1118, %v1180
    %v1199 = vmul.f32 %v1119, %v1182
    %v1200 = vmul.f32 %v1120, %v1184
    %v1201 = vsub.f32 1.0, %v1185
    %v1202 = vsub.f32 1.0, %v1186
    %v1203 = vsub.f32 1.0, %v1187
    %v1204 = vsub.f32 1.0, %v1188
    %v1205 = vsub.f32 1.0, %v1189
    %v1206 = vsub.f32 1.0, %v1190
    %v1207 = vsub.f32 1.0, %v1191
    %v1208 = vsub.f32 1.0, %v1192
    %v1209 = vsub.f32 1.0, %v1193
    %v1210 = vsub.f32 1.0, %v1194
    %v1211 = vsub.f32 1.0, %v1195
    %v1212 = vsub.f32 1.0, %v1196
    %v1213 = vsub.f32 1.0, %v1197
    %v1214 = vsub.f32 1.0, %v1198
    %v1215 = vsub.f32 1.0, %v1199
    %v1216 = vsub.f32 1.0, %v1200
    %vm1217 = vcmp.lt.f32.partialorder %v673, 0.0
    %vm1218 = vcmp.lt.f32.partialorder %v674, 0.0
    %vm1219 = vcmp.lt.f32.partialorder %v675, 0.0
    %vm1220 = vcmp.lt.f32.partialorder %v676, 0.0
    %vm1221 = vcmp.lt.f32.partialorder %v677, 0.0
    %vm1222 = vcmp.lt.f32.partialorder %v678, 0.0
    %vm1223 = vcmp.lt.f32.partialorder %v679, 0.0
    %vm1224 = vcmp.lt.f32.partialorder %v680, 0.0
    %vm1225 = vcmp.lt.f32.partialorder %v681, 0.0
    %vm1226 = vcmp.lt.f32.partialorder %v682, 0.0
    %vm1227 = vcmp.lt.f32.partialorder %v683, 0.0
    %vm1228 = vcmp.lt.f32.partialorder %v684, 0.0
    %vm1229 = vcmp.lt.f32.partialorder %v685, 0.0
    %vm1230 = vcmp.lt.f32.partialorder %v686, 0.0
    %vm1231 = vcmp.lt.f32.partialorder %v687, 0.0
    %vm1232 = vcmp.lt.f32.partialorder %v688, 0.0
    %v1233 = vsub.f32 0.0, %v1201
    %v1234 = vsub.f32 0.0, %v1202
    %v1235 = vsub.f32 0.0, %v1203
    %v1236 = vsub.f32 0.0, %v1204
    %v1237 = vsub.f32 0.0, %v1205
    %v1238 = vsub.f32 0.0, %v1206
    %v1239 = vsub.f32 0.0, %v1207
    %v1240 = vsub.f32 0.0, %v1208
    %v1241 = vsub.f32 0.0, %v1209
    %v1242 = vsub.f32 0.0, %v1210
    %v1243 = vsub.f32 0.0, %v1211
    %v1244 = vsub.f32 0.0, %v1212
    %v1245 = vsub.f32 0.0, %v1213
    %v1246 = vsub.f32 0.0, %v1214
    %v1247 = vsub.f32 0.0, %v1215
    %v1248 = vsub.f32 0.0, %v1216
    %v1249 = vsel %vm1217, %v1233, %v1201
    %v1250 = vsel %vm1218, %v1234, %v1202
    %v1251 = vsel %vm1219, %v1235, %v1203
    %v1252 = vsel %vm1220, %v1236, %v1204
    %v1253 = vsel %vm1221, %v1237, %v1205
    %v1254 = vsel %vm1222, %v1238, %v1206
    %v1255 = vsel %vm1223, %v1239, %v1207
    %v1256 = vsel %vm1224, %v1240, %v1208
    %v1257 = vsel %vm1225, %v1241, %v1209
    %v1258 = vsel %vm1226, %v1242, %v1210
    %v1259 = vsel %vm1227, %v1243, %v1211
    %v1260 = vsel %vm1228, %v1244, %v1212
    %v1261 = vsel %vm1229, %v1245, %v1213
    %v1262 = vsel %vm1230, %v1246, %v1214
    %v1263 = vsel %vm1231, %v1247, %v1215
    %v1264 = vsel %vm1232, %v1248, %v1216
    %v1265 = vadd.f32 %v1249, 1.0
    %v1266 = vadd.f32 %v1250, 1.0
    %v1267 = vadd.f32 %v1251, 1.0
    %v1268 = vadd.f32 %v1252, 1.0
    %v1269 = vadd.f32 %v1253, 1.0
    %v1270 = vadd.f32 %v1254, 1.0
    %v1271 = vadd.f32 %v1255, 1.0
    %v1272 = vadd.f32 %v1256, 1.0
    %v1273 = vadd.f32 %v1257, 1.0
    %v1274 = vadd.f32 %v1258, 1.0
    %v1275 = vadd.f32 %v1259, 1.0
    %v1276 = vadd.f32 %v1260, 1.0
    %v1277 = vadd.f32 %v1261, 1.0
    %v1278 = vadd.f32 %v1262, 1.0
    %v1279 = vadd.f32 %v1263, 1.0
    %v1280 = vadd.f32 %v1264, 1.0
    %v1281 = vmul.f32 %v657, %v1265
    %v1282 = vmul.f32 %v658, %v1266
    %v1283 = vmul.f32 %v659, %v1267
    %v1284 = vmul.f32 %v660, %v1268
    %v1285 = vmul.f32 %v661, %v1269
    %v1286 = vmul.f32 %v662, %v1270
    %v1287 = vmul.f32 %v663, %v1271
    %v1288 = vmul.f32 %v664, %v1272
    %v1289 = vmul.f32 %v665, %v1273
    %v1290 = vmul.f32 %v666, %v1274
    %v1291 = vmul.f32 %v667, %v1275
    %v1292 = vmul.f32 %v668, %v1276
    %v1293 = vmul.f32 %v669, %v1277
    %v1294 = vmul.f32 %v670, %v1278
    %v1295 = vmul.f32 %v671, %v1279
    %v1296 = vmul.f32 %v672, %v1280
    %v1297 = vpack.c.bf16 %v1281, %v1281
    %v1298 = vpack.c.bf16 %v1282, %v1282
    %v1299 = vpack.c.bf16 %v1283, %v1283
    %v1300 = vpack.c.bf16 %v1284, %v1284
    %v1301 = vpack.c.bf16 %v1285, %v1285
    %v1302 = vpack.c.bf16 %v1286, %v1286
    %v1303 = vpack.c.bf16 %v1287, %v1287
    %v1304 = vpack.c.bf16 %v1288, %v1288
    %v1305 = vpack.c.bf16 %v1289, %v1289
    %v1306 = vpack.c.bf16 %v1290, %v1290
    %v1307 = vpack.c.bf16 %v1291, %v1291
    %v1308 = vpack.c.bf16 %v1292, %v1292
    %v1309 = vpack.c.bf16 %v1293, %v1293
    %v1310 = vpack.c.bf16 %v1294, %v1294
    %v1311 = vpack.c.bf16 %v1295, %v1295
    %v1312 = vpack.c.bf16 %v1296, %v1296
    %1313 = vst [vmem:[%s5] sm:$0xf] %v1297
    %1314 = vst [vmem:[%s5 + $0x4] sm:$0xf] %v1298
    %1315 = vst [vmem:[%s5 + $0x8] sm:$0xf] %v1299
    %1316 = vst [vmem:[%s5 + $0xc] sm:$0xf] %v1300
    %1317 = vst [vmem:[%s5 + $0x10] sm:$0xf] %v1301
    %1318 = vst [vmem:[%s5 + $0x14] sm:$0xf] %v1302
    %1319 = vst [vmem:[%s5 + $0x18] sm:$0xf] %v1303
    %1320 = vst [vmem:[%s5 + $0x1c] sm:$0xf] %v1304
    %1321 = vst [vmem:[%s5 + $0x20] sm:$0xf] %v1305
    %1322 = vst [vmem:[%s5 + $0x24] sm:$0xf] %v1306
    %1323 = vst [vmem:[%s5 + $0x28] sm:$0xf] %v1307
    %1324 = vst [vmem:[%s5 + $0x2c] sm:$0xf] %v1308
    %1325 = vst [vmem:[%s5 + $0x30] sm:$0xf] %v1309
    %1326 = vst [vmem:[%s5 + $0x34] sm:$0xf] %v1310
    %1327 = vst [vmem:[%s5 + $0x38] sm:$0xf] %v1311
    %1328 = vst [vmem:[%s5 + $0x3c] sm:$0xf] %v1312
  $region29: #{long_term_stage.24} parent=0 // pred_fallthru
    _
  // Predicated region
  $region30: #{long_term_stage.24} parent=0 // pred_check
    _
  $region31: #{long_term_stage.24} parent=0 // pred_check_branch
    %1330 = sbr.rel (0) target = $region33
  $region32: #{long_term_stage.24} parent=0 // pred_region
    _
  $region33: #{long_term_stage.24} parent=0 // pred_fallthru
    _
  // Predicated region
  $region34: #{long_term_stage.24} parent=0 // pred_check
    _
  $region35: #{long_term_stage.24} parent=0 // pred_check_branch
    %1332 = sbr.rel (0) target = $region37
  $region36: #{long_term_stage.24} parent=0 // pred_region
    _
  $region37: #{long_term_stage.24} parent=0 // pred_fallthru
    _

// kernel: long_term_stage.25
$region0: #{long_term_stage.25}
  #allocation0 [shape = 'u32[]', space=smem, size = 0x4, offset = 0x4, fixed_abs, tag = 'smem constant byte address 0x4 - core index']
  #allocation1 [shape = 'u32[72,128]{1,0:T(1,128)}', space=vmem, size = 0x9000, scoped, tag = 'internal scratch']
  #allocation2 [shape = 'f32[128,32]{1,0:T(8,128)}', space=vmem, size = 0x10000, scoped, tag = 'scratch operand']
  %s0 = inlined_call_operand.vmem [shape: bf16[128,128], index: 0, kind: input, shape index: {}]
  %s1 = inlined_call_operand.vmem [shape: bf16[128,32], index: 1, kind: input, shape index: {}]
  %s2 = inlined_call_operand.vmem [shape: f32[1,32], index: 2, kind: input, shape index: {}]
  %s3 = inlined_call_operand.vmem [shape: bf16[128,32], index: 3, kind: input, shape index: {}]
  %s4 = inlined_call_operand.vmem [shape: bf16[128,32], index: 4, kind: output, shape index: {}]
  %s5 = sld [smem:[#allocation0]]
  $region34: #{long_term_stage.25} parent=0
    _
  %s7 = ssub.s32 1, %s5
  %s8 = scalar_select 0, %s7, %s5
  // Predicated region
  $region2: #{long_term_stage.25} parent=0 // pred_check
    _
  $region3: #{long_term_stage.25} parent=0 // pred_check_branch
    %10 = sbr.rel (0) target = $region5
  $region4: #{long_term_stage.25} parent=0 // pred_region
    _
  $region5: #{long_term_stage.25} parent=0 // pred_fallthru
    _
  // Predicated region
  $region6: #{long_term_stage.25} parent=0 // pred_check
    _
  $region7: #{long_term_stage.25} parent=0 // pred_check_branch
    %12 = sbr.rel (0) target = $region9
  $region8: #{long_term_stage.25} parent=0 // pred_region
    _
  $region9: #{long_term_stage.25} parent=0 // pred_fallthru
    _
  // Predicated region
  $region10: #{long_term_stage.25} parent=0 // pred_check
    _
  $region11: #{long_term_stage.25} parent=0 // pred_check_branch
    %14 = sbr.rel (0) target = $region13
  $region12: #{long_term_stage.25} parent=0 // pred_region
    _
  $region13: #{long_term_stage.25} parent=0 // pred_fallthru
    _
  // Predicated region
  $region14: #{long_term_stage.25} parent=0 // pred_check
    _
  $region15: #{long_term_stage.25} parent=0 // pred_check_branch
    %16 = sbr.rel (0) target = $region17
  $region16: #{long_term_stage.25} parent=0 // pred_region
    _
  $region17: #{long_term_stage.25} parent=0 // pred_fallthru
    _
  %p17 = scmp.eq.s32.totalorder 0, 0
  // Predicated region
  $region18: #{long_term_stage.25} parent=0 // pred_check
    %p18 = pneg %p17
  $region19: #{long_term_stage.25} parent=0 // pred_check_branch
    %20 = sbr.rel (%p18) target = $region21
  $region20: #{long_term_stage.25} parent=0 // pred_region
    %vm21 = vcmask 261120
    %22 = vst.msk [vmem:[#allocation2] sm:$0xff] %vm21, 0.0
    %23 = vst.msk [vmem:[#allocation2 + $0x8] sm:$0xff] %vm21, 0.0
    %24 = vst.msk [vmem:[#allocation2 + $0x10] sm:$0xff] %vm21, 0.0
    %25 = vst.msk [vmem:[#allocation2 + $0x18] sm:$0xff] %vm21, 0.0
    %26 = vst.msk [vmem:[#allocation2 + $0x20] sm:$0xff] %vm21, 0.0
    %27 = vst.msk [vmem:[#allocation2 + $0x28] sm:$0xff] %vm21, 0.0
    %28 = vst.msk [vmem:[#allocation2 + $0x30] sm:$0xff] %vm21, 0.0
    %29 = vst.msk [vmem:[#allocation2 + $0x38] sm:$0xff] %vm21, 0.0
    %30 = vst.msk [vmem:[#allocation2 + $0x40] sm:$0xff] %vm21, 0.0
    %31 = vst.msk [vmem:[#allocation2 + $0x48] sm:$0xff] %vm21, 0.0
    %32 = vst.msk [vmem:[#allocation2 + $0x50] sm:$0xff] %vm21, 0.0
    %33 = vst.msk [vmem:[#allocation2 + $0x58] sm:$0xff] %vm21, 0.0
    %34 = vst.msk [vmem:[#allocation2 + $0x60] sm:$0xff] %vm21, 0.0
    %35 = vst.msk [vmem:[#allocation2 + $0x68] sm:$0xff] %vm21, 0.0
    %36 = vst.msk [vmem:[#allocation2 + $0x70] sm:$0xff] %vm21, 0.0
    %37 = vst.msk [vmem:[#allocation2 + $0x78] sm:$0xff] %vm21, 0.0
  $region21: #{long_term_stage.25} parent=0 // pred_fallthru
    _
  %v38 = vld [vmem:[%s0] sm:$0xf]
  %v39 = vld [vmem:[%s0 + $0x4] sm:$0xf]
  %v40 = vld [vmem:[%s0 + $0x8] sm:$0xf]
  %v41 = vld [vmem:[%s0 + $0xc] sm:$0xf]
  %v42 = vld [vmem:[%s0 + $0x10] sm:$0xf]
  %v43 = vld [vmem:[%s0 + $0x14] sm:$0xf]
  %v44 = vld [vmem:[%s0 + $0x18] sm:$0xf]
  %v45 = vld [vmem:[%s0 + $0x1c] sm:$0xf]
  %v46 = vld [vmem:[%s0 + $0x20] sm:$0xf]
  %v47 = vld [vmem:[%s0 + $0x24] sm:$0xf]
  %v48 = vld [vmem:[%s0 + $0x28] sm:$0xf]
  %v49 = vld [vmem:[%s0 + $0x2c] sm:$0xf]
  %v50 = vld [vmem:[%s0 + $0x30] sm:$0xf]
  %v51 = vld [vmem:[%s0 + $0x34] sm:$0xf]
  %v52 = vld [vmem:[%s0 + $0x38] sm:$0xf]
  %v53 = vld [vmem:[%s0 + $0x3c] sm:$0xf]
  %v54 = vld [vmem:[#allocation2] sm:$0xff]
  %v55 = vld [vmem:[#allocation2 + $0x8] sm:$0xff]
  %v56 = vld [vmem:[#allocation2 + $0x10] sm:$0xff]
  %v57 = vld [vmem:[#allocation2 + $0x18] sm:$0xff]
  %v58 = vld [vmem:[#allocation2 + $0x20] sm:$0xff]
  %v59 = vld [vmem:[#allocation2 + $0x28] sm:$0xff]
  %v60 = vld [vmem:[#allocation2 + $0x30] sm:$0xff]
  %v61 = vld [vmem:[#allocation2 + $0x38] sm:$0xff]
  %v62 = vld [vmem:[#allocation2 + $0x40] sm:$0xff]
  %v63 = vld [vmem:[#allocation2 + $0x48] sm:$0xff]
  %v64 = vld [vmem:[#allocation2 + $0x50] sm:$0xff]
  %v65 = vld [vmem:[#allocation2 + $0x58] sm:$0xff]
  %v66 = vld [vmem:[#allocation2 + $0x60] sm:$0xff]
  %v67 = vld [vmem:[#allocation2 + $0x68] sm:$0xff]
  %v68 = vld [vmem:[#allocation2 + $0x70] sm:$0xff]
  %v69 = vld [vmem:[#allocation2 + $0x78] sm:$0xff]
  %v70 = vld [vmem:[%s1] sm:$0xf]
  %v71 = vld [vmem:[%s1 + $0x4] sm:$0xf]
  %v72 = vld [vmem:[%s1 + $0x8] sm:$0xf]
  %v73 = vld [vmem:[%s1 + $0xc] sm:$0xf]
  %v74 = vld [vmem:[%s1 + $0x10] sm:$0xf]
  %v75 = vld [vmem:[%s1 + $0x14] sm:$0xf]
  %v76 = vld [vmem:[%s1 + $0x18] sm:$0xf]
  %v77 = vld [vmem:[%s1 + $0x1c] sm:$0xf]
  %v78 = vld [vmem:[%s1 + $0x20] sm:$0xf]
  %v79 = vld [vmem:[%s1 + $0x24] sm:$0xf]
  %v80 = vld [vmem:[%s1 + $0x28] sm:$0xf]
  %v81 = vld [vmem:[%s1 + $0x2c] sm:$0xf]
  %v82 = vld [vmem:[%s1 + $0x30] sm:$0xf]
  %v83 = vld [vmem:[%s1 + $0x34] sm:$0xf]
  %v84 = vld [vmem:[%s1 + $0x38] sm:$0xf]
  %v85 = vld [vmem:[%s1 + $0x3c] sm:$0xf]
  %v102 = vunpack.c.l.b16 %v38
  %v103 = vunpack.c.l.b16 %v39
  %v104 = vunpack.c.l.b16 %v40
  %v105 = vunpack.c.l.b16 %v41
  %v106 = vunpack.c.l.b16 %v42
  %v107 = vunpack.c.l.b16 %v43
  %v108 = vunpack.c.l.b16 %v44
  %v109 = vunpack.c.l.b16 %v45
  %v110 = vunpack.c.l.b16 %v46
  %v111 = vunpack.c.l.b16 %v47
  %v112 = vunpack.c.l.b16 %v48
  %v113 = vunpack.c.l.b16 %v49
  %v114 = vunpack.c.l.b16 %v50
  %v115 = vunpack.c.l.b16 %v51
  %v116 = vunpack.c.l.b16 %v52
  %v117 = vunpack.c.l.b16 %v53
  %v118 = vpack.c.b16 %v103, %v102
  %v119 = vpack.c.b16 %v105, %v104
  %v120 = vpack.c.b16 %v107, %v106
  %v121 = vpack.c.b16 %v109, %v108
  %v122 = vpack.c.b16 %v111, %v110
  %v123 = vpack.c.b16 %v113, %v112
  %v124 = vpack.c.b16 %v115, %v114
  %v125 = vpack.c.b16 %v117, %v116
  %v150 = vunpack.c.l.b16 %v70
  %v151 = vunpack.c.l.b16 %v71
  %v152 = vunpack.c.l.b16 %v72
  %v153 = vunpack.c.l.b16 %v73
  %v154 = vunpack.c.l.b16 %v74
  %v155 = vunpack.c.l.b16 %v75
  %v156 = vunpack.c.l.b16 %v76
  %v157 = vunpack.c.l.b16 %v77
  %v158 = vunpack.c.l.b16 %v78
  %v159 = vunpack.c.l.b16 %v79
  %v160 = vunpack.c.l.b16 %v80
  %v161 = vunpack.c.l.b16 %v81
  %v162 = vunpack.c.l.b16 %v82
  %v163 = vunpack.c.l.b16 %v83
  %v164 = vunpack.c.l.b16 %v84
  %v165 = vunpack.c.l.b16 %v85
  %v166 = vpack.c.b16 %v151, %v150
  %v167 = vpack.c.b16 %v153, %v152
  %v168 = vpack.c.b16 %v155, %v154
  %v169 = vpack.c.b16 %v157, %v156
  %v170 = vpack.c.b16 %v159, %v158
  %v171 = vpack.c.b16 %v161, %v160
  %v172 = vpack.c.b16 %v163, %v162
  %v173 = vpack.c.b16 %v165, %v164
  %182 = vmatpush.bf16.msra.mxu0 %v173
  %183 = vmatpush.bf16.msra.mxu0 %v172
  %184 = vmatpush.bf16.msra.mxu0 %v171
  %185 = vmatpush.bf16.msra.mxu0 %v170
  %186 = vmatpush.bf16.msra.mxu0 %v169
  %187 = vmatpush.bf16.msra.mxu0 %v168
  %188 = vmatpush.bf16.msra.mxu0 %v167
  %189 = vmatpush.bf16.msra.mxu0 %v166
  %190 = vmatmul.bf16.gmra.mxu0 %v118
  %v191 = vpop.f32.mrf.mxu0
  %v192 = vadd.f32 0.0, %v191
  %v193 = vpop.f32.mrf.mxu0
  %v194 = vadd.f32 0.0, %v193
  %195 = vmatmul.bf16.gmra.mxu0 %v119
  %v196 = vpop.f32.mrf.mxu0
  %v197 = vadd.f32 0.0, %v196
  %v198 = vpop.f32.mrf.mxu0
  %v199 = vadd.f32 0.0, %v198
  %200 = vmatmul.bf16.gmra.mxu0 %v120
  %v201 = vpop.f32.mrf.mxu0
  %v202 = vadd.f32 0.0, %v201
  %v203 = vpop.f32.mrf.mxu0
  %v204 = vadd.f32 0.0, %v203
  %205 = vmatmul.bf16.gmra.mxu0 %v121
  %v206 = vpop.f32.mrf.mxu0
  %v207 = vadd.f32 0.0, %v206
  %v208 = vpop.f32.mrf.mxu0
  %v209 = vadd.f32 0.0, %v208
  %210 = vmatmul.bf16.gmra.mxu0 %v122
  %v211 = vpop.f32.mrf.mxu0
  %v212 = vadd.f32 0.0, %v211
  %v213 = vpop.f32.mrf.mxu0
  %v214 = vadd.f32 0.0, %v213
  %215 = vmatmul.bf16.gmra.mxu0 %v123
  %v216 = vpop.f32.mrf.mxu0
  %v217 = vadd.f32 0.0, %v216
  %v218 = vpop.f32.mrf.mxu0
  %v219 = vadd.f32 0.0, %v218
  %220 = vmatmul.bf16.gmra.mxu0 %v124
  %v221 = vpop.f32.mrf.mxu0
  %v222 = vadd.f32 0.0, %v221
  %v223 = vpop.f32.mrf.mxu0
  %v224 = vadd.f32 0.0, %v223
  %225 = vmatmul.bf16.gmra.mxu0 %v125
  %v226 = vpop.f32.mrf.mxu0
  %v227 = vadd.f32 0.0, %v226
  %v228 = vpop.f32.mrf.mxu0
  %v229 = vadd.f32 0.0, %v228
  %230 = vdwg.mxu0
  %v231 = vadd.f32 %v54, %v192
  %v232 = vadd.f32 %v55, %v194
  %v233 = vadd.f32 %v56, %v197
  %v234 = vadd.f32 %v57, %v199
  %v235 = vadd.f32 %v58, %v202
  %v236 = vadd.f32 %v59, %v204
  %v237 = vadd.f32 %v60, %v207
  %v238 = vadd.f32 %v61, %v209
  %v239 = vadd.f32 %v62, %v212
  %v240 = vadd.f32 %v63, %v214
  %v241 = vadd.f32 %v64, %v217
  %v242 = vadd.f32 %v65, %v219
  %v243 = vadd.f32 %v66, %v222
  %v244 = vadd.f32 %v67, %v224
  %v245 = vadd.f32 %v68, %v227
  %v246 = vadd.f32 %v69, %v229
  %vm247 = vcmask 261120
  %248 = vst.msk [vmem:[#allocation2] sm:$0xff] %vm247, %v231
  %249 = vst.msk [vmem:[#allocation2 + $0x8] sm:$0xff] %vm247, %v232
  %250 = vst.msk [vmem:[#allocation2 + $0x10] sm:$0xff] %vm247, %v233
  %251 = vst.msk [vmem:[#allocation2 + $0x18] sm:$0xff] %vm247, %v234
  %252 = vst.msk [vmem:[#allocation2 + $0x20] sm:$0xff] %vm247, %v235
  %253 = vst.msk [vmem:[#allocation2 + $0x28] sm:$0xff] %vm247, %v236
  %254 = vst.msk [vmem:[#allocation2 + $0x30] sm:$0xff] %vm247, %v237
  %255 = vst.msk [vmem:[#allocation2 + $0x38] sm:$0xff] %vm247, %v238
  %256 = vst.msk [vmem:[#allocation2 + $0x40] sm:$0xff] %vm247, %v239
  %257 = vst.msk [vmem:[#allocation2 + $0x48] sm:$0xff] %vm247, %v240
  %258 = vst.msk [vmem:[#allocation2 + $0x50] sm:$0xff] %vm247, %v241
  %259 = vst.msk [vmem:[#allocation2 + $0x58] sm:$0xff] %vm247, %v242
  %260 = vst.msk [vmem:[#allocation2 + $0x60] sm:$0xff] %vm247, %v243
  %261 = vst.msk [vmem:[#allocation2 + $0x68] sm:$0xff] %vm247, %v244
  %262 = vst.msk [vmem:[#allocation2 + $0x70] sm:$0xff] %vm247, %v245
  %263 = vst.msk [vmem:[#allocation2 + $0x78] sm:$0xff] %vm247, %v246
  // Predicated region
  $region22: #{long_term_stage.25} parent=0 // pred_check
    %p264 = pneg %p17
  $region23: #{long_term_stage.25} parent=0 // pred_check_branch
    %266 = sbr.rel (%p264) target = $region25
  $region24: #{long_term_stage.25} parent=0 // pred_region
    %v267 = vld [vmem:[#allocation2] sm:$0xff]
    %v268 = vld [vmem:[#allocation2 + $0x8] sm:$0xff]
    %v269 = vld [vmem:[#allocation2 + $0x10] sm:$0xff]
    %v270 = vld [vmem:[#allocation2 + $0x18] sm:$0xff]
    %v271 = vld [vmem:[#allocation2 + $0x20] sm:$0xff]
    %v272 = vld [vmem:[#allocation2 + $0x28] sm:$0xff]
    %v273 = vld [vmem:[#allocation2 + $0x30] sm:$0xff]
    %v274 = vld [vmem:[#allocation2 + $0x38] sm:$0xff]
    %v275 = vld [vmem:[#allocation2 + $0x40] sm:$0xff]
    %v276 = vld [vmem:[#allocation2 + $0x48] sm:$0xff]
    %v277 = vld [vmem:[#allocation2 + $0x50] sm:$0xff]
    %v278 = vld [vmem:[#allocation2 + $0x58] sm:$0xff]
    %v279 = vld [vmem:[#allocation2 + $0x60] sm:$0xff]
    %v280 = vld [vmem:[#allocation2 + $0x68] sm:$0xff]
    %v281 = vld [vmem:[#allocation2 + $0x70] sm:$0xff]
    %v282 = vld [vmem:[#allocation2 + $0x78] sm:$0xff]
    %v283 = vld [vmem:[%s2] sm:$0x1]
    %v285 = vperm.slane %v283, 0
    %v287 = vadd.f32 %v267, %v285
    %v288 = vadd.f32 %v268, %v285
    %v289 = vadd.f32 %v269, %v285
    %v290 = vadd.f32 %v270, %v285
    %v291 = vadd.f32 %v271, %v285
    %v292 = vadd.f32 %v272, %v285
    %v293 = vadd.f32 %v273, %v285
    %v294 = vadd.f32 %v274, %v285
    %v295 = vadd.f32 %v275, %v285
    %v296 = vadd.f32 %v276, %v285
    %v297 = vadd.f32 %v277, %v285
    %v298 = vadd.f32 %v278, %v285
    %v299 = vadd.f32 %v279, %v285
    %v300 = vadd.f32 %v280, %v285
    %v301 = vadd.f32 %v281, %v285
    %v302 = vadd.f32 %v282, %v285
    %v303 = vld [vmem:[%s3] sm:$0xf]
    %v304 = vld [vmem:[%s3 + $0x4] sm:$0xf]
    %v305 = vld [vmem:[%s3 + $0x8] sm:$0xf]
    %v306 = vld [vmem:[%s3 + $0xc] sm:$0xf]
    %v307 = vld [vmem:[%s3 + $0x10] sm:$0xf]
    %v308 = vld [vmem:[%s3 + $0x14] sm:$0xf]
    %v309 = vld [vmem:[%s3 + $0x18] sm:$0xf]
    %v310 = vld [vmem:[%s3 + $0x1c] sm:$0xf]
    %v311 = vld [vmem:[%s3 + $0x20] sm:$0xf]
    %v312 = vld [vmem:[%s3 + $0x24] sm:$0xf]
    %v313 = vld [vmem:[%s3 + $0x28] sm:$0xf]
    %v314 = vld [vmem:[%s3 + $0x2c] sm:$0xf]
    %v315 = vld [vmem:[%s3 + $0x30] sm:$0xf]
    %v316 = vld [vmem:[%s3 + $0x34] sm:$0xf]
    %v317 = vld [vmem:[%s3 + $0x38] sm:$0xf]
    %v318 = vld [vmem:[%s3 + $0x3c] sm:$0xf]
    %v319 = vunpack.c.l.bf16 %v303
    %v320 = vunpack.c.l.bf16 %v304
    %v321 = vunpack.c.l.bf16 %v305
    %v322 = vunpack.c.l.bf16 %v306
    %v323 = vunpack.c.l.bf16 %v307
    %v324 = vunpack.c.l.bf16 %v308
    %v325 = vunpack.c.l.bf16 %v309
    %v326 = vunpack.c.l.bf16 %v310
    %v327 = vunpack.c.l.bf16 %v311
    %v328 = vunpack.c.l.bf16 %v312
    %v329 = vunpack.c.l.bf16 %v313
    %v330 = vunpack.c.l.bf16 %v314
    %v331 = vunpack.c.l.bf16 %v315
    %v332 = vunpack.c.l.bf16 %v316
    %v333 = vunpack.c.l.bf16 %v317
    %v334 = vunpack.c.l.bf16 %v318
    %v335 = vadd.f32 %v287, %v319
    %v336 = vadd.f32 %v288, %v320
    %v337 = vadd.f32 %v289, %v321
    %v338 = vadd.f32 %v290, %v322
    %v339 = vadd.f32 %v291, %v323
    %v340 = vadd.f32 %v292, %v324
    %v341 = vadd.f32 %v293, %v325
    %v342 = vadd.f32 %v294, %v326
    %v343 = vadd.f32 %v295, %v327
    %v344 = vadd.f32 %v296, %v328
    %v345 = vadd.f32 %v297, %v329
    %v346 = vadd.f32 %v298, %v330
    %v347 = vadd.f32 %v299, %v331
    %v348 = vadd.f32 %v300, %v332
    %v349 = vadd.f32 %v301, %v333
    %v350 = vadd.f32 %v302, %v334
    %v351 = vpack.c.bf16 %v335, %v335
    %v352 = vpack.c.bf16 %v336, %v336
    %v353 = vpack.c.bf16 %v337, %v337
    %v354 = vpack.c.bf16 %v338, %v338
    %v355 = vpack.c.bf16 %v339, %v339
    %v356 = vpack.c.bf16 %v340, %v340
    %v357 = vpack.c.bf16 %v341, %v341
    %v358 = vpack.c.bf16 %v342, %v342
    %v359 = vpack.c.bf16 %v343, %v343
    %v360 = vpack.c.bf16 %v344, %v344
    %v361 = vpack.c.bf16 %v345, %v345
    %v362 = vpack.c.bf16 %v346, %v346
    %v363 = vpack.c.bf16 %v347, %v347
    %v364 = vpack.c.bf16 %v348, %v348
    %v365 = vpack.c.bf16 %v349, %v349
    %v366 = vpack.c.bf16 %v350, %v350
    %vm367 = vcmask 257024
    %368 = vst.msk [vmem:[%s4] sm:$0xf] %vm367, %v351
    %369 = vst.msk [vmem:[%s4 + $0x4] sm:$0xf] %vm367, %v352
    %370 = vst.msk [vmem:[%s4 + $0x8] sm:$0xf] %vm367, %v353
    %371 = vst.msk [vmem:[%s4 + $0xc] sm:$0xf] %vm367, %v354
    %372 = vst.msk [vmem:[%s4 + $0x10] sm:$0xf] %vm367, %v355
    %373 = vst.msk [vmem:[%s4 + $0x14] sm:$0xf] %vm367, %v356
    %374 = vst.msk [vmem:[%s4 + $0x18] sm:$0xf] %vm367, %v357
    %375 = vst.msk [vmem:[%s4 + $0x1c] sm:$0xf] %vm367, %v358
    %376 = vst.msk [vmem:[%s4 + $0x20] sm:$0xf] %vm367, %v359
    %377 = vst.msk [vmem:[%s4 + $0x24] sm:$0xf] %vm367, %v360
    %378 = vst.msk [vmem:[%s4 + $0x28] sm:$0xf] %vm367, %v361
    %379 = vst.msk [vmem:[%s4 + $0x2c] sm:$0xf] %vm367, %v362
    %380 = vst.msk [vmem:[%s4 + $0x30] sm:$0xf] %vm367, %v363
    %381 = vst.msk [vmem:[%s4 + $0x34] sm:$0xf] %vm367, %v364
    %382 = vst.msk [vmem:[%s4 + $0x38] sm:$0xf] %vm367, %v365
    %383 = vst.msk [vmem:[%s4 + $0x3c] sm:$0xf] %vm367, %v366
  $region25: #{long_term_stage.25} parent=0 // pred_fallthru
    _
  // Predicated region
  $region26: #{long_term_stage.25} parent=0 // pred_check
    _
  $region27: #{long_term_stage.25} parent=0 // pred_check_branch
    %385 = sbr.rel (0) target = $region29
  $region28: #{long_term_stage.25} parent=0 // pred_region
    _
  $region29: #{long_term_stage.25} parent=0 // pred_fallthru
    _
  // Predicated region
  $region30: #{long_term_stage.25} parent=0 // pred_check
    _
  $region31: #{long_term_stage.25} parent=0 // pred_check_branch
    %387 = sbr.rel (0) target = $region33
  $region32: #{long_term_stage.25} parent=0 // pred_region
    _
  $region33: #{long_term_stage.25} parent=0 // pred_fallthru
    _

// kernel: long_term_stage.31
$region0: #{long_term_stage.31}
  #allocation0 [shape = 'u32[]', space=smem, size = 0x4, offset = 0x4, fixed_abs, tag = 'smem constant byte address 0x4 - core index']
  #allocation1 [shape = 'u32[72,128]{1,0:T(1,128)}', space=vmem, size = 0x9000, scoped, tag = 'internal scratch']
  #allocation2 [shape = 'f32[32,64]{1,0:T(8,128)}', space=vmem, size = 0x4000, scoped, tag = 'scratch operand']
  %s0 = inlined_call_operand.vmem [shape: bf16[32,128], index: 0, kind: input, shape index: {}]
  %s1 = inlined_call_operand.vmem [shape: bf16[128,64], index: 1, kind: input, shape index: {}]
  %s2 = inlined_call_operand.vmem [shape: f32[1,64], index: 2, kind: input, shape index: {}]
  %s3 = inlined_call_operand.vmem [shape: f32[1,128], index: 3, kind: input, shape index: {}]
  %s4 = inlined_call_operand.vmem [shape: f32[1,128], index: 4, kind: input, shape index: {}]
  %s5 = inlined_call_operand.vmem [shape: bf16[32,64], index: 5, kind: output, shape index: {}]
  %s6 = sld [smem:[#allocation0]]
  $region38: #{long_term_stage.31} parent=0
    _
  %s8 = ssub.s32 1, %s6
  %s9 = scalar_select 0, %s8, %s6
  // Predicated region
  $region2: #{long_term_stage.31} parent=0 // pred_check
    _
  $region3: #{long_term_stage.31} parent=0 // pred_check_branch
    %11 = sbr.rel (0) target = $region5
  $region4: #{long_term_stage.31} parent=0 // pred_region
    _
  $region5: #{long_term_stage.31} parent=0 // pred_fallthru
    _
  // Predicated region
  $region6: #{long_term_stage.31} parent=0 // pred_check
    _
  $region7: #{long_term_stage.31} parent=0 // pred_check_branch
    %13 = sbr.rel (0) target = $region9
  $region8: #{long_term_stage.31} parent=0 // pred_region
    _
  $region9: #{long_term_stage.31} parent=0 // pred_fallthru
    _
  // Predicated region
  $region10: #{long_term_stage.31} parent=0 // pred_check
    _
  $region11: #{long_term_stage.31} parent=0 // pred_check_branch
    %15 = sbr.rel (0) target = $region13
  $region12: #{long_term_stage.31} parent=0 // pred_region
    _
  $region13: #{long_term_stage.31} parent=0 // pred_fallthru
    _
  // Predicated region
  $region14: #{long_term_stage.31} parent=0 // pred_check
    _
  $region15: #{long_term_stage.31} parent=0 // pred_check_branch
    %17 = sbr.rel (0) target = $region17
  $region16: #{long_term_stage.31} parent=0 // pred_region
    _
  $region17: #{long_term_stage.31} parent=0 // pred_fallthru
    _
  // Predicated region
  $region18: #{long_term_stage.31} parent=0 // pred_check
    _
  $region19: #{long_term_stage.31} parent=0 // pred_check_branch
    %19 = sbr.rel (0) target = $region21
  $region20: #{long_term_stage.31} parent=0 // pred_region
    _
  $region21: #{long_term_stage.31} parent=0 // pred_fallthru
    _
  %p20 = scmp.eq.s32.totalorder 0, 0
  // Predicated region
  $region22: #{long_term_stage.31} parent=0 // pred_check
    %p21 = pneg %p20
  $region23: #{long_term_stage.31} parent=0 // pred_check_branch
    %23 = sbr.rel (%p21) target = $region25
  $region24: #{long_term_stage.31} parent=0 // pred_region
    %vm24 = vcmask 523264
    %25 = vst.msk [vmem:[#allocation2] sm:$0xff] %vm24, 0.0
    %26 = vst.msk [vmem:[#allocation2 + $0x8] sm:$0xff] %vm24, 0.0
    %27 = vst.msk [vmem:[#allocation2 + $0x10] sm:$0xff] %vm24, 0.0
    %28 = vst.msk [vmem:[#allocation2 + $0x18] sm:$0xff] %vm24, 0.0
  $region25: #{long_term_stage.31} parent=0 // pred_fallthru
    _
  %v29 = vld [vmem:[%s0] sm:$0xf]
  %v30 = vld [vmem:[%s0 + $0x4] sm:$0xf]
  %v31 = vld [vmem:[%s0 + $0x8] sm:$0xf]
  %v32 = vld [vmem:[%s0 + $0xc] sm:$0xf]
  %v33 = vunpack.c.l.bf16 %v29
  %v34 = vunpack.c.l.bf16 %v30
  %v35 = vunpack.c.l.bf16 %v31
  %v36 = vunpack.c.l.bf16 %v32
  %37 = vadd.xlane.f32.xlu0 %v33
  %v38 = vpop.xlane.xlu0 %37
  %39 = vadd.xlane.f32.xlu0 %v34
  %v40 = vpop.xlane.xlu0 %39
  %41 = vadd.xlane.f32.xlu0 %v35
  %v42 = vpop.xlane.xlu0 %41
  %43 = vadd.xlane.f32.xlu0 %v36
  %v44 = vpop.xlane.xlu0 %43
  %v45 = vrcp.pop 128.0
  %v46 = vmul.f32 128.0, %v45
  %v47 = vsub.f32 1.0, %v46
  %v48 = vmul.f32 %v45, %v47
  %v49 = vadd.f32 %v45, %v48
  %vm50 = vweird.f32 %v45
  %v51 = vsel %vm50, %v45, %v49
  %v52 = vmul.f32 %v38, %v51
  %v53 = vmul.f32 %v40, %v51
  %v54 = vmul.f32 %v42, %v51
  %v55 = vmul.f32 %v44, %v51
  %v56 = vsub.f32 %v33, %v52
  %v57 = vsub.f32 %v34, %v53
  %v58 = vsub.f32 %v35, %v54
  %v59 = vsub.f32 %v36, %v55
  %v60 = vmul.f32 %v56, %v56
  %v61 = vmul.f32 %v57, %v57
  %v62 = vmul.f32 %v58, %v58
  %v63 = vmul.f32 %v59, %v59
  %64 = vadd.xlane.f32.xlu0 %v60
  %v65 = vpop.xlane.xlu0 %64
  %66 = vadd.xlane.f32.xlu0 %v61
  %v67 = vpop.xlane.xlu0 %66
  %68 = vadd.xlane.f32.xlu0 %v62
  %v69 = vpop.xlane.xlu0 %68
  %70 = vadd.xlane.f32.xlu0 %v63
  %v71 = vpop.xlane.xlu0 %70
  %v72 = vmul.f32 %v65, %v51
  %v73 = vmul.f32 %v67, %v51
  %v74 = vmul.f32 %v69, %v51
  %v75 = vmul.f32 %v71, %v51
  %v76 = vadd.f32 %v72, 1e-05
  %v77 = vadd.f32 %v73, 1e-05
  %v78 = vadd.f32 %v74, 1e-05
  %v79 = vadd.f32 %v75, 1e-05
  %v80 = vrsqrt.pop %v76
  %v81 = vmul.f32 %v80, %v76
  %v82 = vmul.f32 %v81, %v80
  %v83 = vmul.f32 0.5, %v82
  %v84 = vsub.f32 1.5, %v83
  %v85 = vmul.f32 %v80, %v84
  %vm86 = vweird.f32 %v76
  %vm87 = vweird.f32 %v80
  %vm88 = vmor %vm86, %vm87
  %v89 = vsel %vm88, %v80, %v85
  %v90 = vrsqrt.pop %v77
  %v91 = vmul.f32 %v90, %v77
  %v92 = vmul.f32 %v91, %v90
  %v93 = vmul.f32 0.5, %v92
  %v94 = vsub.f32 1.5, %v93
  %v95 = vmul.f32 %v90, %v94
  %vm96 = vweird.f32 %v77
  %vm97 = vweird.f32 %v90
  %vm98 = vmor %vm96, %vm97
  %v99 = vsel %vm98, %v90, %v95
  %v100 = vrsqrt.pop %v78
  %v101 = vmul.f32 %v100, %v78
  %v102 = vmul.f32 %v101, %v100
  %v103 = vmul.f32 0.5, %v102
  %v104 = vsub.f32 1.5, %v103
  %v105 = vmul.f32 %v100, %v104
  %vm106 = vweird.f32 %v78
  %vm107 = vweird.f32 %v100
  %vm108 = vmor %vm106, %vm107
  %v109 = vsel %vm108, %v100, %v105
  %v110 = vrsqrt.pop %v79
  %v111 = vmul.f32 %v110, %v79
  %v112 = vmul.f32 %v111, %v110
  %v113 = vmul.f32 0.5, %v112
  %v114 = vsub.f32 1.5, %v113
  %v115 = vmul.f32 %v110, %v114
  %vm116 = vweird.f32 %v79
  %vm117 = vweird.f32 %v110
  %vm118 = vmor %vm116, %vm117
  %v119 = vsel %vm118, %v110, %v115
  %v120 = vmul.f32 %v56, %v89
  %v121 = vmul.f32 %v57, %v99
  %v122 = vmul.f32 %v58, %v109
  %v123 = vmul.f32 %v59, %v119
  %v124 = vld [vmem:[%s3] sm:$0x1]
  %v126 = vperm.slane %v124, 0
  %v128 = vmul.f32 %v120, %v126
  %v129 = vmul.f32 %v121, %v126
  %v130 = vmul.f32 %v122, %v126
  %v131 = vmul.f32 %v123, %v126
  %v132 = vld [vmem:[%s4] sm:$0x1]
  %v134 = vperm.slane %v132, 0
  %v136 = vadd.f32 %v128, %v134
  %v137 = vadd.f32 %v129, %v134
  %v138 = vadd.f32 %v130, %v134
  %v139 = vadd.f32 %v131, %v134
  %v140 = vpack.c.bf16 %v137, %v136
  %v141 = vpack.c.bf16 %v139, %v138
  %v142 = vld [vmem:[#allocation2] sm:$0xff]
  %v143 = vld [vmem:[#allocation2 + $0x8] sm:$0xff]
  %v144 = vld [vmem:[#allocation2 + $0x10] sm:$0xff]
  %v145 = vld [vmem:[#allocation2 + $0x18] sm:$0xff]
  %v146 = vld [vmem:[%s1] sm:$0xf]
  %v147 = vld [vmem:[%s1 + $0x4] sm:$0xf]
  %v148 = vld [vmem:[%s1 + $0x8] sm:$0xf]
  %v149 = vld [vmem:[%s1 + $0xc] sm:$0xf]
  %v150 = vld [vmem:[%s1 + $0x10] sm:$0xf]
  %v151 = vld [vmem:[%s1 + $0x14] sm:$0xf]
  %v152 = vld [vmem:[%s1 + $0x18] sm:$0xf]
  %v153 = vld [vmem:[%s1 + $0x1c] sm:$0xf]
  %v154 = vld [vmem:[%s1 + $0x20] sm:$0xf]
  %v155 = vld [vmem:[%s1 + $0x24] sm:$0xf]
  %v156 = vld [vmem:[%s1 + $0x28] sm:$0xf]
  %v157 = vld [vmem:[%s1 + $0x2c] sm:$0xf]
  %v158 = vld [vmem:[%s1 + $0x30] sm:$0xf]
  %v159 = vld [vmem:[%s1 + $0x34] sm:$0xf]
  %v160 = vld [vmem:[%s1 + $0x38] sm:$0xf]
  %v161 = vld [vmem:[%s1 + $0x3c] sm:$0xf]
  %v178 = vunpack.c.l.b16 %v146
  %v179 = vunpack.c.l.b16 %v147
  %v180 = vunpack.c.l.b16 %v148
  %v181 = vunpack.c.l.b16 %v149
  %v182 = vunpack.c.l.b16 %v150
  %v183 = vunpack.c.l.b16 %v151
  %v184 = vunpack.c.l.b16 %v152
  %v185 = vunpack.c.l.b16 %v153
  %v186 = vunpack.c.l.b16 %v154
  %v187 = vunpack.c.l.b16 %v155
  %v188 = vunpack.c.l.b16 %v156
  %v189 = vunpack.c.l.b16 %v157
  %v190 = vunpack.c.l.b16 %v158
  %v191 = vunpack.c.l.b16 %v159
  %v192 = vunpack.c.l.b16 %v160
  %v193 = vunpack.c.l.b16 %v161
  %v194 = vpack.c.b16 %v179, %v178
  %v195 = vpack.c.b16 %v181, %v180
  %v196 = vpack.c.b16 %v183, %v182
  %v197 = vpack.c.b16 %v185, %v184
  %v198 = vpack.c.b16 %v187, %v186
  %v199 = vpack.c.b16 %v189, %v188
  %v200 = vpack.c.b16 %v191, %v190
  %v201 = vpack.c.b16 %v193, %v192
  %210 = vmatpush.bf16.msra.mxu0 %v201
  %211 = vmatpush.bf16.msra.mxu0 %v200
  %212 = vmatpush.bf16.msra.mxu0 %v199
  %213 = vmatpush.bf16.msra.mxu0 %v198
  %214 = vmatpush.bf16.msra.mxu0 %v197
  %215 = vmatpush.bf16.msra.mxu0 %v196
  %216 = vmatpush.bf16.msra.mxu0 %v195
  %217 = vmatpush.bf16.msra.mxu0 %v194
  %218 = vmatmul.bf16.gmra.mxu0 %v140
  %v219 = vpop.f32.mrf.mxu0
  %v220 = vadd.f32 0.0, %v219
  %v221 = vpop.f32.mrf.mxu0
  %v222 = vadd.f32 0.0, %v221
  %223 = vmatmul.bf16.gmra.mxu0 %v141
  %v224 = vpop.f32.mrf.mxu0
  %v225 = vadd.f32 0.0, %v224
  %v226 = vpop.f32.mrf.mxu0
  %v227 = vadd.f32 0.0, %v226
  %228 = vdwg.mxu0
  %v229 = vadd.f32 %v142, %v220
  %v230 = vadd.f32 %v143, %v222
  %v231 = vadd.f32 %v144, %v225
  %v232 = vadd.f32 %v145, %v227
  %vm233 = vcmask 523264
  %234 = vst.msk [vmem:[#allocation2] sm:$0xff] %vm233, %v229
  %235 = vst.msk [vmem:[#allocation2 + $0x8] sm:$0xff] %vm233, %v230
  %236 = vst.msk [vmem:[#allocation2 + $0x10] sm:$0xff] %vm233, %v231
  %237 = vst.msk [vmem:[#allocation2 + $0x18] sm:$0xff] %vm233, %v232
  // Predicated region
  $region26: #{long_term_stage.31} parent=0 // pred_check
    %p238 = pneg %p20
  $region27: #{long_term_stage.31} parent=0 // pred_check_branch
    %240 = sbr.rel (%p238) target = $region29
  $region28: #{long_term_stage.31} parent=0 // pred_region
    %v241 = vld [vmem:[#allocation2] sm:$0xff]
    %v242 = vld [vmem:[#allocation2 + $0x8] sm:$0xff]
    %v243 = vld [vmem:[#allocation2 + $0x10] sm:$0xff]
    %v244 = vld [vmem:[#allocation2 + $0x18] sm:$0xff]
    %v245 = vld [vmem:[%s2] sm:$0x1]
    %v247 = vperm.slane %v245, 0
    %v249 = vadd.f32 %v241, %v247
    %v250 = vadd.f32 %v242, %v247
    %v251 = vadd.f32 %v243, %v247
    %v252 = vadd.f32 %v244, %v247
    %v253 = vpack.c.bf16 %v249, %v249
    %v254 = vpack.c.bf16 %v250, %v250
    %v255 = vpack.c.bf16 %v251, %v251
    %v256 = vpack.c.bf16 %v252, %v252
    %vm257 = vcmask 519168
    %258 = vst.msk [vmem:[%s5] sm:$0xf] %vm257, %v253
    %259 = vst.msk [vmem:[%s5 + $0x4] sm:$0xf] %vm257, %v254
    %260 = vst.msk [vmem:[%s5 + $0x8] sm:$0xf] %vm257, %v255
    %261 = vst.msk [vmem:[%s5 + $0xc] sm:$0xf] %vm257, %v256
  $region29: #{long_term_stage.31} parent=0 // pred_fallthru
    _
  // Predicated region
  $region30: #{long_term_stage.31} parent=0 // pred_check
    _
  $region31: #{long_term_stage.31} parent=0 // pred_check_branch
    %263 = sbr.rel (0) target = $region33
  $region32: #{long_term_stage.31} parent=0 // pred_region
    _
  $region33: #{long_term_stage.31} parent=0 // pred_fallthru
    _
  // Predicated region
  $region34: #{long_term_stage.31} parent=0 // pred_check
    _
  $region35: #{long_term_stage.31} parent=0 // pred_check_branch
    %265 = sbr.rel (0) target = $region37
  $region36: #{long_term_stage.31} parent=0 // pred_region
    _
  $region37: #{long_term_stage.31} parent=0 // pred_fallthru
    _

// kernel: long_term_stage.27
$region0: #{long_term_stage.27}
  #allocation0 [shape = 'u32[]', space=smem, size = 0x4, offset = 0x4, fixed_abs, tag = 'smem constant byte address 0x4 - core index']
  #allocation1 [shape = 'u32[72,128]{1,0:T(1,128)}', space=vmem, size = 0x9000, scoped, tag = 'internal scratch']
  %s0 = inlined_call_operand.vmem [shape: bf16[8,16,96], index: 0, kind: input, shape index: {}]
  %s1 = inlined_call_operand.vmem [shape: f32[4,16,16], index: 1, kind: input, shape index: {}]
  %s2 = inlined_call_operand.vmem [shape: f32[4,16,16], index: 2, kind: input, shape index: {}]
  %s3 = inlined_call_operand.vmem [shape: bf16[8,16,32], index: 3, kind: output, shape index: {}]
  %s4 = sld [smem:[#allocation0]]
  $region45: #{long_term_stage.27} parent=0
    _
  %s6 = ssub.s32 1, %s4
  %s7 = scalar_select 0, %s6, %s4
  loop: start=0, step=1, limit=4
  $region2: #{long_term_stage.27} parent=0 // loop_pre_header
    _
  $region3: #{long_term_stage.27} parent=0 // loop_header
    %s9 = sphi 0, %s13
    %p10 = scmp.ge.s32.totalorder %s9, 4
    %s19 = sphi 0, %s21
    %s22 = sphi 0, %s19
    %s23 = sphi 0, %s22
    %s39 = sphi 0, %s23
    %s43 = sphi 0, %s43
    %s45 = sphi 0, %s43
    %s46 = sphi 0, %s45
    %s60 = sphi 0, %s46
    %s64 = sphi 0, %s64
    %s66 = sphi 0, %s64
    %s67 = sphi 0, %s66
    %s81 = sphi 0, %s67
    %s87 = sphi 0, %s89
    %s90 = sphi 0, %s87
    %s91 = sphi 0, %s90
    %s107 = sphi 0, %s91
  $region4: #{long_term_stage.27} parent=0 // loop_header_branch
    %12 = sbr.rel (%p10) target = $region8
  $region5: #{long_term_stage.27} parent=0 // loop_body
    %s14 = ssub.s32 %s9, 1
    %s15 = ssub.s32 %s9, 2
    %s16 = sadd.s32 %s9, 1
    %s17 = ssub.s32 %s9, %s16
    %p18 = scmp.eq.s32.totalorder %s17, 0
    %s20 = sadd.s32 %s19, 1
    %s21 = scalar_select %p18, %s19, %s20
    %p24 = pneg %p18
    %p25 = scmp.eq.s32.totalorder %s9, 1
    %p26 = por %p24, %p25
    %p27 = scmp.ne.s32.totalorder %s19, %s22
    %p28 = scmp.eq.s32.totalorder %s9, 0
    %p29 = por %p27, %p28
    %p30 = scmp.ne.s32.totalorder %s19, %s22
    %p31 = scmp.eq.s32.totalorder %s14, 1
    %p32 = por %p30, %p31
    %p33 = scmp.ne.s32.totalorder %s22, %s23
    %p34 = scmp.eq.s32.totalorder %s14, 0
    %p35 = por %p33, %p34
    %p36 = scmp.ne.s32.totalorder %s22, %s23
    %p37 = scmp.eq.s32.totalorder %s15, 1
    %p38 = por %p36, %p37
    %p40 = scmp.ne.s32.totalorder %s23, %s39
    %p41 = scmp.eq.s32.totalorder %s15, 0
    %p42 = por %p40, %p41
    %s44 = sadd.s32 %s43, 1
    %p47 = scmp.eq.s32.totalorder %s9, 1
    %p48 = scmp.ne.s32.totalorder %s43, %s45
    %p49 = scmp.eq.s32.totalorder %s9, 0
    %p50 = por %p48, %p49
    %p51 = scmp.ne.s32.totalorder %s43, %s45
    %p52 = scmp.eq.s32.totalorder %s14, 1
    %p53 = por %p51, %p52
    %p54 = scmp.ne.s32.totalorder %s45, %s46
    %p55 = scmp.eq.s32.totalorder %s14, 0
    %p56 = por %p54, %p55
    %p57 = scmp.ne.s32.totalorder %s45, %s46
    %p58 = scmp.eq.s32.totalorder %s15, 1
    %p59 = por %p57, %p58
    %p61 = scmp.ne.s32.totalorder %s46, %s60
    %p62 = scmp.eq.s32.totalorder %s15, 0
    %p63 = por %p61, %p62
    %s65 = sadd.s32 %s64, 1
    %p68 = scmp.eq.s32.totalorder %s9, 1
    %p69 = scmp.ne.s32.totalorder %s64, %s66
    %p70 = scmp.eq.s32.totalorder %s9, 0
    %p71 = por %p69, %p70
    %p72 = scmp.ne.s32.totalorder %s64, %s66
    %p73 = scmp.eq.s32.totalorder %s14, 1
    %p74 = por %p72, %p73
    %p75 = scmp.ne.s32.totalorder %s66, %s67
    %p76 = scmp.eq.s32.totalorder %s14, 0
    %p77 = por %p75, %p76
    %p78 = scmp.ne.s32.totalorder %s66, %s67
    %p79 = scmp.eq.s32.totalorder %s15, 1
    %p80 = por %p78, %p79
    %p82 = scmp.ne.s32.totalorder %s67, %s81
    %p83 = scmp.eq.s32.totalorder %s15, 0
    %p84 = por %p82, %p83
    %s85 = ssub.s32 %s9, %s16
    %p86 = scmp.eq.s32.totalorder %s85, 0
    %s88 = sadd.s32 %s87, 1
    %s89 = scalar_select %p86, %s87, %s88
    %p92 = pneg %p86
    %p93 = scmp.eq.s32.totalorder %s9, 1
    %p94 = por %p92, %p93
    %p95 = scmp.ne.s32.totalorder %s87, %s90
    %p96 = scmp.eq.s32.totalorder %s9, 0
    %p97 = por %p95, %p96
    %p98 = scmp.ne.s32.totalorder %s87, %s90
    %p99 = scmp.eq.s32.totalorder %s14, 1
    %p100 = por %p98, %p99
    %p101 = scmp.ne.s32.totalorder %s90, %s91
    %p102 = scmp.eq.s32.totalorder %s14, 0
    %p103 = por %p101, %p102
    %p104 = scmp.ne.s32.totalorder %s90, %s91
    %p105 = scmp.eq.s32.totalorder %s15, 1
    %p106 = por %p104, %p105
    %p108 = scmp.ne.s32.totalorder %s91, %s107
    %p109 = scmp.eq.s32.totalorder %s15, 0
    %p110 = por %p108, %p109
    %p111 = scmp.le.s32.totalorder 1, %s9
    %p112 = scmp.lt.s32.totalorder %s9, 3
    %p113 = pnand %p111, %p112
    %p114 = pneg %p113
    // Predicated region
    $region9: #{long_term_stage.27} parent=5 // pred_check
      _
    $region10: #{long_term_stage.27} parent=5 // pred_check_branch
      %116 = sbr.rel (%p113) target = $region12
    $region11: #{long_term_stage.27} parent=5 // pred_region
      %s117 = ssub.s32 %s9, 1
      // Predicated region
      $region13: #{long_term_stage.27} parent=11 // pred_check
        %p118 = pneg %p56
      $region14: #{long_term_stage.27} parent=11 // pred_check_branch
        %120 = sbr.rel (%p118) target = $region16
      $region15: #{long_term_stage.27} parent=11 // pred_region
        _
      $region16: #{long_term_stage.27} parent=11 // pred_fallthru
        _
      // Predicated region
      $region17: #{long_term_stage.27} parent=11 // pred_check
        %p121 = pneg %p77
      $region18: #{long_term_stage.27} parent=11 // pred_check_branch
        %123 = sbr.rel (%p121) target = $region20
      $region19: #{long_term_stage.27} parent=11 // pred_region
        _
      $region20: #{long_term_stage.27} parent=11 // pred_fallthru
        _
    $region12: #{long_term_stage.27} parent=5 // pred_fallthru
      _
    %p124 = scmp.lt.s32.totalorder %s9, 2
    // Predicated region
    $region21: #{long_term_stage.27} parent=5 // pred_check
      %p125 = pneg %p124
    $region22: #{long_term_stage.27} parent=5 // pred_check_branch
      %127 = sbr.rel (%p125) target = $region24
    $region23: #{long_term_stage.27} parent=5 // pred_region
      // Predicated region
      $region25: #{long_term_stage.27} parent=23 // pred_check
        %p128 = pneg %p29
      $region26: #{long_term_stage.27} parent=23 // pred_check_branch
        %130 = sbr.rel (%p128) target = $region28
      $region27: #{long_term_stage.27} parent=23 // pred_region
        %s131 = smul.u32 4, %s9
        %p132 = scmp.lt.s32.totalorder %s131, 7
        %s133 = scalar_select %p132, %s131, 7
        %s134 = smul.addr %s133, 2
        %s135 = smul.addr %s134, 4
        %s136 = scalar_lea.vmem %s0, %s135
        %s137 = smul.u32 4, %s9
      $region28: #{long_term_stage.27} parent=23 // pred_fallthru
        _
    $region24: #{long_term_stage.27} parent=5 // pred_fallthru
      _
    %p138 = scmp.le.s32.totalorder 1, %s9
    %p139 = scmp.lt.s32.totalorder %s9, 3
    %p140 = pnand %p138, %p139
    %p141 = pneg %p140
    // Predicated region
    $region29: #{long_term_stage.27} parent=5 // pred_check
      _
    $region30: #{long_term_stage.27} parent=5 // pred_check_branch
      %143 = sbr.rel (%p140) target = $region32
    $region31: #{long_term_stage.27} parent=5 // pred_region
      %s144 = ssub.s32 %s9, 1
      %s145 = smul.u32 4, %s14
      %p146 = scmp.lt.s32.totalorder %s145, 7
      %s147 = scalar_select %p146, %s145, 7
      %s148 = smul.addr %s147, 2
      %s149 = smul.addr %s148, 4
      %s150 = scalar_lea.vmem %s0, %s149
      %p151 = pneg %p35
      %p152 = pneg %p32
      %p153 = pneg %p56
      %p154 = pneg %p53
      %p155 = pneg %p77
      %p156 = pneg %p74
      %p157 = pneg %p103
      %p158 = pneg %p100
      %s159 = smul.u32 4, %s14
      %p160 = scmp.lt.s32.totalorder %s159, 7
      %s161 = scalar_select %p160, %s159, 7
      %s162 = smul.addr %s161, 2
      %s163 = smul.addr %s162, 4
      %s164 = scalar_lea.vmem %s3, %s163
      %s165 = smul.u32 4, %s14
      %p166 = scmp.lt.s32.totalorder %s165, 7
      %s167 = scalar_select %p166, %s165, 7
      %s168 = smul.addr %s167, 2
      %s169 = smul.addr %s168, 4
      %s170 = scalar_lea.vmem %s0, %s169
      %s171 = smul.u32 4, %s14
      %s172 = smul.u32 4, %s14
      %p173 = scmp.lt.s32.totalorder %s172, 7
      %s174 = scalar_select %p173, %s172, 7
      %s175 = smul.addr %s174, 2
      %s176 = smul.addr %s175, 4
      %s177 = scalar_lea.vmem %s3, %s176
      %s178 = smul.u32 4, %s14
      %v180 = vld [vmem:[%s2] sm:$0xff]
      %v181 = vld [vmem:[%s2 + $0x8] sm:$0xff]
      %v182 = vld [vmem:[%s2 + $0x10] sm:$0xff]
      %v183 = vld [vmem:[%s2 + $0x18] sm:$0xff]
      %v184 = vld [vmem:[%s2 + $0x20] sm:$0xff]
      %v185 = vld [vmem:[%s2 + $0x28] sm:$0xff]
      %v186 = vld [vmem:[%s2 + $0x30] sm:$0xff]
      %v187 = vld [vmem:[%s2 + $0x38] sm:$0xff]
      %v188 = vld [vmem:[%s170] sm:$0xf]
      %v189 = vld [vmem:[%s170 + $0x4] sm:$0xf]
      %v190 = vld [vmem:[%s170 + $0x8] sm:$0xf]
      %v191 = vld [vmem:[%s170 + $0xc] sm:$0xf]
      %v192 = vld [vmem:[%s170 + $0x10] sm:$0xf]
      %v193 = vld [vmem:[%s170 + $0x14] sm:$0xf]
      %v194 = vld [vmem:[%s170 + $0x18] sm:$0xf]
      %v195 = vld [vmem:[%s170 + $0x1c] sm:$0xf]
      %v198 = vunpack.c.l.b16 %v188
      %v199 = vunpack.c.l.b16 %v189
      %v200 = vpack.c.b16 %v199, %v198
      %201 = vrot.lane.b32.xlu0 %v200, 96
      %v202 = vpop.permute.xlu0 %201
      %vm203 = vcmask 64512
      %v205 = vsel %vm203, %v200, 0
      %v208 = vsel %vm203, %v202, 0
      %210 = vmatpush.bf16.xpose.msra.mxu0 0
      %211 = vmatpush.bf16.xpose.msra.mxu0 0
      %212 = vmatpush.bf16.xpose.msra.mxu0 0
      %213 = vmatpush.bf16.xpose.msra.mxu0 0
      %214 = vmatpush.bf16.xpose.msra.mxu0 0
      %215 = vmatpush.bf16.xpose.msra.mxu0 0
      %216 = vmatpush.bf16.xpose.msra.mxu0 0
      %217 = vmatpush.bf16.xpose.msra.mxu0 %v208
      %218 = vmatmul.bf16.gmra.mxu0 %v205
      %v219 = vpop.f32.mrf.mxu0
      %v220 = vadd.f32 0.0, %v219
      %v221 = vpop.f32.mrf.mxu0
      %v222 = vadd.f32 0.0, %v221
      %223 = vdwg.mxu0
      %v226 = vunpack.c.l.b16 %v190
      %v227 = vunpack.c.l.b16 %v191
      %v228 = vpack.c.b16 %v227, %v226
      %229 = vrot.lane.b32.xlu0 %v228, 96
      %v230 = vpop.permute.xlu0 %229
      %v232 = vsel %vm203, %v228, 0
      %v235 = vsel %vm203, %v230, 0
      %237 = vmatpush.bf16.xpose.msra.mxu0 0
      %238 = vmatpush.bf16.xpose.msra.mxu0 0
      %239 = vmatpush.bf16.xpose.msra.mxu0 0
      %240 = vmatpush.bf16.xpose.msra.mxu0 0
      %241 = vmatpush.bf16.xpose.msra.mxu0 0
      %242 = vmatpush.bf16.xpose.msra.mxu0 0
      %243 = vmatpush.bf16.xpose.msra.mxu0 0
      %244 = vmatpush.bf16.xpose.msra.mxu0 %v235
      %245 = vmatmul.bf16.gmra.mxu0 %v232
      %v246 = vpop.f32.mrf.mxu0
      %v247 = vadd.f32 0.0, %v246
      %v248 = vpop.f32.mrf.mxu0
      %v249 = vadd.f32 0.0, %v248
      %250 = vdwg.mxu0
      %v253 = vunpack.c.l.b16 %v192
      %v254 = vunpack.c.l.b16 %v193
      %v255 = vpack.c.b16 %v254, %v253
      %256 = vrot.lane.b32.xlu0 %v255, 96
      %v257 = vpop.permute.xlu0 %256
      %v259 = vsel %vm203, %v255, 0
      %v262 = vsel %vm203, %v257, 0
      %264 = vmatpush.bf16.xpose.msra.mxu0 0
      %265 = vmatpush.bf16.xpose.msra.mxu0 0
      %266 = vmatpush.bf16.xpose.msra.mxu0 0
      %267 = vmatpush.bf16.xpose.msra.mxu0 0
      %268 = vmatpush.bf16.xpose.msra.mxu0 0
      %269 = vmatpush.bf16.xpose.msra.mxu0 0
      %270 = vmatpush.bf16.xpose.msra.mxu0 0
      %271 = vmatpush.bf16.xpose.msra.mxu0 %v262
      %272 = vmatmul.bf16.gmra.mxu0 %v259
      %v273 = vpop.f32.mrf.mxu0
      %v274 = vadd.f32 0.0, %v273
      %v275 = vpop.f32.mrf.mxu0
      %v276 = vadd.f32 0.0, %v275
      %277 = vdwg.mxu0
      %v280 = vunpack.c.l.b16 %v194
      %v281 = vunpack.c.l.b16 %v195
      %v282 = vpack.c.b16 %v281, %v280
      %283 = vrot.lane.b32.xlu0 %v282, 96
      %v284 = vpop.permute.xlu0 %283
      %v286 = vsel %vm203, %v282, 0
      %v289 = vsel %vm203, %v284, 0
      %291 = vmatpush.bf16.xpose.msra.mxu0 0
      %292 = vmatpush.bf16.xpose.msra.mxu0 0
      %293 = vmatpush.bf16.xpose.msra.mxu0 0
      %294 = vmatpush.bf16.xpose.msra.mxu0 0
      %295 = vmatpush.bf16.xpose.msra.mxu0 0
      %296 = vmatpush.bf16.xpose.msra.mxu0 0
      %297 = vmatpush.bf16.xpose.msra.mxu0 0
      %298 = vmatpush.bf16.xpose.msra.mxu0 %v289
      %299 = vmatmul.bf16.gmra.mxu0 %v286
      %v300 = vpop.f32.mrf.mxu0
      %v301 = vadd.f32 0.0, %v300
      %v302 = vpop.f32.mrf.mxu0
      %v303 = vadd.f32 0.0, %v302
      %304 = vdwg.mxu0
      %v305 = vmul.f32 %v220, 0.35355338
      %v306 = vmul.f32 %v222, 0.35355338
      %v307 = vmul.f32 %v247, 0.35355338
      %v308 = vmul.f32 %v249, 0.35355338
      %v309 = vmul.f32 %v274, 0.35355338
      %v310 = vmul.f32 %v276, 0.35355338
      %v311 = vmul.f32 %v301, 0.35355338
      %v312 = vmul.f32 %v303, 0.35355338
      %v313 = vld [vmem:[%s1] sm:$0xff]
      %v314 = vld [vmem:[%s1 + $0x8] sm:$0xff]
      %v315 = vadd.f32 %v305, %v313
      %v316 = vadd.f32 %v306, %v314
      %v317 = vadd.f32 %v307, %v313
      %v318 = vadd.f32 %v308, %v314
      %v319 = vadd.f32 %v309, %v313
      %v320 = vadd.f32 %v310, %v314
      %v321 = vadd.f32 %v311, %v313
      %v322 = vadd.f32 %v312, %v314
      %v323 = vadd.f32 %v315, %v180
      %v324 = vadd.f32 %v316, %v181
      %v325 = vadd.f32 %v317, %v182
      %v326 = vadd.f32 %v318, %v183
      %v327 = vadd.f32 %v319, %v184
      %v328 = vadd.f32 %v320, %v185
      %v329 = vadd.f32 %v321, %v186
      %v330 = vadd.f32 %v322, %v187
      %vm331 = vcmask 130048
      %v332 = vsel %vm331, %v323, -inf
      %333 = vmax.xlane.f32.xlu0 %v332
      %v334 = vpop.xlane.xlu0 %333
      %v335 = vsel %vm331, %v324, -inf
      %336 = vmax.xlane.f32.xlu0 %v335
      %v337 = vpop.xlane.xlu0 %336
      %v338 = vsel %vm331, %v325, -inf
      %339 = vmax.xlane.f32.xlu0 %v338
      %v340 = vpop.xlane.xlu0 %339
      %v341 = vsel %vm331, %v326, -inf
      %342 = vmax.xlane.f32.xlu0 %v341
      %v343 = vpop.xlane.xlu0 %342
      %v344 = vsel %vm331, %v327, -inf
      %345 = vmax.xlane.f32.xlu0 %v344
      %v346 = vpop.xlane.xlu0 %345
      %v347 = vsel %vm331, %v328, -inf
      %348 = vmax.xlane.f32.xlu0 %v347
      %v349 = vpop.xlane.xlu0 %348
      %v350 = vsel %vm331, %v329, -inf
      %351 = vmax.xlane.f32.xlu0 %v350
      %v352 = vpop.xlane.xlu0 %351
      %v353 = vsel %vm331, %v330, -inf
      %354 = vmax.xlane.f32.xlu0 %v353
      %v355 = vpop.xlane.xlu0 %354
      %v356 = vsub.f32 %v323, %v334
      %v357 = vsub.f32 %v324, %v337
      %v358 = vsub.f32 %v325, %v340
      %v359 = vsub.f32 %v326, %v343
      %v360 = vsub.f32 %v327, %v346
      %v361 = vsub.f32 %v328, %v349
      %v362 = vsub.f32 %v329, %v352
      %v363 = vsub.f32 %v330, %v355
      %v364 = vmul.f32 %v356, 1.442695
      %v365 = vpow.pop %v364
      %v366 = vmul.f32 %v357, 1.442695
      %v367 = vpow.pop %v366
      %v368 = vmul.f32 %v358, 1.442695
      %v369 = vpow.pop %v368
      %v370 = vmul.f32 %v359, 1.442695
      %v371 = vpow.pop %v370
      %v372 = vmul.f32 %v360, 1.442695
      %v373 = vpow.pop %v372
      %v374 = vmul.f32 %v361, 1.442695
      %v375 = vpow.pop %v374
      %v376 = vmul.f32 %v362, 1.442695
      %v377 = vpow.pop %v376
      %v378 = vmul.f32 %v363, 1.442695
      %v379 = vpow.pop %v378
      %v380 = vsel %vm331, %v365, 0.0
      %381 = vadd.xlane.f32.xlu0 %v380
      %v382 = vpop.xlane.xlu0 %381
      %v383 = vsel %vm331, %v367, 0.0
      %384 = vadd.xlane.f32.xlu0 %v383
      %v385 = vpop.xlane.xlu0 %384
      %v386 = vsel %vm331, %v369, 0.0
      %387 = vadd.xlane.f32.xlu0 %v386
      %v388 = vpop.xlane.xlu0 %387
      %v389 = vsel %vm331, %v371, 0.0
      %390 = vadd.xlane.f32.xlu0 %v389
      %v391 = vpop.xlane.xlu0 %390
      %v392 = vsel %vm331, %v373, 0.0
      %393 = vadd.xlane.f32.xlu0 %v392
      %v394 = vpop.xlane.xlu0 %393
      %v395 = vsel %vm331, %v375, 0.0
      %396 = vadd.xlane.f32.xlu0 %v395
      %v397 = vpop.xlane.xlu0 %396
      %v398 = vsel %vm331, %v377, 0.0
      %399 = vadd.xlane.f32.xlu0 %v398
      %v400 = vpop.xlane.xlu0 %399
      %v401 = vsel %vm331, %v379, 0.0
      %402 = vadd.xlane.f32.xlu0 %v401
      %v403 = vpop.xlane.xlu0 %402
      %v404 = vrcp.pop %v382
      %v405 = vrcp.pop %v385
      %v406 = vrcp.pop %v388
      %v407 = vrcp.pop %v391
      %v408 = vrcp.pop %v394
      %v409 = vrcp.pop %v397
      %v410 = vrcp.pop %v400
      %v411 = vrcp.pop %v403
      %v412 = vmul.f32 %v365, %v404
      %v413 = vmul.f32 %v367, %v405
      %v414 = vmul.f32 %v369, %v406
      %v415 = vmul.f32 %v371, %v407
      %v416 = vmul.f32 %v373, %v408
      %v417 = vmul.f32 %v375, %v409
      %v418 = vmul.f32 %v377, %v410
      %v419 = vmul.f32 %v379, %v411
      %v420 = vpack.c.bf16 %v412, %v412
      %v421 = vpack.c.bf16 %v413, %v413
      %v422 = vpack.c.bf16 %v414, %v414
      %v423 = vpack.c.bf16 %v415, %v415
      %v424 = vpack.c.bf16 %v416, %v416
      %v425 = vpack.c.bf16 %v417, %v417
      %v426 = vpack.c.bf16 %v418, %v418
      %v427 = vpack.c.bf16 %v419, %v419
      %v430 = vunpack.c.l.b16 %v420
      %v431 = vunpack.c.l.b16 %v421
      %v432 = vpack.c.b16 %v431, %v430
      %433 = vrot.lane.b32.xlu0 %v200, 64
      %v434 = vpop.permute.xlu0 %433
      %v437 = vsel %vm331, %v432, 0
      %439 = vmatpush.bf16.msra.mxu0 0
      %440 = vmatpush.bf16.msra.mxu0 0
      %441 = vmatpush.bf16.msra.mxu0 0
      %442 = vmatpush.bf16.msra.mxu0 0
      %443 = vmatpush.bf16.msra.mxu0 0
      %444 = vmatpush.bf16.msra.mxu0 0
      %445 = vmatpush.bf16.msra.mxu0 0
      %446 = vmatpush.bf16.msra.mxu0 %v434
      %447 = vmatmul.bf16.gmra.mxu0 %v437
      %v448 = vpop.f32.mrf.mxu0
      %v449 = vadd.f32 0.0, %v448
      %v450 = vpop.f32.mrf.mxu0
      %v451 = vadd.f32 0.0, %v450
      %452 = vdwg.mxu0
      %v455 = vunpack.c.l.b16 %v422
      %v456 = vunpack.c.l.b16 %v423
      %v457 = vpack.c.b16 %v456, %v455
      %458 = vrot.lane.b32.xlu0 %v228, 64
      %v459 = vpop.permute.xlu0 %458
      %v462 = vsel %vm331, %v457, 0
      %464 = vmatpush.bf16.msra.mxu0 0
      %465 = vmatpush.bf16.msra.mxu0 0
      %466 = vmatpush.bf16.msra.mxu0 0
      %467 = vmatpush.bf16.msra.mxu0 0
      %468 = vmatpush.bf16.msra.mxu0 0
      %469 = vmatpush.bf16.msra.mxu0 0
      %470 = vmatpush.bf16.msra.mxu0 0
      %471 = vmatpush.bf16.msra.mxu0 %v459
      %472 = vmatmul.bf16.gmra.mxu0 %v462
      %v473 = vpop.f32.mrf.mxu0
      %v474 = vadd.f32 0.0, %v473
      %v475 = vpop.f32.mrf.mxu0
      %v476 = vadd.f32 0.0, %v475
      %477 = vdwg.mxu0
      %v480 = vunpack.c.l.b16 %v424
      %v481 = vunpack.c.l.b16 %v425
      %v482 = vpack.c.b16 %v481, %v480
      %483 = vrot.lane.b32.xlu0 %v255, 64
      %v484 = vpop.permute.xlu0 %483
      %v487 = vsel %vm331, %v482, 0
      %489 = vmatpush.bf16.msra.mxu0 0
      %490 = vmatpush.bf16.msra.mxu0 0
      %491 = vmatpush.bf16.msra.mxu0 0
      %492 = vmatpush.bf16.msra.mxu0 0
      %493 = vmatpush.bf16.msra.mxu0 0
      %494 = vmatpush.bf16.msra.mxu0 0
      %495 = vmatpush.bf16.msra.mxu0 0
      %496 = vmatpush.bf16.msra.mxu0 %v484
      %497 = vmatmul.bf16.gmra.mxu0 %v487
      %v498 = vpop.f32.mrf.mxu0
      %v499 = vadd.f32 0.0, %v498
      %v500 = vpop.f32.mrf.mxu0
      %v501 = vadd.f32 0.0, %v500
      %502 = vdwg.mxu0
      %v505 = vunpack.c.l.b16 %v426
      %v506 = vunpack.c.l.b16 %v427
      %v507 = vpack.c.b16 %v506, %v505
      %508 = vrot.lane.b32.xlu0 %v282, 64
      %v509 = vpop.permute.xlu0 %508
      %v512 = vsel %vm331, %v507, 0
      %514 = vmatpush.bf16.msra.mxu0 0
      %515 = vmatpush.bf16.msra.mxu0 0
      %516 = vmatpush.bf16.msra.mxu0 0
      %517 = vmatpush.bf16.msra.mxu0 0
      %518 = vmatpush.bf16.msra.mxu0 0
      %519 = vmatpush.bf16.msra.mxu0 0
      %520 = vmatpush.bf16.msra.mxu0 0
      %521 = vmatpush.bf16.msra.mxu0 %v509
      %522 = vmatmul.bf16.gmra.mxu0 %v512
      %v523 = vpop.f32.mrf.mxu0
      %v524 = vadd.f32 0.0, %v523
      %v525 = vpop.f32.mrf.mxu0
      %v526 = vadd.f32 0.0, %v525
      %527 = vdwg.mxu0
      %v528 = vld [vmem:[%s170] sm:$0xf]
      %v529 = vld [vmem:[%s170 + $0x4] sm:$0xf]
      %v530 = vld [vmem:[%s170 + $0x8] sm:$0xf]
      %v531 = vld [vmem:[%s170 + $0xc] sm:$0xf]
      %v532 = vld [vmem:[%s170 + $0x10] sm:$0xf]
      %v533 = vld [vmem:[%s170 + $0x14] sm:$0xf]
      %v534 = vld [vmem:[%s170 + $0x18] sm:$0xf]
      %v535 = vld [vmem:[%s170 + $0x1c] sm:$0xf]
      %v538 = vunpack.c.l.b16 %v528
      %v539 = vunpack.c.l.b16 %v529
      %v540 = vpack.c.b16 %v539, %v538
      %541 = vrot.lane.b32.xlu0 %v540, 120
      %v542 = vpop.permute.xlu0 %541
      %543 = vrot.lane.b32.xlu0 %v540, 88
      %v544 = vpop.permute.xlu0 %543
      %v546 = vsel %vm203, %v542, 0
      %v549 = vsel %vm203, %v544, 0
      %551 = vmatpush.bf16.xpose.msra.mxu0 0
      %552 = vmatpush.bf16.xpose.msra.mxu0 0
      %553 = vmatpush.bf16.xpose.msra.mxu0 0
      %554 = vmatpush.bf16.xpose.msra.mxu0 0
      %555 = vmatpush.bf16.xpose.msra.mxu0 0
      %556 = vmatpush.bf16.xpose.msra.mxu0 0
      %557 = vmatpush.bf16.xpose.msra.mxu0 0
      %558 = vmatpush.bf16.xpose.msra.mxu0 %v549
      %559 = vmatmul.bf16.gmra.mxu0 %v546
      %v560 = vpop.f32.mrf.mxu0
      %v561 = vadd.f32 0.0, %v560
      %v562 = vpop.f32.mrf.mxu0
      %v563 = vadd.f32 0.0, %v562
      %564 = vdwg.mxu0
      %v567 = vunpack.c.l.b16 %v530
      %v568 = vunpack.c.l.b16 %v531
      %v569 = vpack.c.b16 %v568, %v567
      %570 = vrot.lane.b32.xlu0 %v569, 120
      %v571 = vpop.permute.xlu0 %570
      %572 = vrot.lane.b32.xlu0 %v569, 88
      %v573 = vpop.permute.xlu0 %572
      %v575 = vsel %vm203, %v571, 0
      %v578 = vsel %vm203, %v573, 0
      %580 = vmatpush.bf16.xpose.msra.mxu0 0
      %581 = vmatpush.bf16.xpose.msra.mxu0 0
      %582 = vmatpush.bf16.xpose.msra.mxu0 0
      %583 = vmatpush.bf16.xpose.msra.mxu0 0
      %584 = vmatpush.bf16.xpose.msra.mxu0 0
      %585 = vmatpush.bf16.xpose.msra.mxu0 0
      %586 = vmatpush.bf16.xpose.msra.mxu0 0
      %587 = vmatpush.bf16.xpose.msra.mxu0 %v578
      %588 = vmatmul.bf16.gmra.mxu0 %v575
      %v589 = vpop.f32.mrf.mxu0
      %v590 = vadd.f32 0.0, %v589
      %v591 = vpop.f32.mrf.mxu0
      %v592 = vadd.f32 0.0, %v591
      %593 = vdwg.mxu0
      %v596 = vunpack.c.l.b16 %v532
      %v597 = vunpack.c.l.b16 %v533
      %v598 = vpack.c.b16 %v597, %v596
      %599 = vrot.lane.b32.xlu0 %v598, 120
      %v600 = vpop.permute.xlu0 %599
      %601 = vrot.lane.b32.xlu0 %v598, 88
      %v602 = vpop.permute.xlu0 %601
      %v604 = vsel %vm203, %v600, 0
      %v607 = vsel %vm203, %v602, 0
      %609 = vmatpush.bf16.xpose.msra.mxu0 0
      %610 = vmatpush.bf16.xpose.msra.mxu0 0
      %611 = vmatpush.bf16.xpose.msra.mxu0 0
      %612 = vmatpush.bf16.xpose.msra.mxu0 0
      %613 = vmatpush.bf16.xpose.msra.mxu0 0
      %614 = vmatpush.bf16.xpose.msra.mxu0 0
      %615 = vmatpush.bf16.xpose.msra.mxu0 0
      %616 = vmatpush.bf16.xpose.msra.mxu0 %v607
      %617 = vmatmul.bf16.gmra.mxu0 %v604
      %v618 = vpop.f32.mrf.mxu0
      %v619 = vadd.f32 0.0, %v618
      %v620 = vpop.f32.mrf.mxu0
      %v621 = vadd.f32 0.0, %v620
      %622 = vdwg.mxu0
      %v625 = vunpack.c.l.b16 %v534
      %v626 = vunpack.c.l.b16 %v535
      %v627 = vpack.c.b16 %v626, %v625
      %628 = vrot.lane.b32.xlu0 %v627, 120
      %v629 = vpop.permute.xlu0 %628
      %630 = vrot.lane.b32.xlu0 %v627, 88
      %v631 = vpop.permute.xlu0 %630
      %v633 = vsel %vm203, %v629, 0
      %v636 = vsel %vm203, %v631, 0
      %638 = vmatpush.bf16.xpose.msra.mxu0 0
      %639 = vmatpush.bf16.xpose.msra.mxu0 0
      %640 = vmatpush.bf16.xpose.msra.mxu0 0
      %641 = vmatpush.bf16.xpose.msra.mxu0 0
      %642 = vmatpush.bf16.xpose.msra.mxu0 0
      %643 = vmatpush.bf16.xpose.msra.mxu0 0
      %644 = vmatpush.bf16.xpose.msra.mxu0 0
      %645 = vmatpush.bf16.xpose.msra.mxu0 %v636
      %646 = vmatmul.bf16.gmra.mxu0 %v633
      %v647 = vpop.f32.mrf.mxu0
      %v648 = vadd.f32 0.0, %v647
      %v649 = vpop.f32.mrf.mxu0
      %v650 = vadd.f32 0.0, %v649
      %651 = vdwg.mxu0
      %v652 = vmul.f32 %v561, 0.35355338
      %v653 = vmul.f32 %v563, 0.35355338
      %v654 = vmul.f32 %v590, 0.35355338
      %v655 = vmul.f32 %v592, 0.35355338
      %v656 = vmul.f32 %v619, 0.35355338
      %v657 = vmul.f32 %v621, 0.35355338
      %v658 = vmul.f32 %v648, 0.35355338
      %v659 = vmul.f32 %v650, 0.35355338
      %s660 = scalar_lea.vmem %s1, 16
      %v661 = vld [vmem:[%s660] sm:$0xff]
      %v662 = vld [vmem:[%s660 + $0x8] sm:$0xff]
      %v663 = vadd.f32 %v652, %v661
      %v664 = vadd.f32 %v653, %v662
      %v665 = vadd.f32 %v654, %v661
      %v666 = vadd.f32 %v655, %v662
      %v667 = vadd.f32 %v656, %v661
      %v668 = vadd.f32 %v657, %v662
      %v669 = vadd.f32 %v658, %v661
      %v670 = vadd.f32 %v659, %v662
      %v671 = vadd.f32 %v663, %v180
      %v672 = vadd.f32 %v664, %v181
      %v673 = vadd.f32 %v665, %v182
      %v674 = vadd.f32 %v666, %v183
      %v675 = vadd.f32 %v667, %v184
      %v676 = vadd.f32 %v668, %v185
      %v677 = vadd.f32 %v669, %v186
      %v678 = vadd.f32 %v670, %v187
      %v679 = vsel %vm331, %v671, -inf
      %680 = vmax.xlane.f32.xlu0 %v679
      %v681 = vpop.xlane.xlu0 %680
      %v682 = vsel %vm331, %v672, -inf
      %683 = vmax.xlane.f32.xlu0 %v682
      %v684 = vpop.xlane.xlu0 %683
      %v685 = vsel %vm331, %v673, -inf
      %686 = vmax.xlane.f32.xlu0 %v685
      %v687 = vpop.xlane.xlu0 %686
      %v688 = vsel %vm331, %v674, -inf
      %689 = vmax.xlane.f32.xlu0 %v688
      %v690 = vpop.xlane.xlu0 %689
      %v691 = vsel %vm331, %v675, -inf
      %692 = vmax.xlane.f32.xlu0 %v691
      %v693 = vpop.xlane.xlu0 %692
      %v694 = vsel %vm331, %v676, -inf
      %695 = vmax.xlane.f32.xlu0 %v694
      %v696 = vpop.xlane.xlu0 %695
      %v697 = vsel %vm331, %v677, -inf
      %698 = vmax.xlane.f32.xlu0 %v697
      %v699 = vpop.xlane.xlu0 %698
      %v700 = vsel %vm331, %v678, -inf
      %701 = vmax.xlane.f32.xlu0 %v700
      %v702 = vpop.xlane.xlu0 %701
      %v703 = vsub.f32 %v671, %v681
      %v704 = vsub.f32 %v672, %v684
      %v705 = vsub.f32 %v673, %v687
      %v706 = vsub.f32 %v674, %v690
      %v707 = vsub.f32 %v675, %v693
      %v708 = vsub.f32 %v676, %v696
      %v709 = vsub.f32 %v677, %v699
      %v710 = vsub.f32 %v678, %v702
      %v711 = vmul.f32 %v703, 1.442695
      %v712 = vpow.pop %v711
      %v713 = vmul.f32 %v704, 1.442695
      %v714 = vpow.pop %v713
      %v715 = vmul.f32 %v705, 1.442695
      %v716 = vpow.pop %v715
      %v717 = vmul.f32 %v706, 1.442695
      %v718 = vpow.pop %v717
      %v719 = vmul.f32 %v707, 1.442695
      %v720 = vpow.pop %v719
      %v721 = vmul.f32 %v708, 1.442695
      %v722 = vpow.pop %v721
      %v723 = vmul.f32 %v709, 1.442695
      %v724 = vpow.pop %v723
      %v725 = vmul.f32 %v710, 1.442695
      %v726 = vpow.pop %v725
      %v727 = vsel %vm331, %v712, 0.0
      %728 = vadd.xlane.f32.xlu0 %v727
      %v729 = vpop.xlane.xlu0 %728
      %v730 = vsel %vm331, %v714, 0.0
      %731 = vadd.xlane.f32.xlu0 %v730
      %v732 = vpop.xlane.xlu0 %731
      %v733 = vsel %vm331, %v716, 0.0
      %734 = vadd.xlane.f32.xlu0 %v733
      %v735 = vpop.xlane.xlu0 %734
      %v736 = vsel %vm331, %v718, 0.0
      %737 = vadd.xlane.f32.xlu0 %v736
      %v738 = vpop.xlane.xlu0 %737
      %v739 = vsel %vm331, %v720, 0.0
      %740 = vadd.xlane.f32.xlu0 %v739
      %v741 = vpop.xlane.xlu0 %740
      %v742 = vsel %vm331, %v722, 0.0
      %743 = vadd.xlane.f32.xlu0 %v742
      %v744 = vpop.xlane.xlu0 %743
      %v745 = vsel %vm331, %v724, 0.0
      %746 = vadd.xlane.f32.xlu0 %v745
      %v747 = vpop.xlane.xlu0 %746
      %v748 = vsel %vm331, %v726, 0.0
      %749 = vadd.xlane.f32.xlu0 %v748
      %v750 = vpop.xlane.xlu0 %749
      %v751 = vrcp.pop %v729
      %v752 = vrcp.pop %v732
      %v753 = vrcp.pop %v735
      %v754 = vrcp.pop %v738
      %v755 = vrcp.pop %v741
      %v756 = vrcp.pop %v744
      %v757 = vrcp.pop %v747
      %v758 = vrcp.pop %v750
      %v759 = vmul.f32 %v712, %v751
      %v760 = vmul.f32 %v714, %v752
      %v761 = vmul.f32 %v716, %v753
      %v762 = vmul.f32 %v718, %v754
      %v763 = vmul.f32 %v720, %v755
      %v764 = vmul.f32 %v722, %v756
      %v765 = vmul.f32 %v724, %v757
      %v766 = vmul.f32 %v726, %v758
      %v767 = vpack.c.bf16 %v759, %v759
      %v768 = vpack.c.bf16 %v760, %v760
      %v769 = vpack.c.bf16 %v761, %v761
      %v770 = vpack.c.bf16 %v762, %v762
      %v771 = vpack.c.bf16 %v763, %v763
      %v772 = vpack.c.bf16 %v764, %v764
      %v773 = vpack.c.bf16 %v765, %v765
      %v774 = vpack.c.bf16 %v766, %v766
      %v777 = vunpack.c.l.b16 %v767
      %v778 = vunpack.c.l.b16 %v768
      %v779 = vpack.c.b16 %v778, %v777
      %780 = vrot.lane.b32.xlu0 %v540, 56
      %v781 = vpop.permute.xlu0 %780
      %v784 = vsel %vm331, %v779, 0
      %786 = vmatpush.bf16.msra.mxu0 0
      %787 = vmatpush.bf16.msra.mxu0 0
      %788 = vmatpush.bf16.msra.mxu0 0
      %789 = vmatpush.bf16.msra.mxu0 0
      %790 = vmatpush.bf16.msra.mxu0 0
      %791 = vmatpush.bf16.msra.mxu0 0
      %792 = vmatpush.bf16.msra.mxu0 0
      %793 = vmatpush.bf16.msra.mxu0 %v781
      %794 = vmatmul.bf16.gmra.mxu0 %v784
      %v795 = vpop.f32.mrf.mxu0
      %v796 = vadd.f32 0.0, %v795
      %v797 = vpop.f32.mrf.mxu0
      %v798 = vadd.f32 0.0, %v797
      %799 = vdwg.mxu0
      %v802 = vunpack.c.l.b16 %v769
      %v803 = vunpack.c.l.b16 %v770
      %v804 = vpack.c.b16 %v803, %v802
      %805 = vrot.lane.b32.xlu0 %v569, 56
      %v806 = vpop.permute.xlu0 %805
      %v809 = vsel %vm331, %v804, 0
      %811 = vmatpush.bf16.msra.mxu0 0
      %812 = vmatpush.bf16.msra.mxu0 0
      %813 = vmatpush.bf16.msra.mxu0 0
      %814 = vmatpush.bf16.msra.mxu0 0
      %815 = vmatpush.bf16.msra.mxu0 0
      %816 = vmatpush.bf16.msra.mxu0 0
      %817 = vmatpush.bf16.msra.mxu0 0
      %818 = vmatpush.bf16.msra.mxu0 %v806
      %819 = vmatmul.bf16.gmra.mxu0 %v809
      %v820 = vpop.f32.mrf.mxu0
      %v821 = vadd.f32 0.0, %v820
      %v822 = vpop.f32.mrf.mxu0
      %v823 = vadd.f32 0.0, %v822
      %824 = vdwg.mxu0
      %v827 = vunpack.c.l.b16 %v771
      %v828 = vunpack.c.l.b16 %v772
      %v829 = vpack.c.b16 %v828, %v827
      %830 = vrot.lane.b32.xlu0 %v598, 56
      %v831 = vpop.permute.xlu0 %830
      %v834 = vsel %vm331, %v829, 0
      %836 = vmatpush.bf16.msra.mxu0 0
      %837 = vmatpush.bf16.msra.mxu0 0
      %838 = vmatpush.bf16.msra.mxu0 0
      %839 = vmatpush.bf16.msra.mxu0 0
      %840 = vmatpush.bf16.msra.mxu0 0
      %841 = vmatpush.bf16.msra.mxu0 0
      %842 = vmatpush.bf16.msra.mxu0 0
      %843 = vmatpush.bf16.msra.mxu0 %v831
      %844 = vmatmul.bf16.gmra.mxu0 %v834
      %v845 = vpop.f32.mrf.mxu0
      %v846 = vadd.f32 0.0, %v845
      %v847 = vpop.f32.mrf.mxu0
      %v848 = vadd.f32 0.0, %v847
      %849 = vdwg.mxu0
      %v852 = vunpack.c.l.b16 %v773
      %v853 = vunpack.c.l.b16 %v774
      %v854 = vpack.c.b16 %v853, %v852
      %855 = vrot.lane.b32.xlu0 %v627, 56
      %v856 = vpop.permute.xlu0 %855
      %v859 = vsel %vm331, %v854, 0
      %861 = vmatpush.bf16.msra.mxu0 0
      %862 = vmatpush.bf16.msra.mxu0 0
      %863 = vmatpush.bf16.msra.mxu0 0
      %864 = vmatpush.bf16.msra.mxu0 0
      %865 = vmatpush.bf16.msra.mxu0 0
      %866 = vmatpush.bf16.msra.mxu0 0
      %867 = vmatpush.bf16.msra.mxu0 0
      %868 = vmatpush.bf16.msra.mxu0 %v856
      %869 = vmatmul.bf16.gmra.mxu0 %v859
      %v870 = vpop.f32.mrf.mxu0
      %v871 = vadd.f32 0.0, %v870
      %v872 = vpop.f32.mrf.mxu0
      %v873 = vadd.f32 0.0, %v872
      %874 = vdwg.mxu0
      %v875 = vld [vmem:[%s170] sm:$0xf]
      %v876 = vld [vmem:[%s170 + $0x4] sm:$0xf]
      %v877 = vld [vmem:[%s170 + $0x8] sm:$0xf]
      %v878 = vld [vmem:[%s170 + $0xc] sm:$0xf]
      %v879 = vld [vmem:[%s170 + $0x10] sm:$0xf]
      %v880 = vld [vmem:[%s170 + $0x14] sm:$0xf]
      %v881 = vld [vmem:[%s170 + $0x18] sm:$0xf]
      %v882 = vld [vmem:[%s170 + $0x1c] sm:$0xf]
      %v885 = vunpack.c.l.b16 %v875
      %v886 = vunpack.c.l.b16 %v876
      %v887 = vpack.c.b16 %v886, %v885
      %888 = vrot.lane.b32.xlu0 %v887, 112
      %v889 = vpop.permute.xlu0 %888
      %890 = vrot.lane.b32.xlu0 %v887, 80
      %v891 = vpop.permute.xlu0 %890
      %v893 = vsel %vm203, %v889, 0
      %v896 = vsel %vm203, %v891, 0
      %898 = vmatpush.bf16.xpose.msra.mxu0 0
      %899 = vmatpush.bf16.xpose.msra.mxu0 0
      %900 = vmatpush.bf16.xpose.msra.mxu0 0
      %901 = vmatpush.bf16.xpose.msra.mxu0 0
      %902 = vmatpush.bf16.xpose.msra.mxu0 0
      %903 = vmatpush.bf16.xpose.msra.mxu0 0
      %904 = vmatpush.bf16.xpose.msra.mxu0 0
      %905 = vmatpush.bf16.xpose.msra.mxu0 %v896
      %906 = vmatmul.bf16.gmra.mxu0 %v893
      %v907 = vpop.f32.mrf.mxu0
      %v908 = vadd.f32 0.0, %v907
      %v909 = vpop.f32.mrf.mxu0
      %v910 = vadd.f32 0.0, %v909
      %911 = vdwg.mxu0
      %v914 = vunpack.c.l.b16 %v877
      %v915 = vunpack.c.l.b16 %v878
      %v916 = vpack.c.b16 %v915, %v914
      %917 = vrot.lane.b32.xlu0 %v916, 112
      %v918 = vpop.permute.xlu0 %917
      %919 = vrot.lane.b32.xlu0 %v916, 80
      %v920 = vpop.permute.xlu0 %919
      %v922 = vsel %vm203, %v918, 0
      %v925 = vsel %vm203, %v920, 0
      %927 = vmatpush.bf16.xpose.msra.mxu0 0
      %928 = vmatpush.bf16.xpose.msra.mxu0 0
      %929 = vmatpush.bf16.xpose.msra.mxu0 0
      %930 = vmatpush.bf16.xpose.msra.mxu0 0
      %931 = vmatpush.bf16.xpose.msra.mxu0 0
      %932 = vmatpush.bf16.xpose.msra.mxu0 0
      %933 = vmatpush.bf16.xpose.msra.mxu0 0
      %934 = vmatpush.bf16.xpose.msra.mxu0 %v925
      %935 = vmatmul.bf16.gmra.mxu0 %v922
      %v936 = vpop.f32.mrf.mxu0
      %v937 = vadd.f32 0.0, %v936
      %v938 = vpop.f32.mrf.mxu0
      %v939 = vadd.f32 0.0, %v938
      %940 = vdwg.mxu0
      %v943 = vunpack.c.l.b16 %v879
      %v944 = vunpack.c.l.b16 %v880
      %v945 = vpack.c.b16 %v944, %v943
      %946 = vrot.lane.b32.xlu0 %v945, 112
      %v947 = vpop.permute.xlu0 %946
      %948 = vrot.lane.b32.xlu0 %v945, 80
      %v949 = vpop.permute.xlu0 %948
      %v951 = vsel %vm203, %v947, 0
      %v954 = vsel %vm203, %v949, 0
      %956 = vmatpush.bf16.xpose.msra.mxu0 0
      %957 = vmatpush.bf16.xpose.msra.mxu0 0
      %958 = vmatpush.bf16.xpose.msra.mxu0 0
      %959 = vmatpush.bf16.xpose.msra.mxu0 0
      %960 = vmatpush.bf16.xpose.msra.mxu0 0
      %961 = vmatpush.bf16.xpose.msra.mxu0 0
      %962 = vmatpush.bf16.xpose.msra.mxu0 0
      %963 = vmatpush.bf16.xpose.msra.mxu0 %v954
      %964 = vmatmul.bf16.gmra.mxu0 %v951
      %v965 = vpop.f32.mrf.mxu0
      %v966 = vadd.f32 0.0, %v965
      %v967 = vpop.f32.mrf.mxu0
      %v968 = vadd.f32 0.0, %v967
      %969 = vdwg.mxu0
      %v972 = vunpack.c.l.b16 %v881
      %v973 = vunpack.c.l.b16 %v882
      %v974 = vpack.c.b16 %v973, %v972
      %975 = vrot.lane.b32.xlu0 %v974, 112
      %v976 = vpop.permute.xlu0 %975
      %977 = vrot.lane.b32.xlu0 %v974, 80
      %v978 = vpop.permute.xlu0 %977
      %v980 = vsel %vm203, %v976, 0
      %v983 = vsel %vm203, %v978, 0
      %985 = vmatpush.bf16.xpose.msra.mxu0 0
      %986 = vmatpush.bf16.xpose.msra.mxu0 0
      %987 = vmatpush.bf16.xpose.msra.mxu0 0
      %988 = vmatpush.bf16.xpose.msra.mxu0 0
      %989 = vmatpush.bf16.xpose.msra.mxu0 0
      %990 = vmatpush.bf16.xpose.msra.mxu0 0
      %991 = vmatpush.bf16.xpose.msra.mxu0 0
      %992 = vmatpush.bf16.xpose.msra.mxu0 %v983
      %993 = vmatmul.bf16.gmra.mxu0 %v980
      %v994 = vpop.f32.mrf.mxu0
      %v995 = vadd.f32 0.0, %v994
      %v996 = vpop.f32.mrf.mxu0
      %v997 = vadd.f32 0.0, %v996
      %998 = vdwg.mxu0
      %v999 = vmul.f32 %v908, 0.35355338
      %v1000 = vmul.f32 %v910, 0.35355338
      %v1001 = vmul.f32 %v937, 0.35355338
      %v1002 = vmul.f32 %v939, 0.35355338
      %v1003 = vmul.f32 %v966, 0.35355338
      %v1004 = vmul.f32 %v968, 0.35355338
      %v1005 = vmul.f32 %v995, 0.35355338
      %v1006 = vmul.f32 %v997, 0.35355338
      %s1007 = scalar_lea.vmem %s1, 32
      %v1008 = vld [vmem:[%s1007] sm:$0xff]
      %v1009 = vld [vmem:[%s1007 + $0x8] sm:$0xff]
      %v1010 = vadd.f32 %v999, %v1008
      %v1011 = vadd.f32 %v1000, %v1009
      %v1012 = vadd.f32 %v1001, %v1008
      %v1013 = vadd.f32 %v1002, %v1009
      %v1014 = vadd.f32 %v1003, %v1008
      %v1015 = vadd.f32 %v1004, %v1009
      %v1016 = vadd.f32 %v1005, %v1008
      %v1017 = vadd.f32 %v1006, %v1009
      %v1018 = vadd.f32 %v1010, %v180
      %v1019 = vadd.f32 %v1011, %v181
      %v1020 = vadd.f32 %v1012, %v182
      %v1021 = vadd.f32 %v1013, %v183
      %v1022 = vadd.f32 %v1014, %v184
      %v1023 = vadd.f32 %v1015, %v185
      %v1024 = vadd.f32 %v1016, %v186
      %v1025 = vadd.f32 %v1017, %v187
      %v1026 = vsel %vm331, %v1018, -inf
      %1027 = vmax.xlane.f32.xlu0 %v1026
      %v1028 = vpop.xlane.xlu0 %1027
      %v1029 = vsel %vm331, %v1019, -inf
      %1030 = vmax.xlane.f32.xlu0 %v1029
      %v1031 = vpop.xlane.xlu0 %1030
      %v1032 = vsel %vm331, %v1020, -inf
      %1033 = vmax.xlane.f32.xlu0 %v1032
      %v1034 = vpop.xlane.xlu0 %1033
      %v1035 = vsel %vm331, %v1021, -inf
      %1036 = vmax.xlane.f32.xlu0 %v1035
      %v1037 = vpop.xlane.xlu0 %1036
      %v1038 = vsel %vm331, %v1022, -inf
      %1039 = vmax.xlane.f32.xlu0 %v1038
      %v1040 = vpop.xlane.xlu0 %1039
      %v1041 = vsel %vm331, %v1023, -inf
      %1042 = vmax.xlane.f32.xlu0 %v1041
      %v1043 = vpop.xlane.xlu0 %1042
      %v1044 = vsel %vm331, %v1024, -inf
      %1045 = vmax.xlane.f32.xlu0 %v1044
      %v1046 = vpop.xlane.xlu0 %1045
      %v1047 = vsel %vm331, %v1025, -inf
      %1048 = vmax.xlane.f32.xlu0 %v1047
      %v1049 = vpop.xlane.xlu0 %1048
      %v1050 = vsub.f32 %v1018, %v1028
      %v1051 = vsub.f32 %v1019, %v1031
      %v1052 = vsub.f32 %v1020, %v1034
      %v1053 = vsub.f32 %v1021, %v1037
      %v1054 = vsub.f32 %v1022, %v1040
      %v1055 = vsub.f32 %v1023, %v1043
      %v1056 = vsub.f32 %v1024, %v1046
      %v1057 = vsub.f32 %v1025, %v1049
      %v1058 = vmul.f32 %v1050, 1.442695
      %v1059 = vpow.pop %v1058
      %v1060 = vmul.f32 %v1051, 1.442695
      %v1061 = vpow.pop %v1060
      %v1062 = vmul.f32 %v1052, 1.442695
      %v1063 = vpow.pop %v1062
      %v1064 = vmul.f32 %v1053, 1.442695
      %v1065 = vpow.pop %v1064
      %v1066 = vmul.f32 %v1054, 1.442695
      %v1067 = vpow.pop %v1066
      %v1068 = vmul.f32 %v1055, 1.442695
      %v1069 = vpow.pop %v1068
      %v1070 = vmul.f32 %v1056, 1.442695
      %v1071 = vpow.pop %v1070
      %v1072 = vmul.f32 %v1057, 1.442695
      %v1073 = vpow.pop %v1072
      %v1074 = vsel %vm331, %v1059, 0.0
      %1075 = vadd.xlane.f32.xlu0 %v1074
      %v1076 = vpop.xlane.xlu0 %1075
      %v1077 = vsel %vm331, %v1061, 0.0
      %1078 = vadd.xlane.f32.xlu0 %v1077
      %v1079 = vpop.xlane.xlu0 %1078
      %v1080 = vsel %vm331, %v1063, 0.0
      %1081 = vadd.xlane.f32.xlu0 %v1080
      %v1082 = vpop.xlane.xlu0 %1081
      %v1083 = vsel %vm331, %v1065, 0.0
      %1084 = vadd.xlane.f32.xlu0 %v1083
      %v1085 = vpop.xlane.xlu0 %1084
      %v1086 = vsel %vm331, %v1067, 0.0
      %1087 = vadd.xlane.f32.xlu0 %v1086
      %v1088 = vpop.xlane.xlu0 %1087
      %v1089 = vsel %vm331, %v1069, 0.0
      %1090 = vadd.xlane.f32.xlu0 %v1089
      %v1091 = vpop.xlane.xlu0 %1090
      %v1092 = vsel %vm331, %v1071, 0.0
      %1093 = vadd.xlane.f32.xlu0 %v1092
      %v1094 = vpop.xlane.xlu0 %1093
      %v1095 = vsel %vm331, %v1073, 0.0
      %1096 = vadd.xlane.f32.xlu0 %v1095
      %v1097 = vpop.xlane.xlu0 %1096
      %v1098 = vrcp.pop %v1076
      %v1099 = vrcp.pop %v1079
      %v1100 = vrcp.pop %v1082
      %v1101 = vrcp.pop %v1085
      %v1102 = vrcp.pop %v1088
      %v1103 = vrcp.pop %v1091
      %v1104 = vrcp.pop %v1094
      %v1105 = vrcp.pop %v1097
      %v1106 = vmul.f32 %v1059, %v1098
      %v1107 = vmul.f32 %v1061, %v1099
      %v1108 = vmul.f32 %v1063, %v1100
      %v1109 = vmul.f32 %v1065, %v1101
      %v1110 = vmul.f32 %v1067, %v1102
      %v1111 = vmul.f32 %v1069, %v1103
      %v1112 = vmul.f32 %v1071, %v1104
      %v1113 = vmul.f32 %v1073, %v1105
      %v1114 = vpack.c.bf16 %v1106, %v1106
      %v1115 = vpack.c.bf16 %v1107, %v1107
      %v1116 = vpack.c.bf16 %v1108, %v1108
      %v1117 = vpack.c.bf16 %v1109, %v1109
      %v1118 = vpack.c.bf16 %v1110, %v1110
      %v1119 = vpack.c.bf16 %v1111, %v1111
      %v1120 = vpack.c.bf16 %v1112, %v1112
      %v1121 = vpack.c.bf16 %v1113, %v1113
      %v1124 = vunpack.c.l.b16 %v1114
      %v1125 = vunpack.c.l.b16 %v1115
      %v1126 = vpack.c.b16 %v1125, %v1124
      %1127 = vrot.lane.b32.xlu0 %v887, 48
      %v1128 = vpop.permute.xlu0 %1127
      %v1131 = vsel %vm331, %v1126, 0
      %1133 = vmatpush.bf16.msra.mxu0 0
      %1134 = vmatpush.bf16.msra.mxu0 0
      %1135 = vmatpush.bf16.msra.mxu0 0
      %1136 = vmatpush.bf16.msra.mxu0 0
      %1137 = vmatpush.bf16.msra.mxu0 0
      %1138 = vmatpush.bf16.msra.mxu0 0
      %1139 = vmatpush.bf16.msra.mxu0 0
      %1140 = vmatpush.bf16.msra.mxu0 %v1128
      %1141 = vmatmul.bf16.gmra.mxu0 %v1131
      %v1142 = vpop.f32.mrf.mxu0
      %v1143 = vadd.f32 0.0, %v1142
      %v1144 = vpop.f32.mrf.mxu0
      %v1145 = vadd.f32 0.0, %v1144
      %1146 = vdwg.mxu0
      %v1149 = vunpack.c.l.b16 %v1116
      %v1150 = vunpack.c.l.b16 %v1117
      %v1151 = vpack.c.b16 %v1150, %v1149
      %1152 = vrot.lane.b32.xlu0 %v916, 48
      %v1153 = vpop.permute.xlu0 %1152
      %v1156 = vsel %vm331, %v1151, 0
      %1158 = vmatpush.bf16.msra.mxu0 0
      %1159 = vmatpush.bf16.msra.mxu0 0
      %1160 = vmatpush.bf16.msra.mxu0 0
      %1161 = vmatpush.bf16.msra.mxu0 0
      %1162 = vmatpush.bf16.msra.mxu0 0
      %1163 = vmatpush.bf16.msra.mxu0 0
      %1164 = vmatpush.bf16.msra.mxu0 0
      %1165 = vmatpush.bf16.msra.mxu0 %v1153
      %1166 = vmatmul.bf16.gmra.mxu0 %v1156
      %v1167 = vpop.f32.mrf.mxu0
      %v1168 = vadd.f32 0.0, %v1167
      %v1169 = vpop.f32.mrf.mxu0
      %v1170 = vadd.f32 0.0, %v1169
      %1171 = vdwg.mxu0
      %v1174 = vunpack.c.l.b16 %v1118
      %v1175 = vunpack.c.l.b16 %v1119
      %v1176 = vpack.c.b16 %v1175, %v1174
      %1177 = vrot.lane.b32.xlu0 %v945, 48
      %v1178 = vpop.permute.xlu0 %1177
      %v1181 = vsel %vm331, %v1176, 0
      %1183 = vmatpush.bf16.msra.mxu0 0
      %1184 = vmatpush.bf16.msra.mxu0 0
      %1185 = vmatpush.bf16.msra.mxu0 0
      %1186 = vmatpush.bf16.msra.mxu0 0
      %1187 = vmatpush.bf16.msra.mxu0 0
      %1188 = vmatpush.bf16.msra.mxu0 0
      %1189 = vmatpush.bf16.msra.mxu0 0
      %1190 = vmatpush.bf16.msra.mxu0 %v1178
      %1191 = vmatmul.bf16.gmra.mxu0 %v1181
      %v1192 = vpop.f32.mrf.mxu0
      %v1193 = vadd.f32 0.0, %v1192
      %v1194 = vpop.f32.mrf.mxu0
      %v1195 = vadd.f32 0.0, %v1194
      %1196 = vdwg.mxu0
      %v1199 = vunpack.c.l.b16 %v1120
      %v1200 = vunpack.c.l.b16 %v1121
      %v1201 = vpack.c.b16 %v1200, %v1199
      %1202 = vrot.lane.b32.xlu0 %v974, 48
      %v1203 = vpop.permute.xlu0 %1202
      %v1206 = vsel %vm331, %v1201, 0
      %1208 = vmatpush.bf16.msra.mxu0 0
      %1209 = vmatpush.bf16.msra.mxu0 0
      %1210 = vmatpush.bf16.msra.mxu0 0
      %1211 = vmatpush.bf16.msra.mxu0 0
      %1212 = vmatpush.bf16.msra.mxu0 0
      %1213 = vmatpush.bf16.msra.mxu0 0
      %1214 = vmatpush.bf16.msra.mxu0 0
      %1215 = vmatpush.bf16.msra.mxu0 %v1203
      %1216 = vmatmul.bf16.gmra.mxu0 %v1206
      %v1217 = vpop.f32.mrf.mxu0
      %v1218 = vadd.f32 0.0, %v1217
      %v1219 = vpop.f32.mrf.mxu0
      %v1220 = vadd.f32 0.0, %v1219
      %1221 = vdwg.mxu0
      %v1222 = vld [vmem:[%s170] sm:$0xf]
      %v1223 = vld [vmem:[%s170 + $0x4] sm:$0xf]
      %v1224 = vld [vmem:[%s170 + $0x8] sm:$0xf]
      %v1225 = vld [vmem:[%s170 + $0xc] sm:$0xf]
      %v1226 = vld [vmem:[%s170 + $0x10] sm:$0xf]
      %v1227 = vld [vmem:[%s170 + $0x14] sm:$0xf]
      %v1228 = vld [vmem:[%s170 + $0x18] sm:$0xf]
      %v1229 = vld [vmem:[%s170 + $0x1c] sm:$0xf]
      %v1232 = vunpack.c.l.b16 %v1222
      %v1233 = vunpack.c.l.b16 %v1223
      %v1234 = vpack.c.b16 %v1233, %v1232
      %1235 = vrot.lane.b32.xlu0 %v1234, 104
      %v1236 = vpop.permute.xlu0 %1235
      %1237 = vrot.lane.b32.xlu0 %v1234, 72
      %v1238 = vpop.permute.xlu0 %1237
      %v1240 = vsel %vm203, %v1236, 0
      %v1243 = vsel %vm203, %v1238, 0
      %1245 = vmatpush.bf16.xpose.msra.mxu0 0
      %1246 = vmatpush.bf16.xpose.msra.mxu0 0
      %1247 = vmatpush.bf16.xpose.msra.mxu0 0
      %1248 = vmatpush.bf16.xpose.msra.mxu0 0
      %1249 = vmatpush.bf16.xpose.msra.mxu0 0
      %1250 = vmatpush.bf16.xpose.msra.mxu0 0
      %1251 = vmatpush.bf16.xpose.msra.mxu0 0
      %1252 = vmatpush.bf16.xpose.msra.mxu0 %v1243
      %1253 = vmatmul.bf16.gmra.mxu0 %v1240
      %v1254 = vpop.f32.mrf.mxu0
      %v1255 = vadd.f32 0.0, %v1254
      %v1256 = vpop.f32.mrf.mxu0
      %v1257 = vadd.f32 0.0, %v1256
      %1258 = vdwg.mxu0
      %v1261 = vunpack.c.l.b16 %v1224
      %v1262 = vunpack.c.l.b16 %v1225
      %v1263 = vpack.c.b16 %v1262, %v1261
      %1264 = vrot.lane.b32.xlu0 %v1263, 104
      %v1265 = vpop.permute.xlu0 %1264
      %1266 = vrot.lane.b32.xlu0 %v1263, 72
      %v1267 = vpop.permute.xlu0 %1266
      %v1269 = vsel %vm203, %v1265, 0
      %v1272 = vsel %vm203, %v1267, 0
      %1274 = vmatpush.bf16.xpose.msra.mxu0 0
      %1275 = vmatpush.bf16.xpose.msra.mxu0 0
      %1276 = vmatpush.bf16.xpose.msra.mxu0 0
      %1277 = vmatpush.bf16.xpose.msra.mxu0 0
      %1278 = vmatpush.bf16.xpose.msra.mxu0 0
      %1279 = vmatpush.bf16.xpose.msra.mxu0 0
      %1280 = vmatpush.bf16.xpose.msra.mxu0 0
      %1281 = vmatpush.bf16.xpose.msra.mxu0 %v1272
      %1282 = vmatmul.bf16.gmra.mxu0 %v1269
      %v1283 = vpop.f32.mrf.mxu0
      %v1284 = vadd.f32 0.0, %v1283
      %v1285 = vpop.f32.mrf.mxu0
      %v1286 = vadd.f32 0.0, %v1285
      %1287 = vdwg.mxu0
      %v1290 = vunpack.c.l.b16 %v1226
      %v1291 = vunpack.c.l.b16 %v1227
      %v1292 = vpack.c.b16 %v1291, %v1290
      %1293 = vrot.lane.b32.xlu0 %v1292, 104
      %v1294 = vpop.permute.xlu0 %1293
      %1295 = vrot.lane.b32.xlu0 %v1292, 72
      %v1296 = vpop.permute.xlu0 %1295
      %v1298 = vsel %vm203, %v1294, 0
      %v1301 = vsel %vm203, %v1296, 0
      %1303 = vmatpush.bf16.xpose.msra.mxu0 0
      %1304 = vmatpush.bf16.xpose.msra.mxu0 0
      %1305 = vmatpush.bf16.xpose.msra.mxu0 0
      %1306 = vmatpush.bf16.xpose.msra.mxu0 0
      %1307 = vmatpush.bf16.xpose.msra.mxu0 0
      %1308 = vmatpush.bf16.xpose.msra.mxu0 0
      %1309 = vmatpush.bf16.xpose.msra.mxu0 0
      %1310 = vmatpush.bf16.xpose.msra.mxu0 %v1301
      %1311 = vmatmul.bf16.gmra.mxu0 %v1298
      %v1312 = vpop.f32.mrf.mxu0
      %v1313 = vadd.f32 0.0, %v1312
      %v1314 = vpop.f32.mrf.mxu0
      %v1315 = vadd.f32 0.0, %v1314
      %1316 = vdwg.mxu0
      %v1319 = vunpack.c.l.b16 %v1228
      %v1320 = vunpack.c.l.b16 %v1229
      %v1321 = vpack.c.b16 %v1320, %v1319
      %1322 = vrot.lane.b32.xlu0 %v1321, 104
      %v1323 = vpop.permute.xlu0 %1322
      %1324 = vrot.lane.b32.xlu0 %v1321, 72
      %v1325 = vpop.permute.xlu0 %1324
      %v1327 = vsel %vm203, %v1323, 0
      %v1330 = vsel %vm203, %v1325, 0
      %1332 = vmatpush.bf16.xpose.msra.mxu0 0
      %1333 = vmatpush.bf16.xpose.msra.mxu0 0
      %1334 = vmatpush.bf16.xpose.msra.mxu0 0
      %1335 = vmatpush.bf16.xpose.msra.mxu0 0
      %1336 = vmatpush.bf16.xpose.msra.mxu0 0
      %1337 = vmatpush.bf16.xpose.msra.mxu0 0
      %1338 = vmatpush.bf16.xpose.msra.mxu0 0
      %1339 = vmatpush.bf16.xpose.msra.mxu0 %v1330
      %1340 = vmatmul.bf16.gmra.mxu0 %v1327
      %v1341 = vpop.f32.mrf.mxu0
      %v1342 = vadd.f32 0.0, %v1341
      %v1343 = vpop.f32.mrf.mxu0
      %v1344 = vadd.f32 0.0, %v1343
      %1345 = vdwg.mxu0
      %v1346 = vmul.f32 %v1255, 0.35355338
      %v1347 = vmul.f32 %v1257, 0.35355338
      %v1348 = vmul.f32 %v1284, 0.35355338
      %v1349 = vmul.f32 %v1286, 0.35355338
      %v1350 = vmul.f32 %v1313, 0.35355338
      %v1351 = vmul.f32 %v1315, 0.35355338
      %v1352 = vmul.f32 %v1342, 0.35355338
      %v1353 = vmul.f32 %v1344, 0.35355338
      %s1354 = scalar_lea.vmem %s1, 48
      %v1355 = vld [vmem:[%s1354] sm:$0xff]
      %v1356 = vld [vmem:[%s1354 + $0x8] sm:$0xff]
      %v1357 = vadd.f32 %v1346, %v1355
      %v1358 = vadd.f32 %v1347, %v1356
      %v1359 = vadd.f32 %v1348, %v1355
      %v1360 = vadd.f32 %v1349, %v1356
      %v1361 = vadd.f32 %v1350, %v1355
      %v1362 = vadd.f32 %v1351, %v1356
      %v1363 = vadd.f32 %v1352, %v1355
      %v1364 = vadd.f32 %v1353, %v1356
      %v1365 = vadd.f32 %v1357, %v180
      %v1366 = vadd.f32 %v1358, %v181
      %v1367 = vadd.f32 %v1359, %v182
      %v1368 = vadd.f32 %v1360, %v183
      %v1369 = vadd.f32 %v1361, %v184
      %v1370 = vadd.f32 %v1362, %v185
      %v1371 = vadd.f32 %v1363, %v186
      %v1372 = vadd.f32 %v1364, %v187
      %v1373 = vsel %vm331, %v1365, -inf
      %1374 = vmax.xlane.f32.xlu0 %v1373
      %v1375 = vpop.xlane.xlu0 %1374
      %v1376 = vsel %vm331, %v1366, -inf
      %1377 = vmax.xlane.f32.xlu0 %v1376
      %v1378 = vpop.xlane.xlu0 %1377
      %v1379 = vsel %vm331, %v1367, -inf
      %1380 = vmax.xlane.f32.xlu0 %v1379
      %v1381 = vpop.xlane.xlu0 %1380
      %v1382 = vsel %vm331, %v1368, -inf
      %1383 = vmax.xlane.f32.xlu0 %v1382
      %v1384 = vpop.xlane.xlu0 %1383
      %v1385 = vsel %vm331, %v1369, -inf
      %1386 = vmax.xlane.f32.xlu0 %v1385
      %v1387 = vpop.xlane.xlu0 %1386
      %v1388 = vsel %vm331, %v1370, -inf
      %1389 = vmax.xlane.f32.xlu0 %v1388
      %v1390 = vpop.xlane.xlu0 %1389
      %v1391 = vsel %vm331, %v1371, -inf
      %1392 = vmax.xlane.f32.xlu0 %v1391
      %v1393 = vpop.xlane.xlu0 %1392
      %v1394 = vsel %vm331, %v1372, -inf
      %1395 = vmax.xlane.f32.xlu0 %v1394
      %v1396 = vpop.xlane.xlu0 %1395
      %v1397 = vsub.f32 %v1365, %v1375
      %v1398 = vsub.f32 %v1366, %v1378
      %v1399 = vsub.f32 %v1367, %v1381
      %v1400 = vsub.f32 %v1368, %v1384
      %v1401 = vsub.f32 %v1369, %v1387
      %v1402 = vsub.f32 %v1370, %v1390
      %v1403 = vsub.f32 %v1371, %v1393
      %v1404 = vsub.f32 %v1372, %v1396
      %v1405 = vmul.f32 %v1397, 1.442695
      %v1406 = vpow.pop %v1405
      %v1407 = vmul.f32 %v1398, 1.442695
      %v1408 = vpow.pop %v1407
      %v1409 = vmul.f32 %v1399, 1.442695
      %v1410 = vpow.pop %v1409
      %v1411 = vmul.f32 %v1400, 1.442695
      %v1412 = vpow.pop %v1411
      %v1413 = vmul.f32 %v1401, 1.442695
      %v1414 = vpow.pop %v1413
      %v1415 = vmul.f32 %v1402, 1.442695
      %v1416 = vpow.pop %v1415
      %v1417 = vmul.f32 %v1403, 1.442695
      %v1418 = vpow.pop %v1417
      %v1419 = vmul.f32 %v1404, 1.442695
      %v1420 = vpow.pop %v1419
      %v1421 = vsel %vm331, %v1406, 0.0
      %1422 = vadd.xlane.f32.xlu0 %v1421
      %v1423 = vpop.xlane.xlu0 %1422
      %v1424 = vsel %vm331, %v1408, 0.0
      %1425 = vadd.xlane.f32.xlu0 %v1424
      %v1426 = vpop.xlane.xlu0 %1425
      %v1427 = vsel %vm331, %v1410, 0.0
      %1428 = vadd.xlane.f32.xlu0 %v1427
      %v1429 = vpop.xlane.xlu0 %1428
      %v1430 = vsel %vm331, %v1412, 0.0
      %1431 = vadd.xlane.f32.xlu0 %v1430
      %v1432 = vpop.xlane.xlu0 %1431
      %v1433 = vsel %vm331, %v1414, 0.0
      %1434 = vadd.xlane.f32.xlu0 %v1433
      %v1435 = vpop.xlane.xlu0 %1434
      %v1436 = vsel %vm331, %v1416, 0.0
      %1437 = vadd.xlane.f32.xlu0 %v1436
      %v1438 = vpop.xlane.xlu0 %1437
      %v1439 = vsel %vm331, %v1418, 0.0
      %1440 = vadd.xlane.f32.xlu0 %v1439
      %v1441 = vpop.xlane.xlu0 %1440
      %v1442 = vsel %vm331, %v1420, 0.0
      %1443 = vadd.xlane.f32.xlu0 %v1442
      %v1444 = vpop.xlane.xlu0 %1443
      %v1445 = vrcp.pop %v1423
      %v1446 = vrcp.pop %v1426
      %v1447 = vrcp.pop %v1429
      %v1448 = vrcp.pop %v1432
      %v1449 = vrcp.pop %v1435
      %v1450 = vrcp.pop %v1438
      %v1451 = vrcp.pop %v1441
      %v1452 = vrcp.pop %v1444
      %v1453 = vmul.f32 %v1406, %v1445
      %v1454 = vmul.f32 %v1408, %v1446
      %v1455 = vmul.f32 %v1410, %v1447
      %v1456 = vmul.f32 %v1412, %v1448
      %v1457 = vmul.f32 %v1414, %v1449
      %v1458 = vmul.f32 %v1416, %v1450
      %v1459 = vmul.f32 %v1418, %v1451
      %v1460 = vmul.f32 %v1420, %v1452
      %v1461 = vpack.c.bf16 %v1453, %v1453
      %v1462 = vpack.c.bf16 %v1454, %v1454
      %v1463 = vpack.c.bf16 %v1455, %v1455
      %v1464 = vpack.c.bf16 %v1456, %v1456
      %v1465 = vpack.c.bf16 %v1457, %v1457
      %v1466 = vpack.c.bf16 %v1458, %v1458
      %v1467 = vpack.c.bf16 %v1459, %v1459
      %v1468 = vpack.c.bf16 %v1460, %v1460
      %v1471 = vunpack.c.l.b16 %v1461
      %v1472 = vunpack.c.l.b16 %v1462
      %v1473 = vpack.c.b16 %v1472, %v1471
      %1474 = vrot.lane.b32.xlu0 %v1234, 40
      %v1475 = vpop.permute.xlu0 %1474
      %v1478 = vsel %vm331, %v1473, 0
      %1480 = vmatpush.bf16.msra.mxu0 0
      %1481 = vmatpush.bf16.msra.mxu0 0
      %1482 = vmatpush.bf16.msra.mxu0 0
      %1483 = vmatpush.bf16.msra.mxu0 0
      %1484 = vmatpush.bf16.msra.mxu0 0
      %1485 = vmatpush.bf16.msra.mxu0 0
      %1486 = vmatpush.bf16.msra.mxu0 0
      %1487 = vmatpush.bf16.msra.mxu0 %v1475
      %1488 = vmatmul.bf16.gmra.mxu0 %v1478
      %v1489 = vpop.f32.mrf.mxu0
      %v1490 = vadd.f32 0.0, %v1489
      %v1491 = vpop.f32.mrf.mxu0
      %v1492 = vadd.f32 0.0, %v1491
      %1493 = vdwg.mxu0
      %v1496 = vunpack.c.l.b16 %v1463
      %v1497 = vunpack.c.l.b16 %v1464
      %v1498 = vpack.c.b16 %v1497, %v1496
      %1499 = vrot.lane.b32.xlu0 %v1263, 40
      %v1500 = vpop.permute.xlu0 %1499
      %v1503 = vsel %vm331, %v1498, 0
      %1505 = vmatpush.bf16.msra.mxu0 0
      %1506 = vmatpush.bf16.msra.mxu0 0
      %1507 = vmatpush.bf16.msra.mxu0 0
      %1508 = vmatpush.bf16.msra.mxu0 0
      %1509 = vmatpush.bf16.msra.mxu0 0
      %1510 = vmatpush.bf16.msra.mxu0 0
      %1511 = vmatpush.bf16.msra.mxu0 0
      %1512 = vmatpush.bf16.msra.mxu0 %v1500
      %1513 = vmatmul.bf16.gmra.mxu0 %v1503
      %v1514 = vpop.f32.mrf.mxu0
      %v1515 = vadd.f32 0.0, %v1514
      %v1516 = vpop.f32.mrf.mxu0
      %v1517 = vadd.f32 0.0, %v1516
      %1518 = vdwg.mxu0
      %v1521 = vunpack.c.l.b16 %v1465
      %v1522 = vunpack.c.l.b16 %v1466
      %v1523 = vpack.c.b16 %v1522, %v1521
      %1524 = vrot.lane.b32.xlu0 %v1292, 40
      %v1525 = vpop.permute.xlu0 %1524
      %v1528 = vsel %vm331, %v1523, 0
      %1530 = vmatpush.bf16.msra.mxu0 0
      %1531 = vmatpush.bf16.msra.mxu0 0
      %1532 = vmatpush.bf16.msra.mxu0 0
      %1533 = vmatpush.bf16.msra.mxu0 0
      %1534 = vmatpush.bf16.msra.mxu0 0
      %1535 = vmatpush.bf16.msra.mxu0 0
      %1536 = vmatpush.bf16.msra.mxu0 0
      %1537 = vmatpush.bf16.msra.mxu0 %v1525
      %1538 = vmatmul.bf16.gmra.mxu0 %v1528
      %v1539 = vpop.f32.mrf.mxu0
      %v1540 = vadd.f32 0.0, %v1539
      %v1541 = vpop.f32.mrf.mxu0
      %v1542 = vadd.f32 0.0, %v1541
      %1543 = vdwg.mxu0
      %v1546 = vunpack.c.l.b16 %v1467
      %v1547 = vunpack.c.l.b16 %v1468
      %v1548 = vpack.c.b16 %v1547, %v1546
      %1549 = vrot.lane.b32.xlu0 %v1321, 40
      %v1550 = vpop.permute.xlu0 %1549
      %v1553 = vsel %vm331, %v1548, 0
      %1555 = vmatpush.bf16.msra.mxu0 0
      %1556 = vmatpush.bf16.msra.mxu0 0
      %1557 = vmatpush.bf16.msra.mxu0 0
      %1558 = vmatpush.bf16.msra.mxu0 0
      %1559 = vmatpush.bf16.msra.mxu0 0
      %1560 = vmatpush.bf16.msra.mxu0 0
      %1561 = vmatpush.bf16.msra.mxu0 0
      %1562 = vmatpush.bf16.msra.mxu0 %v1550
      %1563 = vmatmul.bf16.gmra.mxu0 %v1553
      %v1564 = vpop.f32.mrf.mxu0
      %v1565 = vadd.f32 0.0, %v1564
      %v1566 = vpop.f32.mrf.mxu0
      %v1567 = vadd.f32 0.0, %v1566
      %1568 = vdwg.mxu0
      %1577 = vrot.lane.b32.xlu0 %v796, 8
      %v1578 = vpop.permute.xlu0 %1577
      %1579 = vrot.lane.b32.xlu0 %v798, 8
      %v1580 = vpop.permute.xlu0 %1579
      %1581 = vrot.lane.b32.xlu0 %v821, 8
      %v1582 = vpop.permute.xlu0 %1581
      %1583 = vrot.lane.b32.xlu0 %v823, 8
      %v1584 = vpop.permute.xlu0 %1583
      %1585 = vrot.lane.b32.xlu0 %v846, 8
      %v1586 = vpop.permute.xlu0 %1585
      %1587 = vrot.lane.b32.xlu0 %v848, 8
      %v1588 = vpop.permute.xlu0 %1587
      %1589 = vrot.lane.b32.xlu0 %v871, 8
      %v1590 = vpop.permute.xlu0 %1589
      %1591 = vrot.lane.b32.xlu0 %v873, 8
      %v1592 = vpop.permute.xlu0 %1591
      %1609 = vrot.lane.b32.xlu0 %v1143, 16
      %v1610 = vpop.permute.xlu0 %1609
      %1611 = vrot.lane.b32.xlu0 %v1145, 16
      %v1612 = vpop.permute.xlu0 %1611
      %1613 = vrot.lane.b32.xlu0 %v1168, 16
      %v1614 = vpop.permute.xlu0 %1613
      %1615 = vrot.lane.b32.xlu0 %v1170, 16
      %v1616 = vpop.permute.xlu0 %1615
      %1617 = vrot.lane.b32.xlu0 %v1193, 16
      %v1618 = vpop.permute.xlu0 %1617
      %1619 = vrot.lane.b32.xlu0 %v1195, 16
      %v1620 = vpop.permute.xlu0 %1619
      %1621 = vrot.lane.b32.xlu0 %v1218, 16
      %v1622 = vpop.permute.xlu0 %1621
      %1623 = vrot.lane.b32.xlu0 %v1220, 16
      %v1624 = vpop.permute.xlu0 %1623
      %1641 = vrot.lane.b32.xlu0 %v1490, 24
      %v1642 = vpop.permute.xlu0 %1641
      %1643 = vrot.lane.b32.xlu0 %v1492, 24
      %v1644 = vpop.permute.xlu0 %1643
      %1645 = vrot.lane.b32.xlu0 %v1515, 24
      %v1646 = vpop.permute.xlu0 %1645
      %1647 = vrot.lane.b32.xlu0 %v1517, 24
      %v1648 = vpop.permute.xlu0 %1647
      %1649 = vrot.lane.b32.xlu0 %v1540, 24
      %v1650 = vpop.permute.xlu0 %1649
      %1651 = vrot.lane.b32.xlu0 %v1542, 24
      %v1652 = vpop.permute.xlu0 %1651
      %1653 = vrot.lane.b32.xlu0 %v1565, 24
      %v1654 = vpop.permute.xlu0 %1653
      %1655 = vrot.lane.b32.xlu0 %v1567, 24
      %v1656 = vpop.permute.xlu0 %1655
      %v1665 = vsel %vm203, %v449, %v1578
      %v1666 = vsel %vm203, %v451, %v1580
      %v1667 = vsel %vm203, %v474, %v1582
      %v1668 = vsel %vm203, %v476, %v1584
      %v1669 = vsel %vm203, %v499, %v1586
      %v1670 = vsel %vm203, %v501, %v1588
      %v1671 = vsel %vm203, %v524, %v1590
      %v1672 = vsel %vm203, %v526, %v1592
      %v1673 = vsel %vm331, %v1665, %v1610
      %v1674 = vsel %vm331, %v1666, %v1612
      %v1675 = vsel %vm331, %v1667, %v1614
      %v1676 = vsel %vm331, %v1668, %v1616
      %v1677 = vsel %vm331, %v1669, %v1618
      %v1678 = vsel %vm331, %v1670, %v1620
      %v1679 = vsel %vm331, %v1671, %v1622
      %v1680 = vsel %vm331, %v1672, %v1624
      %vm1681 = vcmask 195584
      %v1682 = vsel %vm1681, %v1673, %v1642
      %v1683 = vsel %vm1681, %v1674, %v1644
      %v1684 = vsel %vm1681, %v1675, %v1646
      %v1685 = vsel %vm1681, %v1676, %v1648
      %v1686 = vsel %vm1681, %v1677, %v1650
      %v1687 = vsel %vm1681, %v1678, %v1652
      %v1688 = vsel %vm1681, %v1679, %v1654
      %v1689 = vsel %vm1681, %v1680, %v1656
      %v1690 = vpack.c.bf16 %v1682, %v1682
      %v1691 = vpack.c.bf16 %v1683, %v1683
      %v1692 = vpack.c.bf16 %v1684, %v1684
      %v1693 = vpack.c.bf16 %v1685, %v1685
      %v1694 = vpack.c.bf16 %v1686, %v1686
      %v1695 = vpack.c.bf16 %v1687, %v1687
      %v1696 = vpack.c.bf16 %v1688, %v1688
      %v1697 = vpack.c.bf16 %v1689, %v1689
      %vm1698 = vcmask 257024
      %1699 = vst.msk [vmem:[%s177] sm:$0xf] %vm1698, %v1690
      %1700 = vst.msk [vmem:[%s177 + $0x4] sm:$0xf] %vm1698, %v1691
      %1701 = vst.msk [vmem:[%s177 + $0x8] sm:$0xf] %vm1698, %v1692
      %1702 = vst.msk [vmem:[%s177 + $0xc] sm:$0xf] %vm1698, %v1693
      %1703 = vst.msk [vmem:[%s177 + $0x10] sm:$0xf] %vm1698, %v1694
      %1704 = vst.msk [vmem:[%s177 + $0x14] sm:$0xf] %vm1698, %v1695
      %1705 = vst.msk [vmem:[%s177 + $0x18] sm:$0xf] %vm1698, %v1696
      %1706 = vst.msk [vmem:[%s177 + $0x1c] sm:$0xf] %vm1698, %v1697
      %s1707 = smul.u32 4, %s14
      %p1708 = scmp.lt.s32.totalorder %s1707, 7
      %s1709 = scalar_select %p1708, %s1707, 7
      %s1710 = smul.addr %s1709, 2
      %s1711 = smul.addr %s1710, 4
      %s1712 = scalar_lea.vmem %s3, %s1711
      // Predicated region
      $region33: #{long_term_stage.27} parent=31 // pred_check
        %p1713 = pneg %p100
      $region34: #{long_term_stage.27} parent=31 // pred_check_branch
        %1715 = sbr.rel (%p1713) target = $region36
      $region35: #{long_term_stage.27} parent=31 // pred_region
        %s1716 = smul.u32 4, %s14
      $region36: #{long_term_stage.27} parent=31 // pred_fallthru
        _
    $region32: #{long_term_stage.27} parent=5 // pred_fallthru
      _
    %p1717 = scmp.le.s32.totalorder 2, %s9
    // Predicated region
    $region37: #{long_term_stage.27} parent=5 // pred_check
      %p1718 = pneg %p1717
    $region38: #{long_term_stage.27} parent=5 // pred_check_branch
      %1720 = sbr.rel (%p1718) target = $region40
    $region39: #{long_term_stage.27} parent=5 // pred_region
      %s1721 = ssub.s32 %s9, 2
      // Predicated region
      $region41: #{long_term_stage.27} parent=39 // pred_check
        %p1722 = pneg %p106
      $region42: #{long_term_stage.27} parent=39 // pred_check_branch
        %1724 = sbr.rel (%p1722) target = $region44
      $region43: #{long_term_stage.27} parent=39 // pred_region
        %s1725 = smul.u32 4, %s15
        %p1726 = scmp.lt.s32.totalorder %s1725, 7
        %s1727 = scalar_select %p1726, %s1725, 7
        %s1728 = smul.addr %s1727, 2
        %s1729 = smul.addr %s1728, 4
        %s1730 = scalar_lea.vmem %s3, %s1729
      $region44: #{long_term_stage.27} parent=39 // pred_fallthru
        _
    $region40: #{long_term_stage.27} parent=5 // pred_fallthru
      _
  $region6: #{long_term_stage.27} parent=0 // loop_footer
    %s13 = sadd.s32 1, %s9
  $region7: #{long_term_stage.27} parent=0 // loop_footer_branch
    %8 = sbr.rel target = $region3
  $region8: #{long_term_stage.27} parent=0 // loop_exit
    _

// kernel: long_term_stage.32
$region0: #{long_term_stage.32}
  #allocation0 [shape = 'u32[]', space=smem, size = 0x4, offset = 0x4, fixed_abs, tag = 'smem constant byte address 0x4 - core index']
  #allocation1 [shape = 'u32[72,128]{1,0:T(1,128)}', space=vmem, size = 0x9000, scoped, tag = 'internal scratch']
  #allocation2 [shape = 'f32[32,192]{1,0:T(8,128)}', space=vmem, size = 0x8000, scoped, tag = 'scratch operand']
  %s0 = inlined_call_operand.vmem [shape: bf16[32,64], index: 0, kind: input, shape index: {}]
  %s1 = inlined_call_operand.vmem [shape: bf16[64,192], index: 1, kind: input, shape index: {}]
  %s2 = inlined_call_operand.vmem [shape: f32[1,192], index: 2, kind: input, shape index: {}]
  %s3 = inlined_call_operand.vmem [shape: f32[1,64], index: 3, kind: input, shape index: {}]
  %s4 = inlined_call_operand.vmem [shape: f32[1,64], index: 4, kind: input, shape index: {}]
  %s5 = inlined_call_operand.vmem [shape: bf16[32,192], index: 5, kind: output, shape index: {}]
  %s6 = sld [smem:[#allocation0]]
  $region38: #{long_term_stage.32} parent=0
    _
  %s8 = ssub.s32 1, %s6
  %s9 = scalar_select 0, %s8, %s6
  // Predicated region
  $region2: #{long_term_stage.32} parent=0 // pred_check
    _
  $region3: #{long_term_stage.32} parent=0 // pred_check_branch
    %11 = sbr.rel (0) target = $region5
  $region4: #{long_term_stage.32} parent=0 // pred_region
    _
  $region5: #{long_term_stage.32} parent=0 // pred_fallthru
    _
  // Predicated region
  $region6: #{long_term_stage.32} parent=0 // pred_check
    _
  $region7: #{long_term_stage.32} parent=0 // pred_check_branch
    %13 = sbr.rel (0) target = $region9
  $region8: #{long_term_stage.32} parent=0 // pred_region
    _
  $region9: #{long_term_stage.32} parent=0 // pred_fallthru
    _
  // Predicated region
  $region10: #{long_term_stage.32} parent=0 // pred_check
    _
  $region11: #{long_term_stage.32} parent=0 // pred_check_branch
    %15 = sbr.rel (0) target = $region13
  $region12: #{long_term_stage.32} parent=0 // pred_region
    _
  $region13: #{long_term_stage.32} parent=0 // pred_fallthru
    _
  // Predicated region
  $region14: #{long_term_stage.32} parent=0 // pred_check
    _
  $region15: #{long_term_stage.32} parent=0 // pred_check_branch
    %17 = sbr.rel (0) target = $region17
  $region16: #{long_term_stage.32} parent=0 // pred_region
    _
  $region17: #{long_term_stage.32} parent=0 // pred_fallthru
    _
  // Predicated region
  $region18: #{long_term_stage.32} parent=0 // pred_check
    _
  $region19: #{long_term_stage.32} parent=0 // pred_check_branch
    %19 = sbr.rel (0) target = $region21
  $region20: #{long_term_stage.32} parent=0 // pred_region
    _
  $region21: #{long_term_stage.32} parent=0 // pred_fallthru
    _
  %p21 = scmp.eq.s32.totalorder 0, 0
  // Predicated region
  $region22: #{long_term_stage.32} parent=0 // pred_check
    %p22 = pneg %p21
  $region23: #{long_term_stage.32} parent=0 // pred_check_branch
    %24 = sbr.rel (%p22) target = $region25
  $region24: #{long_term_stage.32} parent=0 // pred_region
    %25 = vst [vmem:[#allocation2] sm:$0xff] 0.0
    %vm26 = vcmask 523264
    %27 = vst.msk [vmem:[#allocation2 + $0x8] sm:$0xff] %vm26, 0.0
    %28 = vst [vmem:[#allocation2 + $0x10] sm:$0xff] 0.0
    %29 = vst.msk [vmem:[#allocation2 + $0x18] sm:$0xff] %vm26, 0.0
    %30 = vst [vmem:[#allocation2 + $0x20] sm:$0xff] 0.0
    %31 = vst.msk [vmem:[#allocation2 + $0x28] sm:$0xff] %vm26, 0.0
    %32 = vst [vmem:[#allocation2 + $0x30] sm:$0xff] 0.0
    %33 = vst.msk [vmem:[#allocation2 + $0x38] sm:$0xff] %vm26, 0.0
  $region25: #{long_term_stage.32} parent=0 // pred_fallthru
    _
  %v34 = vld [vmem:[%s0] sm:$0xf]
  %v35 = vld [vmem:[%s0 + $0x4] sm:$0xf]
  %v36 = vld [vmem:[%s0 + $0x8] sm:$0xf]
  %v37 = vld [vmem:[%s0 + $0xc] sm:$0xf]
  %v38 = vunpack.c.l.bf16 %v34
  %v39 = vunpack.c.l.bf16 %v35
  %v40 = vunpack.c.l.bf16 %v36
  %v41 = vunpack.c.l.bf16 %v37
  %vm42 = vcmask 523264
  %v43 = vsel %vm42, %v38, 0.0
  %44 = vadd.xlane.f32.xlu0 %v43
  %v45 = vpop.xlane.xlu0 %44
  %v46 = vsel %vm42, %v39, 0.0
  %47 = vadd.xlane.f32.xlu0 %v46
  %v48 = vpop.xlane.xlu0 %47
  %v49 = vsel %vm42, %v40, 0.0
  %50 = vadd.xlane.f32.xlu0 %v49
  %v51 = vpop.xlane.xlu0 %50
  %v52 = vsel %vm42, %v41, 0.0
  %53 = vadd.xlane.f32.xlu0 %v52
  %v54 = vpop.xlane.xlu0 %53
  %v55 = vrcp.pop 64.0
  %v56 = vmul.f32 64.0, %v55
  %v57 = vsub.f32 1.0, %v56
  %v58 = vmul.f32 %v55, %v57
  %v59 = vadd.f32 %v55, %v58
  %vm60 = vweird.f32 %v55
  %v61 = vsel %vm60, %v55, %v59
  %v62 = vmul.f32 %v45, %v61
  %v63 = vmul.f32 %v48, %v61
  %v64 = vmul.f32 %v51, %v61
  %v65 = vmul.f32 %v54, %v61
  %v66 = vsub.f32 %v38, %v62
  %v67 = vsub.f32 %v39, %v63
  %v68 = vsub.f32 %v40, %v64
  %v69 = vsub.f32 %v41, %v65
  %v70 = vmul.f32 %v66, %v66
  %v71 = vmul.f32 %v67, %v67
  %v72 = vmul.f32 %v68, %v68
  %v73 = vmul.f32 %v69, %v69
  %v74 = vsel %vm42, %v70, 0.0
  %75 = vadd.xlane.f32.xlu0 %v74
  %v76 = vpop.xlane.xlu0 %75
  %v77 = vsel %vm42, %v71, 0.0
  %78 = vadd.xlane.f32.xlu0 %v77
  %v79 = vpop.xlane.xlu0 %78
  %v80 = vsel %vm42, %v72, 0.0
  %81 = vadd.xlane.f32.xlu0 %v80
  %v82 = vpop.xlane.xlu0 %81
  %v83 = vsel %vm42, %v73, 0.0
  %84 = vadd.xlane.f32.xlu0 %v83
  %v85 = vpop.xlane.xlu0 %84
  %v86 = vmul.f32 %v76, %v61
  %v87 = vmul.f32 %v79, %v61
  %v88 = vmul.f32 %v82, %v61
  %v89 = vmul.f32 %v85, %v61
  %v90 = vadd.f32 %v86, 1e-05
  %v91 = vadd.f32 %v87, 1e-05
  %v92 = vadd.f32 %v88, 1e-05
  %v93 = vadd.f32 %v89, 1e-05
  %v94 = vrsqrt.pop %v90
  %v95 = vmul.f32 %v94, %v90
  %v96 = vmul.f32 %v95, %v94
  %v97 = vmul.f32 0.5, %v96
  %v98 = vsub.f32 1.5, %v97
  %v99 = vmul.f32 %v94, %v98
  %vm100 = vweird.f32 %v90
  %vm101 = vweird.f32 %v94
  %vm102 = vmor %vm100, %vm101
  %v103 = vsel %vm102, %v94, %v99
  %v104 = vrsqrt.pop %v91
  %v105 = vmul.f32 %v104, %v91
  %v106 = vmul.f32 %v105, %v104
  %v107 = vmul.f32 0.5, %v106
  %v108 = vsub.f32 1.5, %v107
  %v109 = vmul.f32 %v104, %v108
  %vm110 = vweird.f32 %v91
  %vm111 = vweird.f32 %v104
  %vm112 = vmor %vm110, %vm111
  %v113 = vsel %vm112, %v104, %v109
  %v114 = vrsqrt.pop %v92
  %v115 = vmul.f32 %v114, %v92
  %v116 = vmul.f32 %v115, %v114
  %v117 = vmul.f32 0.5, %v116
  %v118 = vsub.f32 1.5, %v117
  %v119 = vmul.f32 %v114, %v118
  %vm120 = vweird.f32 %v92
  %vm121 = vweird.f32 %v114
  %vm122 = vmor %vm120, %vm121
  %v123 = vsel %vm122, %v114, %v119
  %v124 = vrsqrt.pop %v93
  %v125 = vmul.f32 %v124, %v93
  %v126 = vmul.f32 %v125, %v124
  %v127 = vmul.f32 0.5, %v126
  %v128 = vsub.f32 1.5, %v127
  %v129 = vmul.f32 %v124, %v128
  %vm130 = vweird.f32 %v93
  %vm131 = vweird.f32 %v124
  %vm132 = vmor %vm130, %vm131
  %v133 = vsel %vm132, %v124, %v129
  %v134 = vmul.f32 %v66, %v103
  %v135 = vmul.f32 %v67, %v113
  %v136 = vmul.f32 %v68, %v123
  %v137 = vmul.f32 %v69, %v133
  %v138 = vld [vmem:[%s3] sm:$0x1]
  %v140 = vperm.slane %v138, 0
  %v142 = vmul.f32 %v134, %v140
  %v143 = vmul.f32 %v135, %v140
  %v144 = vmul.f32 %v136, %v140
  %v145 = vmul.f32 %v137, %v140
  %v146 = vld [vmem:[%s4] sm:$0x1]
  %v148 = vperm.slane %v146, 0
  %v150 = vadd.f32 %v142, %v148
  %v151 = vadd.f32 %v143, %v148
  %v152 = vadd.f32 %v144, %v148
  %v153 = vadd.f32 %v145, %v148
  %v154 = vpack.c.bf16 %v151, %v150
  %v155 = vpack.c.bf16 %v153, %v152
  %v156 = vld [vmem:[#allocation2] sm:$0xff]
  %v157 = vld [vmem:[#allocation2 + $0x8] sm:$0xff]
  %v158 = vld [vmem:[#allocation2 + $0x10] sm:$0xff]
  %v159 = vld [vmem:[#allocation2 + $0x18] sm:$0xff]
  %v160 = vld [vmem:[#allocation2 + $0x20] sm:$0xff]
  %v161 = vld [vmem:[#allocation2 + $0x28] sm:$0xff]
  %v162 = vld [vmem:[#allocation2 + $0x30] sm:$0xff]
  %v163 = vld [vmem:[#allocation2 + $0x38] sm:$0xff]
  %v164 = vld [vmem:[%s1] sm:$0xff]
  %v165 = vld [vmem:[%s1 + $0x8] sm:$0xff]
  %v166 = vld [vmem:[%s1 + $0x10] sm:$0xff]
  %v167 = vld [vmem:[%s1 + $0x18] sm:$0xff]
  %v168 = vld [vmem:[%s1 + $0x20] sm:$0xff]
  %v169 = vld [vmem:[%s1 + $0x28] sm:$0xff]
  %v170 = vld [vmem:[%s1 + $0x30] sm:$0xff]
  %v171 = vld [vmem:[%s1 + $0x38] sm:$0xff]
  %v180 = vunpack.c.l.b16 %v164
  %v181 = vunpack.c.h.b16 %v164
  %v182 = vunpack.c.l.b16 %v165
  %v183 = vunpack.c.h.b16 %v165
  %v184 = vunpack.c.l.b16 %v166
  %v185 = vunpack.c.h.b16 %v166
  %v186 = vunpack.c.l.b16 %v167
  %v187 = vunpack.c.h.b16 %v167
  %v188 = vunpack.c.l.b16 %v168
  %v189 = vunpack.c.h.b16 %v168
  %v190 = vunpack.c.l.b16 %v169
  %v191 = vunpack.c.h.b16 %v169
  %v192 = vunpack.c.l.b16 %v170
  %v193 = vunpack.c.h.b16 %v170
  %v194 = vunpack.c.l.b16 %v171
  %v195 = vunpack.c.h.b16 %v171
  %v196 = vpack.c.b16 %v182, %v180
  %v197 = vpack.c.b16 %v183, %v181
  %v198 = vpack.c.b16 %v186, %v184
  %v199 = vpack.c.b16 %v187, %v185
  %v200 = vpack.c.b16 %v190, %v188
  %v201 = vpack.c.b16 %v191, %v189
  %v202 = vpack.c.b16 %v194, %v192
  %v203 = vpack.c.b16 %v195, %v193
  %v213 = vsel %vm42, %v154, 0
  %v216 = vsel %vm42, %v155, 0
  %218 = vmatpush.bf16.msra.mxu0 0
  %219 = vmatpush.bf16.msra.mxu0 0
  %220 = vmatpush.bf16.msra.mxu0 0
  %221 = vmatpush.bf16.msra.mxu0 0
  %222 = vmatpush.bf16.msra.mxu0 %v202
  %223 = vmatpush.bf16.msra.mxu0 %v200
  %224 = vmatpush.bf16.msra.mxu0 %v198
  %225 = vmatpush.bf16.msra.mxu0 %v196
  %226 = vmatmul.bf16.gmra.mxu0 %v213
  %v227 = vpop.f32.mrf.mxu0
  %v228 = vadd.f32 0.0, %v227
  %v229 = vpop.f32.mrf.mxu0
  %v230 = vadd.f32 0.0, %v229
  %231 = vmatmul.bf16.gmra.mxu0 %v216
  %v232 = vpop.f32.mrf.mxu0
  %v233 = vadd.f32 0.0, %v232
  %v234 = vpop.f32.mrf.mxu0
  %v235 = vadd.f32 0.0, %v234
  %236 = vdwg.mxu0
  %237 = vmatpush.bf16.msra.mxu0 0
  %238 = vmatpush.bf16.msra.mxu0 0
  %239 = vmatpush.bf16.msra.mxu0 0
  %240 = vmatpush.bf16.msra.mxu0 0
  %241 = vmatpush.bf16.msra.mxu0 %v203
  %242 = vmatpush.bf16.msra.mxu0 %v201
  %243 = vmatpush.bf16.msra.mxu0 %v199
  %244 = vmatpush.bf16.msra.mxu0 %v197
  %245 = vmatmul.bf16.gmra.mxu0 %v213
  %v246 = vpop.f32.mrf.mxu0
  %v247 = vadd.f32 0.0, %v246
  %v248 = vpop.f32.mrf.mxu0
  %v249 = vadd.f32 0.0, %v248
  %250 = vmatmul.bf16.gmra.mxu0 %v216
  %v251 = vpop.f32.mrf.mxu0
  %v252 = vadd.f32 0.0, %v251
  %v253 = vpop.f32.mrf.mxu0
  %v254 = vadd.f32 0.0, %v253
  %255 = vdwg.mxu0
  %v256 = vadd.f32 %v156, %v228
  %v257 = vadd.f32 %v157, %v247
  %v258 = vadd.f32 %v158, %v230
  %v259 = vadd.f32 %v159, %v249
  %v260 = vadd.f32 %v160, %v233
  %v261 = vadd.f32 %v161, %v252
  %v262 = vadd.f32 %v162, %v235
  %v263 = vadd.f32 %v163, %v254
  %264 = vst [vmem:[#allocation2] sm:$0xff] %v256
  %265 = vst.msk [vmem:[#allocation2 + $0x8] sm:$0xff] %vm42, %v257
  %266 = vst [vmem:[#allocation2 + $0x10] sm:$0xff] %v258
  %267 = vst.msk [vmem:[#allocation2 + $0x18] sm:$0xff] %vm42, %v259
  %268 = vst [vmem:[#allocation2 + $0x20] sm:$0xff] %v260
  %269 = vst.msk [vmem:[#allocation2 + $0x28] sm:$0xff] %vm42, %v261
  %270 = vst [vmem:[#allocation2 + $0x30] sm:$0xff] %v262
  %271 = vst.msk [vmem:[#allocation2 + $0x38] sm:$0xff] %vm42, %v263
  // Predicated region
  $region26: #{long_term_stage.32} parent=0 // pred_check
    %p272 = pneg %p21
  $region27: #{long_term_stage.32} parent=0 // pred_check_branch
    %274 = sbr.rel (%p272) target = $region29
  $region28: #{long_term_stage.32} parent=0 // pred_region
    %v275 = vld [vmem:[#allocation2] sm:$0xff]
    %v276 = vld [vmem:[#allocation2 + $0x8] sm:$0xff]
    %v277 = vld [vmem:[#allocation2 + $0x10] sm:$0xff]
    %v278 = vld [vmem:[#allocation2 + $0x18] sm:$0xff]
    %v279 = vld [vmem:[#allocation2 + $0x20] sm:$0xff]
    %v280 = vld [vmem:[#allocation2 + $0x28] sm:$0xff]
    %v281 = vld [vmem:[#allocation2 + $0x30] sm:$0xff]
    %v282 = vld [vmem:[#allocation2 + $0x38] sm:$0xff]
    %v283 = vld [vmem:[%s2] sm:$0x3]
    %v285 = vperm.slane %v283, 0
    %v286 = vperm.slane %v283, 1
    %v289 = vadd.f32 %v275, %v285
    %v290 = vadd.f32 %v276, %v286
    %v291 = vadd.f32 %v277, %v285
    %v292 = vadd.f32 %v278, %v286
    %v293 = vadd.f32 %v279, %v285
    %v294 = vadd.f32 %v280, %v286
    %v295 = vadd.f32 %v281, %v285
    %v296 = vadd.f32 %v282, %v286
    %v297 = vpack.c.bf16 %v290, %v289
    %v298 = vpack.c.bf16 %v292, %v291
    %v299 = vpack.c.bf16 %v294, %v293
    %v300 = vpack.c.bf16 %v296, %v295
    %vm301 = vcmask 1043456
    %vm302 = vcmask 523268
    %vm303 = vmor %vm302, %vm301
    %304 = vst.msk [vmem:[%s5] sm:$0xff] %vm303, %v297
    %305 = vst.msk [vmem:[%s5 + $0x8] sm:$0xff] %vm303, %v298
    %306 = vst.msk [vmem:[%s5 + $0x10] sm:$0xff] %vm303, %v299
    %307 = vst.msk [vmem:[%s5 + $0x18] sm:$0xff] %vm303, %v300
  $region29: #{long_term_stage.32} parent=0 // pred_fallthru
    _
  // Predicated region
  $region30: #{long_term_stage.32} parent=0 // pred_check
    _
  $region31: #{long_term_stage.32} parent=0 // pred_check_branch
    %309 = sbr.rel (0) target = $region33
  $region32: #{long_term_stage.32} parent=0 // pred_region
    _
  $region33: #{long_term_stage.32} parent=0 // pred_fallthru
    _
  // Predicated region
  $region34: #{long_term_stage.32} parent=0 // pred_check
    _
  $region35: #{long_term_stage.32} parent=0 // pred_check_branch
    %311 = sbr.rel (0) target = $region37
  $region36: #{long_term_stage.32} parent=0 // pred_region
    _
  $region37: #{long_term_stage.32} parent=0 // pred_fallthru
    _

// kernel: long_term_stage.34
$region0: #{long_term_stage.34}
  #allocation0 [shape = 'u32[]', space=smem, size = 0x4, offset = 0x4, fixed_abs, tag = 'smem constant byte address 0x4 - core index']
  #allocation1 [shape = 'u32[72,128]{1,0:T(1,128)}', space=vmem, size = 0x9000, scoped, tag = 'internal scratch']
  #allocation2 [shape = 'f32[32,64]{1,0:T(8,128)}', space=vmem, size = 0x4000, scoped, tag = 'scratch operand']
  %s0 = inlined_call_operand.vmem [shape: bf16[32,64], index: 0, kind: input, shape index: {}]
  %s1 = inlined_call_operand.vmem [shape: bf16[64,64], index: 1, kind: input, shape index: {}]
  %s2 = inlined_call_operand.vmem [shape: f32[1,64], index: 2, kind: input, shape index: {}]
  %s3 = inlined_call_operand.vmem [shape: bf16[32,64], index: 3, kind: input, shape index: {}]
  %s4 = inlined_call_operand.vmem [shape: bf16[32,64], index: 4, kind: output, shape index: {}]
  %s5 = sld [smem:[#allocation0]]
  $region34: #{long_term_stage.34} parent=0
    _
  %s7 = ssub.s32 1, %s5
  %s8 = scalar_select 0, %s7, %s5
  // Predicated region
  $region2: #{long_term_stage.34} parent=0 // pred_check
    _
  $region3: #{long_term_stage.34} parent=0 // pred_check_branch
    %10 = sbr.rel (0) target = $region5
  $region4: #{long_term_stage.34} parent=0 // pred_region
    _
  $region5: #{long_term_stage.34} parent=0 // pred_fallthru
    _
  // Predicated region
  $region6: #{long_term_stage.34} parent=0 // pred_check
    _
  $region7: #{long_term_stage.34} parent=0 // pred_check_branch
    %12 = sbr.rel (0) target = $region9
  $region8: #{long_term_stage.34} parent=0 // pred_region
    _
  $region9: #{long_term_stage.34} parent=0 // pred_fallthru
    _
  // Predicated region
  $region10: #{long_term_stage.34} parent=0 // pred_check
    _
  $region11: #{long_term_stage.34} parent=0 // pred_check_branch
    %14 = sbr.rel (0) target = $region13
  $region12: #{long_term_stage.34} parent=0 // pred_region
    _
  $region13: #{long_term_stage.34} parent=0 // pred_fallthru
    _
  // Predicated region
  $region14: #{long_term_stage.34} parent=0 // pred_check
    _
  $region15: #{long_term_stage.34} parent=0 // pred_check_branch
    %16 = sbr.rel (0) target = $region17
  $region16: #{long_term_stage.34} parent=0 // pred_region
    _
  $region17: #{long_term_stage.34} parent=0 // pred_fallthru
    _
  %p18 = scmp.eq.s32.totalorder 0, 0
  // Predicated region
  $region18: #{long_term_stage.34} parent=0 // pred_check
    %p19 = pneg %p18
  $region19: #{long_term_stage.34} parent=0 // pred_check_branch
    %21 = sbr.rel (%p19) target = $region21
  $region20: #{long_term_stage.34} parent=0 // pred_region
    %vm22 = vcmask 523264
    %23 = vst.msk [vmem:[#allocation2] sm:$0xff] %vm22, 0.0
    %24 = vst.msk [vmem:[#allocation2 + $0x8] sm:$0xff] %vm22, 0.0
    %25 = vst.msk [vmem:[#allocation2 + $0x10] sm:$0xff] %vm22, 0.0
    %26 = vst.msk [vmem:[#allocation2 + $0x18] sm:$0xff] %vm22, 0.0
  $region21: #{long_term_stage.34} parent=0 // pred_fallthru
    _
  %v27 = vld [vmem:[%s0] sm:$0xf]
  %v28 = vld [vmem:[%s0 + $0x4] sm:$0xf]
  %v29 = vld [vmem:[%s0 + $0x8] sm:$0xf]
  %v30 = vld [vmem:[%s0 + $0xc] sm:$0xf]
  %v31 = vld [vmem:[#allocation2] sm:$0xff]
  %v32 = vld [vmem:[#allocation2 + $0x8] sm:$0xff]
  %v33 = vld [vmem:[#allocation2 + $0x10] sm:$0xff]
  %v34 = vld [vmem:[#allocation2 + $0x18] sm:$0xff]
  %v35 = vld [vmem:[%s1] sm:$0xf]
  %v36 = vld [vmem:[%s1 + $0x4] sm:$0xf]
  %v37 = vld [vmem:[%s1 + $0x8] sm:$0xf]
  %v38 = vld [vmem:[%s1 + $0xc] sm:$0xf]
  %v39 = vld [vmem:[%s1 + $0x10] sm:$0xf]
  %v40 = vld [vmem:[%s1 + $0x14] sm:$0xf]
  %v41 = vld [vmem:[%s1 + $0x18] sm:$0xf]
  %v42 = vld [vmem:[%s1 + $0x1c] sm:$0xf]
  %v47 = vunpack.c.l.b16 %v27
  %v48 = vunpack.c.l.b16 %v28
  %v49 = vunpack.c.l.b16 %v29
  %v50 = vunpack.c.l.b16 %v30
  %v51 = vpack.c.b16 %v48, %v47
  %v52 = vpack.c.b16 %v50, %v49
  %v61 = vunpack.c.l.b16 %v35
  %v62 = vunpack.c.l.b16 %v36
  %v63 = vunpack.c.l.b16 %v37
  %v64 = vunpack.c.l.b16 %v38
  %v65 = vunpack.c.l.b16 %v39
  %v66 = vunpack.c.l.b16 %v40
  %v67 = vunpack.c.l.b16 %v41
  %v68 = vunpack.c.l.b16 %v42
  %v69 = vpack.c.b16 %v62, %v61
  %v70 = vpack.c.b16 %v64, %v63
  %v71 = vpack.c.b16 %v66, %v65
  %v72 = vpack.c.b16 %v68, %v67
  %vm77 = vcmask 523264
  %v79 = vsel %vm77, %v51, 0
  %v82 = vsel %vm77, %v52, 0
  %84 = vmatpush.bf16.msra.mxu0 0
  %85 = vmatpush.bf16.msra.mxu0 0
  %86 = vmatpush.bf16.msra.mxu0 0
  %87 = vmatpush.bf16.msra.mxu0 0
  %88 = vmatpush.bf16.msra.mxu0 %v72
  %89 = vmatpush.bf16.msra.mxu0 %v71
  %90 = vmatpush.bf16.msra.mxu0 %v70
  %91 = vmatpush.bf16.msra.mxu0 %v69
  %92 = vmatmul.bf16.gmra.mxu0 %v79
  %v93 = vpop.f32.mrf.mxu0
  %v94 = vadd.f32 0.0, %v93
  %v95 = vpop.f32.mrf.mxu0
  %v96 = vadd.f32 0.0, %v95
  %97 = vmatmul.bf16.gmra.mxu0 %v82
  %v98 = vpop.f32.mrf.mxu0
  %v99 = vadd.f32 0.0, %v98
  %v100 = vpop.f32.mrf.mxu0
  %v101 = vadd.f32 0.0, %v100
  %102 = vdwg.mxu0
  %v103 = vadd.f32 %v31, %v94
  %v104 = vadd.f32 %v32, %v96
  %v105 = vadd.f32 %v33, %v99
  %v106 = vadd.f32 %v34, %v101
  %107 = vst.msk [vmem:[#allocation2] sm:$0xff] %vm77, %v103
  %108 = vst.msk [vmem:[#allocation2 + $0x8] sm:$0xff] %vm77, %v104
  %109 = vst.msk [vmem:[#allocation2 + $0x10] sm:$0xff] %vm77, %v105
  %110 = vst.msk [vmem:[#allocation2 + $0x18] sm:$0xff] %vm77, %v106
  // Predicated region
  $region22: #{long_term_stage.34} parent=0 // pred_check
    %p111 = pneg %p18
  $region23: #{long_term_stage.34} parent=0 // pred_check_branch
    %113 = sbr.rel (%p111) target = $region25
  $region24: #{long_term_stage.34} parent=0 // pred_region
    %v114 = vld [vmem:[#allocation2] sm:$0xff]
    %v115 = vld [vmem:[#allocation2 + $0x8] sm:$0xff]
    %v116 = vld [vmem:[#allocation2 + $0x10] sm:$0xff]
    %v117 = vld [vmem:[#allocation2 + $0x18] sm:$0xff]
    %v118 = vld [vmem:[%s2] sm:$0x1]
    %v120 = vperm.slane %v118, 0
    %v122 = vadd.f32 %v114, %v120
    %v123 = vadd.f32 %v115, %v120
    %v124 = vadd.f32 %v116, %v120
    %v125 = vadd.f32 %v117, %v120
    %v126 = vld [vmem:[%s3] sm:$0xf]
    %v127 = vld [vmem:[%s3 + $0x4] sm:$0xf]
    %v128 = vld [vmem:[%s3 + $0x8] sm:$0xf]
    %v129 = vld [vmem:[%s3 + $0xc] sm:$0xf]
    %v130 = vunpack.c.l.bf16 %v126
    %v131 = vunpack.c.l.bf16 %v127
    %v132 = vunpack.c.l.bf16 %v128
    %v133 = vunpack.c.l.bf16 %v129
    %v134 = vadd.f32 %v122, %v130
    %v135 = vadd.f32 %v123, %v131
    %v136 = vadd.f32 %v124, %v132
    %v137 = vadd.f32 %v125, %v133
    %v138 = vpack.c.bf16 %v134, %v134
    %v139 = vpack.c.bf16 %v135, %v135
    %v140 = vpack.c.bf16 %v136, %v136
    %v141 = vpack.c.bf16 %v137, %v137
    %vm142 = vcmask 519168
    %143 = vst.msk [vmem:[%s4] sm:$0xf] %vm142, %v138
    %144 = vst.msk [vmem:[%s4 + $0x4] sm:$0xf] %vm142, %v139
    %145 = vst.msk [vmem:[%s4 + $0x8] sm:$0xf] %vm142, %v140
    %146 = vst.msk [vmem:[%s4 + $0xc] sm:$0xf] %vm142, %v141
  $region25: #{long_term_stage.34} parent=0 // pred_fallthru
    _
  // Predicated region
  $region26: #{long_term_stage.34} parent=0 // pred_check
    _
  $region27: #{long_term_stage.34} parent=0 // pred_check_branch
    %148 = sbr.rel (0) target = $region29
  $region28: #{long_term_stage.34} parent=0 // pred_region
    _
  $region29: #{long_term_stage.34} parent=0 // pred_fallthru
    _
  // Predicated region
  $region30: #{long_term_stage.34} parent=0 // pred_check
    _
  $region31: #{long_term_stage.34} parent=0 // pred_check_branch
    %150 = sbr.rel (0) target = $region33
  $region32: #{long_term_stage.34} parent=0 // pred_region
    _
  $region33: #{long_term_stage.34} parent=0 // pred_fallthru
    _

// kernel: long_term_stage.35
$region0: #{long_term_stage.35}
  #allocation0 [shape = 'u32[]', space=smem, size = 0x4, offset = 0x4, fixed_abs, tag = 'smem constant byte address 0x4 - core index']
  #allocation1 [shape = 'u32[72,128]{1,0:T(1,128)}', space=vmem, size = 0x9000, scoped, tag = 'internal scratch']
  #allocation2 [shape = 'f32[32,256]{1,0:T(8,128)}', space=vmem, size = 0x8000, scoped, tag = 'scratch operand']
  %s0 = inlined_call_operand.vmem [shape: bf16[32,64], index: 0, kind: input, shape index: {}]
  %s1 = inlined_call_operand.vmem [shape: bf16[64,256], index: 1, kind: input, shape index: {}]
  %s2 = inlined_call_operand.vmem [shape: f32[1,256], index: 2, kind: input, shape index: {}]
  %s3 = inlined_call_operand.vmem [shape: f32[1,64], index: 3, kind: input, shape index: {}]
  %s4 = inlined_call_operand.vmem [shape: f32[1,64], index: 4, kind: input, shape index: {}]
  %s5 = inlined_call_operand.vmem [shape: bf16[32,256], index: 5, kind: output, shape index: {}]
  %s6 = sld [smem:[#allocation0]]
  $region38: #{long_term_stage.35} parent=0
    _
  %s8 = ssub.s32 1, %s6
  %s9 = scalar_select 0, %s8, %s6
  // Predicated region
  $region2: #{long_term_stage.35} parent=0 // pred_check
    _
  $region3: #{long_term_stage.35} parent=0 // pred_check_branch
    %11 = sbr.rel (0) target = $region5
  $region4: #{long_term_stage.35} parent=0 // pred_region
    _
  $region5: #{long_term_stage.35} parent=0 // pred_fallthru
    _
  // Predicated region
  $region6: #{long_term_stage.35} parent=0 // pred_check
    _
  $region7: #{long_term_stage.35} parent=0 // pred_check_branch
    %13 = sbr.rel (0) target = $region9
  $region8: #{long_term_stage.35} parent=0 // pred_region
    _
  $region9: #{long_term_stage.35} parent=0 // pred_fallthru
    _
  // Predicated region
  $region10: #{long_term_stage.35} parent=0 // pred_check
    _
  $region11: #{long_term_stage.35} parent=0 // pred_check_branch
    %15 = sbr.rel (0) target = $region13
  $region12: #{long_term_stage.35} parent=0 // pred_region
    _
  $region13: #{long_term_stage.35} parent=0 // pred_fallthru
    _
  // Predicated region
  $region14: #{long_term_stage.35} parent=0 // pred_check
    _
  $region15: #{long_term_stage.35} parent=0 // pred_check_branch
    %17 = sbr.rel (0) target = $region17
  $region16: #{long_term_stage.35} parent=0 // pred_region
    _
  $region17: #{long_term_stage.35} parent=0 // pred_fallthru
    _
  // Predicated region
  $region18: #{long_term_stage.35} parent=0 // pred_check
    _
  $region19: #{long_term_stage.35} parent=0 // pred_check_branch
    %19 = sbr.rel (0) target = $region21
  $region20: #{long_term_stage.35} parent=0 // pred_region
    _
  $region21: #{long_term_stage.35} parent=0 // pred_fallthru
    _
  %p21 = scmp.eq.s32.totalorder 0, 0
  // Predicated region
  $region22: #{long_term_stage.35} parent=0 // pred_check
    %p22 = pneg %p21
  $region23: #{long_term_stage.35} parent=0 // pred_check_branch
    %24 = sbr.rel (%p22) target = $region25
  $region24: #{long_term_stage.35} parent=0 // pred_region
    %25 = vst [vmem:[#allocation2] sm:$0xff] 0.0
    %26 = vst [vmem:[#allocation2 + $0x8] sm:$0xff] 0.0
    %27 = vst [vmem:[#allocation2 + $0x10] sm:$0xff] 0.0
    %28 = vst [vmem:[#allocation2 + $0x18] sm:$0xff] 0.0
    %29 = vst [vmem:[#allocation2 + $0x20] sm:$0xff] 0.0
    %30 = vst [vmem:[#allocation2 + $0x28] sm:$0xff] 0.0
    %31 = vst [vmem:[#allocation2 + $0x30] sm:$0xff] 0.0
    %32 = vst [vmem:[#allocation2 + $0x38] sm:$0xff] 0.0
  $region25: #{long_term_stage.35} parent=0 // pred_fallthru
    _
  %v33 = vld [vmem:[%s0] sm:$0xf]
  %v34 = vld [vmem:[%s0 + $0x4] sm:$0xf]
  %v35 = vld [vmem:[%s0 + $0x8] sm:$0xf]
  %v36 = vld [vmem:[%s0 + $0xc] sm:$0xf]
  %v37 = vunpack.c.l.bf16 %v33
  %v38 = vunpack.c.l.bf16 %v34
  %v39 = vunpack.c.l.bf16 %v35
  %v40 = vunpack.c.l.bf16 %v36
  %vm41 = vcmask 523264
  %v42 = vsel %vm41, %v37, 0.0
  %43 = vadd.xlane.f32.xlu0 %v42
  %v44 = vpop.xlane.xlu0 %43
  %v45 = vsel %vm41, %v38, 0.0
  %46 = vadd.xlane.f32.xlu0 %v45
  %v47 = vpop.xlane.xlu0 %46
  %v48 = vsel %vm41, %v39, 0.0
  %49 = vadd.xlane.f32.xlu0 %v48
  %v50 = vpop.xlane.xlu0 %49
  %v51 = vsel %vm41, %v40, 0.0
  %52 = vadd.xlane.f32.xlu0 %v51
  %v53 = vpop.xlane.xlu0 %52
  %v54 = vrcp.pop 64.0
  %v55 = vmul.f32 64.0, %v54
  %v56 = vsub.f32 1.0, %v55
  %v57 = vmul.f32 %v54, %v56
  %v58 = vadd.f32 %v54, %v57
  %vm59 = vweird.f32 %v54
  %v60 = vsel %vm59, %v54, %v58
  %v61 = vmul.f32 %v44, %v60
  %v62 = vmul.f32 %v47, %v60
  %v63 = vmul.f32 %v50, %v60
  %v64 = vmul.f32 %v53, %v60
  %v65 = vsub.f32 %v37, %v61
  %v66 = vsub.f32 %v38, %v62
  %v67 = vsub.f32 %v39, %v63
  %v68 = vsub.f32 %v40, %v64
  %v69 = vmul.f32 %v65, %v65
  %v70 = vmul.f32 %v66, %v66
  %v71 = vmul.f32 %v67, %v67
  %v72 = vmul.f32 %v68, %v68
  %v73 = vsel %vm41, %v69, 0.0
  %74 = vadd.xlane.f32.xlu0 %v73
  %v75 = vpop.xlane.xlu0 %74
  %v76 = vsel %vm41, %v70, 0.0
  %77 = vadd.xlane.f32.xlu0 %v76
  %v78 = vpop.xlane.xlu0 %77
  %v79 = vsel %vm41, %v71, 0.0
  %80 = vadd.xlane.f32.xlu0 %v79
  %v81 = vpop.xlane.xlu0 %80
  %v82 = vsel %vm41, %v72, 0.0
  %83 = vadd.xlane.f32.xlu0 %v82
  %v84 = vpop.xlane.xlu0 %83
  %v85 = vmul.f32 %v75, %v60
  %v86 = vmul.f32 %v78, %v60
  %v87 = vmul.f32 %v81, %v60
  %v88 = vmul.f32 %v84, %v60
  %v89 = vadd.f32 %v85, 1e-05
  %v90 = vadd.f32 %v86, 1e-05
  %v91 = vadd.f32 %v87, 1e-05
  %v92 = vadd.f32 %v88, 1e-05
  %v93 = vrsqrt.pop %v89
  %v94 = vmul.f32 %v93, %v89
  %v95 = vmul.f32 %v94, %v93
  %v96 = vmul.f32 0.5, %v95
  %v97 = vsub.f32 1.5, %v96
  %v98 = vmul.f32 %v93, %v97
  %vm99 = vweird.f32 %v89
  %vm100 = vweird.f32 %v93
  %vm101 = vmor %vm99, %vm100
  %v102 = vsel %vm101, %v93, %v98
  %v103 = vrsqrt.pop %v90
  %v104 = vmul.f32 %v103, %v90
  %v105 = vmul.f32 %v104, %v103
  %v106 = vmul.f32 0.5, %v105
  %v107 = vsub.f32 1.5, %v106
  %v108 = vmul.f32 %v103, %v107
  %vm109 = vweird.f32 %v90
  %vm110 = vweird.f32 %v103
  %vm111 = vmor %vm109, %vm110
  %v112 = vsel %vm111, %v103, %v108
  %v113 = vrsqrt.pop %v91
  %v114 = vmul.f32 %v113, %v91
  %v115 = vmul.f32 %v114, %v113
  %v116 = vmul.f32 0.5, %v115
  %v117 = vsub.f32 1.5, %v116
  %v118 = vmul.f32 %v113, %v117
  %vm119 = vweird.f32 %v91
  %vm120 = vweird.f32 %v113
  %vm121 = vmor %vm119, %vm120
  %v122 = vsel %vm121, %v113, %v118
  %v123 = vrsqrt.pop %v92
  %v124 = vmul.f32 %v123, %v92
  %v125 = vmul.f32 %v124, %v123
  %v126 = vmul.f32 0.5, %v125
  %v127 = vsub.f32 1.5, %v126
  %v128 = vmul.f32 %v123, %v127
  %vm129 = vweird.f32 %v92
  %vm130 = vweird.f32 %v123
  %vm131 = vmor %vm129, %vm130
  %v132 = vsel %vm131, %v123, %v128
  %v133 = vmul.f32 %v65, %v102
  %v134 = vmul.f32 %v66, %v112
  %v135 = vmul.f32 %v67, %v122
  %v136 = vmul.f32 %v68, %v132
  %v137 = vld [vmem:[%s3] sm:$0x1]
  %v139 = vperm.slane %v137, 0
  %v141 = vmul.f32 %v133, %v139
  %v142 = vmul.f32 %v134, %v139
  %v143 = vmul.f32 %v135, %v139
  %v144 = vmul.f32 %v136, %v139
  %v145 = vld [vmem:[%s4] sm:$0x1]
  %v147 = vperm.slane %v145, 0
  %v149 = vadd.f32 %v141, %v147
  %v150 = vadd.f32 %v142, %v147
  %v151 = vadd.f32 %v143, %v147
  %v152 = vadd.f32 %v144, %v147
  %v153 = vpack.c.bf16 %v150, %v149
  %v154 = vpack.c.bf16 %v152, %v151
  %v155 = vld [vmem:[#allocation2] sm:$0xff]
  %v156 = vld [vmem:[#allocation2 + $0x8] sm:$0xff]
  %v157 = vld [vmem:[#allocation2 + $0x10] sm:$0xff]
  %v158 = vld [vmem:[#allocation2 + $0x18] sm:$0xff]
  %v159 = vld [vmem:[#allocation2 + $0x20] sm:$0xff]
  %v160 = vld [vmem:[#allocation2 + $0x28] sm:$0xff]
  %v161 = vld [vmem:[#allocation2 + $0x30] sm:$0xff]
  %v162 = vld [vmem:[#allocation2 + $0x38] sm:$0xff]
  %v163 = vld [vmem:[%s1] sm:$0xff]
  %v164 = vld [vmem:[%s1 + $0x8] sm:$0xff]
  %v165 = vld [vmem:[%s1 + $0x10] sm:$0xff]
  %v166 = vld [vmem:[%s1 + $0x18] sm:$0xff]
  %v167 = vld [vmem:[%s1 + $0x20] sm:$0xff]
  %v168 = vld [vmem:[%s1 + $0x28] sm:$0xff]
  %v169 = vld [vmem:[%s1 + $0x30] sm:$0xff]
  %v170 = vld [vmem:[%s1 + $0x38] sm:$0xff]
  %v179 = vunpack.c.l.b16 %v163
  %v180 = vunpack.c.h.b16 %v163
  %v181 = vunpack.c.l.b16 %v164
  %v182 = vunpack.c.h.b16 %v164
  %v183 = vunpack.c.l.b16 %v165
  %v184 = vunpack.c.h.b16 %v165
  %v185 = vunpack.c.l.b16 %v166
  %v186 = vunpack.c.h.b16 %v166
  %v187 = vunpack.c.l.b16 %v167
  %v188 = vunpack.c.h.b16 %v167
  %v189 = vunpack.c.l.b16 %v168
  %v190 = vunpack.c.h.b16 %v168
  %v191 = vunpack.c.l.b16 %v169
  %v192 = vunpack.c.h.b16 %v169
  %v193 = vunpack.c.l.b16 %v170
  %v194 = vunpack.c.h.b16 %v170
  %v195 = vpack.c.b16 %v181, %v179
  %v196 = vpack.c.b16 %v182, %v180
  %v197 = vpack.c.b16 %v185, %v183
  %v198 = vpack.c.b16 %v186, %v184
  %v199 = vpack.c.b16 %v189, %v187
  %v200 = vpack.c.b16 %v190, %v188
  %v201 = vpack.c.b16 %v193, %v191
  %v202 = vpack.c.b16 %v194, %v192
  %v212 = vsel %vm41, %v153, 0
  %v215 = vsel %vm41, %v154, 0
  %217 = vmatpush.bf16.msra.mxu0 0
  %218 = vmatpush.bf16.msra.mxu0 0
  %219 = vmatpush.bf16.msra.mxu0 0
  %220 = vmatpush.bf16.msra.mxu0 0
  %221 = vmatpush.bf16.msra.mxu0 %v201
  %222 = vmatpush.bf16.msra.mxu0 %v199
  %223 = vmatpush.bf16.msra.mxu0 %v197
  %224 = vmatpush.bf16.msra.mxu0 %v195
  %225 = vmatmul.bf16.gmra.mxu0 %v212
  %v226 = vpop.f32.mrf.mxu0
  %v227 = vadd.f32 0.0, %v226
  %v228 = vpop.f32.mrf.mxu0
  %v229 = vadd.f32 0.0, %v228
  %230 = vmatmul.bf16.gmra.mxu0 %v215
  %v231 = vpop.f32.mrf.mxu0
  %v232 = vadd.f32 0.0, %v231
  %v233 = vpop.f32.mrf.mxu0
  %v234 = vadd.f32 0.0, %v233
  %235 = vdwg.mxu0
  %236 = vmatpush.bf16.msra.mxu0 0
  %237 = vmatpush.bf16.msra.mxu0 0
  %238 = vmatpush.bf16.msra.mxu0 0
  %239 = vmatpush.bf16.msra.mxu0 0
  %240 = vmatpush.bf16.msra.mxu0 %v202
  %241 = vmatpush.bf16.msra.mxu0 %v200
  %242 = vmatpush.bf16.msra.mxu0 %v198
  %243 = vmatpush.bf16.msra.mxu0 %v196
  %244 = vmatmul.bf16.gmra.mxu0 %v212
  %v245 = vpop.f32.mrf.mxu0
  %v246 = vadd.f32 0.0, %v245
  %v247 = vpop.f32.mrf.mxu0
  %v248 = vadd.f32 0.0, %v247
  %249 = vmatmul.bf16.gmra.mxu0 %v215
  %v250 = vpop.f32.mrf.mxu0
  %v251 = vadd.f32 0.0, %v250
  %v252 = vpop.f32.mrf.mxu0
  %v253 = vadd.f32 0.0, %v252
  %254 = vdwg.mxu0
  %v255 = vadd.f32 %v155, %v227
  %v256 = vadd.f32 %v156, %v246
  %v257 = vadd.f32 %v157, %v229
  %v258 = vadd.f32 %v158, %v248
  %v259 = vadd.f32 %v159, %v232
  %v260 = vadd.f32 %v160, %v251
  %v261 = vadd.f32 %v161, %v234
  %v262 = vadd.f32 %v162, %v253
  %263 = vst [vmem:[#allocation2] sm:$0xff] %v255
  %264 = vst [vmem:[#allocation2 + $0x8] sm:$0xff] %v256
  %265 = vst [vmem:[#allocation2 + $0x10] sm:$0xff] %v257
  %266 = vst [vmem:[#allocation2 + $0x18] sm:$0xff] %v258
  %267 = vst [vmem:[#allocation2 + $0x20] sm:$0xff] %v259
  %268 = vst [vmem:[#allocation2 + $0x28] sm:$0xff] %v260
  %269 = vst [vmem:[#allocation2 + $0x30] sm:$0xff] %v261
  %270 = vst [vmem:[#allocation2 + $0x38] sm:$0xff] %v262
  // Predicated region
  $region26: #{long_term_stage.35} parent=0 // pred_check
    %p271 = pneg %p21
  $region27: #{long_term_stage.35} parent=0 // pred_check_branch
    %273 = sbr.rel (%p271) target = $region29
  $region28: #{long_term_stage.35} parent=0 // pred_region
    %v274 = vld [vmem:[#allocation2] sm:$0xff]
    %v275 = vld [vmem:[#allocation2 + $0x8] sm:$0xff]
    %v276 = vld [vmem:[#allocation2 + $0x10] sm:$0xff]
    %v277 = vld [vmem:[#allocation2 + $0x18] sm:$0xff]
    %v278 = vld [vmem:[#allocation2 + $0x20] sm:$0xff]
    %v279 = vld [vmem:[#allocation2 + $0x28] sm:$0xff]
    %v280 = vld [vmem:[#allocation2 + $0x30] sm:$0xff]
    %v281 = vld [vmem:[#allocation2 + $0x38] sm:$0xff]
    %v282 = vld [vmem:[%s2] sm:$0x3]
    %v284 = vperm.slane %v282, 0
    %v285 = vperm.slane %v282, 1
    %v288 = vadd.f32 %v274, %v284
    %v289 = vadd.f32 %v275, %v285
    %v290 = vadd.f32 %v276, %v284
    %v291 = vadd.f32 %v277, %v285
    %v292 = vadd.f32 %v278, %v284
    %v293 = vadd.f32 %v279, %v285
    %v294 = vadd.f32 %v280, %v284
    %v295 = vadd.f32 %v281, %v285
    %v296 = vmul.f32 %v288, 0.5
    %v297 = vmul.f32 %v289, 0.5
    %v298 = vmul.f32 %v290, 0.5
    %v299 = vmul.f32 %v291, 0.5
    %v300 = vmul.f32 %v292, 0.5
    %v301 = vmul.f32 %v293, 0.5
    %v302 = vmul.f32 %v294, 0.5
    %v303 = vmul.f32 %v295, 0.5
    %v304 = vmul.f32 %v288, 0.70710677
    %v305 = vmul.f32 %v289, 0.70710677
    %v306 = vmul.f32 %v290, 0.70710677
    %v307 = vmul.f32 %v291, 0.70710677
    %v308 = vmul.f32 %v292, 0.70710677
    %v309 = vmul.f32 %v293, 0.70710677
    %v310 = vmul.f32 %v294, 0.70710677
    %v311 = vmul.f32 %v295, 0.70710677
    %v312 = vand.u32 2147483647, %v304
    %v313 = vand.u32 2147483647, %v305
    %v314 = vand.u32 2147483647, %v306
    %v315 = vand.u32 2147483647, %v307
    %v316 = vand.u32 2147483647, %v308
    %v317 = vand.u32 2147483647, %v309
    %v318 = vand.u32 2147483647, %v310
    %v319 = vand.u32 2147483647, %v311
    %v320 = vmul.f32 %v312, 0.3275911
    %v321 = vmul.f32 %v313, 0.3275911
    %v322 = vmul.f32 %v314, 0.3275911
    %v323 = vmul.f32 %v315, 0.3275911
    %v324 = vmul.f32 %v316, 0.3275911
    %v325 = vmul.f32 %v317, 0.3275911
    %v326 = vmul.f32 %v318, 0.3275911
    %v327 = vmul.f32 %v319, 0.3275911
    %v328 = vadd.f32 %v320, 1.0
    %v329 = vadd.f32 %v321, 1.0
    %v330 = vadd.f32 %v322, 1.0
    %v331 = vadd.f32 %v323, 1.0
    %v332 = vadd.f32 %v324, 1.0
    %v333 = vadd.f32 %v325, 1.0
    %v334 = vadd.f32 %v326, 1.0
    %v335 = vadd.f32 %v327, 1.0
    %v336 = vrcp.pop %v328
    %v337 = vmul.f32 %v328, %v336
    %v338 = vsub.f32 1.0, %v337
    %v339 = vmul.f32 %v336, %v338
    %v340 = vadd.f32 %v336, %v339
    %vm341 = vweird.f32 %v328
    %vm342 = vweird.f32 %v336
    %vm343 = vmor %vm341, %vm342
    %v344 = vsel %vm343, %v336, %v340
    %v345 = vand.u32 2147483647, %v328
    %vm346 = vcmp.eq.f32.partialorder %v345, 8.507059e+37
    %v347 = vand.u32 %v328, 2147483648
    %v348 = vor.u32 1.1754944e-38, %v347
    %v349 = vsel %vm346, %v348, %v344
    %v350 = vmul.f32 1.0, %v349
    %v351 = vrcp.pop %v329
    %v352 = vmul.f32 %v329, %v351
    %v353 = vsub.f32 1.0, %v352
    %v354 = vmul.f32 %v351, %v353
    %v355 = vadd.f32 %v351, %v354
    %vm356 = vweird.f32 %v329
    %vm357 = vweird.f32 %v351
    %vm358 = vmor %vm356, %vm357
    %v359 = vsel %vm358, %v351, %v355
    %v360 = vand.u32 2147483647, %v329
    %vm361 = vcmp.eq.f32.partialorder %v360, 8.507059e+37
    %v362 = vand.u32 %v329, 2147483648
    %v363 = vor.u32 1.1754944e-38, %v362
    %v364 = vsel %vm361, %v363, %v359
    %v365 = vmul.f32 1.0, %v364
    %v366 = vrcp.pop %v330
    %v367 = vmul.f32 %v330, %v366
    %v368 = vsub.f32 1.0, %v367
    %v369 = vmul.f32 %v366, %v368
    %v370 = vadd.f32 %v366, %v369
    %vm371 = vweird.f32 %v330
    %vm372 = vweird.f32 %v366
    %vm373 = vmor %vm371, %vm372
    %v374 = vsel %vm373, %v366, %v370
    %v375 = vand.u32 2147483647, %v330
    %vm376 = vcmp.eq.f32.partialorder %v375, 8.507059e+37
    %v377 = vand.u32 %v330, 2147483648
    %v378 = vor.u32 1.1754944e-38, %v377
    %v379 = vsel %vm376, %v378, %v374
    %v380 = vmul.f32 1.0, %v379
    %v381 = vrcp.pop %v331
    %v382 = vmul.f32 %v331, %v381
    %v383 = vsub.f32 1.0, %v382
    %v384 = vmul.f32 %v381, %v383
    %v385 = vadd.f32 %v381, %v384
    %vm386 = vweird.f32 %v331
    %vm387 = vweird.f32 %v381
    %vm388 = vmor %vm386, %vm387
    %v389 = vsel %vm388, %v381, %v385
    %v390 = vand.u32 2147483647, %v331
    %vm391 = vcmp.eq.f32.partialorder %v390, 8.507059e+37
    %v392 = vand.u32 %v331, 2147483648
    %v393 = vor.u32 1.1754944e-38, %v392
    %v394 = vsel %vm391, %v393, %v389
    %v395 = vmul.f32 1.0, %v394
    %v396 = vrcp.pop %v332
    %v397 = vmul.f32 %v332, %v396
    %v398 = vsub.f32 1.0, %v397
    %v399 = vmul.f32 %v396, %v398
    %v400 = vadd.f32 %v396, %v399
    %vm401 = vweird.f32 %v332
    %vm402 = vweird.f32 %v396
    %vm403 = vmor %vm401, %vm402
    %v404 = vsel %vm403, %v396, %v400
    %v405 = vand.u32 2147483647, %v332
    %vm406 = vcmp.eq.f32.partialorder %v405, 8.507059e+37
    %v407 = vand.u32 %v332, 2147483648
    %v408 = vor.u32 1.1754944e-38, %v407
    %v409 = vsel %vm406, %v408, %v404
    %v410 = vmul.f32 1.0, %v409
    %v411 = vrcp.pop %v333
    %v412 = vmul.f32 %v333, %v411
    %v413 = vsub.f32 1.0, %v412
    %v414 = vmul.f32 %v411, %v413
    %v415 = vadd.f32 %v411, %v414
    %vm416 = vweird.f32 %v333
    %vm417 = vweird.f32 %v411
    %vm418 = vmor %vm416, %vm417
    %v419 = vsel %vm418, %v411, %v415
    %v420 = vand.u32 2147483647, %v333
    %vm421 = vcmp.eq.f32.partialorder %v420, 8.507059e+37
    %v422 = vand.u32 %v333, 2147483648
    %v423 = vor.u32 1.1754944e-38, %v422
    %v424 = vsel %vm421, %v423, %v419
    %v425 = vmul.f32 1.0, %v424
    %v426 = vrcp.pop %v334
    %v427 = vmul.f32 %v334, %v426
    %v428 = vsub.f32 1.0, %v427
    %v429 = vmul.f32 %v426, %v428
    %v430 = vadd.f32 %v426, %v429
    %vm431 = vweird.f32 %v334
    %vm432 = vweird.f32 %v426
    %vm433 = vmor %vm431, %vm432
    %v434 = vsel %vm433, %v426, %v430
    %v435 = vand.u32 2147483647, %v334
    %vm436 = vcmp.eq.f32.partialorder %v435, 8.507059e+37
    %v437 = vand.u32 %v334, 2147483648
    %v438 = vor.u32 1.1754944e-38, %v437
    %v439 = vsel %vm436, %v438, %v434
    %v440 = vmul.f32 1.0, %v439
    %v441 = vrcp.pop %v335
    %v442 = vmul.f32 %v335, %v441
    %v443 = vsub.f32 1.0, %v442
    %v444 = vmul.f32 %v441, %v443
    %v445 = vadd.f32 %v441, %v444
    %vm446 = vweird.f32 %v335
    %vm447 = vweird.f32 %v441
    %vm448 = vmor %vm446, %vm447
    %v449 = vsel %vm448, %v441, %v445
    %v450 = vand.u32 2147483647, %v335
    %vm451 = vcmp.eq.f32.partialorder %v450, 8.507059e+37
    %v452 = vand.u32 %v335, 2147483648
    %v453 = vor.u32 1.1754944e-38, %v452
    %v454 = vsel %vm451, %v453, %v449
    %v455 = vmul.f32 1.0, %v454
    %v456 = vmul.f32 %v350, 1.0614054
    %v457 = vmul.f32 %v365, 1.0614054
    %v458 = vmul.f32 %v380, 1.0614054
    %v459 = vmul.f32 %v395, 1.0614054
    %v460 = vmul.f32 %v410, 1.0614054
    %v461 = vmul.f32 %v425, 1.0614054
    %v462 = vmul.f32 %v440, 1.0614054
    %v463 = vmul.f32 %v455, 1.0614054
    %v464 = vadd.f32 %v456, -1.4531521
    %v465 = vadd.f32 %v457, -1.4531521
    %v466 = vadd.f32 %v458, -1.4531521
    %v467 = vadd.f32 %v459, -1.4531521
    %v468 = vadd.f32 %v460, -1.4531521
    %v469 = vadd.f32 %v461, -1.4531521
    %v470 = vadd.f32 %v462, -1.4531521
    %v471 = vadd.f32 %v463, -1.4531521
    %v472 = vmul.f32 %v464, %v350
    %v473 = vmul.f32 %v465, %v365
    %v474 = vmul.f32 %v466, %v380
    %v475 = vmul.f32 %v467, %v395
    %v476 = vmul.f32 %v468, %v410
    %v477 = vmul.f32 %v469, %v425
    %v478 = vmul.f32 %v470, %v440
    %v479 = vmul.f32 %v471, %v455
    %v480 = vadd.f32 %v472, 1.4214138
    %v481 = vadd.f32 %v473, 1.4214138
    %v482 = vadd.f32 %v474, 1.4214138
    %v483 = vadd.f32 %v475, 1.4214138
    %v484 = vadd.f32 %v476, 1.4214138
    %v485 = vadd.f32 %v477, 1.4214138
    %v486 = vadd.f32 %v478, 1.4214138
    %v487 = vadd.f32 %v479, 1.4214138
    %v488 = vmul.f32 %v480, %v350
    %v489 = vmul.f32 %v481, %v365
    %v490 = vmul.f32 %v482, %v380
    %v491 = vmul.f32 %v483, %v395
    %v492 = vmul.f32 %v484, %v410
    %v493 = vmul.f32 %v485, %v425
    %v494 = vmul.f32 %v486, %v440
    %v495 = vmul.f32 %v487, %v455
    %v496 = vadd.f32 %v488, -0.28449672
    %v497 = vadd.f32 %v489, -0.28449672
    %v498 = vadd.f32 %v490, -0.28449672
    %v499 = vadd.f32 %v491, -0.28449672
    %v500 = vadd.f32 %v492, -0.28449672
    %v501 = vadd.f32 %v493, -0.28449672
    %v502 = vadd.f32 %v494, -0.28449672
    %v503 = vadd.f32 %v495, -0.28449672
    %v504 = vmul.f32 %v496, %v350
    %v505 = vmul.f32 %v497, %v365
    %v506 = vmul.f32 %v498, %v380
    %v507 = vmul.f32 %v499, %v395
    %v508 = vmul.f32 %v500, %v410
    %v509 = vmul.f32 %v501, %v425
    %v510 = vmul.f32 %v502, %v440
    %v511 = vmul.f32 %v503, %v455
    %v512 = vadd.f32 %v504, 0.2548296
    %v513 = vadd.f32 %v505, 0.2548296
    %v514 = vadd.f32 %v506, 0.2548296
    %v515 = vadd.f32 %v507, 0.2548296
    %v516 = vadd.f32 %v508, 0.2548296
    %v517 = vadd.f32 %v509, 0.2548296
    %v518 = vadd.f32 %v510, 0.2548296
    %v519 = vadd.f32 %v511, 0.2548296
    %v520 = vmul.f32 %v512, %v350
    %v521 = vmul.f32 %v513, %v365
    %v522 = vmul.f32 %v514, %v380
    %v523 = vmul.f32 %v515, %v395
    %v524 = vmul.f32 %v516, %v410
    %v525 = vmul.f32 %v517, %v425
    %v526 = vmul.f32 %v518, %v440
    %v527 = vmul.f32 %v519, %v455
    %v528 = vsub.f32 0.0, %v312
    %v529 = vsub.f32 0.0, %v313
    %v530 = vsub.f32 0.0, %v314
    %v531 = vsub.f32 0.0, %v315
    %v532 = vsub.f32 0.0, %v316
    %v533 = vsub.f32 0.0, %v317
    %v534 = vsub.f32 0.0, %v318
    %v535 = vsub.f32 0.0, %v319
    %v536 = vmul.f32 %v528, %v312
    %v537 = vmul.f32 %v529, %v313
    %v538 = vmul.f32 %v530, %v314
    %v539 = vmul.f32 %v531, %v315
    %v540 = vmul.f32 %v532, %v316
    %v541 = vmul.f32 %v533, %v317
    %v542 = vmul.f32 %v534, %v318
    %v543 = vmul.f32 %v535, %v319
    %v544 = vmul.f32 %v536, 1.442695
    %v545 = vpow.pop %v544
    %v546 = vmul.f32 %v537, 1.442695
    %v547 = vpow.pop %v546
    %v548 = vmul.f32 %v538, 1.442695
    %v549 = vpow.pop %v548
    %v550 = vmul.f32 %v539, 1.442695
    %v551 = vpow.pop %v550
    %v552 = vmul.f32 %v540, 1.442695
    %v553 = vpow.pop %v552
    %v554 = vmul.f32 %v541, 1.442695
    %v555 = vpow.pop %v554
    %v556 = vmul.f32 %v542, 1.442695
    %v557 = vpow.pop %v556
    %v558 = vmul.f32 %v543, 1.442695
    %v559 = vpow.pop %v558
    %v560 = vmul.f32 %v520, %v545
    %v561 = vmul.f32 %v521, %v547
    %v562 = vmul.f32 %v522, %v549
    %v563 = vmul.f32 %v523, %v551
    %v564 = vmul.f32 %v524, %v553
    %v565 = vmul.f32 %v525, %v555
    %v566 = vmul.f32 %v526, %v557
    %v567 = vmul.f32 %v527, %v559
    %v568 = vsub.f32 1.0, %v560
    %v569 = vsub.f32 1.0, %v561
    %v570 = vsub.f32 1.0, %v562
    %v571 = vsub.f32 1.0, %v563
    %v572 = vsub.f32 1.0, %v564
    %v573 = vsub.f32 1.0, %v565
    %v574 = vsub.f32 1.0, %v566
    %v575 = vsub.f32 1.0, %v567
    %vm576 = vcmp.lt.f32.partialorder %v304, 0.0
    %vm577 = vcmp.lt.f32.partialorder %v305, 0.0
    %vm578 = vcmp.lt.f32.partialorder %v306, 0.0
    %vm579 = vcmp.lt.f32.partialorder %v307, 0.0
    %vm580 = vcmp.lt.f32.partialorder %v308, 0.0
    %vm581 = vcmp.lt.f32.partialorder %v309, 0.0
    %vm582 = vcmp.lt.f32.partialorder %v310, 0.0
    %vm583 = vcmp.lt.f32.partialorder %v311, 0.0
    %v584 = vsub.f32 0.0, %v568
    %v585 = vsub.f32 0.0, %v569
    %v586 = vsub.f32 0.0, %v570
    %v587 = vsub.f32 0.0, %v571
    %v588 = vsub.f32 0.0, %v572
    %v589 = vsub.f32 0.0, %v573
    %v590 = vsub.f32 0.0, %v574
    %v591 = vsub.f32 0.0, %v575
    %v592 = vsel %vm576, %v584, %v568
    %v593 = vsel %vm577, %v585, %v569
    %v594 = vsel %vm578, %v586, %v570
    %v595 = vsel %vm579, %v587, %v571
    %v596 = vsel %vm580, %v588, %v572
    %v597 = vsel %vm581, %v589, %v573
    %v598 = vsel %vm582, %v590, %v574
    %v599 = vsel %vm583, %v591, %v575
    %v600 = vadd.f32 %v592, 1.0
    %v601 = vadd.f32 %v593, 1.0
    %v602 = vadd.f32 %v594, 1.0
    %v603 = vadd.f32 %v595, 1.0
    %v604 = vadd.f32 %v596, 1.0
    %v605 = vadd.f32 %v597, 1.0
    %v606 = vadd.f32 %v598, 1.0
    %v607 = vadd.f32 %v599, 1.0
    %v608 = vmul.f32 %v296, %v600
    %v609 = vmul.f32 %v297, %v601
    %v610 = vmul.f32 %v298, %v602
    %v611 = vmul.f32 %v299, %v603
    %v612 = vmul.f32 %v300, %v604
    %v613 = vmul.f32 %v301, %v605
    %v614 = vmul.f32 %v302, %v606
    %v615 = vmul.f32 %v303, %v607
    %v616 = vpack.c.bf16 %v609, %v608
    %v617 = vpack.c.bf16 %v611, %v610
    %v618 = vpack.c.bf16 %v613, %v612
    %v619 = vpack.c.bf16 %v615, %v614
    %620 = vst [vmem:[%s5] sm:$0xff] %v616
    %621 = vst [vmem:[%s5 + $0x8] sm:$0xff] %v617
    %622 = vst [vmem:[%s5 + $0x10] sm:$0xff] %v618
    %623 = vst [vmem:[%s5 + $0x18] sm:$0xff] %v619
  $region29: #{long_term_stage.35} parent=0 // pred_fallthru
    _
  // Predicated region
  $region30: #{long_term_stage.35} parent=0 // pred_check
    _
  $region31: #{long_term_stage.35} parent=0 // pred_check_branch
    %625 = sbr.rel (0) target = $region33
  $region32: #{long_term_stage.35} parent=0 // pred_region
    _
  $region33: #{long_term_stage.35} parent=0 // pred_fallthru
    _
  // Predicated region
  $region34: #{long_term_stage.35} parent=0 // pred_check
    _
  $region35: #{long_term_stage.35} parent=0 // pred_check_branch
    %627 = sbr.rel (0) target = $region37
  $region36: #{long_term_stage.35} parent=0 // pred_region
    _
  $region37: #{long_term_stage.35} parent=0 // pred_fallthru
    _

// kernel: long_term_stage.33
$region0: #{long_term_stage.33}
  #allocation0 [shape = 'u32[]', space=smem, size = 0x4, offset = 0x4, fixed_abs, tag = 'smem constant byte address 0x4 - core index']
  #allocation1 [shape = 'u32[72,128]{1,0:T(1,128)}', space=vmem, size = 0x9000, scoped, tag = 'internal scratch']
  %s0 = inlined_call_operand.vmem [shape: bf16[2,16,192], index: 0, kind: input, shape index: {}]
  %s1 = inlined_call_operand.vmem [shape: f32[8,16,16], index: 1, kind: input, shape index: {}]
  %s2 = inlined_call_operand.vmem [shape: bf16[2,16,64], index: 2, kind: output, shape index: {}]
  %s3 = sld [smem:[#allocation0]]
  $region41: #{long_term_stage.33} parent=0
    _
  %s5 = ssub.s32 1, %s3
  %s6 = scalar_select 0, %s5, %s3
  loop: start=0, step=1, limit=4
  $region2: #{long_term_stage.33} parent=0 // loop_pre_header
    _
  $region3: #{long_term_stage.33} parent=0 // loop_header
    %s8 = sphi 0, %s12
    %p9 = scmp.ge.s32.totalorder %s8, 4
    %s18 = sphi 0, %s20
    %s21 = sphi 0, %s18
    %s22 = sphi 0, %s21
    %s38 = sphi 0, %s22
    %s42 = sphi 0, %s42
    %s44 = sphi 0, %s42
    %s45 = sphi 0, %s44
    %s59 = sphi 0, %s45
    %s65 = sphi 0, %s67
    %s68 = sphi 0, %s65
    %s69 = sphi 0, %s68
    %s85 = sphi 0, %s69
  $region4: #{long_term_stage.33} parent=0 // loop_header_branch
    %11 = sbr.rel (%p9) target = $region8
  $region5: #{long_term_stage.33} parent=0 // loop_body
    %s13 = ssub.s32 %s8, 1
    %s14 = ssub.s32 %s8, 2
    %s15 = sadd.s32 %s8, 1
    %s16 = ssub.s32 %s8, %s15
    %p17 = scmp.eq.s32.totalorder %s16, 0
    %s19 = sadd.s32 %s18, 1
    %s20 = scalar_select %p17, %s18, %s19
    %p23 = pneg %p17
    %p24 = scmp.eq.s32.totalorder %s8, 1
    %p25 = por %p23, %p24
    %p26 = scmp.ne.s32.totalorder %s18, %s21
    %p27 = scmp.eq.s32.totalorder %s8, 0
    %p28 = por %p26, %p27
    %p29 = scmp.ne.s32.totalorder %s18, %s21
    %p30 = scmp.eq.s32.totalorder %s13, 1
    %p31 = por %p29, %p30
    %p32 = scmp.ne.s32.totalorder %s21, %s22
    %p33 = scmp.eq.s32.totalorder %s13, 0
    %p34 = por %p32, %p33
    %p35 = scmp.ne.s32.totalorder %s21, %s22
    %p36 = scmp.eq.s32.totalorder %s14, 1
    %p37 = por %p35, %p36
    %p39 = scmp.ne.s32.totalorder %s22, %s38
    %p40 = scmp.eq.s32.totalorder %s14, 0
    %p41 = por %p39, %p40
    %s43 = sadd.s32 %s42, 1
    %p46 = scmp.eq.s32.totalorder %s8, 1
    %p47 = scmp.ne.s32.totalorder %s42, %s44
    %p48 = scmp.eq.s32.totalorder %s8, 0
    %p49 = por %p47, %p48
    %p50 = scmp.ne.s32.totalorder %s42, %s44
    %p51 = scmp.eq.s32.totalorder %s13, 1
    %p52 = por %p50, %p51
    %p53 = scmp.ne.s32.totalorder %s44, %s45
    %p54 = scmp.eq.s32.totalorder %s13, 0
    %p55 = por %p53, %p54
    %p56 = scmp.ne.s32.totalorder %s44, %s45
    %p57 = scmp.eq.s32.totalorder %s14, 1
    %p58 = por %p56, %p57
    %p60 = scmp.ne.s32.totalorder %s45, %s59
    %p61 = scmp.eq.s32.totalorder %s14, 0
    %p62 = por %p60, %p61
    %s63 = ssub.s32 %s8, %s15
    %p64 = scmp.eq.s32.totalorder %s63, 0
    %s66 = sadd.s32 %s65, 1
    %s67 = scalar_select %p64, %s65, %s66
    %p70 = pneg %p64
    %p71 = scmp.eq.s32.totalorder %s8, 1
    %p72 = por %p70, %p71
    %p73 = scmp.ne.s32.totalorder %s65, %s68
    %p74 = scmp.eq.s32.totalorder %s8, 0
    %p75 = por %p73, %p74
    %p76 = scmp.ne.s32.totalorder %s65, %s68
    %p77 = scmp.eq.s32.totalorder %s13, 1
    %p78 = por %p76, %p77
    %p79 = scmp.ne.s32.totalorder %s68, %s69
    %p80 = scmp.eq.s32.totalorder %s13, 0
    %p81 = por %p79, %p80
    %p82 = scmp.ne.s32.totalorder %s68, %s69
    %p83 = scmp.eq.s32.totalorder %s14, 1
    %p84 = por %p82, %p83
    %p86 = scmp.ne.s32.totalorder %s69, %s85
    %p87 = scmp.eq.s32.totalorder %s14, 0
    %p88 = por %p86, %p87
    %p89 = scmp.le.s32.totalorder 1, %s8
    %p90 = scmp.lt.s32.totalorder %s8, 3
    %p91 = pnand %p89, %p90
    %p92 = pneg %p91
    // Predicated region
    $region9: #{long_term_stage.33} parent=5 // pred_check
      _
    $region10: #{long_term_stage.33} parent=5 // pred_check_branch
      %94 = sbr.rel (%p91) target = $region12
    $region11: #{long_term_stage.33} parent=5 // pred_region
      %s95 = ssub.s32 %s8, 1
      // Predicated region
      $region13: #{long_term_stage.33} parent=11 // pred_check
        %p96 = pneg %p55
      $region14: #{long_term_stage.33} parent=11 // pred_check_branch
        %98 = sbr.rel (%p96) target = $region16
      $region15: #{long_term_stage.33} parent=11 // pred_region
        _
      $region16: #{long_term_stage.33} parent=11 // pred_fallthru
        _
    $region12: #{long_term_stage.33} parent=5 // pred_fallthru
      _
    %p99 = scmp.lt.s32.totalorder %s8, 2
    // Predicated region
    $region17: #{long_term_stage.33} parent=5 // pred_check
      %p100 = pneg %p99
    $region18: #{long_term_stage.33} parent=5 // pred_check_branch
      %102 = sbr.rel (%p100) target = $region20
    $region19: #{long_term_stage.33} parent=5 // pred_region
      // Predicated region
      $region21: #{long_term_stage.33} parent=19 // pred_check
        %p103 = pneg %p28
      $region22: #{long_term_stage.33} parent=19 // pred_check_branch
        %105 = sbr.rel (%p103) target = $region24
      $region23: #{long_term_stage.33} parent=19 // pred_region
        %p106 = scmp.lt.s32.totalorder %s8, 1
        %s107 = scalar_select %p106, %s8, 1
        %s108 = smul.addr %s107, 4
        %s109 = smul.addr %s108, 4
        %s110 = scalar_lea.vmem %s0, %s109
      $region24: #{long_term_stage.33} parent=19 // pred_fallthru
        _
    $region20: #{long_term_stage.33} parent=5 // pred_fallthru
      _
    %p111 = scmp.le.s32.totalorder 1, %s8
    %p112 = scmp.lt.s32.totalorder %s8, 3
    %p113 = pnand %p111, %p112
    %p114 = pneg %p113
    // Predicated region
    $region25: #{long_term_stage.33} parent=5 // pred_check
      _
    $region26: #{long_term_stage.33} parent=5 // pred_check_branch
      %116 = sbr.rel (%p113) target = $region28
    $region27: #{long_term_stage.33} parent=5 // pred_region
      %s117 = ssub.s32 %s8, 1
      %p118 = scmp.lt.s32.totalorder %s13, 1
      %s119 = scalar_select %p118, %s13, 1
      %s120 = smul.addr %s119, 4
      %s121 = smul.addr %s120, 4
      %s122 = scalar_lea.vmem %s0, %s121
      %p123 = pneg %p34
      %p124 = pneg %p31
      %p125 = pneg %p55
      %p126 = pneg %p52
      %p127 = pneg %p81
      %p128 = pneg %p78
      %p129 = scmp.lt.s32.totalorder %s13, 1
      %s130 = scalar_select %p129, %s13, 1
      %s131 = smul.addr %s130, 2
      %s132 = smul.addr %s131, 4
      %s133 = scalar_lea.vmem %s2, %s132
      %p134 = scmp.lt.s32.totalorder %s13, 1
      %s135 = scalar_select %p134, %s13, 1
      %s136 = smul.addr %s135, 4
      %s137 = smul.addr %s136, 4
      %s138 = scalar_lea.vmem %s0, %s137
      %p139 = scmp.lt.s32.totalorder %s13, 1
      %s140 = scalar_select %p139, %s13, 1
      %s141 = smul.addr %s140, 2
      %s142 = smul.addr %s141, 4
      %s143 = scalar_lea.vmem %s2, %s142
      %v145 = vld [vmem:[%s138] sm:$0xf]
      %v146 = vld [vmem:[%s138 + $0x8] sm:$0xf]
      %v147 = vld [vmem:[%s138 + $0x4] sm:$0xf]
      %v148 = vld [vmem:[%s138 + $0xc] sm:$0xf]
      %v151 = vunpack.c.l.b16 %v145
      %v152 = vunpack.c.l.b16 %v146
      %v153 = vpack.c.b16 %v152, %v151
      %154 = vrot.lane.b32.xlu0 %v153, 64
      %v155 = vpop.permute.xlu0 %154
      %vm156 = vcmask 64512
      %v158 = vsel %vm156, %v153, 0
      %v161 = vsel %vm156, %v155, 0
      %163 = vmatpush.bf16.xpose.msra.mxu0 0
      %164 = vmatpush.bf16.xpose.msra.mxu0 0
      %165 = vmatpush.bf16.xpose.msra.mxu0 0
      %166 = vmatpush.bf16.xpose.msra.mxu0 0
      %167 = vmatpush.bf16.xpose.msra.mxu0 0
      %168 = vmatpush.bf16.xpose.msra.mxu0 0
      %169 = vmatpush.bf16.xpose.msra.mxu0 0
      %170 = vmatpush.bf16.xpose.msra.mxu0 %v161
      %171 = vmatmul.bf16.gmra.mxu0 %v158
      %v172 = vpop.f32.mrf.mxu0
      %v173 = vadd.f32 0.0, %v172
      %v174 = vpop.f32.mrf.mxu0
      %v175 = vadd.f32 0.0, %v174
      %176 = vdwg.mxu0
      %v177 = vmul.f32 %v173, 0.35355338
      %v178 = vmul.f32 %v175, 0.35355338
      %v179 = vld [vmem:[%s1] sm:$0xff]
      %v180 = vld [vmem:[%s1 + $0x8] sm:$0xff]
      %v181 = vadd.f32 %v177, %v179
      %v182 = vadd.f32 %v178, %v180
      %vm183 = vcmask 130048
      %v184 = vsel %vm183, %v181, -inf
      %185 = vmax.xlane.f32.xlu0 %v184
      %v186 = vpop.xlane.xlu0 %185
      %v187 = vsel %vm183, %v182, -inf
      %188 = vmax.xlane.f32.xlu0 %v187
      %v189 = vpop.xlane.xlu0 %188
      %v190 = vsub.f32 %v181, %v186
      %v191 = vsub.f32 %v182, %v189
      %v192 = vmul.f32 %v190, 1.442695
      %v193 = vpow.pop %v192
      %v194 = vmul.f32 %v191, 1.442695
      %v195 = vpow.pop %v194
      %v196 = vsel %vm183, %v193, 0.0
      %197 = vadd.xlane.f32.xlu0 %v196
      %v198 = vpop.xlane.xlu0 %197
      %v199 = vsel %vm183, %v195, 0.0
      %200 = vadd.xlane.f32.xlu0 %v199
      %v201 = vpop.xlane.xlu0 %200
      %v202 = vrcp.pop %v198
      %v203 = vrcp.pop %v201
      %v204 = vmul.f32 %v193, %v202
      %v205 = vmul.f32 %v195, %v203
      %v206 = vpack.c.bf16 %v204, %v204
      %v207 = vpack.c.bf16 %v205, %v205
      %v210 = vunpack.c.l.b16 %v206
      %v211 = vunpack.c.l.b16 %v207
      %v212 = vpack.c.b16 %v211, %v210
      %v215 = vunpack.c.l.b16 %v147
      %v216 = vunpack.c.l.b16 %v148
      %v217 = vpack.c.b16 %v216, %v215
      %v220 = vsel %vm183, %v212, 0
      %222 = vmatpush.bf16.msra.mxu0 0
      %223 = vmatpush.bf16.msra.mxu0 0
      %224 = vmatpush.bf16.msra.mxu0 0
      %225 = vmatpush.bf16.msra.mxu0 0
      %226 = vmatpush.bf16.msra.mxu0 0
      %227 = vmatpush.bf16.msra.mxu0 0
      %228 = vmatpush.bf16.msra.mxu0 0
      %229 = vmatpush.bf16.msra.mxu0 %v217
      %230 = vmatmul.bf16.gmra.mxu0 %v220
      %v231 = vpop.f32.mrf.mxu0
      %v232 = vadd.f32 0.0, %v231
      %v233 = vpop.f32.mrf.mxu0
      %v234 = vadd.f32 0.0, %v233
      %235 = vdwg.mxu0
      %v236 = vld [vmem:[%s138] sm:$0xf]
      %v237 = vld [vmem:[%s138 + $0x8] sm:$0xf]
      %v238 = vld [vmem:[%s138 + $0x4] sm:$0xf]
      %v239 = vld [vmem:[%s138 + $0xc] sm:$0xf]
      %v242 = vunpack.c.l.b16 %v236
      %v243 = vunpack.c.l.b16 %v237
      %v244 = vpack.c.b16 %v243, %v242
      %245 = vrot.lane.b32.xlu0 %v244, 120
      %v246 = vpop.permute.xlu0 %245
      %247 = vrot.lane.b32.xlu0 %v244, 56
      %v248 = vpop.permute.xlu0 %247
      %v250 = vsel %vm156, %v246, 0
      %v253 = vsel %vm156, %v248, 0
      %255 = vmatpush.bf16.xpose.msra.mxu0 0
      %256 = vmatpush.bf16.xpose.msra.mxu0 0
      %257 = vmatpush.bf16.xpose.msra.mxu0 0
      %258 = vmatpush.bf16.xpose.msra.mxu0 0
      %259 = vmatpush.bf16.xpose.msra.mxu0 0
      %260 = vmatpush.bf16.xpose.msra.mxu0 0
      %261 = vmatpush.bf16.xpose.msra.mxu0 0
      %262 = vmatpush.bf16.xpose.msra.mxu0 %v253
      %263 = vmatmul.bf16.gmra.mxu0 %v250
      %v264 = vpop.f32.mrf.mxu0
      %v265 = vadd.f32 0.0, %v264
      %v266 = vpop.f32.mrf.mxu0
      %v267 = vadd.f32 0.0, %v266
      %268 = vdwg.mxu0
      %v269 = vmul.f32 %v265, 0.35355338
      %v270 = vmul.f32 %v267, 0.35355338
      %s271 = scalar_lea.vmem %s1, 16
      %v272 = vld [vmem:[%s271] sm:$0xff]
      %v273 = vld [vmem:[%s271 + $0x8] sm:$0xff]
      %v274 = vadd.f32 %v269, %v272
      %v275 = vadd.f32 %v270, %v273
      %v276 = vsel %vm183, %v274, -inf
      %277 = vmax.xlane.f32.xlu0 %v276
      %v278 = vpop.xlane.xlu0 %277
      %v279 = vsel %vm183, %v275, -inf
      %280 = vmax.xlane.f32.xlu0 %v279
      %v281 = vpop.xlane.xlu0 %280
      %v282 = vsub.f32 %v274, %v278
      %v283 = vsub.f32 %v275, %v281
      %v284 = vmul.f32 %v282, 1.442695
      %v285 = vpow.pop %v284
      %v286 = vmul.f32 %v283, 1.442695
      %v287 = vpow.pop %v286
      %v288 = vsel %vm183, %v285, 0.0
      %289 = vadd.xlane.f32.xlu0 %v288
      %v290 = vpop.xlane.xlu0 %289
      %v291 = vsel %vm183, %v287, 0.0
      %292 = vadd.xlane.f32.xlu0 %v291
      %v293 = vpop.xlane.xlu0 %292
      %v294 = vrcp.pop %v290
      %v295 = vrcp.pop %v293
      %v296 = vmul.f32 %v285, %v294
      %v297 = vmul.f32 %v287, %v295
      %v298 = vpack.c.bf16 %v296, %v296
      %v299 = vpack.c.bf16 %v297, %v297
      %v302 = vunpack.c.l.b16 %v298
      %v303 = vunpack.c.l.b16 %v299
      %v304 = vpack.c.b16 %v303, %v302
      %v307 = vunpack.c.l.b16 %v238
      %v308 = vunpack.c.l.b16 %v239
      %v309 = vpack.c.b16 %v308, %v307
      %310 = vrot.lane.b32.xlu0 %v309, 120
      %v311 = vpop.permute.xlu0 %310
      %v314 = vsel %vm183, %v304, 0
      %316 = vmatpush.bf16.msra.mxu0 0
      %317 = vmatpush.bf16.msra.mxu0 0
      %318 = vmatpush.bf16.msra.mxu0 0
      %319 = vmatpush.bf16.msra.mxu0 0
      %320 = vmatpush.bf16.msra.mxu0 0
      %321 = vmatpush.bf16.msra.mxu0 0
      %322 = vmatpush.bf16.msra.mxu0 0
      %323 = vmatpush.bf16.msra.mxu0 %v311
      %324 = vmatmul.bf16.gmra.mxu0 %v314
      %v325 = vpop.f32.mrf.mxu0
      %v326 = vadd.f32 0.0, %v325
      %v327 = vpop.f32.mrf.mxu0
      %v328 = vadd.f32 0.0, %v327
      %329 = vdwg.mxu0
      %v330 = vld [vmem:[%s138] sm:$0xf]
      %v331 = vld [vmem:[%s138 + $0x8] sm:$0xf]
      %v332 = vld [vmem:[%s138 + $0x4] sm:$0xf]
      %v333 = vld [vmem:[%s138 + $0xc] sm:$0xf]
      %v336 = vunpack.c.l.b16 %v330
      %v337 = vunpack.c.l.b16 %v331
      %v338 = vpack.c.b16 %v337, %v336
      %339 = vrot.lane.b32.xlu0 %v338, 112
      %v340 = vpop.permute.xlu0 %339
      %341 = vrot.lane.b32.xlu0 %v338, 48
      %v342 = vpop.permute.xlu0 %341
      %v344 = vsel %vm156, %v340, 0
      %v347 = vsel %vm156, %v342, 0
      %349 = vmatpush.bf16.xpose.msra.mxu0 0
      %350 = vmatpush.bf16.xpose.msra.mxu0 0
      %351 = vmatpush.bf16.xpose.msra.mxu0 0
      %352 = vmatpush.bf16.xpose.msra.mxu0 0
      %353 = vmatpush.bf16.xpose.msra.mxu0 0
      %354 = vmatpush.bf16.xpose.msra.mxu0 0
      %355 = vmatpush.bf16.xpose.msra.mxu0 0
      %356 = vmatpush.bf16.xpose.msra.mxu0 %v347
      %357 = vmatmul.bf16.gmra.mxu0 %v344
      %v358 = vpop.f32.mrf.mxu0
      %v359 = vadd.f32 0.0, %v358
      %v360 = vpop.f32.mrf.mxu0
      %v361 = vadd.f32 0.0, %v360
      %362 = vdwg.mxu0
      %v363 = vmul.f32 %v359, 0.35355338
      %v364 = vmul.f32 %v361, 0.35355338
      %s365 = scalar_lea.vmem %s1, 32
      %v366 = vld [vmem:[%s365] sm:$0xff]
      %v367 = vld [vmem:[%s365 + $0x8] sm:$0xff]
      %v368 = vadd.f32 %v363, %v366
      %v369 = vadd.f32 %v364, %v367
      %v370 = vsel %vm183, %v368, -inf
      %371 = vmax.xlane.f32.xlu0 %v370
      %v372 = vpop.xlane.xlu0 %371
      %v373 = vsel %vm183, %v369, -inf
      %374 = vmax.xlane.f32.xlu0 %v373
      %v375 = vpop.xlane.xlu0 %374
      %v376 = vsub.f32 %v368, %v372
      %v377 = vsub.f32 %v369, %v375
      %v378 = vmul.f32 %v376, 1.442695
      %v379 = vpow.pop %v378
      %v380 = vmul.f32 %v377, 1.442695
      %v381 = vpow.pop %v380
      %v382 = vsel %vm183, %v379, 0.0
      %383 = vadd.xlane.f32.xlu0 %v382
      %v384 = vpop.xlane.xlu0 %383
      %v385 = vsel %vm183, %v381, 0.0
      %386 = vadd.xlane.f32.xlu0 %v385
      %v387 = vpop.xlane.xlu0 %386
      %v388 = vrcp.pop %v384
      %v389 = vrcp.pop %v387
      %v390 = vmul.f32 %v379, %v388
      %v391 = vmul.f32 %v381, %v389
      %v392 = vpack.c.bf16 %v390, %v390
      %v393 = vpack.c.bf16 %v391, %v391
      %v396 = vunpack.c.l.b16 %v392
      %v397 = vunpack.c.l.b16 %v393
      %v398 = vpack.c.b16 %v397, %v396
      %v401 = vunpack.c.l.b16 %v332
      %v402 = vunpack.c.l.b16 %v333
      %v403 = vpack.c.b16 %v402, %v401
      %404 = vrot.lane.b32.xlu0 %v403, 112
      %v405 = vpop.permute.xlu0 %404
      %v408 = vsel %vm183, %v398, 0
      %410 = vmatpush.bf16.msra.mxu0 0
      %411 = vmatpush.bf16.msra.mxu0 0
      %412 = vmatpush.bf16.msra.mxu0 0
      %413 = vmatpush.bf16.msra.mxu0 0
      %414 = vmatpush.bf16.msra.mxu0 0
      %415 = vmatpush.bf16.msra.mxu0 0
      %416 = vmatpush.bf16.msra.mxu0 0
      %417 = vmatpush.bf16.msra.mxu0 %v405
      %418 = vmatmul.bf16.gmra.mxu0 %v408
      %v419 = vpop.f32.mrf.mxu0
      %v420 = vadd.f32 0.0, %v419
      %v421 = vpop.f32.mrf.mxu0
      %v422 = vadd.f32 0.0, %v421
      %423 = vdwg.mxu0
      %v424 = vld [vmem:[%s138] sm:$0xf]
      %v425 = vld [vmem:[%s138 + $0x8] sm:$0xf]
      %v426 = vld [vmem:[%s138 + $0x4] sm:$0xf]
      %v427 = vld [vmem:[%s138 + $0xc] sm:$0xf]
      %v430 = vunpack.c.l.b16 %v424
      %v431 = vunpack.c.l.b16 %v425
      %v432 = vpack.c.b16 %v431, %v430
      %433 = vrot.lane.b32.xlu0 %v432, 104
      %v434 = vpop.permute.xlu0 %433
      %435 = vrot.lane.b32.xlu0 %v432, 40
      %v436 = vpop.permute.xlu0 %435
      %v438 = vsel %vm156, %v434, 0
      %v441 = vsel %vm156, %v436, 0
      %443 = vmatpush.bf16.xpose.msra.mxu0 0
      %444 = vmatpush.bf16.xpose.msra.mxu0 0
      %445 = vmatpush.bf16.xpose.msra.mxu0 0
      %446 = vmatpush.bf16.xpose.msra.mxu0 0
      %447 = vmatpush.bf16.xpose.msra.mxu0 0
      %448 = vmatpush.bf16.xpose.msra.mxu0 0
      %449 = vmatpush.bf16.xpose.msra.mxu0 0
      %450 = vmatpush.bf16.xpose.msra.mxu0 %v441
      %451 = vmatmul.bf16.gmra.mxu0 %v438
      %v452 = vpop.f32.mrf.mxu0
      %v453 = vadd.f32 0.0, %v452
      %v454 = vpop.f32.mrf.mxu0
      %v455 = vadd.f32 0.0, %v454
      %456 = vdwg.mxu0
      %v457 = vmul.f32 %v453, 0.35355338
      %v458 = vmul.f32 %v455, 0.35355338
      %s459 = scalar_lea.vmem %s1, 48
      %v460 = vld [vmem:[%s459] sm:$0xff]
      %v461 = vld [vmem:[%s459 + $0x8] sm:$0xff]
      %v462 = vadd.f32 %v457, %v460
      %v463 = vadd.f32 %v458, %v461
      %v464 = vsel %vm183, %v462, -inf
      %465 = vmax.xlane.f32.xlu0 %v464
      %v466 = vpop.xlane.xlu0 %465
      %v467 = vsel %vm183, %v463, -inf
      %468 = vmax.xlane.f32.xlu0 %v467
      %v469 = vpop.xlane.xlu0 %468
      %v470 = vsub.f32 %v462, %v466
      %v471 = vsub.f32 %v463, %v469
      %v472 = vmul.f32 %v470, 1.442695
      %v473 = vpow.pop %v472
      %v474 = vmul.f32 %v471, 1.442695
      %v475 = vpow.pop %v474
      %v476 = vsel %vm183, %v473, 0.0
      %477 = vadd.xlane.f32.xlu0 %v476
      %v478 = vpop.xlane.xlu0 %477
      %v479 = vsel %vm183, %v475, 0.0
      %480 = vadd.xlane.f32.xlu0 %v479
      %v481 = vpop.xlane.xlu0 %480
      %v482 = vrcp.pop %v478
      %v483 = vrcp.pop %v481
      %v484 = vmul.f32 %v473, %v482
      %v485 = vmul.f32 %v475, %v483
      %v486 = vpack.c.bf16 %v484, %v484
      %v487 = vpack.c.bf16 %v485, %v485
      %v490 = vunpack.c.l.b16 %v486
      %v491 = vunpack.c.l.b16 %v487
      %v492 = vpack.c.b16 %v491, %v490
      %v495 = vunpack.c.l.b16 %v426
      %v496 = vunpack.c.l.b16 %v427
      %v497 = vpack.c.b16 %v496, %v495
      %498 = vrot.lane.b32.xlu0 %v497, 104
      %v499 = vpop.permute.xlu0 %498
      %v502 = vsel %vm183, %v492, 0
      %504 = vmatpush.bf16.msra.mxu0 0
      %505 = vmatpush.bf16.msra.mxu0 0
      %506 = vmatpush.bf16.msra.mxu0 0
      %507 = vmatpush.bf16.msra.mxu0 0
      %508 = vmatpush.bf16.msra.mxu0 0
      %509 = vmatpush.bf16.msra.mxu0 0
      %510 = vmatpush.bf16.msra.mxu0 0
      %511 = vmatpush.bf16.msra.mxu0 %v499
      %512 = vmatmul.bf16.gmra.mxu0 %v502
      %v513 = vpop.f32.mrf.mxu0
      %v514 = vadd.f32 0.0, %v513
      %v515 = vpop.f32.mrf.mxu0
      %v516 = vadd.f32 0.0, %v515
      %517 = vdwg.mxu0
      %v518 = vld [vmem:[%s138] sm:$0xf]
      %v519 = vld [vmem:[%s138 + $0x8] sm:$0xf]
      %v520 = vld [vmem:[%s138 + $0x4] sm:$0xf]
      %v521 = vld [vmem:[%s138 + $0xc] sm:$0xf]
      %v524 = vunpack.c.l.b16 %v518
      %v525 = vunpack.c.l.b16 %v519
      %v526 = vpack.c.b16 %v525, %v524
      %527 = vrot.lane.b32.xlu0 %v526, 96
      %v528 = vpop.permute.xlu0 %527
      %529 = vrot.lane.b32.xlu0 %v526, 32
      %v530 = vpop.permute.xlu0 %529
      %v532 = vsel %vm156, %v528, 0
      %v535 = vsel %vm156, %v530, 0
      %537 = vmatpush.bf16.xpose.msra.mxu0 0
      %538 = vmatpush.bf16.xpose.msra.mxu0 0
      %539 = vmatpush.bf16.xpose.msra.mxu0 0
      %540 = vmatpush.bf16.xpose.msra.mxu0 0
      %541 = vmatpush.bf16.xpose.msra.mxu0 0
      %542 = vmatpush.bf16.xpose.msra.mxu0 0
      %543 = vmatpush.bf16.xpose.msra.mxu0 0
      %544 = vmatpush.bf16.xpose.msra.mxu0 %v535
      %545 = vmatmul.bf16.gmra.mxu0 %v532
      %v546 = vpop.f32.mrf.mxu0
      %v547 = vadd.f32 0.0, %v546
      %v548 = vpop.f32.mrf.mxu0
      %v549 = vadd.f32 0.0, %v548
      %550 = vdwg.mxu0
      %v551 = vmul.f32 %v547, 0.35355338
      %v552 = vmul.f32 %v549, 0.35355338
      %s553 = scalar_lea.vmem %s1, 64
      %v554 = vld [vmem:[%s553] sm:$0xff]
      %v555 = vld [vmem:[%s553 + $0x8] sm:$0xff]
      %v556 = vadd.f32 %v551, %v554
      %v557 = vadd.f32 %v552, %v555
      %v558 = vsel %vm183, %v556, -inf
      %559 = vmax.xlane.f32.xlu0 %v558
      %v560 = vpop.xlane.xlu0 %559
      %v561 = vsel %vm183, %v557, -inf
      %562 = vmax.xlane.f32.xlu0 %v561
      %v563 = vpop.xlane.xlu0 %562
      %v564 = vsub.f32 %v556, %v560
      %v565 = vsub.f32 %v557, %v563
      %v566 = vmul.f32 %v564, 1.442695
      %v567 = vpow.pop %v566
      %v568 = vmul.f32 %v565, 1.442695
      %v569 = vpow.pop %v568
      %v570 = vsel %vm183, %v567, 0.0
      %571 = vadd.xlane.f32.xlu0 %v570
      %v572 = vpop.xlane.xlu0 %571
      %v573 = vsel %vm183, %v569, 0.0
      %574 = vadd.xlane.f32.xlu0 %v573
      %v575 = vpop.xlane.xlu0 %574
      %v576 = vrcp.pop %v572
      %v577 = vrcp.pop %v575
      %v578 = vmul.f32 %v567, %v576
      %v579 = vmul.f32 %v569, %v577
      %v580 = vpack.c.bf16 %v578, %v578
      %v581 = vpack.c.bf16 %v579, %v579
      %v584 = vunpack.c.l.b16 %v580
      %v585 = vunpack.c.l.b16 %v581
      %v586 = vpack.c.b16 %v585, %v584
      %v589 = vunpack.c.l.b16 %v520
      %v590 = vunpack.c.l.b16 %v521
      %v591 = vpack.c.b16 %v590, %v589
      %592 = vrot.lane.b32.xlu0 %v591, 96
      %v593 = vpop.permute.xlu0 %592
      %v596 = vsel %vm183, %v586, 0
      %598 = vmatpush.bf16.msra.mxu0 0
      %599 = vmatpush.bf16.msra.mxu0 0
      %600 = vmatpush.bf16.msra.mxu0 0
      %601 = vmatpush.bf16.msra.mxu0 0
      %602 = vmatpush.bf16.msra.mxu0 0
      %603 = vmatpush.bf16.msra.mxu0 0
      %604 = vmatpush.bf16.msra.mxu0 0
      %605 = vmatpush.bf16.msra.mxu0 %v593
      %606 = vmatmul.bf16.gmra.mxu0 %v596
      %v607 = vpop.f32.mrf.mxu0
      %v608 = vadd.f32 0.0, %v607
      %v609 = vpop.f32.mrf.mxu0
      %v610 = vadd.f32 0.0, %v609
      %611 = vdwg.mxu0
      %v612 = vld [vmem:[%s138] sm:$0xf]
      %v613 = vld [vmem:[%s138 + $0x8] sm:$0xf]
      %v614 = vld [vmem:[%s138 + $0x4] sm:$0xf]
      %v615 = vld [vmem:[%s138 + $0xc] sm:$0xf]
      %v618 = vunpack.c.l.b16 %v612
      %v619 = vunpack.c.l.b16 %v613
      %v620 = vpack.c.b16 %v619, %v618
      %621 = vrot.lane.b32.xlu0 %v620, 88
      %v622 = vpop.permute.xlu0 %621
      %623 = vrot.lane.b32.xlu0 %v620, 24
      %v624 = vpop.permute.xlu0 %623
      %v626 = vsel %vm156, %v622, 0
      %v629 = vsel %vm156, %v624, 0
      %631 = vmatpush.bf16.xpose.msra.mxu0 0
      %632 = vmatpush.bf16.xpose.msra.mxu0 0
      %633 = vmatpush.bf16.xpose.msra.mxu0 0
      %634 = vmatpush.bf16.xpose.msra.mxu0 0
      %635 = vmatpush.bf16.xpose.msra.mxu0 0
      %636 = vmatpush.bf16.xpose.msra.mxu0 0
      %637 = vmatpush.bf16.xpose.msra.mxu0 0
      %638 = vmatpush.bf16.xpose.msra.mxu0 %v629
      %639 = vmatmul.bf16.gmra.mxu0 %v626
      %v640 = vpop.f32.mrf.mxu0
      %v641 = vadd.f32 0.0, %v640
      %v642 = vpop.f32.mrf.mxu0
      %v643 = vadd.f32 0.0, %v642
      %644 = vdwg.mxu0
      %v645 = vmul.f32 %v641, 0.35355338
      %v646 = vmul.f32 %v643, 0.35355338
      %s647 = scalar_lea.vmem %s1, 80
      %v648 = vld [vmem:[%s647] sm:$0xff]
      %v649 = vld [vmem:[%s647 + $0x8] sm:$0xff]
      %v650 = vadd.f32 %v645, %v648
      %v651 = vadd.f32 %v646, %v649
      %v652 = vsel %vm183, %v650, -inf
      %653 = vmax.xlane.f32.xlu0 %v652
      %v654 = vpop.xlane.xlu0 %653
      %v655 = vsel %vm183, %v651, -inf
      %656 = vmax.xlane.f32.xlu0 %v655
      %v657 = vpop.xlane.xlu0 %656
      %v658 = vsub.f32 %v650, %v654
      %v659 = vsub.f32 %v651, %v657
      %v660 = vmul.f32 %v658, 1.442695
      %v661 = vpow.pop %v660
      %v662 = vmul.f32 %v659, 1.442695
      %v663 = vpow.pop %v662
      %v664 = vsel %vm183, %v661, 0.0
      %665 = vadd.xlane.f32.xlu0 %v664
      %v666 = vpop.xlane.xlu0 %665
      %v667 = vsel %vm183, %v663, 0.0
      %668 = vadd.xlane.f32.xlu0 %v667
      %v669 = vpop.xlane.xlu0 %668
      %v670 = vrcp.pop %v666
      %v671 = vrcp.pop %v669
      %v672 = vmul.f32 %v661, %v670
      %v673 = vmul.f32 %v663, %v671
      %v674 = vpack.c.bf16 %v672, %v672
      %v675 = vpack.c.bf16 %v673, %v673
      %v678 = vunpack.c.l.b16 %v674
      %v679 = vunpack.c.l.b16 %v675
      %v680 = vpack.c.b16 %v679, %v678
      %v683 = vunpack.c.l.b16 %v614
      %v684 = vunpack.c.l.b16 %v615
      %v685 = vpack.c.b16 %v684, %v683
      %686 = vrot.lane.b32.xlu0 %v685, 88
      %v687 = vpop.permute.xlu0 %686
      %v690 = vsel %vm183, %v680, 0
      %692 = vmatpush.bf16.msra.mxu0 0
      %693 = vmatpush.bf16.msra.mxu0 0
      %694 = vmatpush.bf16.msra.mxu0 0
      %695 = vmatpush.bf16.msra.mxu0 0
      %696 = vmatpush.bf16.msra.mxu0 0
      %697 = vmatpush.bf16.msra.mxu0 0
      %698 = vmatpush.bf16.msra.mxu0 0
      %699 = vmatpush.bf16.msra.mxu0 %v687
      %700 = vmatmul.bf16.gmra.mxu0 %v690
      %v701 = vpop.f32.mrf.mxu0
      %v702 = vadd.f32 0.0, %v701
      %v703 = vpop.f32.mrf.mxu0
      %v704 = vadd.f32 0.0, %v703
      %705 = vdwg.mxu0
      %v706 = vld [vmem:[%s138] sm:$0xf]
      %v707 = vld [vmem:[%s138 + $0x8] sm:$0xf]
      %v708 = vld [vmem:[%s138 + $0x4] sm:$0xf]
      %v709 = vld [vmem:[%s138 + $0xc] sm:$0xf]
      %v712 = vunpack.c.l.b16 %v706
      %v713 = vunpack.c.l.b16 %v707
      %v714 = vpack.c.b16 %v713, %v712
      %715 = vrot.lane.b32.xlu0 %v714, 80
      %v716 = vpop.permute.xlu0 %715
      %717 = vrot.lane.b32.xlu0 %v714, 16
      %v718 = vpop.permute.xlu0 %717
      %v720 = vsel %vm156, %v716, 0
      %v723 = vsel %vm156, %v718, 0
      %725 = vmatpush.bf16.xpose.msra.mxu0 0
      %726 = vmatpush.bf16.xpose.msra.mxu0 0
      %727 = vmatpush.bf16.xpose.msra.mxu0 0
      %728 = vmatpush.bf16.xpose.msra.mxu0 0
      %729 = vmatpush.bf16.xpose.msra.mxu0 0
      %730 = vmatpush.bf16.xpose.msra.mxu0 0
      %731 = vmatpush.bf16.xpose.msra.mxu0 0
      %732 = vmatpush.bf16.xpose.msra.mxu0 %v723
      %733 = vmatmul.bf16.gmra.mxu0 %v720
      %v734 = vpop.f32.mrf.mxu0
      %v735 = vadd.f32 0.0, %v734
      %v736 = vpop.f32.mrf.mxu0
      %v737 = vadd.f32 0.0, %v736
      %738 = vdwg.mxu0
      %v739 = vmul.f32 %v735, 0.35355338
      %v740 = vmul.f32 %v737, 0.35355338
      %s741 = scalar_lea.vmem %s1, 96
      %v742 = vld [vmem:[%s741] sm:$0xff]
      %v743 = vld [vmem:[%s741 + $0x8] sm:$0xff]
      %v744 = vadd.f32 %v739, %v742
      %v745 = vadd.f32 %v740, %v743
      %v746 = vsel %vm183, %v744, -inf
      %747 = vmax.xlane.f32.xlu0 %v746
      %v748 = vpop.xlane.xlu0 %747
      %v749 = vsel %vm183, %v745, -inf
      %750 = vmax.xlane.f32.xlu0 %v749
      %v751 = vpop.xlane.xlu0 %750
      %v752 = vsub.f32 %v744, %v748
      %v753 = vsub.f32 %v745, %v751
      %v754 = vmul.f32 %v752, 1.442695
      %v755 = vpow.pop %v754
      %v756 = vmul.f32 %v753, 1.442695
      %v757 = vpow.pop %v756
      %v758 = vsel %vm183, %v755, 0.0
      %759 = vadd.xlane.f32.xlu0 %v758
      %v760 = vpop.xlane.xlu0 %759
      %v761 = vsel %vm183, %v757, 0.0
      %762 = vadd.xlane.f32.xlu0 %v761
      %v763 = vpop.xlane.xlu0 %762
      %v764 = vrcp.pop %v760
      %v765 = vrcp.pop %v763
      %v766 = vmul.f32 %v755, %v764
      %v767 = vmul.f32 %v757, %v765
      %v768 = vpack.c.bf16 %v766, %v766
      %v769 = vpack.c.bf16 %v767, %v767
      %v772 = vunpack.c.l.b16 %v768
      %v773 = vunpack.c.l.b16 %v769
      %v774 = vpack.c.b16 %v773, %v772
      %v777 = vunpack.c.l.b16 %v708
      %v778 = vunpack.c.l.b16 %v709
      %v779 = vpack.c.b16 %v778, %v777
      %780 = vrot.lane.b32.xlu0 %v779, 80
      %v781 = vpop.permute.xlu0 %780
      %v784 = vsel %vm183, %v774, 0
      %786 = vmatpush.bf16.msra.mxu0 0
      %787 = vmatpush.bf16.msra.mxu0 0
      %788 = vmatpush.bf16.msra.mxu0 0
      %789 = vmatpush.bf16.msra.mxu0 0
      %790 = vmatpush.bf16.msra.mxu0 0
      %791 = vmatpush.bf16.msra.mxu0 0
      %792 = vmatpush.bf16.msra.mxu0 0
      %793 = vmatpush.bf16.msra.mxu0 %v781
      %794 = vmatmul.bf16.gmra.mxu0 %v784
      %v795 = vpop.f32.mrf.mxu0
      %v796 = vadd.f32 0.0, %v795
      %v797 = vpop.f32.mrf.mxu0
      %v798 = vadd.f32 0.0, %v797
      %799 = vdwg.mxu0
      %v800 = vld [vmem:[%s138] sm:$0xf]
      %v801 = vld [vmem:[%s138 + $0x8] sm:$0xf]
      %v802 = vld [vmem:[%s138 + $0x4] sm:$0xf]
      %v803 = vld [vmem:[%s138 + $0xc] sm:$0xf]
      %v806 = vunpack.c.l.b16 %v800
      %v807 = vunpack.c.l.b16 %v801
      %v808 = vpack.c.b16 %v807, %v806
      %809 = vrot.lane.b32.xlu0 %v808, 72
      %v810 = vpop.permute.xlu0 %809
      %811 = vrot.lane.b32.xlu0 %v808, 8
      %v812 = vpop.permute.xlu0 %811
      %v814 = vsel %vm156, %v810, 0
      %v817 = vsel %vm156, %v812, 0
      %819 = vmatpush.bf16.xpose.msra.mxu0 0
      %820 = vmatpush.bf16.xpose.msra.mxu0 0
      %821 = vmatpush.bf16.xpose.msra.mxu0 0
      %822 = vmatpush.bf16.xpose.msra.mxu0 0
      %823 = vmatpush.bf16.xpose.msra.mxu0 0
      %824 = vmatpush.bf16.xpose.msra.mxu0 0
      %825 = vmatpush.bf16.xpose.msra.mxu0 0
      %826 = vmatpush.bf16.xpose.msra.mxu0 %v817
      %827 = vmatmul.bf16.gmra.mxu0 %v814
      %v828 = vpop.f32.mrf.mxu0
      %v829 = vadd.f32 0.0, %v828
      %v830 = vpop.f32.mrf.mxu0
      %v831 = vadd.f32 0.0, %v830
      %832 = vdwg.mxu0
      %v833 = vmul.f32 %v829, 0.35355338
      %v834 = vmul.f32 %v831, 0.35355338
      %s835 = scalar_lea.vmem %s1, 112
      %v836 = vld [vmem:[%s835] sm:$0xff]
      %v837 = vld [vmem:[%s835 + $0x8] sm:$0xff]
      %v838 = vadd.f32 %v833, %v836
      %v839 = vadd.f32 %v834, %v837
      %v840 = vsel %vm183, %v838, -inf
      %841 = vmax.xlane.f32.xlu0 %v840
      %v842 = vpop.xlane.xlu0 %841
      %v843 = vsel %vm183, %v839, -inf
      %844 = vmax.xlane.f32.xlu0 %v843
      %v845 = vpop.xlane.xlu0 %844
      %v846 = vsub.f32 %v838, %v842
      %v847 = vsub.f32 %v839, %v845
      %v848 = vmul.f32 %v846, 1.442695
      %v849 = vpow.pop %v848
      %v850 = vmul.f32 %v847, 1.442695
      %v851 = vpow.pop %v850
      %v852 = vsel %vm183, %v849, 0.0
      %853 = vadd.xlane.f32.xlu0 %v852
      %v854 = vpop.xlane.xlu0 %853
      %v855 = vsel %vm183, %v851, 0.0
      %856 = vadd.xlane.f32.xlu0 %v855
      %v857 = vpop.xlane.xlu0 %856
      %v858 = vrcp.pop %v854
      %v859 = vrcp.pop %v857
      %v860 = vmul.f32 %v849, %v858
      %v861 = vmul.f32 %v851, %v859
      %v862 = vpack.c.bf16 %v860, %v860
      %v863 = vpack.c.bf16 %v861, %v861
      %v866 = vunpack.c.l.b16 %v862
      %v867 = vunpack.c.l.b16 %v863
      %v868 = vpack.c.b16 %v867, %v866
      %v871 = vunpack.c.l.b16 %v802
      %v872 = vunpack.c.l.b16 %v803
      %v873 = vpack.c.b16 %v872, %v871
      %874 = vrot.lane.b32.xlu0 %v873, 72
      %v875 = vpop.permute.xlu0 %874
      %v878 = vsel %vm183, %v868, 0
      %880 = vmatpush.bf16.msra.mxu0 0
      %881 = vmatpush.bf16.msra.mxu0 0
      %882 = vmatpush.bf16.msra.mxu0 0
      %883 = vmatpush.bf16.msra.mxu0 0
      %884 = vmatpush.bf16.msra.mxu0 0
      %885 = vmatpush.bf16.msra.mxu0 0
      %886 = vmatpush.bf16.msra.mxu0 0
      %887 = vmatpush.bf16.msra.mxu0 %v875
      %888 = vmatmul.bf16.gmra.mxu0 %v878
      %v889 = vpop.f32.mrf.mxu0
      %v890 = vadd.f32 0.0, %v889
      %v891 = vpop.f32.mrf.mxu0
      %v892 = vadd.f32 0.0, %v891
      %893 = vdwg.mxu0
      %896 = vrot.lane.b32.xlu0 %v326, 8
      %v897 = vpop.permute.xlu0 %896
      %898 = vrot.lane.b32.xlu0 %v328, 8
      %v899 = vpop.permute.xlu0 %898
      %904 = vrot.lane.b32.xlu0 %v420, 16
      %v905 = vpop.permute.xlu0 %904
      %906 = vrot.lane.b32.xlu0 %v422, 16
      %v907 = vpop.permute.xlu0 %906
      %912 = vrot.lane.b32.xlu0 %v514, 24
      %v913 = vpop.permute.xlu0 %912
      %914 = vrot.lane.b32.xlu0 %v516, 24
      %v915 = vpop.permute.xlu0 %914
      %920 = vrot.lane.b32.xlu0 %v608, 32
      %v921 = vpop.permute.xlu0 %920
      %922 = vrot.lane.b32.xlu0 %v610, 32
      %v923 = vpop.permute.xlu0 %922
      %928 = vrot.lane.b32.xlu0 %v702, 40
      %v929 = vpop.permute.xlu0 %928
      %930 = vrot.lane.b32.xlu0 %v704, 40
      %v931 = vpop.permute.xlu0 %930
      %936 = vrot.lane.b32.xlu0 %v796, 48
      %v937 = vpop.permute.xlu0 %936
      %938 = vrot.lane.b32.xlu0 %v798, 48
      %v939 = vpop.permute.xlu0 %938
      %944 = vrot.lane.b32.xlu0 %v890, 56
      %v945 = vpop.permute.xlu0 %944
      %946 = vrot.lane.b32.xlu0 %v892, 56
      %v947 = vpop.permute.xlu0 %946
      %v950 = vsel %vm156, %v232, %v897
      %v951 = vsel %vm156, %v234, %v899
      %v952 = vsel %vm183, %v950, %v905
      %v953 = vsel %vm183, %v951, %v907
      %vm954 = vcmask 195584
      %v955 = vsel %vm954, %v952, %v913
      %v956 = vsel %vm954, %v953, %v915
      %vm957 = vcmask 261120
      %v958 = vsel %vm957, %v955, %v921
      %v959 = vsel %vm957, %v956, %v923
      %vm960 = vcmask 326656
      %v961 = vsel %vm960, %v958, %v929
      %v962 = vsel %vm960, %v959, %v931
      %vm963 = vcmask 392192
      %v964 = vsel %vm963, %v961, %v937
      %v965 = vsel %vm963, %v962, %v939
      %vm966 = vcmask 457728
      %v967 = vsel %vm966, %v964, %v945
      %v968 = vsel %vm966, %v965, %v947
      %v969 = vpack.c.bf16 %v967, %v967
      %v970 = vpack.c.bf16 %v968, %v968
      %vm971 = vcmask 519168
      %972 = vst.msk [vmem:[%s143] sm:$0xf] %vm971, %v969
      %973 = vst.msk [vmem:[%s143 + $0x4] sm:$0xf] %vm971, %v970
      %p974 = scmp.lt.s32.totalorder %s13, 1
      %s975 = scalar_select %p974, %s13, 1
      %s976 = smul.addr %s975, 2
      %s977 = smul.addr %s976, 4
      %s978 = scalar_lea.vmem %s2, %s977
      // Predicated region
      $region29: #{long_term_stage.33} parent=27 // pred_check
        %p979 = pneg %p78
      $region30: #{long_term_stage.33} parent=27 // pred_check_branch
        %981 = sbr.rel (%p979) target = $region32
      $region31: #{long_term_stage.33} parent=27 // pred_region
        _
      $region32: #{long_term_stage.33} parent=27 // pred_fallthru
        _
    $region28: #{long_term_stage.33} parent=5 // pred_fallthru
      _
    %p982 = scmp.le.s32.totalorder 2, %s8
    // Predicated region
    $region33: #{long_term_stage.33} parent=5 // pred_check
      %p983 = pneg %p982
    $region34: #{long_term_stage.33} parent=5 // pred_check_branch
      %985 = sbr.rel (%p983) target = $region36
    $region35: #{long_term_stage.33} parent=5 // pred_region
      %s986 = ssub.s32 %s8, 2
      // Predicated region
      $region37: #{long_term_stage.33} parent=35 // pred_check
        %p987 = pneg %p84
      $region38: #{long_term_stage.33} parent=35 // pred_check_branch
        %989 = sbr.rel (%p987) target = $region40
      $region39: #{long_term_stage.33} parent=35 // pred_region
        %p990 = scmp.lt.s32.totalorder %s14, 1
        %s991 = scalar_select %p990, %s14, 1
        %s992 = smul.addr %s991, 2
        %s993 = smul.addr %s992, 4
        %s994 = scalar_lea.vmem %s2, %s993
      $region40: #{long_term_stage.33} parent=35 // pred_fallthru
        _
    $region36: #{long_term_stage.33} parent=5 // pred_fallthru
      _
  $region6: #{long_term_stage.33} parent=0 // loop_footer
    %s12 = sadd.s32 1, %s8
  $region7: #{long_term_stage.33} parent=0 // loop_footer_branch
    %7 = sbr.rel target = $region3
  $region8: #{long_term_stage.33} parent=0 // loop_exit
    _

// kernel: long_term_stage.36
$region0: #{long_term_stage.36}
  #allocation0 [shape = 'u32[]', space=smem, size = 0x4, offset = 0x4, fixed_abs, tag = 'smem constant byte address 0x4 - core index']
  #allocation1 [shape = 'u32[72,128]{1,0:T(1,128)}', space=vmem, size = 0x9000, scoped, tag = 'internal scratch']
  #allocation2 [shape = 'f32[32,64]{1,0:T(8,128)}', space=vmem, size = 0x4000, scoped, tag = 'scratch operand']
  %s0 = inlined_call_operand.vmem [shape: bf16[32,256], index: 0, kind: input, shape index: {}]
  %s1 = inlined_call_operand.vmem [shape: bf16[256,64], index: 1, kind: input, shape index: {}]
  %s2 = inlined_call_operand.vmem [shape: f32[1,64], index: 2, kind: input, shape index: {}]
  %s3 = inlined_call_operand.vmem [shape: bf16[32,64], index: 3, kind: input, shape index: {}]
  %s4 = inlined_call_operand.vmem [shape: bf16[32,64], index: 4, kind: output, shape index: {}]
  %s5 = sld [smem:[#allocation0]]
  $region34: #{long_term_stage.36} parent=0
    _
  %s7 = ssub.s32 1, %s5
  %s8 = scalar_select 0, %s7, %s5
  // Predicated region
  $region2: #{long_term_stage.36} parent=0 // pred_check
    _
  $region3: #{long_term_stage.36} parent=0 // pred_check_branch
    %10 = sbr.rel (0) target = $region5
  $region4: #{long_term_stage.36} parent=0 // pred_region
    _
  $region5: #{long_term_stage.36} parent=0 // pred_fallthru
    _
  // Predicated region
  $region6: #{long_term_stage.36} parent=0 // pred_check
    _
  $region7: #{long_term_stage.36} parent=0 // pred_check_branch
    %12 = sbr.rel (0) target = $region9
  $region8: #{long_term_stage.36} parent=0 // pred_region
    _
  $region9: #{long_term_stage.36} parent=0 // pred_fallthru
    _
  // Predicated region
  $region10: #{long_term_stage.36} parent=0 // pred_check
    _
  $region11: #{long_term_stage.36} parent=0 // pred_check_branch
    %14 = sbr.rel (0) target = $region13
  $region12: #{long_term_stage.36} parent=0 // pred_region
    _
  $region13: #{long_term_stage.36} parent=0 // pred_fallthru
    _
  // Predicated region
  $region14: #{long_term_stage.36} parent=0 // pred_check
    _
  $region15: #{long_term_stage.36} parent=0 // pred_check_branch
    %16 = sbr.rel (0) target = $region17
  $region16: #{long_term_stage.36} parent=0 // pred_region
    _
  $region17: #{long_term_stage.36} parent=0 // pred_fallthru
    _
  %p17 = scmp.eq.s32.totalorder 0, 0
  // Predicated region
  $region18: #{long_term_stage.36} parent=0 // pred_check
    %p18 = pneg %p17
  $region19: #{long_term_stage.36} parent=0 // pred_check_branch
    %20 = sbr.rel (%p18) target = $region21
  $region20: #{long_term_stage.36} parent=0 // pred_region
    %vm21 = vcmask 523264
    %22 = vst.msk [vmem:[#allocation2] sm:$0xff] %vm21, 0.0
    %23 = vst.msk [vmem:[#allocation2 + $0x8] sm:$0xff] %vm21, 0.0
    %24 = vst.msk [vmem:[#allocation2 + $0x10] sm:$0xff] %vm21, 0.0
    %25 = vst.msk [vmem:[#allocation2 + $0x18] sm:$0xff] %vm21, 0.0
  $region21: #{long_term_stage.36} parent=0 // pred_fallthru
    _
  %v26 = vld [vmem:[%s0] sm:$0xff]
  %v27 = vld [vmem:[%s0 + $0x8] sm:$0xff]
  %v28 = vld [vmem:[%s0 + $0x10] sm:$0xff]
  %v29 = vld [vmem:[%s0 + $0x18] sm:$0xff]
  %v30 = vld [vmem:[#allocation2] sm:$0xff]
  %v31 = vld [vmem:[#allocation2 + $0x8] sm:$0xff]
  %v32 = vld [vmem:[#allocation2 + $0x10] sm:$0xff]
  %v33 = vld [vmem:[#allocation2 + $0x18] sm:$0xff]
  %v34 = vld [vmem:[%s1] sm:$0xf]
  %v35 = vld [vmem:[%s1 + $0x4] sm:$0xf]
  %v36 = vld [vmem:[%s1 + $0x8] sm:$0xf]
  %v37 = vld [vmem:[%s1 + $0xc] sm:$0xf]
  %v38 = vld [vmem:[%s1 + $0x10] sm:$0xf]
  %v39 = vld [vmem:[%s1 + $0x14] sm:$0xf]
  %v40 = vld [vmem:[%s1 + $0x18] sm:$0xf]
  %v41 = vld [vmem:[%s1 + $0x1c] sm:$0xf]
  %v42 = vld [vmem:[%s1 + $0x20] sm:$0xf]
  %v43 = vld [vmem:[%s1 + $0x24] sm:$0xf]
  %v44 = vld [vmem:[%s1 + $0x28] sm:$0xf]
  %v45 = vld [vmem:[%s1 + $0x2c] sm:$0xf]
  %v46 = vld [vmem:[%s1 + $0x30] sm:$0xf]
  %v47 = vld [vmem:[%s1 + $0x34] sm:$0xf]
  %v48 = vld [vmem:[%s1 + $0x38] sm:$0xf]
  %v49 = vld [vmem:[%s1 + $0x3c] sm:$0xf]
  %v50 = vld [vmem:[%s1 + $0x40] sm:$0xf]
  %v51 = vld [vmem:[%s1 + $0x44] sm:$0xf]
  %v52 = vld [vmem:[%s1 + $0x48] sm:$0xf]
  %v53 = vld [vmem:[%s1 + $0x4c] sm:$0xf]
  %v54 = vld [vmem:[%s1 + $0x50] sm:$0xf]
  %v55 = vld [vmem:[%s1 + $0x54] sm:$0xf]
  %v56 = vld [vmem:[%s1 + $0x58] sm:$0xf]
  %v57 = vld [vmem:[%s1 + $0x5c] sm:$0xf]
  %v58 = vld [vmem:[%s1 + $0x60] sm:$0xf]
  %v59 = vld [vmem:[%s1 + $0x64] sm:$0xf]
  %v60 = vld [vmem:[%s1 + $0x68] sm:$0xf]
  %v61 = vld [vmem:[%s1 + $0x6c] sm:$0xf]
  %v62 = vld [vmem:[%s1 + $0x70] sm:$0xf]
  %v63 = vld [vmem:[%s1 + $0x74] sm:$0xf]
  %v64 = vld [vmem:[%s1 + $0x78] sm:$0xf]
  %v65 = vld [vmem:[%s1 + $0x7c] sm:$0xf]
  %v70 = vunpack.c.l.b16 %v26
  %v71 = vunpack.c.h.b16 %v26
  %v72 = vunpack.c.l.b16 %v27
  %v73 = vunpack.c.h.b16 %v27
  %v74 = vunpack.c.l.b16 %v28
  %v75 = vunpack.c.h.b16 %v28
  %v76 = vunpack.c.l.b16 %v29
  %v77 = vunpack.c.h.b16 %v29
  %v78 = vpack.c.b16 %v72, %v70
  %v79 = vpack.c.b16 %v73, %v71
  %v80 = vpack.c.b16 %v76, %v74
  %v81 = vpack.c.b16 %v77, %v75
  %v118 = vunpack.c.l.b16 %v34
  %v119 = vunpack.c.l.b16 %v35
  %v120 = vunpack.c.l.b16 %v36
  %v121 = vunpack.c.l.b16 %v37
  %v122 = vunpack.c.l.b16 %v38
  %v123 = vunpack.c.l.b16 %v39
  %v124 = vunpack.c.l.b16 %v40
  %v125 = vunpack.c.l.b16 %v41
  %v126 = vunpack.c.l.b16 %v42
  %v127 = vunpack.c.l.b16 %v43
  %v128 = vunpack.c.l.b16 %v44
  %v129 = vunpack.c.l.b16 %v45
  %v130 = vunpack.c.l.b16 %v46
  %v131 = vunpack.c.l.b16 %v47
  %v132 = vunpack.c.l.b16 %v48
  %v133 = vunpack.c.l.b16 %v49
  %v134 = vunpack.c.l.b16 %v50
  %v135 = vunpack.c.l.b16 %v51
  %v136 = vunpack.c.l.b16 %v52
  %v137 = vunpack.c.l.b16 %v53
  %v138 = vunpack.c.l.b16 %v54
  %v139 = vunpack.c.l.b16 %v55
  %v140 = vunpack.c.l.b16 %v56
  %v141 = vunpack.c.l.b16 %v57
  %v142 = vunpack.c.l.b16 %v58
  %v143 = vunpack.c.l.b16 %v59
  %v144 = vunpack.c.l.b16 %v60
  %v145 = vunpack.c.l.b16 %v61
  %v146 = vunpack.c.l.b16 %v62
  %v147 = vunpack.c.l.b16 %v63
  %v148 = vunpack.c.l.b16 %v64
  %v149 = vunpack.c.l.b16 %v65
  %v150 = vpack.c.b16 %v119, %v118
  %v151 = vpack.c.b16 %v121, %v120
  %v152 = vpack.c.b16 %v123, %v122
  %v153 = vpack.c.b16 %v125, %v124
  %v154 = vpack.c.b16 %v127, %v126
  %v155 = vpack.c.b16 %v129, %v128
  %v156 = vpack.c.b16 %v131, %v130
  %v157 = vpack.c.b16 %v133, %v132
  %v158 = vpack.c.b16 %v135, %v134
  %v159 = vpack.c.b16 %v137, %v136
  %v160 = vpack.c.b16 %v139, %v138
  %v161 = vpack.c.b16 %v141, %v140
  %v162 = vpack.c.b16 %v143, %v142
  %v163 = vpack.c.b16 %v145, %v144
  %v164 = vpack.c.b16 %v147, %v146
  %v165 = vpack.c.b16 %v149, %v148
  %182 = vmatpush.bf16.msra.mxu0 %v157
  %183 = vmatpush.bf16.msra.mxu0 %v156
  %184 = vmatpush.bf16.msra.mxu0 %v155
  %185 = vmatpush.bf16.msra.mxu0 %v154
  %186 = vmatpush.bf16.msra.mxu0 %v153
  %187 = vmatpush.bf16.msra.mxu0 %v152
  %188 = vmatpush.bf16.msra.mxu0 %v151
  %189 = vmatpush.bf16.msra.mxu0 %v150
  %190 = vmatmul.bf16.gmra.mxu0 %v78
  %v191 = vpop.f32.mrf.mxu0
  %v192 = vadd.f32 0.0, %v191
  %v193 = vpop.f32.mrf.mxu0
  %v194 = vadd.f32 0.0, %v193
  %195 = vmatmul.bf16.gmra.mxu0 %v80
  %v196 = vpop.f32.mrf.mxu0
  %v197 = vadd.f32 0.0, %v196
  %v198 = vpop.f32.mrf.mxu0
  %v199 = vadd.f32 0.0, %v198
  %200 = vdwg.mxu0
  %201 = vmatpush.bf16.msra.mxu0 %v165
  %202 = vmatpush.bf16.msra.mxu0 %v164
  %203 = vmatpush.bf16.msra.mxu0 %v163
  %204 = vmatpush.bf16.msra.mxu0 %v162
  %205 = vmatpush.bf16.msra.mxu0 %v161
  %206 = vmatpush.bf16.msra.mxu0 %v160
  %207 = vmatpush.bf16.msra.mxu0 %v159
  %208 = vmatpush.bf16.msra.mxu0 %v158
  %209 = vmatmul.bf16.gmra.mxu0 %v79
  %v210 = vpop.f32.mrf.mxu0
  %v211 = vadd.f32 %v192, %v210
  %v212 = vpop.f32.mrf.mxu0
  %v213 = vadd.f32 %v194, %v212
  %214 = vmatmul.bf16.gmra.mxu0 %v81
  %v215 = vpop.f32.mrf.mxu0
  %v216 = vadd.f32 %v197, %v215
  %v217 = vpop.f32.mrf.mxu0
  %v218 = vadd.f32 %v199, %v217
  %219 = vdwg.mxu0
  %v220 = vadd.f32 %v30, %v211
  %v221 = vadd.f32 %v31, %v213
  %v222 = vadd.f32 %v32, %v216
  %v223 = vadd.f32 %v33, %v218
  %vm224 = vcmask 523264
  %225 = vst.msk [vmem:[#allocation2] sm:$0xff] %vm224, %v220
  %226 = vst.msk [vmem:[#allocation2 + $0x8] sm:$0xff] %vm224, %v221
  %227 = vst.msk [vmem:[#allocation2 + $0x10] sm:$0xff] %vm224, %v222
  %228 = vst.msk [vmem:[#allocation2 + $0x18] sm:$0xff] %vm224, %v223
  // Predicated region
  $region22: #{long_term_stage.36} parent=0 // pred_check
    %p229 = pneg %p17
  $region23: #{long_term_stage.36} parent=0 // pred_check_branch
    %231 = sbr.rel (%p229) target = $region25
  $region24: #{long_term_stage.36} parent=0 // pred_region
    %v232 = vld [vmem:[#allocation2] sm:$0xff]
    %v233 = vld [vmem:[#allocation2 + $0x8] sm:$0xff]
    %v234 = vld [vmem:[#allocation2 + $0x10] sm:$0xff]
    %v235 = vld [vmem:[#allocation2 + $0x18] sm:$0xff]
    %v236 = vld [vmem:[%s2] sm:$0x1]
    %v238 = vperm.slane %v236, 0
    %v240 = vadd.f32 %v232, %v238
    %v241 = vadd.f32 %v233, %v238
    %v242 = vadd.f32 %v234, %v238
    %v243 = vadd.f32 %v235, %v238
    %v244 = vld [vmem:[%s3] sm:$0xf]
    %v245 = vld [vmem:[%s3 + $0x4] sm:$0xf]
    %v246 = vld [vmem:[%s3 + $0x8] sm:$0xf]
    %v247 = vld [vmem:[%s3 + $0xc] sm:$0xf]
    %v248 = vunpack.c.l.bf16 %v244
    %v249 = vunpack.c.l.bf16 %v245
    %v250 = vunpack.c.l.bf16 %v246
    %v251 = vunpack.c.l.bf16 %v247
    %v252 = vadd.f32 %v240, %v248
    %v253 = vadd.f32 %v241, %v249
    %v254 = vadd.f32 %v242, %v250
    %v255 = vadd.f32 %v243, %v251
    %v256 = vpack.c.bf16 %v252, %v252
    %v257 = vpack.c.bf16 %v253, %v253
    %v258 = vpack.c.bf16 %v254, %v254
    %v259 = vpack.c.bf16 %v255, %v255
    %vm260 = vcmask 519168
    %261 = vst.msk [vmem:[%s4] sm:$0xf] %vm260, %v256
    %262 = vst.msk [vmem:[%s4 + $0x4] sm:$0xf] %vm260, %v257
    %263 = vst.msk [vmem:[%s4 + $0x8] sm:$0xf] %vm260, %v258
    %264 = vst.msk [vmem:[%s4 + $0xc] sm:$0xf] %vm260, %v259
  $region25: #{long_term_stage.36} parent=0 // pred_fallthru
    _
  // Predicated region
  $region26: #{long_term_stage.36} parent=0 // pred_check
    _
  $region27: #{long_term_stage.36} parent=0 // pred_check_branch
    %266 = sbr.rel (0) target = $region29
  $region28: #{long_term_stage.36} parent=0 // pred_region
    _
  $region29: #{long_term_stage.36} parent=0 // pred_fallthru
    _
  // Predicated region
  $region30: #{long_term_stage.36} parent=0 // pred_check
    _
  $region31: #{long_term_stage.36} parent=0 // pred_check_branch
    %268 = sbr.rel (0) target = $region33
  $region32: #{long_term_stage.36} parent=0 // pred_region
    _
  $region33: #{long_term_stage.36} parent=0 // pred_fallthru
    _

</llo_original>
